<compile_context>
chip_gen: v5e
topology: v5e:2x2
jax: 0.10.0
libtpu: 0.0.40
codegen_flags: <defaults>
</compile_context>

<pallas_src>
import functools

import jax
import jax.numpy as jnp
from jax.experimental import pallas as pl
from jax.experimental.pallas import tpu as pltpu

# ---------------------------------------------------------------------------
# Static geometry (28x28 MNIST, forced by fc1's 9216 = 64*12*12 input features)
# ---------------------------------------------------------------------------
IMG = 28
XLEN = 29 * 28        # 812: image flattened row-major + one zero pad row
Y_ROWS = 736          # conv1 rows computed (>= 671 + 58, multiple of 8)
Z_ROWS = 672          # 24*28 conv2 rows (row r = h*28 + w, valid w < 24)
M1_ROWS = 667         # rows of the w-pair max   (needs z rows <= 667)
M2_ROWS = 639         # rows of the 2x2-window max (needs m1 rows <= 666)
P_ROWS = 144          # 12*12 pooled positions
POOL_HW = 12
C1, C2 = 32, 64
FEAT = P_ROWS * C2    # 9216


# ---------------------------------------------------------------------------
# Kernel 1: conv1 (VPU) + conv2 (MXU, 9-tap accumulation) + relu + 2x2 maxpool
#           + flatten-compaction.  One grid step per batch element (parallel).
# ---------------------------------------------------------------------------
def _conv_stack_kernel(x_ref, w1_ref, b1_ref, w2_ref, b2_ref, sel_ref, out_ref):
    # ---- conv1 (1 -> 32, 3x3) on the VPU: 9 shifted broadcast-FMAs ---------
    xv = x_ref[0]                                        # (812, 1) f32
    acc1 = jnp.zeros((Y_ROWS, C1), jnp.float32)
    for di in range(3):
        for dj in range(3):
            off = di * IMG + dj
            tap = di * 3 + dj
            # (736, 1) * (1, 32) -> (736, 32)
            acc1 = acc1 + xv[off:off + Y_ROWS, :] * w1_ref[tap:tap + 1, :]
    y1 = jnp.maximum(acc1 + b1_ref[...], 0.0)            # (736, 32), row = h*28+w

    # ---- conv2 (32 -> 64, 3x3) on the MXU: 9-tap accumulation, bf16 in ------
    acc2 = jnp.zeros((Z_ROWS, C2), jnp.float32)
    for di in range(3):
        for dj in range(3):
            off = di * IMG + dj
            tap = di * 3 + dj
            lhs = y1[off:off + Z_ROWS, :].astype(jnp.bfloat16)   # (672, 32)
            acc2 = acc2 + jnp.dot(lhs, w2_ref[tap],
                                  preferred_element_type=jnp.float32)
    z = jnp.maximum(acc2 + b2_ref[...], 0.0)             # (672, 64), row = h*28+w

    # ---- fused 2x2 max-pool + NHWC flatten-compaction -----------------------
    m1 = jnp.maximum(z[0:M1_ROWS, :], z[1:M1_ROWS + 1, :])        # pairs along w
    m2 = jnp.maximum(m1[0:M2_ROWS, :], m1[28:M2_ROWS + 28, :])    # pairs along h
    # m2[56*hp + 2*wp] is the pooled value at (hp, wp); the constant one-hot
    # matrix compacts those rows to p = hp*12 + wp (exact: 0/1 weights, f32 acc).
    pooled = jnp.dot(sel_ref[...], m2.astype(jnp.bfloat16),
                     preferred_element_type=jnp.float32)          # (144, 64)
    out_ref[0, :, :] = pooled.astype(jnp.bfloat16)


def conv_stack(x_pad, w1, b1, w2, b2, sel):
    n = x_pad.shape[0]
    flops = int(n * (Y_ROWS * C1 * 9 * 2          # conv1 (VPU)
                     + Z_ROWS * C1 * C2 * 9 * 2   # conv2 (MXU)
                     + P_ROWS * M2_ROWS * C2 * 2))  # selection matmul
    bytes_accessed = int(n * (XLEN * 4 + P_ROWS * C2 * 2)
                         + w1.size * 4 + b1.size * 4
                         + w2.size * 2 + b2.size * 4 + sel.size * 2)
    return pl.pallas_call(
        _conv_stack_kernel,
        out_shape=jax.ShapeDtypeStruct((n, P_ROWS, C2), jnp.bfloat16),
        grid=(n,),
        in_specs=[
            pl.BlockSpec((1, XLEN, 1), lambda b: (b, 0, 0)),
            pl.BlockSpec((9, C1), lambda b: (0, 0)),
            pl.BlockSpec((1, C1), lambda b: (0, 0)),
            pl.BlockSpec((9, C1, C2), lambda b: (0, 0, 0)),
            pl.BlockSpec((1, C2), lambda b: (0, 0)),
            pl.BlockSpec((P_ROWS, M2_ROWS), lambda b: (0, 0)),
        ],
        out_specs=pl.BlockSpec((1, P_ROWS, C2), lambda b: (b, 0, 0)),
        compiler_params=pltpu.CompilerParams(
            dimension_semantics=("parallel",)),
        cost_estimate=pl.CostEstimate(flops=flops, transcendentals=0,
                                      bytes_accessed=bytes_accessed),
    )(x_pad, w1, b1, w2, b2, sel)


# ---------------------------------------------------------------------------
# Kernel 2: fc1 (K-tiled, f32 accumulator) + relu + fc2 + log_softmax.
# ---------------------------------------------------------------------------
def _mlp_head_kernel(f_ref, w1_ref, b1_ref, w2_ref, b2_ref, out_ref, acc_ref):
    k = pl.program_id(0)

    @pl.when(k == 0)
    def _init():
        acc_ref[...] = jnp.zeros_like(acc_ref)

    acc_ref[...] += jnp.dot(f_ref[...], w1_ref[...],
                            preferred_element_type=jnp.float32)

    @pl.when(k == pl.num_programs(0) - 1)
    def _finalize():
        h = jnp.maximum(acc_ref[...] + b1_ref[...], 0.0)          # (N, 128) f32
        logits = jnp.dot(h.astype(jnp.bfloat16), w2_ref[...],
                         preferred_element_type=jnp.float32) + b2_ref[...]
        m = jnp.max(logits, axis=-1, keepdims=True)
        s = logits - m
        lse = jnp.log(jnp.sum(jnp.exp(s), axis=-1, keepdims=True))
        out_ref[...] = s - lse


def mlp_head(flat, w1, b1, w2, b2, *, tk=1152):
    n, kdim = flat.shape
    assert kdim % tk == 0
    kt = kdim // tk
    flops = int(n * (2 * kdim * 128 + 2 * 128 * 10))
    bytes_accessed = int(flat.size * 2 + w1.size * 2 + b1.size * 4
                         + w2.size * 2 + b2.size * 4 + n * 10 * 4)
    return pl.pallas_call(
        _mlp_head_kernel,
        out_shape=jax.ShapeDtypeStruct((n, 10), jnp.float32),
        grid=(kt,),
        in_specs=[
            pl.BlockSpec((n, tk), lambda k: (0, k)),
            pl.BlockSpec((tk, 128), lambda k: (k, 0)),
            pl.BlockSpec((1, 128), lambda k: (0, 0)),
            pl.BlockSpec((128, 10), lambda k: (0, 0)),
            pl.BlockSpec((1, 10), lambda k: (0, 0)),
        ],
        out_specs=pl.BlockSpec((n, 10), lambda k: (0, 0)),
        scratch_shapes=[pltpu.VMEM((n, 128), jnp.float32)],
        compiler_params=pltpu.CompilerParams(
            dimension_semantics=("arbitrary",)),
        cost_estimate=pl.CostEstimate(flops=flops, transcendentals=int(n * 11),
                                      bytes_accessed=bytes_accessed),
    )(flat, w1, b1, w2, b2)


# ---------------------------------------------------------------------------
# Parameters (PyTorch layouts) + one-time layout / dtype preparation.
# ---------------------------------------------------------------------------
def init_params(key):
    ks = jax.random.split(key, 8)
    scale = 0.05
    return {
        "conv1_w": scale * jax.random.normal(ks[0], (32, 1, 3, 3), jnp.float32),
        "conv1_b": scale * jax.random.normal(ks[1], (32,), jnp.float32),
        "conv2_w": scale * jax.random.normal(ks[2], (64, 32, 3, 3), jnp.float32),
        "conv2_b": scale * jax.random.normal(ks[3], (64,), jnp.float32),
        "fc1_w": scale * jax.random.normal(ks[4], (128, 9216), jnp.float32),
        "fc1_b": scale * jax.random.normal(ks[5], (128,), jnp.float32),
        "fc2_w": scale * jax.random.normal(ks[6], (10, 128), jnp.float32),
        "fc2_b": scale * jax.random.normal(ks[7], (10,), jnp.float32),
    }


def prepare_params(params):
    """Hoist all weight transposes / permutations / bf16 casts out of the hot path."""
    # conv weights -> tap-major (kh*kw, C_in, C_out)
    w1 = params["conv1_w"].transpose(2, 3, 1, 0).reshape(9, C1)           # f32 (VPU)
    w2 = params["conv2_w"].transpose(2, 3, 1, 0).reshape(9, C1, C2).astype(jnp.bfloat16)
    # fc1 weight: (out, C*Hp*Wp) -> ((Hp*Wp)*C, out), matching the kernel's
    # (hp, wp, c) flatten order so no runtime activation transpose is needed.
    w3 = (params["fc1_w"].reshape(128, C2, POOL_HW, POOL_HW)
          .transpose(2, 3, 1, 0).reshape(FEAT, 128).astype(jnp.bfloat16))
    w4 = params["fc2_w"].T.astype(jnp.bfloat16)                           # (128, 10)
    # constant one-hot compaction matrix: row p=hp*12+wp selects m2 row 56*hp+2*wp
    p = jnp.arange(P_ROWS)
    rows = 56 * (p // POOL_HW) + 2 * (p % POOL_HW)
    sel = (rows[:, None] == jnp.arange(M2_ROWS)[None, :]).astype(jnp.bfloat16)
    return {
        "w1": w1, "b1": params["conv1_b"].reshape(1, C1),
        "w2": w2, "b2": params["conv2_b"].reshape(1, C2),
        "w3": w3, "b3": params["fc1_b"].reshape(1, 128),
        "w4": w4, "b4": params["fc2_b"].reshape(1, 10),
        "sel": sel,
    }


# ---------------------------------------------------------------------------
# Forward pass (dropout1/dropout2 are identity in eval mode).
# ---------------------------------------------------------------------------
def net_forward(x_nchw, p):
    n = x_nchw.shape[0]
    # width-28 "overhang" flattening of the 28x28 image, plus one zero pad row
    # so every shifted in-kernel window stays in bounds.
    x_flat = x_nchw.reshape(n, IMG * IMG)
    x_pad = jnp.pad(x_flat, ((0, 0), (0, XLEN - IMG * IMG)))[..., None]   # (N,812,1)
    feats = conv_stack(x_pad, p["w1"], p["b1"], p["w2"], p["b2"], p["sel"])
    flat = feats.reshape(n, FEAT)                      # contiguous, free reshape
    return mlp_head(flat, p["w3"], p["b3"], p["w4"], p["b4"])


# ---------------------------------------------------------------------------
# Pure-JAX reference (f32, highest precision) for correctness checking.
# ---------------------------------------------------------------------------
def reference_forward(x, params):
    conv = functools.partial(
        jax.lax.conv_general_dilated, window_strides=(1, 1), padding="VALID",
        dimension_numbers=("NCHW", "OIHW", "NCHW"),
        precision=jax.lax.Precision.HIGHEST)
    y = jnp.maximum(conv(x, params["conv1_w"])
                    + params["conv1_b"][None, :, None, None], 0.0)
    y = jnp.maximum(conv(y, params["conv2_w"])
                    + params["conv2_b"][None, :, None, None], 0.0)
    n, c, h, w = y.shape
    y = y.reshape(n, c, h // 2, 2, w // 2, 2).max(axis=(3, 5))
    flat = y.reshape(n, -1)
    h1 = jnp.maximum(jnp.dot(flat, params["fc1_w"].T,
                             precision=jax.lax.Precision.HIGHEST)
                     + params["fc1_b"], 0.0)
    logits = jnp.dot(h1, params["fc2_w"].T,
                     precision=jax.lax.Precision.HIGHEST) + params["fc2_b"]
    return jax.nn.log_softmax(logits, axis=-1)


if __name__ == "__main__":
    key = jax.random.PRNGKey(0)
    k_x, k_p = jax.random.split(key)
    # fc1 expects 9216 = 64*12*12 features, which forces 28x28 inputs (MNIST).
    x = jax.random.normal(k_x, (2, 1, 28, 28), jnp.float32)
    torch_params = init_params(k_p)
    p = prepare_params(torch_params)

    fwd = jax.jit(net_forward)
    out = jax.block_until_ready(fwd(x, p))

    assert out.shape == (2, 10)
    # log_softmax sanity: rows exponentiate-and-sum to 1
    assert jnp.allclose(jnp.exp(out).sum(axis=-1), 1.0, atol=1e-3)
    # numerical check vs. f32 reference (bf16 matmul operands -> loose tol)
    ref = reference_forward(x, torch_params)
    assert jnp.allclose(out, ref, atol=3e-2), (out, ref)
    print("KERNEL_OK")
</pallas_src>

<mosaic_0001>
module attributes {stable_mosaic.version = 11 : i64} {
  func.func @_mlp_head_kernel(%arg0: i32, %arg1: memref<2x1152xbf16, #tpu.memory_space<vmem>>, %arg2: memref<1152x128xbf16, #tpu.memory_space<vmem>>, %arg3: memref<1x128xf32, #tpu.memory_space<vmem>>, %arg4: memref<128x10xbf16, #tpu.memory_space<vmem>>, %arg5: memref<1x10xf32, #tpu.memory_space<vmem>>, %arg6: memref<2x10xf32, #tpu.memory_space<vmem>>, %arg7: memref<2x128xf32, #tpu.memory_space<vmem>>) attributes {dimension_semantics = [#tpu.dimension_semantics<arbitrary>], iteration_bounds = array<i64: 8>, scalar_prefetch = 0 : i64, scratch_operands = 1 : i64, tpu.core_type = #tpu.core_type<tc>, window_params = [{transform_indices = @transform_0, window_bounds = array<i64: 2, 1152>}, {transform_indices = @transform_1, window_bounds = array<i64: 1152, 128>}, {pipeline_mode = #tpu.pipeline_mode<synchronous>, transform_indices = @transform_2, window_bounds = array<i64: 1, 128>}, {pipeline_mode = #tpu.pipeline_mode<synchronous>, transform_indices = @transform_3, window_bounds = array<i64: 128, 10>}, {pipeline_mode = #tpu.pipeline_mode<synchronous>, transform_indices = @transform_4, window_bounds = array<i64: 1, 10>}, {pipeline_mode = #tpu.pipeline_mode<synchronous>, transform_indices = @transform_5, window_bounds = array<i64: 2, 10>}]} {
    %c0_i32 = arith.constant 0 : i32
    %0 = arith.cmpi eq, %arg0, %c0_i32 : i32
    %1 = arith.extui %0 : i1 to i32
    %c0_i32_0 = arith.constant 0 : i32
    %2 = arith.cmpi ne, %1, %c0_i32_0 : i32
    scf.if %2 {
      %cst_9 = arith.constant 0.000000e+00 : f32
      %12 = vector.broadcast %cst_9 : f32 to vector<2x128xf32>
      %c0_10 = arith.constant 0 : index
      %c0_11 = arith.constant 0 : index
      %13 = vector.load %arg7[%c0_10, %c0_11] : memref<2x128xf32, #tpu.memory_space<vmem>>, vector<2x128xf32>
      tpu.vector_store %arg7[%c0_10, %c0_11], %12 {strides = array<i32>} : memref<2x128xf32, #tpu.memory_space<vmem>>, vector<2x128xf32>,
    } else {
    }
    %c0 = arith.constant 0 : index
    %c0_1 = arith.constant 0 : index
    %3 = vector.load %arg7[%c0, %c0_1] : memref<2x128xf32, #tpu.memory_space<vmem>>, vector<2x128xf32>
    %c0_2 = arith.constant 0 : index
    %c0_3 = arith.constant 0 : index
    %4 = vector.load %arg1[%c0_2, %c0_3] : memref<2x1152xbf16, #tpu.memory_space<vmem>>, vector<2x1152xbf16>
    %c0_4 = arith.constant 0 : index
    %c0_5 = arith.constant 0 : index
    %5 = vector.load %arg2[%c0_4, %c0_5] : memref<1152x128xbf16, #tpu.memory_space<vmem>>, vector<1152x128xbf16>
    %cst = arith.constant dense<0.000000e+00> : vector<2x128xf32>
    %6 = tpu.matmul %4, %5, %cst {dimension_numbers = #tpu.dot_dimension_numbers<[1], [0], [0], [1], [0, 0, 1, 1], [], []>} : vector<2x1152xbf16>, vector<1152x128xbf16>, vector<2x128xf32> -> vector<2x128xf32>
    %7 = arith.addf %3, %6 : vector<2x128xf32>
    %c0_6 = arith.constant 0 : index
    %c0_7 = arith.constant 0 : index
    %8 = vector.load %arg7[%c0_6, %c0_7] : memref<2x128xf32, #tpu.memory_space<vmem>>, vector<2x128xf32>
    tpu.vector_store %arg7[%c0_6, %c0_7], %7 {strides = array<i32>} : memref<2x128xf32, #tpu.memory_space<vmem>>, vector<2x128xf32>,
    %c7_i32 = arith.constant 7 : i32
    %9 = arith.cmpi eq, %arg0, %c7_i32 : i32
    %10 = arith.extui %9 : i1 to i32
    %c0_i32_8 = arith.constant 0 : i32
    %11 = arith.cmpi ne, %10, %c0_i32_8 : i32
    scf.if %11 {
      %c0_9 = arith.constant 0 : index
      %c0_10 = arith.constant 0 : index
      %12 = vector.load %arg7[%c0_9, %c0_10] : memref<2x128xf32, #tpu.memory_space<vmem>>, vector<2x128xf32>
      %c0_11 = arith.constant 0 : index
      %c0_12 = arith.constant 0 : index
      %13 = vector.load %arg3[%c0_11, %c0_12] : memref<1x128xf32, #tpu.memory_space<vmem>>, vector<1x128xf32>
      %14 = vector.broadcast %13 : vector<1x128xf32> to vector<2x128xf32>
      %15 = arith.addf %12, %14 : vector<2x128xf32>
      %cst_13 = arith.constant 0.000000e+00 : f32
      %16 = vector.broadcast %cst_13 : f32 to vector<2x128xf32>
      %17 = arith.maximumf %15, %16 : vector<2x128xf32>
      %18 = arith.truncf %17 : vector<2x128xf32> to vector<2x128xbf16>
      %c0_14 = arith.constant 0 : index
      %c0_15 = arith.constant 0 : index
      %19 = vector.load %arg4[%c0_14, %c0_15] : memref<128x10xbf16, #tpu.memory_space<vmem>>, vector<128x10xbf16>
      %cst_16 = arith.constant dense<0.000000e+00> : vector<2x10xf32>
      %20 = tpu.matmul %18, %19, %cst_16 {dimension_numbers = #tpu.dot_dimension_numbers<[1], [0], [0], [1], [0, 0, 1, 1], [], []>} : vector<2x128xbf16>, vector<128x10xbf16>, vector<2x10xf32> -> vector<2x10xf32>
      %c0_17 = arith.constant 0 : index
      %c0_18 = arith.constant 0 : index
      %21 = vector.load %arg5[%c0_17, %c0_18] : memref<1x10xf32, #tpu.memory_space<vmem>>, vector<1x10xf32>
      %22 = vector.broadcast %21 : vector<1x10xf32> to vector<2x10xf32>
      %23 = arith.addf %20, %22 : vector<2x10xf32>
      %cst_19 = arith.constant dense<0xFF800000> : vector<2xf32>
      %24 = vector.multi_reduction <maximumf>, %23, %cst_19 [1] : vector<2x10xf32> to vector<2xf32>
      %25 = vector.shape_cast %24 : vector<2xf32> to vector<2x1xf32>
      %26 = vector.broadcast %25 : vector<2x1xf32> to vector<2x10xf32>
      %27 = arith.subf %23, %26 : vector<2x10xf32>
      %28 = math.exp %27 : vector<2x10xf32>
      %cst_20 = arith.constant dense<0.000000e+00> : vector<2xf32>
      %29 = vector.multi_reduction <add>, %28, %cst_20 [1] : vector<2x10xf32> to vector<2xf32>
      %30 = vector.shape_cast %29 : vector<2xf32> to vector<2x1xf32>
      %31 = math.log %30 : vector<2x1xf32>
      %32 = vector.broadcast %31 : vector<2x1xf32> to vector<2x10xf32>
      %33 = arith.subf %27, %32 : vector<2x10xf32>
      %c0_21 = arith.constant 0 : index
      %c0_22 = arith.constant 0 : index
      %34 = vector.load %arg6[%c0_21, %c0_22] : memref<2x10xf32, #tpu.memory_space<vmem>>, vector<2x10xf32>
      tpu.vector_store %arg6[%c0_21, %c0_22], %33 {strides = array<i32>} : memref<2x10xf32, #tpu.memory_space<vmem>>, vector<2x10xf32>,
    } else {
    }
    return
  }
  func.func @transform_0(%arg0: i32) -> (i32, i32) {
    %c0_i32 = arith.constant 0 : i32
    %c0_i32_0 = arith.constant 0 : i32
    return %c0_i32, %arg0 : i32, i32
  }
  func.func @transform_1(%arg0: i32) -> (i32, i32) {
    %c0_i32 = arith.constant 0 : i32
    %c0_i32_0 = arith.constant 0 : i32
    return %arg0, %c0_i32 : i32, i32
  }
  func.func @transform_2(%arg0: i32) -> (i32, i32) {
    %c0_i32 = arith.constant 0 : i32
    %c0_i32_0 = arith.constant 0 : i32
    %c0_i32_1 = arith.constant 0 : i32
    return %c0_i32, %c0_i32_0 : i32, i32
  }
  func.func @transform_3(%arg0: i32) -> (i32, i32) {
    %c0_i32 = arith.constant 0 : i32
    %c0_i32_0 = arith.constant 0 : i32
    %c0_i32_1 = arith.constant 0 : i32
    return %c0_i32, %c0_i32_0 : i32, i32
  }
  func.func @transform_4(%arg0: i32) -> (i32, i32) {
    %c0_i32 = arith.constant 0 : i32
    %c0_i32_0 = arith.constant 0 : i32
    %c0_i32_1 = arith.constant 0 : i32
    return %c0_i32, %c0_i32_0 : i32, i32
  }
  func.func @transform_5(%arg0: i32) -> (i32, i32) {
    %c0_i32 = arith.constant 0 : i32
    %c0_i32_0 = arith.constant 0 : i32
    %c0_i32_1 = arith.constant 0 : i32
    return %c0_i32, %c0_i32_0 : i32, i32
  }
}

module attributes {stable_mosaic.version = 11 : i64} {
  func.func @_conv_stack_kernel(%arg0: i32, %arg1: memref<1x812x1xf32, #tpu.memory_space<vmem>>, %arg2: memref<9x32xf32, #tpu.memory_space<vmem>>, %arg3: memref<1x32xf32, #tpu.memory_space<vmem>>, %arg4: memref<9x32x64xbf16, #tpu.memory_space<vmem>>, %arg5: memref<1x64xf32, #tpu.memory_space<vmem>>, %arg6: memref<144x639xbf16, #tpu.memory_space<vmem>>, %arg7: memref<1x144x64xbf16, #tpu.memory_space<vmem>>) attributes {dimension_semantics = [#tpu.dimension_semantics<parallel>], iteration_bounds = array<i64: 2>, scalar_prefetch = 0 : i64, scratch_operands = 0 : i64, tpu.core_type = #tpu.core_type<tc>, window_params = [{transform_indices = @transform_0, window_bounds = array<i64: 1, 812, 1>}, {pipeline_mode = #tpu.pipeline_mode<synchronous>, transform_indices = @transform_1, window_bounds = array<i64: 9, 32>}, {pipeline_mode = #tpu.pipeline_mode<synchronous>, transform_indices = @transform_2, window_bounds = array<i64: 1, 32>}, {pipeline_mode = #tpu.pipeline_mode<synchronous>, transform_indices = @transform_3, window_bounds = array<i64: 9, 32, 64>}, {pipeline_mode = #tpu.pipeline_mode<synchronous>, transform_indices = @transform_4, window_bounds = array<i64: 1, 64>}, {pipeline_mode = #tpu.pipeline_mode<synchronous>, transform_indices = @transform_5, window_bounds = array<i64: 144, 639>}, {transform_indices = @transform_6, window_bounds = array<i64: 1, 144, 64>}]} {
    %c0 = arith.constant 0 : index
    %c0_0 = arith.constant 0 : index
    %c0_1 = arith.constant 0 : index
    %0 = vector.load %arg1[%c0, %c0_0, %c0_1] : memref<1x812x1xf32, #tpu.memory_space<vmem>>, vector<1x812x1xf32>
    %1 = vector.shape_cast %0 : vector<1x812x1xf32> to vector<812x1xf32>
    %cst = arith.constant 0.000000e+00 : f32
    %2 = vector.broadcast %cst : f32 to vector<736x32xf32>
    %3 = vector.extract_strided_slice %1 {offsets = [0, 0], sizes = [736, 1], strides = [1, 1]} : vector<812x1xf32> to vector<736x1xf32>
    %c0_2 = arith.constant 0 : index
    %c0_3 = arith.constant 0 : index
    %4 = vector.load %arg2[%c0_2, %c0_3] : memref<9x32xf32, #tpu.memory_space<vmem>>, vector<1x32xf32>
    %5 = vector.broadcast %3 : vector<736x1xf32> to vector<736x32xf32>
    %6 = vector.broadcast %4 : vector<1x32xf32> to vector<736x32xf32>
    %7 = arith.mulf %5, %6 : vector<736x32xf32>
    %8 = arith.addf %2, %7 : vector<736x32xf32>
    %9 = vector.extract_strided_slice %1 {offsets = [1, 0], sizes = [736, 1], strides = [1, 1]} : vector<812x1xf32> to vector<736x1xf32>
    %c1 = arith.constant 1 : index
    %c0_4 = arith.constant 0 : index
    %10 = vector.load %arg2[%c1, %c0_4] : memref<9x32xf32, #tpu.memory_space<vmem>>, vector<1x32xf32>
    %11 = vector.broadcast %9 : vector<736x1xf32> to vector<736x32xf32>
    %12 = vector.broadcast %10 : vector<1x32xf32> to vector<736x32xf32>
    %13 = arith.mulf %11, %12 : vector<736x32xf32>
    %14 = arith.addf %8, %13 : vector<736x32xf32>
    %15 = vector.extract_strided_slice %1 {offsets = [2, 0], sizes = [736, 1], strides = [1, 1]} : vector<812x1xf32> to vector<736x1xf32>
    %c2 = arith.constant 2 : index
    %c0_5 = arith.constant 0 : index
    %16 = vector.load %arg2[%c2, %c0_5] : memref<9x32xf32, #tpu.memory_space<vmem>>, vector<1x32xf32>
    %17 = vector.broadcast %15 : vector<736x1xf32> to vector<736x32xf32>
    %18 = vector.broadcast %16 : vector<1x32xf32> to vector<736x32xf32>
    %19 = arith.mulf %17, %18 : vector<736x32xf32>
    %20 = arith.addf %14, %19 : vector<736x32xf32>
    %21 = vector.extract_strided_slice %1 {offsets = [28, 0], sizes = [736, 1], strides = [1, 1]} : vector<812x1xf32> to vector<736x1xf32>
    %c3 = arith.constant 3 : index
    %c0_6 = arith.constant 0 : index
    %22 = vector.load %arg2[%c3, %c0_6] : memref<9x32xf32, #tpu.memory_space<vmem>>, vector<1x32xf32>
    %23 = vector.broadcast %21 : vector<736x1xf32> to vector<736x32xf32>
    %24 = vector.broadcast %22 : vector<1x32xf32> to vector<736x32xf32>
    %25 = arith.mulf %23, %24 : vector<736x32xf32>
    %26 = arith.addf %20, %25 : vector<736x32xf32>
    %27 = vector.extract_strided_slice %1 {offsets = [29, 0], sizes = [736, 1], strides = [1, 1]} : vector<812x1xf32> to vector<736x1xf32>
    %c4 = arith.constant 4 : index
    %c0_7 = arith.constant 0 : index
    %28 = vector.load %arg2[%c4, %c0_7] : memref<9x32xf32, #tpu.memory_space<vmem>>, vector<1x32xf32>
    %29 = vector.broadcast %27 : vector<736x1xf32> to vector<736x32xf32>
    %30 = vector.broadcast %28 : vector<1x32xf32> to vector<736x32xf32>
    %31 = arith.mulf %29, %30 : vector<736x32xf32>
    %32 = arith.addf %26, %31 : vector<736x32xf32>
    %33 = vector.extract_strided_slice %1 {offsets = [30, 0], sizes = [736, 1], strides = [1, 1]} : vector<812x1xf32> to vector<736x1xf32>
    %c5 = arith.constant 5 : index
    %c0_8 = arith.constant 0 : index
    %34 = vector.load %arg2[%c5, %c0_8] : memref<9x32xf32, #tpu.memory_space<vmem>>, vector<1x32xf32>
    %35 = vector.broadcast %33 : vector<736x1xf32> to vector<736x32xf32>
    %36 = vector.broadcast %34 : vector<1x32xf32> to vector<736x32xf32>
    %37 = arith.mulf %35, %36 : vector<736x32xf32>
    %38 = arith.addf %32, %37 : vector<736x32xf32>
    %39 = vector.extract_strided_slice %1 {offsets = [56, 0], sizes = [736, 1], strides = [1, 1]} : vector<812x1xf32> to vector<736x1xf32>
    %c6 = arith.constant 6 : index
    %c0_9 = arith.constant 0 : index
    %40 = vector.load %arg2[%c6, %c0_9] : memref<9x32xf32, #tpu.memory_space<vmem>>, vector<1x32xf32>
    %41 = vector.broadcast %39 : vector<736x1xf32> to vector<736x32xf32>
    %42 = vector.broadcast %40 : vector<1x32xf32> to vector<736x32xf32>
    %43 = arith.mulf %41, %42 : vector<736x32xf32>
    %44 = arith.addf %38, %43 : vector<736x32xf32>
    %45 = vector.extract_strided_slice %1 {offsets = [57, 0], sizes = [736, 1], strides = [1, 1]} : vector<812x1xf32> to vector<736x1xf32>
    %c7 = arith.constant 7 : index
    %c0_10 = arith.constant 0 : index
    %46 = vector.load %arg2[%c7, %c0_10] : memref<9x32xf32, #tpu.memory_space<vmem>>, vector<1x32xf32>
    %47 = vector.broadcast %45 : vector<736x1xf32> to vector<736x32xf32>
    %48 = vector.broadcast %46 : vector<1x32xf32> to vector<736x32xf32>
    %49 = arith.mulf %47, %48 : vector<736x32xf32>
    %50 = arith.addf %44, %49 : vector<736x32xf32>
    %51 = vector.extract_strided_slice %1 {offsets = [58, 0], sizes = [736, 1], strides = [1, 1]} : vector<812x1xf32> to vector<736x1xf32>
    %c8 = arith.constant 8 : index
    %c0_11 = arith.constant 0 : index
    %52 = vector.load %arg2[%c8, %c0_11] : memref<9x32xf32, #tpu.memory_space<vmem>>, vector<1x32xf32>
    %53 = vector.broadcast %51 : vector<736x1xf32> to vector<736x32xf32>
    %54 = vector.broadcast %52 : vector<1x32xf32> to vector<736x32xf32>
    %55 = arith.mulf %53, %54 : vector<736x32xf32>
    %56 = arith.addf %50, %55 : vector<736x32xf32>
    %c0_12 = arith.constant 0 : index
    %c0_13 = arith.constant 0 : index
    %57 = vector.load %arg3[%c0_12, %c0_13] : memref<1x32xf32, #tpu.memory_space<vmem>>, vector<1x32xf32>
    %58 = vector.broadcast %57 : vector<1x32xf32> to vector<736x32xf32>
    %59 = arith.addf %56, %58 : vector<736x32xf32>
    %cst_14 = arith.constant 0.000000e+00 : f32
    %60 = vector.broadcast %cst_14 : f32 to vector<736x32xf32>
    %61 = arith.maximumf %59, %60 : vector<736x32xf32>
    %cst_15 = arith.constant 0.000000e+00 : f32
    %62 = vector.broadcast %cst_15 : f32 to vector<672x64xf32>
    %63 = vector.extract_strided_slice %61 {offsets = [0, 0], sizes = [672, 32], strides = [1, 1]} : vector<736x32xf32> to vector<672x32xf32>
    %64 = arith.truncf %63 : vector<672x32xf32> to vector<672x32xbf16>
    %c0_16 = arith.constant 0 : index
    %c0_17 = arith.constant 0 : index
    %c0_18 = arith.constant 0 : index
    %65 = vector.load %arg4[%c0_16, %c0_17, %c0_18] : memref<9x32x64xbf16, #tpu.memory_space<vmem>>, vector<1x32x64xbf16>
    %66 = vector.shape_cast %65 : vector<1x32x64xbf16> to vector<32x64xbf16>
    %cst_19 = arith.constant dense<0.000000e+00> : vector<672x64xf32>
    %67 = tpu.matmul %64, %66, %cst_19 {dimension_numbers = #tpu.dot_dimension_numbers<[1], [0], [0], [1], [0, 0, 1, 1], [], []>} : vector<672x32xbf16>, vector<32x64xbf16>, vector<672x64xf32> -> vector<672x64xf32>
    %68 = arith.addf %62, %67 : vector<672x64xf32>
    %69 = vector.extract_strided_slice %61 {offsets = [1, 0], sizes = [672, 32], strides = [1, 1]} : vector<736x32xf32> to vector<672x32xf32>
    %70 = arith.truncf %69 : vector<672x32xf32> to vector<672x32xbf16>
    %c1_20 = arith.constant 1 : index
    %c0_21 = arith.constant 0 : index
    %c0_22 = arith.constant 0 : index
    %71 = vector.load %arg4[%c1_20, %c0_21, %c0_22] : memref<9x32x64xbf16, #tpu.memory_space<vmem>>, vector<1x32x64xbf16>
    %72 = vector.shape_cast %71 : vector<1x32x64xbf16> to vector<32x64xbf16>
    %cst_23 = arith.constant dense<0.000000e+00> : vector<672x64xf32>
    %73 = tpu.matmul %70, %72, %cst_23 {dimension_numbers = #tpu.dot_dimension_numbers<[1], [0], [0], [1], [0, 0, 1, 1], [], []>} : vector<672x32xbf16>, vector<32x64xbf16>, vector<672x64xf32> -> vector<672x64xf32>
    %74 = arith.addf %68, %73 : vector<672x64xf32>
    %75 = vector.extract_strided_slice %61 {offsets = [2, 0], sizes = [672, 32], strides = [1, 1]} : vector<736x32xf32> to vector<672x32xf32>
    %76 = arith.truncf %75 : vector<672x32xf32> to vector<672x32xbf16>
    %c2_24 = arith.constant 2 : index
    %c0_25 = arith.constant 0 : index
    %c0_26 = arith.constant 0 : index
    %77 = vector.load %arg4[%c2_24, %c0_25, %c0_26] : memref<9x32x64xbf16, #tpu.memory_space<vmem>>, vector<1x32x64xbf16>
    %78 = vector.shape_cast %77 : vector<1x32x64xbf16> to vector<32x64xbf16>
    %cst_27 = arith.constant dense<0.000000e+00> : vector<672x64xf32>
    %79 = tpu.matmul %76, %78, %cst_27 {dimension_numbers = #tpu.dot_dimension_numbers<[1], [0], [0], [1], [0, 0, 1, 1], [], []>} : vector<672x32xbf16>, vector<32x64xbf16>, vector<672x64xf32> -> vector<672x64xf32>
    %80 = arith.addf %74, %79 : vector<672x64xf32>
    %81 = vector.extract_strided_slice %61 {offsets = [28, 0], sizes = [672, 32], strides = [1, 1]} : vector<736x32xf32> to vector<672x32xf32>
    %82 = arith.truncf %81 : vector<672x32xf32> to vector<672x32xbf16>
    %c3_28 = arith.constant 3 : index
    %c0_29 = arith.constant 0 : index
    %c0_30 = arith.constant 0 : index
    %83 = vector.load %arg4[%c3_28, %c0_29, %c0_30] : memref<9x32x64xbf16, #tpu.memory_space<vmem>>, vector<1x32x64xbf16>
    %84 = vector.shape_cast %83 : vector<1x32x64xbf16> to vector<32x64xbf16>
    %cst_31 = arith.constant dense<0.000000e+00> : vector<672x64xf32>
    %85 = tpu.matmul %82, %84, %cst_31 {dimension_numbers = #tpu.dot_dimension_numbers<[1], [0], [0], [1], [0, 0, 1, 1], [], []>} : vector<672x32xbf16>, vector<32x64xbf16>, vector<672x64xf32> -> vector<672x64xf32>
    %86 = arith.addf %80, %85 : vector<672x64xf32>
    %87 = vector.extract_strided_slice %61 {offsets = [29, 0], sizes = [672, 32], strides = [1, 1]} : vector<736x32xf32> to vector<672x32xf32>
    %88 = arith.truncf %87 : vector<672x32xf32> to vector<672x32xbf16>
    %c4_32 = arith.constant 4 : index
    %c0_33 = arith.constant 0 : index
    %c0_34 = arith.constant 0 : index
    %89 = vector.load %arg4[%c4_32, %c0_33, %c0_34] : memref<9x32x64xbf16, #tpu.memory_space<vmem>>, vector<1x32x64xbf16>
    %90 = vector.shape_cast %89 : vector<1x32x64xbf16> to vector<32x64xbf16>
    %cst_35 = arith.constant dense<0.000000e+00> : vector<672x64xf32>
    %91 = tpu.matmul %88, %90, %cst_35 {dimension_numbers = #tpu.dot_dimension_numbers<[1], [0], [0], [1], [0, 0, 1, 1], [], []>} : vector<672x32xbf16>, vector<32x64xbf16>, vector<672x64xf32> -> vector<672x64xf32>
    %92 = arith.addf %86, %91 : vector<672x64xf32>
    %93 = vector.extract_strided_slice %61 {offsets = [30, 0], sizes = [672, 32], strides = [1, 1]} : vector<736x32xf32> to vector<672x32xf32>
    %94 = arith.truncf %93 : vector<672x32xf32> to vector<672x32xbf16>
    %c5_36 = arith.constant 5 : index
    %c0_37 = arith.constant 0 : index
    %c0_38 = arith.constant 0 : index
    %95 = vector.load %arg4[%c5_36, %c0_37, %c0_38] : memref<9x32x64xbf16, #tpu.memory_space<vmem>>, vector<1x32x64xbf16>
    %96 = vector.shape_cast %95 : vector<1x32x64xbf16> to vector<32x64xbf16>
    %cst_39 = arith.constant dense<0.000000e+00> : vector<672x64xf32>
    %97 = tpu.matmul %94, %96, %cst_39 {dimension_numbers = #tpu.dot_dimension_numbers<[1], [0], [0], [1], [0, 0, 1, 1], [], []>} : vector<672x32xbf16>, vector<32x64xbf16>, vector<672x64xf32> -> vector<672x64xf32>
    %98 = arith.addf %92, %97 : vector<672x64xf32>
    %99 = vector.extract_strided_slice %61 {offsets = [56, 0], sizes = [672, 32], strides = [1, 1]} : vector<736x32xf32> to vector<672x32xf32>
    %100 = arith.truncf %99 : vector<672x32xf32> to vector<672x32xbf16>
    %c6_40 = arith.constant 6 : index
    %c0_41 = arith.constant 0 : index
    %c0_42 = arith.constant 0 : index
    %101 = vector.load %arg4[%c6_40, %c0_41, %c0_42] : memref<9x32x64xbf16, #tpu.memory_space<vmem>>, vector<1x32x64xbf16>
    %102 = vector.shape_cast %101 : vector<1x32x64xbf16> to vector<32x64xbf16>
    %cst_43 = arith.constant dense<0.000000e+00> : vector<672x64xf32>
    %103 = tpu.matmul %100, %102, %cst_43 {dimension_numbers = #tpu.dot_dimension_numbers<[1], [0], [0], [1], [0, 0, 1, 1], [], []>} : vector<672x32xbf16>, vector<32x64xbf16>, vector<672x64xf32> -> vector<672x64xf32>
    %104 = arith.addf %98, %103 : vector<672x64xf32>
    %105 = vector.extract_strided_slice %61 {offsets = [57, 0], sizes = [672, 32], strides = [1, 1]} : vector<736x32xf32> to vector<672x32xf32>
    %106 = arith.truncf %105 : vector<672x32xf32> to vector<672x32xbf16>
    %c7_44 = arith.constant 7 : index
    %c0_45 = arith.constant 0 : index
    %c0_46 = arith.constant 0 : index
    %107 = vector.load %arg4[%c7_44, %c0_45, %c0_46] : memref<9x32x64xbf16, #tpu.memory_space<vmem>>, vector<1x32x64xbf16>
    %108 = vector.shape_cast %107 : vector<1x32x64xbf16> to vector<32x64xbf16>
    %cst_47 = arith.constant dense<0.000000e+00> : vector<672x64xf32>
    %109 = tpu.matmul %106, %108, %cst_47 {dimension_numbers = #tpu.dot_dimension_numbers<[1], [0], [0], [1], [0, 0, 1, 1], [], []>} : vector<672x32xbf16>, vector<32x64xbf16>, vector<672x64xf32> -> vector<672x64xf32>
    %110 = arith.addf %104, %109 : vector<672x64xf32>
    %111 = vector.extract_strided_slice %61 {offsets = [58, 0], sizes = [672, 32], strides = [1, 1]} : vector<736x32xf32> to vector<672x32xf32>
    %112 = arith.truncf %111 : vector<672x32xf32> to vector<672x32xbf16>
    %c8_48 = arith.constant 8 : index
    %c0_49 = arith.constant 0 : index
    %c0_50 = arith.constant 0 : index
    %113 = vector.load %arg4[%c8_48, %c0_49, %c0_50] : memref<9x32x64xbf16, #tpu.memory_space<vmem>>, vector<1x32x64xbf16>
    %114 = vector.shape_cast %113 : vector<1x32x64xbf16> to vector<32x64xbf16>
    %cst_51 = arith.constant dense<0.000000e+00> : vector<672x64xf32>
    %115 = tpu.matmul %112, %114, %cst_51 {dimension_numbers = #tpu.dot_dimension_numbers<[1], [0], [0], [1], [0, 0, 1, 1], [], []>} : vector<672x32xbf16>, vector<32x64xbf16>, vector<672x64xf32> -> vector<672x64xf32>
    %116 = arith.addf %110, %115 : vector<672x64xf32>
    %c0_52 = arith.constant 0 : index
    %c0_53 = arith.constant 0 : index
    %117 = vector.load %arg5[%c0_52, %c0_53] : memref<1x64xf32, #tpu.memory_space<vmem>>, vector<1x64xf32>
    %118 = vector.broadcast %117 : vector<1x64xf32> to vector<672x64xf32>
    %119 = arith.addf %116, %118 : vector<672x64xf32>
    %cst_54 = arith.constant 0.000000e+00 : f32
    %120 = vector.broadcast %cst_54 : f32 to vector<672x64xf32>
    %121 = arith.maximumf %119, %120 : vector<672x64xf32>
    %122 = vector.extract_strided_slice %121 {offsets = [0, 0], sizes = [667, 64], strides = [1, 1]} : vector<672x64xf32> to vector<667x64xf32>
    %123 = vector.extract_strided_slice %121 {offsets = [1, 0], sizes = [667, 64], strides = [1, 1]} : vector<672x64xf32> to vector<667x64xf32>
    %124 = arith.maximumf %122, %123 : vector<667x64xf32>
    %125 = vector.extract_strided_slice %124 {offsets = [0, 0], sizes = [639, 64], strides = [1, 1]} : vector<667x64xf32> to vector<639x64xf32>
    %126 = vector.extract_strided_slice %124 {offsets = [28, 0], sizes = [639, 64], strides = [1, 1]} : vector<667x64xf32> to vector<639x64xf32>
    %127 = arith.maximumf %125, %126 : vector<639x64xf32>
    %c0_55 = arith.constant 0 : index
    %c0_56 = arith.constant 0 : index
    %128 = vector.load %arg6[%c0_55, %c0_56] : memref<144x639xbf16, #tpu.memory_space<vmem>>, vector<144x639xbf16>
    %129 = arith.truncf %127 : vector<639x64xf32> to vector<639x64xbf16>
    %cst_57 = arith.constant dense<0.000000e+00> : vector<144x64xf32>
    %130 = tpu.matmul %128, %129, %cst_57 {dimension_numbers = #tpu.dot_dimension_numbers<[1], [0], [0], [1], [0, 0, 1, 1], [], []>} : vector<144x639xbf16>, vector<639x64xbf16>, vector<144x64xf32> -> vector<144x64xf32>
    %131 = arith.truncf %130 : vector<144x64xf32> to vector<144x64xbf16>
    %c0_58 = arith.constant 0 : index
    %c0_59 = arith.constant 0 : index
    %c0_60 = arith.constant 0 : index
    %132 = vector.load %arg7[%c0_58, %c0_59, %c0_60] : memref<1x144x64xbf16, #tpu.memory_space<vmem>>, vector<1x144x64xbf16>
    %133 = vector.shape_cast %132 : vector<1x144x64xbf16> to vector<144x64xbf16>
    %134 = vector.shape_cast %131 : vector<144x64xbf16> to vector<1x144x64xbf16>
    tpu.vector_store %arg7[%c0_58, %c0_59, %c0_60], %134 {strides = array<i32>} : memref<1x144x64xbf16, #tpu.memory_space<vmem>>, vector<1x144x64xbf16>,
    return
  }
  func.func @transform_0(%arg0: i32) -> (i32, i32, i32) {
    %c0_i32 = arith.constant 0 : i32
    %c0_i32_0 = arith.constant 0 : i32
    %c0_i32_1 = arith.constant 0 : i32
    return %arg0, %c0_i32, %c0_i32_0 : i32, i32, i32
  }
  func.func @transform_1(%arg0: i32) -> (i32, i32) {
    %c0_i32 = arith.constant 0 : i32
    %c0_i32_0 = arith.constant 0 : i32
    %c0_i32_1 = arith.constant 0 : i32
    return %c0_i32, %c0_i32_0 : i32, i32
  }
  func.func @transform_2(%arg0: i32) -> (i32, i32) {
    %c0_i32 = arith.constant 0 : i32
    %c0_i32_0 = arith.constant 0 : i32
    %c0_i32_1 = arith.constant 0 : i32
    return %c0_i32, %c0_i32_0 : i32, i32
  }
  func.func @transform_3(%arg0: i32) -> (i32, i32, i32) {
    %c0_i32 = arith.constant 0 : i32
    %c0_i32_0 = arith.constant 0 : i32
    %c0_i32_1 = arith.constant 0 : i32
    %c0_i32_2 = arith.constant 0 : i32
    return %c0_i32, %c0_i32_0, %c0_i32_1 : i32, i32, i32
  }
  func.func @transform_4(%arg0: i32) -> (i32, i32) {
    %c0_i32 = arith.constant 0 : i32
    %c0_i32_0 = arith.constant 0 : i32
    %c0_i32_1 = arith.constant 0 : i32
    return %c0_i32, %c0_i32_0 : i32, i32
  }
  func.func @transform_5(%arg0: i32) -> (i32, i32) {
    %c0_i32 = arith.constant 0 : i32
    %c0_i32_0 = arith.constant 0 : i32
    %c0_i32_1 = arith.constant 0 : i32
    return %c0_i32, %c0_i32_0 : i32, i32
  }
  func.func @transform_6(%arg0: i32) -> (i32, i32, i32) {
    %c0_i32 = arith.constant 0 : i32
    %c0_i32_0 = arith.constant 0 : i32
    %c0_i32_1 = arith.constant 0 : i32
    return %arg0, %c0_i32, %c0_i32_0 : i32, i32, i32
  }
}

</mosaic_0001>

<llo_original>
// kernel: net_forward.3
$region0: #{net_forward.3}
  #allocation0 [shape = 'u32[]', space=smem, size = 0x4, offset = 0x4, fixed_abs, tag = 'smem constant byte address 0x4 - core index']
  #allocation1 [shape = 'u32[72,128]{1,0:T(1,128)}', space=vmem, size = 0x9000, scoped, tag = 'internal scratch']
  #allocation2 [shape = 'f32[2,128]{1,0:T(2,128)}', space=vmem, size = 0x400, scoped, tag = 'scratch operand']
  %s0 = inlined_call_operand.vmem [shape: bf16[2,9216], index: 0, kind: input, shape index: {}]
  %s1 = inlined_call_operand.hbm [shape: bf16[9216,128], index: 1, kind: input, shape index: {}]
  %s2 = inlined_call_operand.hbm [shape: f32[1,128], index: 2, kind: input, shape index: {}]
  %s3 = inlined_call_operand.vmem [shape: bf16[128,10], index: 3, kind: input, shape index: {}]
  %s4 = inlined_call_operand.hbm [shape: f32[1,10], index: 4, kind: input, shape index: {}]
  %s5 = inlined_call_operand.hbm [shape: f32[2,10], index: 5, kind: output, shape index: {}]
  %s6 = sld [smem:[#allocation0]]
  $region73: #{net_forward.3} parent=0
    _
  %s8 = ssub.s32 1, %s6
  %s9 = scalar_select 0, %s8, %s6
  $region1: #{net_forward.3} parent=0
    #allocation3 [shape = 'u8[589824]{0}', space=vmem, size = 0x90000, scoped, tag = 'input window, operand 1']
    #allocation4 [shape = 's32[2]{0}', space=sflag, size = 0x8, scoped, tag = 'scoped memory for net_forward.3']
    #allocation5 [shape = 's32[2]{0}', space=sflag, size = 0x8, scoped, tag = 'scoped memory for net_forward.3']
    #allocation6 [shape = 'u8[512]{0}', space=vmem, size = 0x400, scoped, tag = 'input window, operand 2, single buffered']
    #allocation7 [shape = 's32[1]{0}', space=sflag, size = 0x4, scoped, tag = 'scoped memory for net_forward.3']
    #allocation8 [shape = 'u8[512]{0}', space=vmem, size = 0x400, scoped, tag = 'input window, operand 4, single buffered']
    #allocation9 [shape = 'u8[1024]{0}', space=vmem, size = 0x400, scoped, tag = 'output window, operand 0, single buffered']
    %10 = vsyncpa [#allocation4], 0
    %s11 = scalar_lea.sflag [#allocation4], 1
    %12 = vsyncpa %s11, 0
    %13 = vsyncpa [#allocation7], 0
    %14 = vsyncpa [#allocation5], 0
    loop: start=0, step=1, limit=10
    $region2: #{net_forward.3} parent=1 // loop_pre_header
      _
    $region3: #{net_forward.3} parent=1 // loop_header
      %s16 = sphi 0, %s20
      %p17 = scmp.ge.s32.totalorder %s16, 10
      %s26 = sphi 0, %s28
      %s29 = sphi 0, %s26
      %s30 = sphi 0, %s29
      %s46 = sphi 0, %s30
      %s52 = sphi 0, %s54
      %s55 = sphi 0, %s52
      %s56 = sphi 0, %s55
      %s72 = sphi 0, %s56
      %s76 = sphi 0, %s76
      %s78 = sphi 0, %s76
      %s79 = sphi 0, %s78
      %s93 = sphi 0, %s79
      %s97 = sphi 0, %s97
      %s99 = sphi 0, %s97
      %s100 = sphi 0, %s99
      %s114 = sphi 0, %s100
      %s118 = sphi 0, %s118
      %s120 = sphi 0, %s118
      %s121 = sphi 0, %s120
      %s135 = sphi 0, %s121
      %s139 = sphi 0, %s139
      %s141 = sphi 0, %s139
      %s142 = sphi 0, %s141
      %s156 = sphi 0, %s142
    $region4: #{net_forward.3} parent=1 // loop_header_branch
      %19 = sbr.rel (%p17) target = $region8
    $region5: #{net_forward.3} parent=1 // loop_body
      %s21 = ssub.s32 %s16, 1
      %s22 = ssub.s32 %s16, 2
      %s23 = sadd.s32 %s16, 1
      %s24 = ssub.s32 %s16, %s23
      %p25 = scmp.eq.s32.totalorder %s24, 0
      %s27 = sadd.s32 %s26, 1
      %s28 = scalar_select %p25, %s26, %s27
      %p31 = pneg %p25
      %p32 = scmp.eq.s32.totalorder %s16, 7
      %p33 = por %p31, %p32
      %p34 = scmp.ne.s32.totalorder %s26, %s29
      %p35 = scmp.eq.s32.totalorder %s16, 0
      %p36 = por %p34, %p35
      %p37 = scmp.ne.s32.totalorder %s26, %s29
      %p38 = scmp.eq.s32.totalorder %s21, 7
      %p39 = por %p37, %p38
      %p40 = scmp.ne.s32.totalorder %s29, %s30
      %p41 = scmp.eq.s32.totalorder %s21, 0
      %p42 = por %p40, %p41
      %p43 = scmp.ne.s32.totalorder %s29, %s30
      %p44 = scmp.eq.s32.totalorder %s22, 7
      %p45 = por %p43, %p44
      %p47 = scmp.ne.s32.totalorder %s30, %s46
      %p48 = scmp.eq.s32.totalorder %s22, 0
      %p49 = por %p47, %p48
      %s50 = ssub.s32 %s16, %s23
      %p51 = scmp.eq.s32.totalorder %s50, 0
      %s53 = sadd.s32 %s52, 1
      %s54 = scalar_select %p51, %s52, %s53
      %p57 = pneg %p51
      %p58 = scmp.eq.s32.totalorder %s16, 7
      %p59 = por %p57, %p58
      %p60 = scmp.ne.s32.totalorder %s52, %s55
      %p61 = scmp.eq.s32.totalorder %s16, 0
      %p62 = por %p60, %p61
      %p63 = scmp.ne.s32.totalorder %s52, %s55
      %p64 = scmp.eq.s32.totalorder %s21, 7
      %p65 = por %p63, %p64
      %p66 = scmp.ne.s32.totalorder %s55, %s56
      %p67 = scmp.eq.s32.totalorder %s21, 0
      %p68 = por %p66, %p67
      %p69 = scmp.ne.s32.totalorder %s55, %s56
      %p70 = scmp.eq.s32.totalorder %s22, 7
      %p71 = por %p69, %p70
      %p73 = scmp.ne.s32.totalorder %s56, %s72
      %p74 = scmp.eq.s32.totalorder %s22, 0
      %p75 = por %p73, %p74
      %s77 = sadd.s32 %s76, 1
      %p80 = scmp.eq.s32.totalorder %s16, 7
      %p81 = scmp.ne.s32.totalorder %s76, %s78
      %p82 = scmp.eq.s32.totalorder %s16, 0
      %p83 = por %p81, %p82
      %p84 = scmp.ne.s32.totalorder %s76, %s78
      %p85 = scmp.eq.s32.totalorder %s21, 7
      %p86 = por %p84, %p85
      %p87 = scmp.ne.s32.totalorder %s78, %s79
      %p88 = scmp.eq.s32.totalorder %s21, 0
      %p89 = por %p87, %p88
      %p90 = scmp.ne.s32.totalorder %s78, %s79
      %p91 = scmp.eq.s32.totalorder %s22, 7
      %p92 = por %p90, %p91
      %p94 = scmp.ne.s32.totalorder %s79, %s93
      %p95 = scmp.eq.s32.totalorder %s22, 0
      %p96 = por %p94, %p95
      %s98 = sadd.s32 %s97, 1
      %p101 = scmp.eq.s32.totalorder %s16, 7
      %p102 = scmp.ne.s32.totalorder %s97, %s99
      %p103 = scmp.eq.s32.totalorder %s16, 0
      %p104 = por %p102, %p103
      %p105 = scmp.ne.s32.totalorder %s97, %s99
      %p106 = scmp.eq.s32.totalorder %s21, 7
      %p107 = por %p105, %p106
      %p108 = scmp.ne.s32.totalorder %s99, %s100
      %p109 = scmp.eq.s32.totalorder %s21, 0
      %p110 = por %p108, %p109
      %p111 = scmp.ne.s32.totalorder %s99, %s100
      %p112 = scmp.eq.s32.totalorder %s22, 7
      %p113 = por %p111, %p112
      %p115 = scmp.ne.s32.totalorder %s100, %s114
      %p116 = scmp.eq.s32.totalorder %s22, 0
      %p117 = por %p115, %p116
      %s119 = sadd.s32 %s118, 1
      %p122 = scmp.eq.s32.totalorder %s16, 7
      %p123 = scmp.ne.s32.totalorder %s118, %s120
      %p124 = scmp.eq.s32.totalorder %s16, 0
      %p125 = por %p123, %p124
      %p126 = scmp.ne.s32.totalorder %s118, %s120
      %p127 = scmp.eq.s32.totalorder %s21, 7
      %p128 = por %p126, %p127
      %p129 = scmp.ne.s32.totalorder %s120, %s121
      %p130 = scmp.eq.s32.totalorder %s21, 0
      %p131 = por %p129, %p130
      %p132 = scmp.ne.s32.totalorder %s120, %s121
      %p133 = scmp.eq.s32.totalorder %s22, 7
      %p134 = por %p132, %p133
      %p136 = scmp.ne.s32.totalorder %s121, %s135
      %p137 = scmp.eq.s32.totalorder %s22, 0
      %p138 = por %p136, %p137
      %s140 = sadd.s32 %s139, 1
      %p143 = scmp.eq.s32.totalorder %s16, 7
      %p144 = scmp.ne.s32.totalorder %s139, %s141
      %p145 = scmp.eq.s32.totalorder %s16, 0
      %p146 = por %p144, %p145
      %p147 = scmp.ne.s32.totalorder %s139, %s141
      %p148 = scmp.eq.s32.totalorder %s21, 7
      %p149 = por %p147, %p148
      %p150 = scmp.ne.s32.totalorder %s141, %s142
      %p151 = scmp.eq.s32.totalorder %s21, 0
      %p152 = por %p150, %p151
      %p153 = scmp.ne.s32.totalorder %s141, %s142
      %p154 = scmp.eq.s32.totalorder %s22, 7
      %p155 = por %p153, %p154
      %p157 = scmp.ne.s32.totalorder %s142, %s156
      %p158 = scmp.eq.s32.totalorder %s22, 0
      %p159 = por %p157, %p158
      %p160 = scmp.le.s32.totalorder 1, %s16
      %p161 = scmp.lt.s32.totalorder %s16, 9
      %p162 = pnand %p160, %p161
      %p163 = pneg %p162
      // Predicated region
      $region9: #{net_forward.3} parent=5 // pred_check
        _
      $region10: #{net_forward.3} parent=5 // pred_check_branch
        %165 = sbr.rel (%p162) target = $region12
      $region11: #{net_forward.3} parent=5 // pred_region
        %s166 = ssub.s32 %s16, 1
        // Predicated region
        $region13: #{net_forward.3} parent=11 // pred_check
          %p167 = pneg %p89
        $region14: #{net_forward.3} parent=11 // pred_check_branch
          %169 = sbr.rel (%p167) target = $region16
        $region15: #{net_forward.3} parent=11 // pred_region
          %171 = vsyncadd [#allocation7], 0
          %s173 = sshll.u32 %s2, 4
          %s174 = int_to_ptr.hbm [resolvable:$true] %s173
          %s175 = sshll.u32 [#allocation6], 4
          %s176 = int_to_ptr.vmem [resolvable:$true] %s175
          %178 = dma.hbm_to_vmem [thread:$0]  %s174, 16, %s176, [#allocation7]
        $region16: #{net_forward.3} parent=11 // pred_fallthru
          _
        // Predicated region
        $region17: #{net_forward.3} parent=11 // pred_check
          %p179 = pneg %p110
        $region18: #{net_forward.3} parent=11 // pred_check_branch
          %181 = sbr.rel (%p179) target = $region20
        $region19: #{net_forward.3} parent=11 // pred_region
          _
        $region20: #{net_forward.3} parent=11 // pred_fallthru
          _
        // Predicated region
        $region21: #{net_forward.3} parent=11 // pred_check
          %p182 = pneg %p131
        $region22: #{net_forward.3} parent=11 // pred_check_branch
          %184 = sbr.rel (%p182) target = $region24
        $region23: #{net_forward.3} parent=11 // pred_region
          %186 = vsyncadd [#allocation7], 0
          %s188 = sshll.u32 %s4, 4
          %s189 = int_to_ptr.hbm [resolvable:$true] %s188
          %s190 = sshll.u32 [#allocation8], 4
          %s191 = int_to_ptr.vmem [resolvable:$true] %s190
          %193 = dma.hbm_to_vmem [thread:$0]  %s189, 16, %s191, [#allocation7]
        $region24: #{net_forward.3} parent=11 // pred_fallthru
          _
      $region12: #{net_forward.3} parent=5 // pred_fallthru
        _
      %p194 = scmp.lt.s32.totalorder %s16, 8
      // Predicated region
      $region25: #{net_forward.3} parent=5 // pred_check
        %p195 = pneg %p194
      $region26: #{net_forward.3} parent=5 // pred_check_branch
        %197 = sbr.rel (%p195) target = $region28
      $region27: #{net_forward.3} parent=5 // pred_region
        // Predicated region
        $region29: #{net_forward.3} parent=27 // pred_check
          %p198 = pneg %p36
        $region30: #{net_forward.3} parent=27 // pred_check_branch
          %200 = sbr.rel (%p198) target = $region32
        $region31: #{net_forward.3} parent=27 // pred_region
          %s201 = smul.u32 9, %s16
          %p202 = scmp.lt.s32.totalorder %s201, 71
          %s203 = scalar_select %p202, %s201, 71
          %s204 = scalar_lea.vmem %s0, %s203
          %s205 = smul.u32 9, %s16
        $region32: #{net_forward.3} parent=27 // pred_fallthru
          _
        // Predicated region
        $region33: #{net_forward.3} parent=27 // pred_check
          %p206 = pneg %p62
        $region34: #{net_forward.3} parent=27 // pred_check_branch
          %208 = sbr.rel (%p206) target = $region36
        $region35: #{net_forward.3} parent=27 // pred_region
          %s209 = sand.u32 %s52, 1
          %s210 = scalar_lea.sflag [#allocation4], %s209
          %s211 = sand.u32 %s52, 1
          %s212 = smul.addr %s211, 576
          %s213 = scalar_lea.vmem [#allocation3], %s212
          %s214 = smul.u32 144, %s16
          %216 = vsyncadd %s210, 0
          %s217 = smul.addr %s214, 4
          %s218 = scalar_lea.hbm %s1, %s217
          %s219 = sshll.u32 %s218, 4
          %s220 = int_to_ptr.hbm [resolvable:$true] %s219
          %s221 = sshll.u32 %s213, 4
          %s222 = int_to_ptr.vmem [resolvable:$true] %s221
          %227 = dma.hbm_to_vmem [thread:$0]  %s220, 9216, %s222, %s210, 64, 64, 4
        $region36: #{net_forward.3} parent=27 // pred_fallthru
          _
      $region28: #{net_forward.3} parent=5 // pred_fallthru
        _
      %p228 = scmp.le.s32.totalorder 1, %s16
      %p229 = scmp.lt.s32.totalorder %s16, 9
      %p230 = pnand %p228, %p229
      %p231 = pneg %p230
      // Predicated region
      $region37: #{net_forward.3} parent=5 // pred_check
        _
      $region38: #{net_forward.3} parent=5 // pred_check_branch
        %233 = sbr.rel (%p230) target = $region40
      $region39: #{net_forward.3} parent=5 // pred_region
        %s234 = ssub.s32 %s16, 1
        %s235 = sand.u32 %s55, 1
        %s236 = scalar_lea.sflag [#allocation4], %s235
        %s237 = sand.u32 %s55, 1
        %s238 = smul.addr %s237, 576
        %s239 = scalar_lea.vmem [#allocation3], %s238
        // Predicated region
        $region41: #{net_forward.3} parent=39 // pred_check
          %p240 = pneg %p68
        $region42: #{net_forward.3} parent=39 // pred_check_branch
          %242 = sbr.rel (%p240) target = $region44
        $region43: #{net_forward.3} parent=39 // pred_region
          %244 = dma.done %s236, 9216
        $region44: #{net_forward.3} parent=39 // pred_fallthru
          _
        // Predicated region
        $region45: #{net_forward.3} parent=39 // pred_check
          %p245 = pneg %p89
        $region46: #{net_forward.3} parent=39 // pred_check_branch
          %247 = sbr.rel (%p245) target = $region48
        $region47: #{net_forward.3} parent=39 // pred_region
          %249 = dma.done [#allocation7], 16
        $region48: #{net_forward.3} parent=39 // pred_fallthru
          _
        // Predicated region
        $region49: #{net_forward.3} parent=39 // pred_check
          %p250 = pneg %p131
        $region50: #{net_forward.3} parent=39 // pred_check_branch
          %252 = sbr.rel (%p250) target = $region52
        $region51: #{net_forward.3} parent=39 // pred_region
          %254 = dma.done [#allocation7], 16
        $region52: #{net_forward.3} parent=39 // pred_fallthru
          _
        %s255 = smul.u32 9, %s21
        %p256 = scmp.lt.s32.totalorder %s255, 71
        %s257 = scalar_select %p256, %s255, 71
        %s258 = scalar_lea.vmem %s0, %s257
        %p259 = pneg %p42
        %p260 = pneg %p39
        %s261 = sand.u32 %s55, 1
        %s262 = scalar_lea.sflag [#allocation4], %s261
        %s263 = sand.u32 %s55, 1
        %s264 = smul.addr %s263, 576
        %s265 = scalar_lea.vmem [#allocation3], %s264
        %p266 = pneg %p68
        %p267 = pneg %p65
        %p268 = pneg %p89
        %p269 = pneg %p86
        %p270 = pneg %p110
        %p271 = pneg %p107
        %p272 = pneg %p131
        %p273 = pneg %p128
        %p274 = pneg %p152
        %p275 = pneg %p149
        %s276 = smul.u32 9, %s21
        %p277 = scmp.lt.s32.totalorder %s276, 71
        %s278 = scalar_select %p277, %s276, 71
        %s279 = scalar_lea.vmem %s0, %s278
        %s280 = smul.u32 9, %s21
        %s281 = smul.u32 144, %s21
        %p282 = scmp.eq.s32.totalorder %s21, 0
        // Predicated region
        $region53: #{net_forward.3} parent=39 // pred_check
          %p283 = pneg %p282
        $region54: #{net_forward.3} parent=39 // pred_check_branch
          %285 = sbr.rel (%p283) target = $region56
        $region55: #{net_forward.3} parent=39 // pred_region
          %286 = vst [vmem:[#allocation2] sm:$0x3] 0.0
        $region56: #{net_forward.3} parent=39 // pred_fallthru
          _
        %v287 = vld [vmem:[#allocation2] sm:$0x3]
        %v288 = vld [vmem:[%s279] sm:$0xff]
        %v289 = vld [vmem:[%s279 + $0x8] sm:$0x1]
        %v290 = vld [vmem:[%s239] sm:$0xf]
        %v291 = vld [vmem:[%s239 + $0x4] sm:$0xf]
        %v292 = vld [vmem:[%s239 + $0x8] sm:$0xf]
        %v293 = vld [vmem:[%s239 + $0xc] sm:$0xf]
        %v294 = vld [vmem:[%s239 + $0x10] sm:$0xf]
        %v295 = vld [vmem:[%s239 + $0x14] sm:$0xf]
        %v296 = vld [vmem:[%s239 + $0x18] sm:$0xf]
        %v297 = vld [vmem:[%s239 + $0x1c] sm:$0xf]
        %v298 = vld [vmem:[%s239 + $0x20] sm:$0xf]
        %v299 = vld [vmem:[%s239 + $0x24] sm:$0xf]
        %v300 = vld [vmem:[%s239 + $0x28] sm:$0xf]
        %v301 = vld [vmem:[%s239 + $0x2c] sm:$0xf]
        %v302 = vld [vmem:[%s239 + $0x30] sm:$0xf]
        %v303 = vld [vmem:[%s239 + $0x34] sm:$0xf]
        %v304 = vld [vmem:[%s239 + $0x38] sm:$0xf]
        %v305 = vld [vmem:[%s239 + $0x3c] sm:$0xf]
        %v306 = vld [vmem:[%s239 + $0x40] sm:$0xf]
        %v307 = vld [vmem:[%s239 + $0x44] sm:$0xf]
        %v308 = vld [vmem:[%s239 + $0x48] sm:$0xf]
        %v309 = vld [vmem:[%s239 + $0x4c] sm:$0xf]
        %v310 = vld [vmem:[%s239 + $0x50] sm:$0xf]
        %v311 = vld [vmem:[%s239 + $0x54] sm:$0xf]
        %v312 = vld [vmem:[%s239 + $0x58] sm:$0xf]
        %v313 = vld [vmem:[%s239 + $0x5c] sm:$0xf]
        %v314 = vld [vmem:[%s239 + $0x60] sm:$0xf]
        %v315 = vld [vmem:[%s239 + $0x64] sm:$0xf]
        %v316 = vld [vmem:[%s239 + $0x68] sm:$0xf]
        %v317 = vld [vmem:[%s239 + $0x6c] sm:$0xf]
        %v318 = vld [vmem:[%s239 + $0x70] sm:$0xf]
        %v319 = vld [vmem:[%s239 + $0x74] sm:$0xf]
        %v320 = vld [vmem:[%s239 + $0x78] sm:$0xf]
        %v321 = vld [vmem:[%s239 + $0x7c] sm:$0xf]
        %v322 = vld [vmem:[%s239 + $0x80] sm:$0xf]
        %v323 = vld [vmem:[%s239 + $0x84] sm:$0xf]
        %v324 = vld [vmem:[%s239 + $0x88] sm:$0xf]
        %v325 = vld [vmem:[%s239 + $0x8c] sm:$0xf]
        %v326 = vld [vmem:[%s239 + $0x90] sm:$0xf]
        %v327 = vld [vmem:[%s239 + $0x94] sm:$0xf]
        %v328 = vld [vmem:[%s239 + $0x98] sm:$0xf]
        %v329 = vld [vmem:[%s239 + $0x9c] sm:$0xf]
        %v330 = vld [vmem:[%s239 + $0xa0] sm:$0xf]
        %v331 = vld [vmem:[%s239 + $0xa4] sm:$0xf]
        %v332 = vld [vmem:[%s239 + $0xa8] sm:$0xf]
        %v333 = vld [vmem:[%s239 + $0xac] sm:$0xf]
        %v334 = vld [vmem:[%s239 + $0xb0] sm:$0xf]
        %v335 = vld [vmem:[%s239 + $0xb4] sm:$0xf]
        %v336 = vld [vmem:[%s239 + $0xb8] sm:$0xf]
        %v337 = vld [vmem:[%s239 + $0xbc] sm:$0xf]
        %v338 = vld [vmem:[%s239 + $0xc0] sm:$0xf]
        %v339 = vld [vmem:[%s239 + $0xc4] sm:$0xf]
        %v340 = vld [vmem:[%s239 + $0xc8] sm:$0xf]
        %v341 = vld [vmem:[%s239 + $0xcc] sm:$0xf]
        %v342 = vld [vmem:[%s239 + $0xd0] sm:$0xf]
        %v343 = vld [vmem:[%s239 + $0xd4] sm:$0xf]
        %v344 = vld [vmem:[%s239 + $0xd8] sm:$0xf]
        %v345 = vld [vmem:[%s239 + $0xdc] sm:$0xf]
        %v346 = vld [vmem:[%s239 + $0xe0] sm:$0xf]
        %v347 = vld [vmem:[%s239 + $0xe4] sm:$0xf]
        %v348 = vld [vmem:[%s239 + $0xe8] sm:$0xf]
        %v349 = vld [vmem:[%s239 + $0xec] sm:$0xf]
        %v350 = vld [vmem:[%s239 + $0xf0] sm:$0xf]
        %v351 = vld [vmem:[%s239 + $0xf4] sm:$0xf]
        %v352 = vld [vmem:[%s239 + $0xf8] sm:$0xf]
        %v353 = vld [vmem:[%s239 + $0xfc] sm:$0xf]
        %v354 = vld [vmem:[%s239 + $0x100] sm:$0xf]
        %v355 = vld [vmem:[%s239 + $0x104] sm:$0xf]
        %v356 = vld [vmem:[%s239 + $0x108] sm:$0xf]
        %v357 = vld [vmem:[%s239 + $0x10c] sm:$0xf]
        %v358 = vld [vmem:[%s239 + $0x110] sm:$0xf]
        %v359 = vld [vmem:[%s239 + $0x114] sm:$0xf]
        %v360 = vld [vmem:[%s239 + $0x118] sm:$0xf]
        %v361 = vld [vmem:[%s239 + $0x11c] sm:$0xf]
        %v362 = vld [vmem:[%s239 + $0x120] sm:$0xf]
        %v363 = vld [vmem:[%s239 + $0x124] sm:$0xf]
        %v364 = vld [vmem:[%s239 + $0x128] sm:$0xf]
        %v365 = vld [vmem:[%s239 + $0x12c] sm:$0xf]
        %v366 = vld [vmem:[%s239 + $0x130] sm:$0xf]
        %v367 = vld [vmem:[%s239 + $0x134] sm:$0xf]
        %v368 = vld [vmem:[%s239 + $0x138] sm:$0xf]
        %v369 = vld [vmem:[%s239 + $0x13c] sm:$0xf]
        %v370 = vld [vmem:[%s239 + $0x140] sm:$0xf]
        %v371 = vld [vmem:[%s239 + $0x144] sm:$0xf]
        %v372 = vld [vmem:[%s239 + $0x148] sm:$0xf]
        %v373 = vld [vmem:[%s239 + $0x14c] sm:$0xf]
        %v374 = vld [vmem:[%s239 + $0x150] sm:$0xf]
        %v375 = vld [vmem:[%s239 + $0x154] sm:$0xf]
        %v376 = vld [vmem:[%s239 + $0x158] sm:$0xf]
        %v377 = vld [vmem:[%s239 + $0x15c] sm:$0xf]
        %v378 = vld [vmem:[%s239 + $0x160] sm:$0xf]
        %v379 = vld [vmem:[%s239 + $0x164] sm:$0xf]
        %v380 = vld [vmem:[%s239 + $0x168] sm:$0xf]
        %v381 = vld [vmem:[%s239 + $0x16c] sm:$0xf]
        %v382 = vld [vmem:[%s239 + $0x170] sm:$0xf]
        %v383 = vld [vmem:[%s239 + $0x174] sm:$0xf]
        %v384 = vld [vmem:[%s239 + $0x178] sm:$0xf]
        %v385 = vld [vmem:[%s239 + $0x17c] sm:$0xf]
        %v386 = vld [vmem:[%s239 + $0x180] sm:$0xf]
        %v387 = vld [vmem:[%s239 + $0x184] sm:$0xf]
        %v388 = vld [vmem:[%s239 + $0x188] sm:$0xf]
        %v389 = vld [vmem:[%s239 + $0x18c] sm:$0xf]
        %v390 = vld [vmem:[%s239 + $0x190] sm:$0xf]
        %v391 = vld [vmem:[%s239 + $0x194] sm:$0xf]
        %v392 = vld [vmem:[%s239 + $0x198] sm:$0xf]
        %v393 = vld [vmem:[%s239 + $0x19c] sm:$0xf]
        %v394 = vld [vmem:[%s239 + $0x1a0] sm:$0xf]
        %v395 = vld [vmem:[%s239 + $0x1a4] sm:$0xf]
        %v396 = vld [vmem:[%s239 + $0x1a8] sm:$0xf]
        %v397 = vld [vmem:[%s239 + $0x1ac] sm:$0xf]
        %v398 = vld [vmem:[%s239 + $0x1b0] sm:$0xf]
        %v399 = vld [vmem:[%s239 + $0x1b4] sm:$0xf]
        %v400 = vld [vmem:[%s239 + $0x1b8] sm:$0xf]
        %v401 = vld [vmem:[%s239 + $0x1bc] sm:$0xf]
        %v402 = vld [vmem:[%s239 + $0x1c0] sm:$0xf]
        %v403 = vld [vmem:[%s239 + $0x1c4] sm:$0xf]
        %v404 = vld [vmem:[%s239 + $0x1c8] sm:$0xf]
        %v405 = vld [vmem:[%s239 + $0x1cc] sm:$0xf]
        %v406 = vld [vmem:[%s239 + $0x1d0] sm:$0xf]
        %v407 = vld [vmem:[%s239 + $0x1d4] sm:$0xf]
        %v408 = vld [vmem:[%s239 + $0x1d8] sm:$0xf]
        %v409 = vld [vmem:[%s239 + $0x1dc] sm:$0xf]
        %v410 = vld [vmem:[%s239 + $0x1e0] sm:$0xf]
        %v411 = vld [vmem:[%s239 + $0x1e4] sm:$0xf]
        %v412 = vld [vmem:[%s239 + $0x1e8] sm:$0xf]
        %v413 = vld [vmem:[%s239 + $0x1ec] sm:$0xf]
        %v414 = vld [vmem:[%s239 + $0x1f0] sm:$0xf]
        %v415 = vld [vmem:[%s239 + $0x1f4] sm:$0xf]
        %v416 = vld [vmem:[%s239 + $0x1f8] sm:$0xf]
        %v417 = vld [vmem:[%s239 + $0x1fc] sm:$0xf]
        %v418 = vld [vmem:[%s239 + $0x200] sm:$0xf]
        %v419 = vld [vmem:[%s239 + $0x204] sm:$0xf]
        %v420 = vld [vmem:[%s239 + $0x208] sm:$0xf]
        %v421 = vld [vmem:[%s239 + $0x20c] sm:$0xf]
        %v422 = vld [vmem:[%s239 + $0x210] sm:$0xf]
        %v423 = vld [vmem:[%s239 + $0x214] sm:$0xf]
        %v424 = vld [vmem:[%s239 + $0x218] sm:$0xf]
        %v425 = vld [vmem:[%s239 + $0x21c] sm:$0xf]
        %v426 = vld [vmem:[%s239 + $0x220] sm:$0xf]
        %v427 = vld [vmem:[%s239 + $0x224] sm:$0xf]
        %v428 = vld [vmem:[%s239 + $0x228] sm:$0xf]
        %v429 = vld [vmem:[%s239 + $0x22c] sm:$0xf]
        %v430 = vld [vmem:[%s239 + $0x230] sm:$0xf]
        %v431 = vld [vmem:[%s239 + $0x234] sm:$0xf]
        %v432 = vld [vmem:[%s239 + $0x238] sm:$0xf]
        %v433 = vld [vmem:[%s239 + $0x23c] sm:$0xf]
        %435 = vst [vmem:[#allocation1] ss:$9 sm:$0xff] %v288
        %v436 = vld [vmem:[#allocation1] sm:$0xff]
        %v437 = vld [vmem:[#allocation1 + $0x9] sm:$0xff]
        %v438 = vld [vmem:[#allocation1 + $0x12] sm:$0xff]
        %v439 = vld [vmem:[#allocation1 + $0x1b] sm:$0xff]
        %v440 = vld [vmem:[#allocation1 + $0x24] sm:$0xff]
        %v441 = vld [vmem:[#allocation1 + $0x2d] sm:$0xff]
        %v442 = vld [vmem:[#allocation1 + $0x36] sm:$0xff]
        %v443 = vld [vmem:[#allocation1 + $0x3f] sm:$0xff]
        %445 = vst [vmem:[#allocation1] ss:$9 sm:$0xff] %v289
        %v446 = vld [vmem:[#allocation1] sm:$0xff]
        %v600 = vunpack.c.l.b16 %v290
        %v601 = vunpack.c.l.b16 %v291
        %v602 = vunpack.c.l.b16 %v292
        %v603 = vunpack.c.l.b16 %v293
        %v604 = vunpack.c.l.b16 %v294
        %v605 = vunpack.c.l.b16 %v295
        %v606 = vunpack.c.l.b16 %v296
        %v607 = vunpack.c.l.b16 %v297
        %v608 = vunpack.c.l.b16 %v298
        %v609 = vunpack.c.l.b16 %v299
        %v610 = vunpack.c.l.b16 %v300
        %v611 = vunpack.c.l.b16 %v301
        %v612 = vunpack.c.l.b16 %v302
        %v613 = vunpack.c.l.b16 %v303
        %v614 = vunpack.c.l.b16 %v304
        %v615 = vunpack.c.l.b16 %v305
        %v616 = vunpack.c.l.b16 %v306
        %v617 = vunpack.c.l.b16 %v307
        %v618 = vunpack.c.l.b16 %v308
        %v619 = vunpack.c.l.b16 %v309
        %v620 = vunpack.c.l.b16 %v310
        %v621 = vunpack.c.l.b16 %v311
        %v622 = vunpack.c.l.b16 %v312
        %v623 = vunpack.c.l.b16 %v313
        %v624 = vunpack.c.l.b16 %v314
        %v625 = vunpack.c.l.b16 %v315
        %v626 = vunpack.c.l.b16 %v316
        %v627 = vunpack.c.l.b16 %v317
        %v628 = vunpack.c.l.b16 %v318
        %v629 = vunpack.c.l.b16 %v319
        %v630 = vunpack.c.l.b16 %v320
        %v631 = vunpack.c.l.b16 %v321
        %v632 = vunpack.c.l.b16 %v322
        %v633 = vunpack.c.l.b16 %v323
        %v634 = vunpack.c.l.b16 %v324
        %v635 = vunpack.c.l.b16 %v325
        %v636 = vunpack.c.l.b16 %v326
        %v637 = vunpack.c.l.b16 %v327
        %v638 = vunpack.c.l.b16 %v328
        %v639 = vunpack.c.l.b16 %v329
        %v640 = vunpack.c.l.b16 %v330
        %v641 = vunpack.c.l.b16 %v331
        %v642 = vunpack.c.l.b16 %v332
        %v643 = vunpack.c.l.b16 %v333
        %v644 = vunpack.c.l.b16 %v334
        %v645 = vunpack.c.l.b16 %v335
        %v646 = vunpack.c.l.b16 %v336
        %v647 = vunpack.c.l.b16 %v337
        %v648 = vunpack.c.l.b16 %v338
        %v649 = vunpack.c.l.b16 %v339
        %v650 = vunpack.c.l.b16 %v340
        %v651 = vunpack.c.l.b16 %v341
        %v652 = vunpack.c.l.b16 %v342
        %v653 = vunpack.c.l.b16 %v343
        %v654 = vunpack.c.l.b16 %v344
        %v655 = vunpack.c.l.b16 %v345
        %v656 = vunpack.c.l.b16 %v346
        %v657 = vunpack.c.l.b16 %v347
        %v658 = vunpack.c.l.b16 %v348
        %v659 = vunpack.c.l.b16 %v349
        %v660 = vunpack.c.l.b16 %v350
        %v661 = vunpack.c.l.b16 %v351
        %v662 = vunpack.c.l.b16 %v352
        %v663 = vunpack.c.l.b16 %v353
        %v664 = vunpack.c.l.b16 %v354
        %v665 = vunpack.c.l.b16 %v355
        %v666 = vunpack.c.l.b16 %v356
        %v667 = vunpack.c.l.b16 %v357
        %v668 = vunpack.c.l.b16 %v358
        %v669 = vunpack.c.l.b16 %v359
        %v670 = vunpack.c.l.b16 %v360
        %v671 = vunpack.c.l.b16 %v361
        %v672 = vunpack.c.l.b16 %v362
        %v673 = vunpack.c.l.b16 %v363
        %v674 = vunpack.c.l.b16 %v364
        %v675 = vunpack.c.l.b16 %v365
        %v676 = vunpack.c.l.b16 %v366
        %v677 = vunpack.c.l.b16 %v367
        %v678 = vunpack.c.l.b16 %v368
        %v679 = vunpack.c.l.b16 %v369
        %v680 = vunpack.c.l.b16 %v370
        %v681 = vunpack.c.l.b16 %v371
        %v682 = vunpack.c.l.b16 %v372
        %v683 = vunpack.c.l.b16 %v373
        %v684 = vunpack.c.l.b16 %v374
        %v685 = vunpack.c.l.b16 %v375
        %v686 = vunpack.c.l.b16 %v376
        %v687 = vunpack.c.l.b16 %v377
        %v688 = vunpack.c.l.b16 %v378
        %v689 = vunpack.c.l.b16 %v379
        %v690 = vunpack.c.l.b16 %v380
        %v691 = vunpack.c.l.b16 %v381
        %v692 = vunpack.c.l.b16 %v382
        %v693 = vunpack.c.l.b16 %v383
        %v694 = vunpack.c.l.b16 %v384
        %v695 = vunpack.c.l.b16 %v385
        %v696 = vunpack.c.l.b16 %v386
        %v697 = vunpack.c.l.b16 %v387
        %v698 = vunpack.c.l.b16 %v388
        %v699 = vunpack.c.l.b16 %v389
        %v700 = vunpack.c.l.b16 %v390
        %v701 = vunpack.c.l.b16 %v391
        %v702 = vunpack.c.l.b16 %v392
        %v703 = vunpack.c.l.b16 %v393
        %v704 = vunpack.c.l.b16 %v394
        %v705 = vunpack.c.l.b16 %v395
        %v706 = vunpack.c.l.b16 %v396
        %v707 = vunpack.c.l.b16 %v397
        %v708 = vunpack.c.l.b16 %v398
        %v709 = vunpack.c.l.b16 %v399
        %v710 = vunpack.c.l.b16 %v400
        %v711 = vunpack.c.l.b16 %v401
        %v712 = vunpack.c.l.b16 %v402
        %v713 = vunpack.c.l.b16 %v403
        %v714 = vunpack.c.l.b16 %v404
        %v715 = vunpack.c.l.b16 %v405
        %v716 = vunpack.c.l.b16 %v406
        %v717 = vunpack.c.l.b16 %v407
        %v718 = vunpack.c.l.b16 %v408
        %v719 = vunpack.c.l.b16 %v409
        %v720 = vunpack.c.l.b16 %v410
        %v721 = vunpack.c.l.b16 %v411
        %v722 = vunpack.c.l.b16 %v412
        %v723 = vunpack.c.l.b16 %v413
        %v724 = vunpack.c.l.b16 %v414
        %v725 = vunpack.c.l.b16 %v415
        %v726 = vunpack.c.l.b16 %v416
        %v727 = vunpack.c.l.b16 %v417
        %v728 = vunpack.c.l.b16 %v418
        %v729 = vunpack.c.l.b16 %v419
        %v730 = vunpack.c.l.b16 %v420
        %v731 = vunpack.c.l.b16 %v421
        %v732 = vunpack.c.l.b16 %v422
        %v733 = vunpack.c.l.b16 %v423
        %v734 = vunpack.c.l.b16 %v424
        %v735 = vunpack.c.l.b16 %v425
        %v736 = vunpack.c.l.b16 %v426
        %v737 = vunpack.c.l.b16 %v427
        %v738 = vunpack.c.l.b16 %v428
        %v739 = vunpack.c.l.b16 %v429
        %v740 = vunpack.c.l.b16 %v430
        %v741 = vunpack.c.l.b16 %v431
        %v742 = vunpack.c.l.b16 %v432
        %v743 = vunpack.c.l.b16 %v433
        %v744 = vpack.c.b16 %v601, %v600
        %v745 = vpack.c.b16 %v603, %v602
        %v746 = vpack.c.b16 %v605, %v604
        %v747 = vpack.c.b16 %v607, %v606
        %v748 = vpack.c.b16 %v609, %v608
        %v749 = vpack.c.b16 %v611, %v610
        %v750 = vpack.c.b16 %v613, %v612
        %v751 = vpack.c.b16 %v615, %v614
        %v752 = vpack.c.b16 %v617, %v616
        %v753 = vpack.c.b16 %v619, %v618
        %v754 = vpack.c.b16 %v621, %v620
        %v755 = vpack.c.b16 %v623, %v622
        %v756 = vpack.c.b16 %v625, %v624
        %v757 = vpack.c.b16 %v627, %v626
        %v758 = vpack.c.b16 %v629, %v628
        %v759 = vpack.c.b16 %v631, %v630
        %v760 = vpack.c.b16 %v633, %v632
        %v761 = vpack.c.b16 %v635, %v634
        %v762 = vpack.c.b16 %v637, %v636
        %v763 = vpack.c.b16 %v639, %v638
        %v764 = vpack.c.b16 %v641, %v640
        %v765 = vpack.c.b16 %v643, %v642
        %v766 = vpack.c.b16 %v645, %v644
        %v767 = vpack.c.b16 %v647, %v646
        %v768 = vpack.c.b16 %v649, %v648
        %v769 = vpack.c.b16 %v651, %v650
        %v770 = vpack.c.b16 %v653, %v652
        %v771 = vpack.c.b16 %v655, %v654
        %v772 = vpack.c.b16 %v657, %v656
        %v773 = vpack.c.b16 %v659, %v658
        %v774 = vpack.c.b16 %v661, %v660
        %v775 = vpack.c.b16 %v663, %v662
        %v776 = vpack.c.b16 %v665, %v664
        %v777 = vpack.c.b16 %v667, %v666
        %v778 = vpack.c.b16 %v669, %v668
        %v779 = vpack.c.b16 %v671, %v670
        %v780 = vpack.c.b16 %v673, %v672
        %v781 = vpack.c.b16 %v675, %v674
        %v782 = vpack.c.b16 %v677, %v676
        %v783 = vpack.c.b16 %v679, %v678
        %v784 = vpack.c.b16 %v681, %v680
        %v785 = vpack.c.b16 %v683, %v682
        %v786 = vpack.c.b16 %v685, %v684
        %v787 = vpack.c.b16 %v687, %v686
        %v788 = vpack.c.b16 %v689, %v688
        %v789 = vpack.c.b16 %v691, %v690
        %v790 = vpack.c.b16 %v693, %v692
        %v791 = vpack.c.b16 %v695, %v694
        %v792 = vpack.c.b16 %v697, %v696
        %v793 = vpack.c.b16 %v699, %v698
        %v794 = vpack.c.b16 %v701, %v700
        %v795 = vpack.c.b16 %v703, %v702
        %v796 = vpack.c.b16 %v705, %v704
        %v797 = vpack.c.b16 %v707, %v706
        %v798 = vpack.c.b16 %v709, %v708
        %v799 = vpack.c.b16 %v711, %v710
        %v800 = vpack.c.b16 %v713, %v712
        %v801 = vpack.c.b16 %v715, %v714
        %v802 = vpack.c.b16 %v717, %v716
        %v803 = vpack.c.b16 %v719, %v718
        %v804 = vpack.c.b16 %v721, %v720
        %v805 = vpack.c.b16 %v723, %v722
        %v806 = vpack.c.b16 %v725, %v724
        %v807 = vpack.c.b16 %v727, %v726
        %v808 = vpack.c.b16 %v729, %v728
        %v809 = vpack.c.b16 %v731, %v730
        %v810 = vpack.c.b16 %v733, %v732
        %v811 = vpack.c.b16 %v735, %v734
        %v812 = vpack.c.b16 %v737, %v736
        %v813 = vpack.c.b16 %v739, %v738
        %v814 = vpack.c.b16 %v741, %v740
        %v815 = vpack.c.b16 %v743, %v742
        %888 = vmatpush.bf16.msra.mxu0 %v751
        %889 = vmatpush.bf16.msra.mxu0 %v750
        %890 = vmatpush.bf16.msra.mxu0 %v749
        %891 = vmatpush.bf16.msra.mxu0 %v748
        %892 = vmatpush.bf16.msra.mxu0 %v747
        %893 = vmatpush.bf16.msra.mxu0 %v746
        %894 = vmatpush.bf16.msra.mxu0 %v745
        %895 = vmatpush.bf16.msra.mxu0 %v744
        %896 = vmatmul.bf16.gmra.mxu0 %v436
        %v897 = vpop.f32.mrf.mxu0
        %v898 = vadd.f32 0.0, %v897
        %v899 = vpop.f32.mrf.mxu0
        %900 = vdwg.mxu0
        %901 = vmatpush.bf16.msra.mxu0 %v759
        %902 = vmatpush.bf16.msra.mxu0 %v758
        %903 = vmatpush.bf16.msra.mxu0 %v757
        %904 = vmatpush.bf16.msra.mxu0 %v756
        %905 = vmatpush.bf16.msra.mxu0 %v755
        %906 = vmatpush.bf16.msra.mxu0 %v754
        %907 = vmatpush.bf16.msra.mxu0 %v753
        %908 = vmatpush.bf16.msra.mxu0 %v752
        %909 = vmatmul.bf16.gmra.mxu0 %v437
        %v910 = vpop.f32.mrf.mxu0
        %v911 = vadd.f32 %v898, %v910
        %v912 = vpop.f32.mrf.mxu0
        %913 = vdwg.mxu0
        %914 = vmatpush.bf16.msra.mxu0 %v767
        %915 = vmatpush.bf16.msra.mxu0 %v766
        %916 = vmatpush.bf16.msra.mxu0 %v765
        %917 = vmatpush.bf16.msra.mxu0 %v764
        %918 = vmatpush.bf16.msra.mxu0 %v763
        %919 = vmatpush.bf16.msra.mxu0 %v762
        %920 = vmatpush.bf16.msra.mxu0 %v761
        %921 = vmatpush.bf16.msra.mxu0 %v760
        %922 = vmatmul.bf16.gmra.mxu0 %v438
        %v923 = vpop.f32.mrf.mxu0
        %v924 = vadd.f32 %v911, %v923
        %v925 = vpop.f32.mrf.mxu0
        %926 = vdwg.mxu0
        %927 = vmatpush.bf16.msra.mxu0 %v775
        %928 = vmatpush.bf16.msra.mxu0 %v774
        %929 = vmatpush.bf16.msra.mxu0 %v773
        %930 = vmatpush.bf16.msra.mxu0 %v772
        %931 = vmatpush.bf16.msra.mxu0 %v771
        %932 = vmatpush.bf16.msra.mxu0 %v770
        %933 = vmatpush.bf16.msra.mxu0 %v769
        %934 = vmatpush.bf16.msra.mxu0 %v768
        %935 = vmatmul.bf16.gmra.mxu0 %v439
        %v936 = vpop.f32.mrf.mxu0
        %v937 = vadd.f32 %v924, %v936
        %v938 = vpop.f32.mrf.mxu0
        %939 = vdwg.mxu0
        %940 = vmatpush.bf16.msra.mxu0 %v783
        %941 = vmatpush.bf16.msra.mxu0 %v782
        %942 = vmatpush.bf16.msra.mxu0 %v781
        %943 = vmatpush.bf16.msra.mxu0 %v780
        %944 = vmatpush.bf16.msra.mxu0 %v779
        %945 = vmatpush.bf16.msra.mxu0 %v778
        %946 = vmatpush.bf16.msra.mxu0 %v777
        %947 = vmatpush.bf16.msra.mxu0 %v776
        %948 = vmatmul.bf16.gmra.mxu0 %v440
        %v949 = vpop.f32.mrf.mxu0
        %v950 = vadd.f32 %v937, %v949
        %v951 = vpop.f32.mrf.mxu0
        %952 = vdwg.mxu0
        %953 = vmatpush.bf16.msra.mxu0 %v791
        %954 = vmatpush.bf16.msra.mxu0 %v790
        %955 = vmatpush.bf16.msra.mxu0 %v789
        %956 = vmatpush.bf16.msra.mxu0 %v788
        %957 = vmatpush.bf16.msra.mxu0 %v787
        %958 = vmatpush.bf16.msra.mxu0 %v786
        %959 = vmatpush.bf16.msra.mxu0 %v785
        %960 = vmatpush.bf16.msra.mxu0 %v784
        %961 = vmatmul.bf16.gmra.mxu0 %v441
        %v962 = vpop.f32.mrf.mxu0
        %v963 = vadd.f32 %v950, %v962
        %v964 = vpop.f32.mrf.mxu0
        %965 = vdwg.mxu0
        %966 = vmatpush.bf16.msra.mxu0 %v799
        %967 = vmatpush.bf16.msra.mxu0 %v798
        %968 = vmatpush.bf16.msra.mxu0 %v797
        %969 = vmatpush.bf16.msra.mxu0 %v796
        %970 = vmatpush.bf16.msra.mxu0 %v795
        %971 = vmatpush.bf16.msra.mxu0 %v794
        %972 = vmatpush.bf16.msra.mxu0 %v793
        %973 = vmatpush.bf16.msra.mxu0 %v792
        %974 = vmatmul.bf16.gmra.mxu0 %v442
        %v975 = vpop.f32.mrf.mxu0
        %v976 = vadd.f32 %v963, %v975
        %v977 = vpop.f32.mrf.mxu0
        %978 = vdwg.mxu0
        %979 = vmatpush.bf16.msra.mxu0 %v807
        %980 = vmatpush.bf16.msra.mxu0 %v806
        %981 = vmatpush.bf16.msra.mxu0 %v805
        %982 = vmatpush.bf16.msra.mxu0 %v804
        %983 = vmatpush.bf16.msra.mxu0 %v803
        %984 = vmatpush.bf16.msra.mxu0 %v802
        %985 = vmatpush.bf16.msra.mxu0 %v801
        %986 = vmatpush.bf16.msra.mxu0 %v800
        %987 = vmatmul.bf16.gmra.mxu0 %v443
        %v988 = vpop.f32.mrf.mxu0
        %v989 = vadd.f32 %v976, %v988
        %v990 = vpop.f32.mrf.mxu0
        %991 = vdwg.mxu0
        %992 = vmatpush.bf16.msra.mxu0 %v815
        %993 = vmatpush.bf16.msra.mxu0 %v814
        %994 = vmatpush.bf16.msra.mxu0 %v813
        %995 = vmatpush.bf16.msra.mxu0 %v812
        %996 = vmatpush.bf16.msra.mxu0 %v811
        %997 = vmatpush.bf16.msra.mxu0 %v810
        %998 = vmatpush.bf16.msra.mxu0 %v809
        %999 = vmatpush.bf16.msra.mxu0 %v808
        %1000 = vmatmul.bf16.gmra.mxu0 %v446
        %v1001 = vpop.f32.mrf.mxu0
        %v1002 = vadd.f32 %v989, %v1001
        %v1003 = vpop.f32.mrf.mxu0
        %1004 = vdwg.mxu0
        %v1005 = vadd.f32 %v287, %v1002
        %1006 = vst [vmem:[#allocation2] sm:$0x3] %v1005
        %p1007 = scmp.eq.s32.totalorder %s21, 7
        // Predicated region
        $region57: #{net_forward.3} parent=39 // pred_check
          %p1008 = pneg %p1007
        $region58: #{net_forward.3} parent=39 // pred_check_branch
          %1010 = sbr.rel (%p1008) target = $region60
        $region59: #{net_forward.3} parent=39 // pred_region
          %v1011 = vld [vmem:[#allocation2] sm:$0x3]
          %v1012 = vld [vmem:[#allocation6] sm:$0x1]
          %v1014 = vperm.slane %v1012, 0
          %v1016 = vadd.f32 %v1011, %v1014
          %v1017 = vmax.f32 %v1016, 0.0
          %v1018 = vpack.c.bf16 %v1017, %v1017
          %v1019 = vld [vmem:[%s3] sm:$0xf]
          %v1020 = vld [vmem:[%s3 + $0x4] sm:$0xf]
          %v1021 = vld [vmem:[%s3 + $0x8] sm:$0xf]
          %v1022 = vld [vmem:[%s3 + $0xc] sm:$0xf]
          %v1023 = vld [vmem:[%s3 + $0x10] sm:$0xf]
          %v1024 = vld [vmem:[%s3 + $0x14] sm:$0xf]
          %v1025 = vld [vmem:[%s3 + $0x18] sm:$0xf]
          %v1026 = vld [vmem:[%s3 + $0x1c] sm:$0xf]
          %v1027 = vld [vmem:[%s3 + $0x20] sm:$0xf]
          %v1028 = vld [vmem:[%s3 + $0x24] sm:$0xf]
          %v1029 = vld [vmem:[%s3 + $0x28] sm:$0xf]
          %v1030 = vld [vmem:[%s3 + $0x2c] sm:$0xf]
          %v1031 = vld [vmem:[%s3 + $0x30] sm:$0xf]
          %v1032 = vld [vmem:[%s3 + $0x34] sm:$0xf]
          %v1033 = vld [vmem:[%s3 + $0x38] sm:$0xf]
          %v1034 = vld [vmem:[%s3 + $0x3c] sm:$0xf]
          %v1035 = vld [vmem:[#allocation8] sm:$0x1]
          %v1037 = vperm.slane %v1035, 0
          %v1055 = vunpack.c.l.b16 %v1019
          %v1056 = vunpack.c.l.b16 %v1020
          %v1057 = vunpack.c.l.b16 %v1021
          %v1058 = vunpack.c.l.b16 %v1022
          %v1059 = vunpack.c.l.b16 %v1023
          %v1060 = vunpack.c.l.b16 %v1024
          %v1061 = vunpack.c.l.b16 %v1025
          %v1062 = vunpack.c.l.b16 %v1026
          %v1063 = vunpack.c.l.b16 %v1027
          %v1064 = vunpack.c.l.b16 %v1028
          %v1065 = vunpack.c.l.b16 %v1029
          %v1066 = vunpack.c.l.b16 %v1030
          %v1067 = vunpack.c.l.b16 %v1031
          %v1068 = vunpack.c.l.b16 %v1032
          %v1069 = vunpack.c.l.b16 %v1033
          %v1070 = vunpack.c.l.b16 %v1034
          %v1071 = vpack.c.b16 %v1056, %v1055
          %v1072 = vpack.c.b16 %v1058, %v1057
          %v1073 = vpack.c.b16 %v1060, %v1059
          %v1074 = vpack.c.b16 %v1062, %v1061
          %v1075 = vpack.c.b16 %v1064, %v1063
          %v1076 = vpack.c.b16 %v1066, %v1065
          %v1077 = vpack.c.b16 %v1068, %v1067
          %v1078 = vpack.c.b16 %v1070, %v1069
          %1087 = vmatpush.bf16.msra.mxu0 %v1078
          %1088 = vmatpush.bf16.msra.mxu0 %v1077
          %1089 = vmatpush.bf16.msra.mxu0 %v1076
          %1090 = vmatpush.bf16.msra.mxu0 %v1075
          %1091 = vmatpush.bf16.msra.mxu0 %v1074
          %1092 = vmatpush.bf16.msra.mxu0 %v1073
          %1093 = vmatpush.bf16.msra.mxu0 %v1072
          %1094 = vmatpush.bf16.msra.mxu0 %v1071
          %1095 = vmatmul.bf16.gmra.mxu0 %v1018
          %v1096 = vpop.f32.mrf.mxu0
          %v1097 = vadd.f32 %v1037, %v1096
          %v1098 = vpop.f32.mrf.mxu0
          %1099 = vdwg.mxu0
          %vm1100 = vcmask 74752
          %v1101 = vsel %vm1100, %v1097, -inf
          %1102 = vmax.xlane.f32.xlu0 %v1101
          %v1103 = vpop.xlane.xlu0 %1102
          %v1104 = vsub.f32 %v1097, %v1103
          %v1105 = vmul.f32 %v1104, 1.442695
          %v1106 = vpow.pop %v1105
          %v1107 = vsel %vm1100, %v1106, 0.0
          %1108 = vadd.xlane.f32.xlu0 %v1107
          %v1109 = vpop.xlane.xlu0 %1108
          %v1110 = vlog2.pop %v1109
          %v1111 = vmul.f32 %v1110, 0.6931472
          %v1112 = vsub.f32 %v1104, %v1111
          %1113 = vst.msk [vmem:[#allocation9] sm:$0x3] %vm1100, %v1112
        $region60: #{net_forward.3} parent=39 // pred_fallthru
          _
        // Predicated region
        $region61: #{net_forward.3} parent=39 // pred_check
          %p1114 = pneg %p149
        $region62: #{net_forward.3} parent=39 // pred_check_branch
          %1116 = sbr.rel (%p1114) target = $region64
        $region63: #{net_forward.3} parent=39 // pred_region
          %1118 = vsyncadd [#allocation5], 0
          %s1120 = sshll.u32 [#allocation9], 4
          %s1121 = int_to_ptr.vmem [resolvable:$true] %s1120
          %s1122 = sshll.u32 %s5, 4
          %s1123 = int_to_ptr.hbm [resolvable:$true] %s1122
          %1125 = dma.vmem_to_hbm [thread:$0]  %s1121, 32, %s1123, [#allocation5]
        $region64: #{net_forward.3} parent=39 // pred_fallthru
          _
        // Predicated region
        $region65: #{net_forward.3} parent=39 // pred_check
          %p1126 = pneg %p149
        $region66: #{net_forward.3} parent=39 // pred_check_branch
          %1128 = sbr.rel (%p1126) target = $region68
        $region67: #{net_forward.3} parent=39 // pred_region
          %1130 = dma.done [#allocation5], 32
        $region68: #{net_forward.3} parent=39 // pred_fallthru
          _
      $region40: #{net_forward.3} parent=5 // pred_fallthru
        _
      %p1131 = scmp.le.s32.totalorder 2, %s16
      // Predicated region
      $region69: #{net_forward.3} parent=5 // pred_check
        %p1132 = pneg %p1131
      $region70: #{net_forward.3} parent=5 // pred_check_branch
        %1134 = sbr.rel (%p1132) target = $region72
      $region71: #{net_forward.3} parent=5 // pred_region
        %s1135 = ssub.s32 %s16, 2
      $region72: #{net_forward.3} parent=5 // pred_fallthru
        _
    $region6: #{net_forward.3} parent=1 // loop_footer
      %s20 = sadd.s32 1, %s16
    $region7: #{net_forward.3} parent=1 // loop_footer_branch
      %15 = sbr.rel target = $region3
    $region8: #{net_forward.3} parent=1 // loop_exit
      _
    %1136 = vsyncpa [#allocation4], 1
    %s1137 = scalar_lea.sflag [#allocation4], 1
    %1138 = vsyncpa %s1137, 1
    %1139 = vsyncpa [#allocation7], 1
    %1140 = vsyncpa [#allocation5], 1
    %s1141 = scalar_lea.sflag [#allocation5], 1
    %1142 = vsyncpa %s1141, 1

// kernel: net_forward.2
$region0: #{net_forward.2}
  #allocation0 [shape = 'u32[]', space=smem, size = 0x4, offset = 0x4, fixed_abs, tag = 'smem constant byte address 0x4 - core index']
  #allocation1 [shape = 'u32[72,128]{1,0:T(1,128)}', space=vmem, size = 0x9000, scoped, tag = 'internal scratch']
  %s0 = inlined_call_operand.vmem [shape: f32[2,812,1], index: 0, kind: input, shape index: {}]
  %s1 = inlined_call_operand.hbm [shape: f32[9,32], index: 1, kind: input, shape index: {}]
  %s2 = inlined_call_operand.hbm [shape: f32[1,32], index: 2, kind: input, shape index: {}]
  %s3 = inlined_call_operand.hbm [shape: bf16[9,32,64], index: 3, kind: input, shape index: {}]
  %s4 = inlined_call_operand.hbm [shape: f32[1,64], index: 4, kind: input, shape index: {}]
  %s5 = inlined_call_operand.hbm [shape: bf16[144,639], index: 5, kind: input, shape index: {}]
  %s6 = inlined_call_operand.vmem [shape: bf16[2,144,64], index: 6, kind: output, shape index: {}]
  %s7 = sld [smem:[#allocation0]]
  $region77: #{net_forward.2} parent=0
    _
  %s9 = ssub.s32 1, %s7
  %s10 = scalar_select 0, %s9, %s7
  $region1: #{net_forward.2} parent=0
    #allocation2 [shape = 'u8[8192]{0}', space=vmem, size = 0x2000, scoped, tag = 'input window, operand 1, single buffered']
    #allocation3 [shape = 's32[2]{0}', space=sflag, size = 0x8, scoped, tag = 'scoped memory for net_forward.2']
    #allocation4 [shape = 'u8[512]{0}', space=vmem, size = 0x400, scoped, tag = 'input window, operand 2, single buffered']
    #allocation5 [shape = 's32[1]{0}', space=sflag, size = 0x4, scoped, tag = 'scoped memory for net_forward.2']
    #allocation6 [shape = 'u8[73728]{0}', space=vmem, size = 0x12000, scoped, tag = 'input window, operand 3, single buffered']
    #allocation7 [shape = 'u8[512]{0}', space=vmem, size = 0x400, scoped, tag = 'input window, operand 4, single buffered']
    #allocation8 [shape = 's32[1]{0}', space=sflag, size = 0x4, scoped, tag = 'scoped memory for net_forward.2']
    #allocation9 [shape = 'u8[184320]{0}', space=vmem, size = 0x2d000, scoped, tag = 'input window, operand 5, single buffered']
    %11 = vsyncpa [#allocation3], 0
    %12 = vsyncpa [#allocation5], 0
    %13 = vsyncpa [#allocation8], 0
    loop: start=0, step=1, limit=4
    $region2: #{net_forward.2} parent=1 // loop_pre_header
      _
    $region3: #{net_forward.2} parent=1 // loop_header
      %s15 = sphi 0, %s19
      %p16 = scmp.ge.s32.totalorder %s15, 4
      %s25 = sphi 0, %s27
      %s28 = sphi 0, %s25
      %s29 = sphi 0, %s28
      %s45 = sphi 0, %s29
      %s49 = sphi 0, %s49
      %s51 = sphi 0, %s49
      %s52 = sphi 0, %s51
      %s66 = sphi 0, %s52
      %s70 = sphi 0, %s70
      %s72 = sphi 0, %s70
      %s73 = sphi 0, %s72
      %s87 = sphi 0, %s73
      %s91 = sphi 0, %s91
      %s93 = sphi 0, %s91
      %s94 = sphi 0, %s93
      %s108 = sphi 0, %s94
      %s112 = sphi 0, %s112
      %s114 = sphi 0, %s112
      %s115 = sphi 0, %s114
      %s129 = sphi 0, %s115
      %s133 = sphi 0, %s133
      %s135 = sphi 0, %s133
      %s136 = sphi 0, %s135
      %s150 = sphi 0, %s136
      %s156 = sphi 0, %s158
      %s159 = sphi 0, %s156
      %s160 = sphi 0, %s159
      %s176 = sphi 0, %s160
    $region4: #{net_forward.2} parent=1 // loop_header_branch
      %18 = sbr.rel (%p16) target = $region8
    $region5: #{net_forward.2} parent=1 // loop_body
      %s20 = ssub.s32 %s15, 1
      %s21 = ssub.s32 %s15, 2
      %s22 = sadd.s32 %s15, 1
      %s23 = ssub.s32 %s15, %s22
      %p24 = scmp.eq.s32.totalorder %s23, 0
      %s26 = sadd.s32 %s25, 1
      %s27 = scalar_select %p24, %s25, %s26
      %p30 = pneg %p24
      %p31 = scmp.eq.s32.totalorder %s15, 1
      %p32 = por %p30, %p31
      %p33 = scmp.ne.s32.totalorder %s25, %s28
      %p34 = scmp.eq.s32.totalorder %s15, 0
      %p35 = por %p33, %p34
      %p36 = scmp.ne.s32.totalorder %s25, %s28
      %p37 = scmp.eq.s32.totalorder %s20, 1
      %p38 = por %p36, %p37
      %p39 = scmp.ne.s32.totalorder %s28, %s29
      %p40 = scmp.eq.s32.totalorder %s20, 0
      %p41 = por %p39, %p40
      %p42 = scmp.ne.s32.totalorder %s28, %s29
      %p43 = scmp.eq.s32.totalorder %s21, 1
      %p44 = por %p42, %p43
      %p46 = scmp.ne.s32.totalorder %s29, %s45
      %p47 = scmp.eq.s32.totalorder %s21, 0
      %p48 = por %p46, %p47
      %s50 = sadd.s32 %s49, 1
      %p53 = scmp.eq.s32.totalorder %s15, 1
      %p54 = scmp.ne.s32.totalorder %s49, %s51
      %p55 = scmp.eq.s32.totalorder %s15, 0
      %p56 = por %p54, %p55
      %p57 = scmp.ne.s32.totalorder %s49, %s51
      %p58 = scmp.eq.s32.totalorder %s20, 1
      %p59 = por %p57, %p58
      %p60 = scmp.ne.s32.totalorder %s51, %s52
      %p61 = scmp.eq.s32.totalorder %s20, 0
      %p62 = por %p60, %p61
      %p63 = scmp.ne.s32.totalorder %s51, %s52
      %p64 = scmp.eq.s32.totalorder %s21, 1
      %p65 = por %p63, %p64
      %p67 = scmp.ne.s32.totalorder %s52, %s66
      %p68 = scmp.eq.s32.totalorder %s21, 0
      %p69 = por %p67, %p68
      %s71 = sadd.s32 %s70, 1
      %p74 = scmp.eq.s32.totalorder %s15, 1
      %p75 = scmp.ne.s32.totalorder %s70, %s72
      %p76 = scmp.eq.s32.totalorder %s15, 0
      %p77 = por %p75, %p76
      %p78 = scmp.ne.s32.totalorder %s70, %s72
      %p79 = scmp.eq.s32.totalorder %s20, 1
      %p80 = por %p78, %p79
      %p81 = scmp.ne.s32.totalorder %s72, %s73
      %p82 = scmp.eq.s32.totalorder %s20, 0
      %p83 = por %p81, %p82
      %p84 = scmp.ne.s32.totalorder %s72, %s73
      %p85 = scmp.eq.s32.totalorder %s21, 1
      %p86 = por %p84, %p85
      %p88 = scmp.ne.s32.totalorder %s73, %s87
      %p89 = scmp.eq.s32.totalorder %s21, 0
      %p90 = por %p88, %p89
      %s92 = sadd.s32 %s91, 1
      %p95 = scmp.eq.s32.totalorder %s15, 1
      %p96 = scmp.ne.s32.totalorder %s91, %s93
      %p97 = scmp.eq.s32.totalorder %s15, 0
      %p98 = por %p96, %p97
      %p99 = scmp.ne.s32.totalorder %s91, %s93
      %p100 = scmp.eq.s32.totalorder %s20, 1
      %p101 = por %p99, %p100
      %p102 = scmp.ne.s32.totalorder %s93, %s94
      %p103 = scmp.eq.s32.totalorder %s20, 0
      %p104 = por %p102, %p103
      %p105 = scmp.ne.s32.totalorder %s93, %s94
      %p106 = scmp.eq.s32.totalorder %s21, 1
      %p107 = por %p105, %p106
      %p109 = scmp.ne.s32.totalorder %s94, %s108
      %p110 = scmp.eq.s32.totalorder %s21, 0
      %p111 = por %p109, %p110
      %s113 = sadd.s32 %s112, 1
      %p116 = scmp.eq.s32.totalorder %s15, 1
      %p117 = scmp.ne.s32.totalorder %s112, %s114
      %p118 = scmp.eq.s32.totalorder %s15, 0
      %p119 = por %p117, %p118
      %p120 = scmp.ne.s32.totalorder %s112, %s114
      %p121 = scmp.eq.s32.totalorder %s20, 1
      %p122 = por %p120, %p121
      %p123 = scmp.ne.s32.totalorder %s114, %s115
      %p124 = scmp.eq.s32.totalorder %s20, 0
      %p125 = por %p123, %p124
      %p126 = scmp.ne.s32.totalorder %s114, %s115
      %p127 = scmp.eq.s32.totalorder %s21, 1
      %p128 = por %p126, %p127
      %p130 = scmp.ne.s32.totalorder %s115, %s129
      %p131 = scmp.eq.s32.totalorder %s21, 0
      %p132 = por %p130, %p131
      %s134 = sadd.s32 %s133, 1
      %p137 = scmp.eq.s32.totalorder %s15, 1
      %p138 = scmp.ne.s32.totalorder %s133, %s135
      %p139 = scmp.eq.s32.totalorder %s15, 0
      %p140 = por %p138, %p139
      %p141 = scmp.ne.s32.totalorder %s133, %s135
      %p142 = scmp.eq.s32.totalorder %s20, 1
      %p143 = por %p141, %p142
      %p144 = scmp.ne.s32.totalorder %s135, %s136
      %p145 = scmp.eq.s32.totalorder %s20, 0
      %p146 = por %p144, %p145
      %p147 = scmp.ne.s32.totalorder %s135, %s136
      %p148 = scmp.eq.s32.totalorder %s21, 1
      %p149 = por %p147, %p148
      %p151 = scmp.ne.s32.totalorder %s136, %s150
      %p152 = scmp.eq.s32.totalorder %s21, 0
      %p153 = por %p151, %p152
      %s154 = ssub.s32 %s15, %s22
      %p155 = scmp.eq.s32.totalorder %s154, 0
      %s157 = sadd.s32 %s156, 1
      %s158 = scalar_select %p155, %s156, %s157
      %p161 = pneg %p155
      %p162 = scmp.eq.s32.totalorder %s15, 1
      %p163 = por %p161, %p162
      %p164 = scmp.ne.s32.totalorder %s156, %s159
      %p165 = scmp.eq.s32.totalorder %s15, 0
      %p166 = por %p164, %p165
      %p167 = scmp.ne.s32.totalorder %s156, %s159
      %p168 = scmp.eq.s32.totalorder %s20, 1
      %p169 = por %p167, %p168
      %p170 = scmp.ne.s32.totalorder %s159, %s160
      %p171 = scmp.eq.s32.totalorder %s20, 0
      %p172 = por %p170, %p171
      %p173 = scmp.ne.s32.totalorder %s159, %s160
      %p174 = scmp.eq.s32.totalorder %s21, 1
      %p175 = por %p173, %p174
      %p177 = scmp.ne.s32.totalorder %s160, %s176
      %p178 = scmp.eq.s32.totalorder %s21, 0
      %p179 = por %p177, %p178
      %p180 = scmp.le.s32.totalorder 1, %s15
      %p181 = scmp.lt.s32.totalorder %s15, 3
      %p182 = pnand %p180, %p181
      %p183 = pneg %p182
      // Predicated region
      $region9: #{net_forward.2} parent=5 // pred_check
        _
      $region10: #{net_forward.2} parent=5 // pred_check_branch
        %185 = sbr.rel (%p182) target = $region12
      $region11: #{net_forward.2} parent=5 // pred_region
        %s186 = ssub.s32 %s15, 1
        // Predicated region
        $region13: #{net_forward.2} parent=11 // pred_check
          %p187 = pneg %p62
        $region14: #{net_forward.2} parent=11 // pred_check_branch
          %189 = sbr.rel (%p187) target = $region16
        $region15: #{net_forward.2} parent=11 // pred_region
          %191 = vsyncadd [#allocation3], 0
          %s192 = sshll.u32 %s1, 4
          %s193 = int_to_ptr.hbm [resolvable:$true] %s192
          %s194 = sshll.u32 [#allocation2], 4
          %s195 = int_to_ptr.vmem [resolvable:$true] %s194
          %200 = dma.hbm_to_vmem [thread:$0]  %s193, 256, %s195, [#allocation3], 128, 128, 8
        $region16: #{net_forward.2} parent=11 // pred_fallthru
          _
        // Predicated region
        $region17: #{net_forward.2} parent=11 // pred_check
          %p201 = pneg %p83
        $region18: #{net_forward.2} parent=11 // pred_check_branch
          %203 = sbr.rel (%p201) target = $region20
        $region19: #{net_forward.2} parent=11 // pred_region
          %205 = vsyncadd [#allocation5], 0
          %s207 = sshll.u32 %s2, 4
          %s208 = int_to_ptr.hbm [resolvable:$true] %s207
          %s209 = sshll.u32 [#allocation4], 4
          %s210 = int_to_ptr.vmem [resolvable:$true] %s209
          %212 = dma.hbm_to_vmem [thread:$0]  %s208, 16, %s210, [#allocation5]
        $region20: #{net_forward.2} parent=11 // pred_fallthru
          _
        // Predicated region
        $region21: #{net_forward.2} parent=11 // pred_check
          %p213 = pneg %p104
        $region22: #{net_forward.2} parent=11 // pred_check_branch
          %215 = sbr.rel (%p213) target = $region24
        $region23: #{net_forward.2} parent=11 // pred_region
          %217 = vsyncadd [#allocation5], 0
          %s218 = sshll.u32 %s3, 4
          %s219 = int_to_ptr.hbm [resolvable:$true] %s218
          %s220 = sshll.u32 [#allocation6], 4
          %s221 = int_to_ptr.vmem [resolvable:$true] %s220
          %226 = dma.hbm_to_vmem [thread:$0]  %s219, 2304, %s221, [#allocation5], 64, 64, 4
        $region24: #{net_forward.2} parent=11 // pred_fallthru
          _
        // Predicated region
        $region25: #{net_forward.2} parent=11 // pred_check
          %p227 = pneg %p125
        $region26: #{net_forward.2} parent=11 // pred_check_branch
          %229 = sbr.rel (%p227) target = $region28
        $region27: #{net_forward.2} parent=11 // pred_region
          %231 = vsyncadd [#allocation8], 0
          %s233 = sshll.u32 %s4, 4
          %s234 = int_to_ptr.hbm [resolvable:$true] %s233
          %s235 = sshll.u32 [#allocation7], 4
          %s236 = int_to_ptr.vmem [resolvable:$true] %s235
          %238 = dma.hbm_to_vmem [thread:$0]  %s234, 16, %s236, [#allocation8]
        $region28: #{net_forward.2} parent=11 // pred_fallthru
          _
        // Predicated region
        $region29: #{net_forward.2} parent=11 // pred_check
          %p239 = pneg %p146
        $region30: #{net_forward.2} parent=11 // pred_check_branch
          %241 = sbr.rel (%p239) target = $region32
        $region31: #{net_forward.2} parent=11 // pred_region
          %243 = vsyncadd [#allocation8], 0
          %s244 = sshll.u32 %s5, 4
          %s245 = int_to_ptr.hbm [resolvable:$true] %s244
          %s246 = sshll.u32 [#allocation9], 4
          %s247 = int_to_ptr.vmem [resolvable:$true] %s246
          %252 = dma.hbm_to_vmem [thread:$0]  %s245, 5760, %s247, [#allocation8], 320, 320, 20
        $region32: #{net_forward.2} parent=11 // pred_fallthru
          _
      $region12: #{net_forward.2} parent=5 // pred_fallthru
        _
      %p253 = scmp.lt.s32.totalorder %s15, 2
      // Predicated region
      $region33: #{net_forward.2} parent=5 // pred_check
        %p254 = pneg %p253
      $region34: #{net_forward.2} parent=5 // pred_check_branch
        %256 = sbr.rel (%p254) target = $region36
      $region35: #{net_forward.2} parent=5 // pred_region
        // Predicated region
        $region37: #{net_forward.2} parent=35 // pred_check
          %p257 = pneg %p35
        $region38: #{net_forward.2} parent=35 // pred_check_branch
          %259 = sbr.rel (%p257) target = $region40
        $region39: #{net_forward.2} parent=35 // pred_region
          %p260 = scmp.lt.s32.totalorder %s15, 1
          %s261 = scalar_select %p260, %s15, 1
          %s262 = smul.addr %s261, 102
          %s263 = smul.addr %s262, 8
          %s264 = scalar_lea.vmem %s0, %s263
        $region40: #{net_forward.2} parent=35 // pred_fallthru
          _
      $region36: #{net_forward.2} parent=5 // pred_fallthru
        _
      %p265 = scmp.le.s32.totalorder 1, %s15
      %p266 = scmp.lt.s32.totalorder %s15, 3
      %p267 = pnand %p265, %p266
      %p268 = pneg %p267
      // Predicated region
      $region41: #{net_forward.2} parent=5 // pred_check
        _
      $region42: #{net_forward.2} parent=5 // pred_check_branch
        %270 = sbr.rel (%p267) target = $region44
      $region43: #{net_forward.2} parent=5 // pred_region
        %s271 = ssub.s32 %s15, 1
        // Predicated region
        $region45: #{net_forward.2} parent=43 // pred_check
          %p272 = pneg %p62
        $region46: #{net_forward.2} parent=43 // pred_check_branch
          %274 = sbr.rel (%p272) target = $region48
        $region47: #{net_forward.2} parent=43 // pred_region
          %276 = dma.done [#allocation3], 256
        $region48: #{net_forward.2} parent=43 // pred_fallthru
          _
        // Predicated region
        $region49: #{net_forward.2} parent=43 // pred_check
          %p277 = pneg %p83
        $region50: #{net_forward.2} parent=43 // pred_check_branch
          %279 = sbr.rel (%p277) target = $region52
        $region51: #{net_forward.2} parent=43 // pred_region
          %281 = dma.done [#allocation5], 16
        $region52: #{net_forward.2} parent=43 // pred_fallthru
          _
        // Predicated region
        $region53: #{net_forward.2} parent=43 // pred_check
          %p282 = pneg %p104
        $region54: #{net_forward.2} parent=43 // pred_check_branch
          %284 = sbr.rel (%p282) target = $region56
        $region55: #{net_forward.2} parent=43 // pred_region
          %286 = dma.done [#allocation5], 2304
        $region56: #{net_forward.2} parent=43 // pred_fallthru
          _
        // Predicated region
        $region57: #{net_forward.2} parent=43 // pred_check
          %p287 = pneg %p125
        $region58: #{net_forward.2} parent=43 // pred_check_branch
          %289 = sbr.rel (%p287) target = $region60
        $region59: #{net_forward.2} parent=43 // pred_region
          %291 = dma.done [#allocation8], 16
        $region60: #{net_forward.2} parent=43 // pred_fallthru
          _
        // Predicated region
        $region61: #{net_forward.2} parent=43 // pred_check
          %p292 = pneg %p146
        $region62: #{net_forward.2} parent=43 // pred_check_branch
          %294 = sbr.rel (%p292) target = $region64
        $region63: #{net_forward.2} parent=43 // pred_region
          %296 = dma.done [#allocation8], 5760
        $region64: #{net_forward.2} parent=43 // pred_fallthru
          _
        %p297 = scmp.lt.s32.totalorder %s20, 1
        %s298 = scalar_select %p297, %s20, 1
        %s299 = smul.addr %s298, 102
        %s300 = smul.addr %s299, 8
        %s301 = scalar_lea.vmem %s0, %s300
        %p302 = pneg %p41
        %p303 = pneg %p38
        %p304 = pneg %p62
        %p305 = pneg %p59
        %p306 = pneg %p83
        %p307 = pneg %p80
        %p308 = pneg %p104
        %p309 = pneg %p101
        %p310 = pneg %p125
        %p311 = pneg %p122
        %p312 = pneg %p146
        %p313 = pneg %p143
        %p314 = pneg %p172
        %p315 = pneg %p169
        %p316 = scmp.lt.s32.totalorder %s20, 1
        %s317 = scalar_select %p316, %s20, 1
        %s318 = smul.addr %s317, 18
        %s319 = smul.addr %s318, 4
        %s320 = scalar_lea.vmem %s6, %s319
        %p321 = scmp.lt.s32.totalorder %s20, 1
        %s322 = scalar_select %p321, %s20, 1
        %s323 = smul.addr %s322, 102
        %s324 = smul.addr %s323, 8
        %s325 = scalar_lea.vmem %s0, %s324
        %p326 = scmp.lt.s32.totalorder %s20, 1
        %s327 = scalar_select %p326, %s20, 1
        %s328 = smul.addr %s327, 18
        %s329 = smul.addr %s328, 4
        %s330 = scalar_lea.vmem %s6, %s329
        %v332 = vld [vmem:[%s325] sm:$0xff]
        %v333 = vld [vmem:[%s325 + $0x8] sm:$0xff]
        %v334 = vld [vmem:[%s325 + $0x10] sm:$0xff]
        %v335 = vld [vmem:[%s325 + $0x18] sm:$0xff]
        %v336 = vld [vmem:[%s325 + $0x20] sm:$0xff]
        %v337 = vld [vmem:[%s325 + $0x28] sm:$0xff]
        %v338 = vld [vmem:[%s325 + $0x30] sm:$0xff]
        %v339 = vld [vmem:[%s325 + $0x38] sm:$0xff]
        %v340 = vld [vmem:[%s325 + $0x40] sm:$0xff]
        %v341 = vld [vmem:[%s325 + $0x48] sm:$0xff]
        %v342 = vld [vmem:[%s325 + $0x50] sm:$0xff]
        %v343 = vld [vmem:[%s325 + $0x58] sm:$0xff]
        %v344 = vld [vmem:[%s325 + $0x60] sm:$0xff]
        %v345 = vld [vmem:[%s325 + $0x68] sm:$0xff]
        %v346 = vld [vmem:[%s325 + $0x70] sm:$0xff]
        %v347 = vld [vmem:[%s325 + $0x78] sm:$0xff]
        %v348 = vld [vmem:[%s325 + $0x80] sm:$0xff]
        %v349 = vld [vmem:[%s325 + $0x88] sm:$0xff]
        %v350 = vld [vmem:[%s325 + $0x90] sm:$0xff]
        %v351 = vld [vmem:[%s325 + $0x98] sm:$0xff]
        %v352 = vld [vmem:[%s325 + $0xa0] sm:$0xff]
        %v353 = vld [vmem:[%s325 + $0xa8] sm:$0xff]
        %v354 = vld [vmem:[%s325 + $0xb0] sm:$0xff]
        %v355 = vld [vmem:[%s325 + $0xb8] sm:$0xff]
        %v356 = vld [vmem:[%s325 + $0xc0] sm:$0xff]
        %v357 = vld [vmem:[%s325 + $0xc8] sm:$0xff]
        %v358 = vld [vmem:[%s325 + $0xd0] sm:$0xff]
        %v359 = vld [vmem:[%s325 + $0xd8] sm:$0xff]
        %v360 = vld [vmem:[%s325 + $0xe0] sm:$0xff]
        %v361 = vld [vmem:[%s325 + $0xe8] sm:$0xff]
        %v362 = vld [vmem:[%s325 + $0xf0] sm:$0xff]
        %v363 = vld [vmem:[%s325 + $0xf8] sm:$0xff]
        %v364 = vld [vmem:[%s325 + $0x100] sm:$0xff]
        %v365 = vld [vmem:[%s325 + $0x108] sm:$0xff]
        %v366 = vld [vmem:[%s325 + $0x110] sm:$0xff]
        %v367 = vld [vmem:[%s325 + $0x118] sm:$0xff]
        %v368 = vld [vmem:[%s325 + $0x120] sm:$0xff]
        %v369 = vld [vmem:[%s325 + $0x128] sm:$0xff]
        %v370 = vld [vmem:[%s325 + $0x130] sm:$0xff]
        %v371 = vld [vmem:[%s325 + $0x138] sm:$0xff]
        %v372 = vld [vmem:[%s325 + $0x140] sm:$0xff]
        %v373 = vld [vmem:[%s325 + $0x148] sm:$0xff]
        %v374 = vld [vmem:[%s325 + $0x150] sm:$0xff]
        %v375 = vld [vmem:[%s325 + $0x158] sm:$0xff]
        %v376 = vld [vmem:[%s325 + $0x160] sm:$0xff]
        %v377 = vld [vmem:[%s325 + $0x168] sm:$0xff]
        %v378 = vld [vmem:[%s325 + $0x170] sm:$0xff]
        %v379 = vld [vmem:[%s325 + $0x178] sm:$0xff]
        %v380 = vld [vmem:[%s325 + $0x180] sm:$0xff]
        %v381 = vld [vmem:[%s325 + $0x188] sm:$0xff]
        %v382 = vld [vmem:[%s325 + $0x190] sm:$0xff]
        %v383 = vld [vmem:[%s325 + $0x198] sm:$0xff]
        %v384 = vld [vmem:[%s325 + $0x1a0] sm:$0xff]
        %v385 = vld [vmem:[%s325 + $0x1a8] sm:$0xff]
        %v386 = vld [vmem:[%s325 + $0x1b0] sm:$0xff]
        %v387 = vld [vmem:[%s325 + $0x1b8] sm:$0xff]
        %v388 = vld [vmem:[%s325 + $0x1c0] sm:$0xff]
        %v389 = vld [vmem:[%s325 + $0x1c8] sm:$0xff]
        %v390 = vld [vmem:[%s325 + $0x1d0] sm:$0xff]
        %v391 = vld [vmem:[%s325 + $0x1d8] sm:$0xff]
        %v392 = vld [vmem:[%s325 + $0x1e0] sm:$0xff]
        %v393 = vld [vmem:[%s325 + $0x1e8] sm:$0xff]
        %v394 = vld [vmem:[%s325 + $0x1f0] sm:$0xff]
        %v395 = vld [vmem:[%s325 + $0x1f8] sm:$0xff]
        %v396 = vld [vmem:[%s325 + $0x200] sm:$0xff]
        %v397 = vld [vmem:[%s325 + $0x208] sm:$0xff]
        %v398 = vld [vmem:[%s325 + $0x210] sm:$0xff]
        %v399 = vld [vmem:[%s325 + $0x218] sm:$0xff]
        %v400 = vld [vmem:[%s325 + $0x220] sm:$0xff]
        %v401 = vld [vmem:[%s325 + $0x228] sm:$0xff]
        %v402 = vld [vmem:[%s325 + $0x230] sm:$0xff]
        %v403 = vld [vmem:[%s325 + $0x238] sm:$0xff]
        %v404 = vld [vmem:[%s325 + $0x240] sm:$0xff]
        %v405 = vld [vmem:[%s325 + $0x248] sm:$0xff]
        %v406 = vld [vmem:[%s325 + $0x250] sm:$0xff]
        %v407 = vld [vmem:[%s325 + $0x258] sm:$0xff]
        %v408 = vld [vmem:[%s325 + $0x260] sm:$0xff]
        %v409 = vld [vmem:[%s325 + $0x268] sm:$0xff]
        %v410 = vld [vmem:[%s325 + $0x270] sm:$0xff]
        %v411 = vld [vmem:[%s325 + $0x278] sm:$0xff]
        %v412 = vld [vmem:[%s325 + $0x280] sm:$0xff]
        %v413 = vld [vmem:[%s325 + $0x288] sm:$0xff]
        %v414 = vld [vmem:[%s325 + $0x290] sm:$0xff]
        %v415 = vld [vmem:[%s325 + $0x298] sm:$0xff]
        %v416 = vld [vmem:[%s325 + $0x2a0] sm:$0xff]
        %v417 = vld [vmem:[%s325 + $0x2a8] sm:$0xff]
        %v418 = vld [vmem:[%s325 + $0x2b0] sm:$0xff]
        %v419 = vld [vmem:[%s325 + $0x2b8] sm:$0xff]
        %v420 = vld [vmem:[%s325 + $0x2c0] sm:$0xff]
        %v421 = vld [vmem:[%s325 + $0x2c8] sm:$0xff]
        %v422 = vld [vmem:[%s325 + $0x2d0] sm:$0xff]
        %v423 = vld [vmem:[%s325 + $0x2d8] sm:$0xff]
        %v424 = vld [vmem:[%s325 + $0x2e0] sm:$0xff]
        %v425 = vld [vmem:[%s325 + $0x2e8] sm:$0xff]
        %v426 = vld [vmem:[%s325 + $0x2f0] sm:$0xff]
        %v427 = vld [vmem:[%s325 + $0x2f8] sm:$0xff]
        %v428 = vld [vmem:[%s325 + $0x300] sm:$0xff]
        %v429 = vld [vmem:[%s325 + $0x308] sm:$0xff]
        %v430 = vld [vmem:[%s325 + $0x310] sm:$0xff]
        %v431 = vld [vmem:[%s325 + $0x318] sm:$0xff]
        %v432 = vld [vmem:[#allocation2] sm:$0x1]
        %434 = vset.pattern.permute.xlu0 0
        %435 = vperm.xlu0 %434, %v332
        %v436 = vpop.permute.xlu0 %435
        %439 = vset.pattern.permute.xlu0 0
        %440 = vperm.xlu0 %439, %v333
        %v441 = vpop.permute.xlu0 %440
        %444 = vset.pattern.permute.xlu0 0
        %445 = vperm.xlu0 %444, %v334
        %v446 = vpop.permute.xlu0 %445
        %449 = vset.pattern.permute.xlu0 0
        %450 = vperm.xlu0 %449, %v335
        %v451 = vpop.permute.xlu0 %450
        %454 = vset.pattern.permute.xlu0 0
        %455 = vperm.xlu0 %454, %v336
        %v456 = vpop.permute.xlu0 %455
        %459 = vset.pattern.permute.xlu0 0
        %460 = vperm.xlu0 %459, %v337
        %v461 = vpop.permute.xlu0 %460
        %464 = vset.pattern.permute.xlu0 0
        %465 = vperm.xlu0 %464, %v338
        %v466 = vpop.permute.xlu0 %465
        %469 = vset.pattern.permute.xlu0 0
        %470 = vperm.xlu0 %469, %v339
        %v471 = vpop.permute.xlu0 %470
        %474 = vset.pattern.permute.xlu0 0
        %475 = vperm.xlu0 %474, %v340
        %v476 = vpop.permute.xlu0 %475
        %479 = vset.pattern.permute.xlu0 0
        %480 = vperm.xlu0 %479, %v341
        %v481 = vpop.permute.xlu0 %480
        %484 = vset.pattern.permute.xlu0 0
        %485 = vperm.xlu0 %484, %v342
        %v486 = vpop.permute.xlu0 %485
        %489 = vset.pattern.permute.xlu0 0
        %490 = vperm.xlu0 %489, %v343
        %v491 = vpop.permute.xlu0 %490
        %494 = vset.pattern.permute.xlu0 0
        %495 = vperm.xlu0 %494, %v344
        %v496 = vpop.permute.xlu0 %495
        %499 = vset.pattern.permute.xlu0 0
        %500 = vperm.xlu0 %499, %v345
        %v501 = vpop.permute.xlu0 %500
        %504 = vset.pattern.permute.xlu0 0
        %505 = vperm.xlu0 %504, %v346
        %v506 = vpop.permute.xlu0 %505
        %509 = vset.pattern.permute.xlu0 0
        %510 = vperm.xlu0 %509, %v347
        %v511 = vpop.permute.xlu0 %510
        %514 = vset.pattern.permute.xlu0 0
        %515 = vperm.xlu0 %514, %v348
        %v516 = vpop.permute.xlu0 %515
        %519 = vset.pattern.permute.xlu0 0
        %520 = vperm.xlu0 %519, %v349
        %v521 = vpop.permute.xlu0 %520
        %524 = vset.pattern.permute.xlu0 0
        %525 = vperm.xlu0 %524, %v350
        %v526 = vpop.permute.xlu0 %525
        %529 = vset.pattern.permute.xlu0 0
        %530 = vperm.xlu0 %529, %v351
        %v531 = vpop.permute.xlu0 %530
        %534 = vset.pattern.permute.xlu0 0
        %535 = vperm.xlu0 %534, %v352
        %v536 = vpop.permute.xlu0 %535
        %539 = vset.pattern.permute.xlu0 0
        %540 = vperm.xlu0 %539, %v353
        %v541 = vpop.permute.xlu0 %540
        %544 = vset.pattern.permute.xlu0 0
        %545 = vperm.xlu0 %544, %v354
        %v546 = vpop.permute.xlu0 %545
        %549 = vset.pattern.permute.xlu0 0
        %550 = vperm.xlu0 %549, %v355
        %v551 = vpop.permute.xlu0 %550
        %554 = vset.pattern.permute.xlu0 0
        %555 = vperm.xlu0 %554, %v356
        %v556 = vpop.permute.xlu0 %555
        %559 = vset.pattern.permute.xlu0 0
        %560 = vperm.xlu0 %559, %v357
        %v561 = vpop.permute.xlu0 %560
        %564 = vset.pattern.permute.xlu0 0
        %565 = vperm.xlu0 %564, %v358
        %v566 = vpop.permute.xlu0 %565
        %569 = vset.pattern.permute.xlu0 0
        %570 = vperm.xlu0 %569, %v359
        %v571 = vpop.permute.xlu0 %570
        %574 = vset.pattern.permute.xlu0 0
        %575 = vperm.xlu0 %574, %v360
        %v576 = vpop.permute.xlu0 %575
        %579 = vset.pattern.permute.xlu0 0
        %580 = vperm.xlu0 %579, %v361
        %v581 = vpop.permute.xlu0 %580
        %584 = vset.pattern.permute.xlu0 0
        %585 = vperm.xlu0 %584, %v362
        %v586 = vpop.permute.xlu0 %585
        %589 = vset.pattern.permute.xlu0 0
        %590 = vperm.xlu0 %589, %v363
        %v591 = vpop.permute.xlu0 %590
        %594 = vset.pattern.permute.xlu0 0
        %595 = vperm.xlu0 %594, %v364
        %v596 = vpop.permute.xlu0 %595
        %599 = vset.pattern.permute.xlu0 0
        %600 = vperm.xlu0 %599, %v365
        %v601 = vpop.permute.xlu0 %600
        %604 = vset.pattern.permute.xlu0 0
        %605 = vperm.xlu0 %604, %v366
        %v606 = vpop.permute.xlu0 %605
        %609 = vset.pattern.permute.xlu0 0
        %610 = vperm.xlu0 %609, %v367
        %v611 = vpop.permute.xlu0 %610
        %614 = vset.pattern.permute.xlu0 0
        %615 = vperm.xlu0 %614, %v368
        %v616 = vpop.permute.xlu0 %615
        %619 = vset.pattern.permute.xlu0 0
        %620 = vperm.xlu0 %619, %v369
        %v621 = vpop.permute.xlu0 %620
        %624 = vset.pattern.permute.xlu0 0
        %625 = vperm.xlu0 %624, %v370
        %v626 = vpop.permute.xlu0 %625
        %629 = vset.pattern.permute.xlu0 0
        %630 = vperm.xlu0 %629, %v371
        %v631 = vpop.permute.xlu0 %630
        %634 = vset.pattern.permute.xlu0 0
        %635 = vperm.xlu0 %634, %v372
        %v636 = vpop.permute.xlu0 %635
        %639 = vset.pattern.permute.xlu0 0
        %640 = vperm.xlu0 %639, %v373
        %v641 = vpop.permute.xlu0 %640
        %644 = vset.pattern.permute.xlu0 0
        %645 = vperm.xlu0 %644, %v374
        %v646 = vpop.permute.xlu0 %645
        %649 = vset.pattern.permute.xlu0 0
        %650 = vperm.xlu0 %649, %v375
        %v651 = vpop.permute.xlu0 %650
        %654 = vset.pattern.permute.xlu0 0
        %655 = vperm.xlu0 %654, %v376
        %v656 = vpop.permute.xlu0 %655
        %659 = vset.pattern.permute.xlu0 0
        %660 = vperm.xlu0 %659, %v377
        %v661 = vpop.permute.xlu0 %660
        %664 = vset.pattern.permute.xlu0 0
        %665 = vperm.xlu0 %664, %v378
        %v666 = vpop.permute.xlu0 %665
        %669 = vset.pattern.permute.xlu0 0
        %670 = vperm.xlu0 %669, %v379
        %v671 = vpop.permute.xlu0 %670
        %674 = vset.pattern.permute.xlu0 0
        %675 = vperm.xlu0 %674, %v380
        %v676 = vpop.permute.xlu0 %675
        %679 = vset.pattern.permute.xlu0 0
        %680 = vperm.xlu0 %679, %v381
        %v681 = vpop.permute.xlu0 %680
        %684 = vset.pattern.permute.xlu0 0
        %685 = vperm.xlu0 %684, %v382
        %v686 = vpop.permute.xlu0 %685
        %689 = vset.pattern.permute.xlu0 0
        %690 = vperm.xlu0 %689, %v383
        %v691 = vpop.permute.xlu0 %690
        %694 = vset.pattern.permute.xlu0 0
        %695 = vperm.xlu0 %694, %v384
        %v696 = vpop.permute.xlu0 %695
        %699 = vset.pattern.permute.xlu0 0
        %700 = vperm.xlu0 %699, %v385
        %v701 = vpop.permute.xlu0 %700
        %704 = vset.pattern.permute.xlu0 0
        %705 = vperm.xlu0 %704, %v386
        %v706 = vpop.permute.xlu0 %705
        %709 = vset.pattern.permute.xlu0 0
        %710 = vperm.xlu0 %709, %v387
        %v711 = vpop.permute.xlu0 %710
        %714 = vset.pattern.permute.xlu0 0
        %715 = vperm.xlu0 %714, %v388
        %v716 = vpop.permute.xlu0 %715
        %719 = vset.pattern.permute.xlu0 0
        %720 = vperm.xlu0 %719, %v389
        %v721 = vpop.permute.xlu0 %720
        %724 = vset.pattern.permute.xlu0 0
        %725 = vperm.xlu0 %724, %v390
        %v726 = vpop.permute.xlu0 %725
        %729 = vset.pattern.permute.xlu0 0
        %730 = vperm.xlu0 %729, %v391
        %v731 = vpop.permute.xlu0 %730
        %734 = vset.pattern.permute.xlu0 0
        %735 = vperm.xlu0 %734, %v392
        %v736 = vpop.permute.xlu0 %735
        %739 = vset.pattern.permute.xlu0 0
        %740 = vperm.xlu0 %739, %v393
        %v741 = vpop.permute.xlu0 %740
        %744 = vset.pattern.permute.xlu0 0
        %745 = vperm.xlu0 %744, %v394
        %v746 = vpop.permute.xlu0 %745
        %749 = vset.pattern.permute.xlu0 0
        %750 = vperm.xlu0 %749, %v395
        %v751 = vpop.permute.xlu0 %750
        %754 = vset.pattern.permute.xlu0 0
        %755 = vperm.xlu0 %754, %v396
        %v756 = vpop.permute.xlu0 %755
        %759 = vset.pattern.permute.xlu0 0
        %760 = vperm.xlu0 %759, %v397
        %v761 = vpop.permute.xlu0 %760
        %764 = vset.pattern.permute.xlu0 0
        %765 = vperm.xlu0 %764, %v398
        %v766 = vpop.permute.xlu0 %765
        %769 = vset.pattern.permute.xlu0 0
        %770 = vperm.xlu0 %769, %v399
        %v771 = vpop.permute.xlu0 %770
        %774 = vset.pattern.permute.xlu0 0
        %775 = vperm.xlu0 %774, %v400
        %v776 = vpop.permute.xlu0 %775
        %779 = vset.pattern.permute.xlu0 0
        %780 = vperm.xlu0 %779, %v401
        %v781 = vpop.permute.xlu0 %780
        %784 = vset.pattern.permute.xlu0 0
        %785 = vperm.xlu0 %784, %v402
        %v786 = vpop.permute.xlu0 %785
        %789 = vset.pattern.permute.xlu0 0
        %790 = vperm.xlu0 %789, %v403
        %v791 = vpop.permute.xlu0 %790
        %794 = vset.pattern.permute.xlu0 0
        %795 = vperm.xlu0 %794, %v404
        %v796 = vpop.permute.xlu0 %795
        %799 = vset.pattern.permute.xlu0 0
        %800 = vperm.xlu0 %799, %v405
        %v801 = vpop.permute.xlu0 %800
        %804 = vset.pattern.permute.xlu0 0
        %805 = vperm.xlu0 %804, %v406
        %v806 = vpop.permute.xlu0 %805
        %809 = vset.pattern.permute.xlu0 0
        %810 = vperm.xlu0 %809, %v407
        %v811 = vpop.permute.xlu0 %810
        %814 = vset.pattern.permute.xlu0 0
        %815 = vperm.xlu0 %814, %v408
        %v816 = vpop.permute.xlu0 %815
        %819 = vset.pattern.permute.xlu0 0
        %820 = vperm.xlu0 %819, %v409
        %v821 = vpop.permute.xlu0 %820
        %824 = vset.pattern.permute.xlu0 0
        %825 = vperm.xlu0 %824, %v410
        %v826 = vpop.permute.xlu0 %825
        %829 = vset.pattern.permute.xlu0 0
        %830 = vperm.xlu0 %829, %v411
        %v831 = vpop.permute.xlu0 %830
        %834 = vset.pattern.permute.xlu0 0
        %835 = vperm.xlu0 %834, %v412
        %v836 = vpop.permute.xlu0 %835
        %839 = vset.pattern.permute.xlu0 0
        %840 = vperm.xlu0 %839, %v413
        %v841 = vpop.permute.xlu0 %840
        %844 = vset.pattern.permute.xlu0 0
        %845 = vperm.xlu0 %844, %v414
        %v846 = vpop.permute.xlu0 %845
        %849 = vset.pattern.permute.xlu0 0
        %850 = vperm.xlu0 %849, %v415
        %v851 = vpop.permute.xlu0 %850
        %854 = vset.pattern.permute.xlu0 0
        %855 = vperm.xlu0 %854, %v416
        %v856 = vpop.permute.xlu0 %855
        %859 = vset.pattern.permute.xlu0 0
        %860 = vperm.xlu0 %859, %v417
        %v861 = vpop.permute.xlu0 %860
        %864 = vset.pattern.permute.xlu0 0
        %865 = vperm.xlu0 %864, %v418
        %v866 = vpop.permute.xlu0 %865
        %869 = vset.pattern.permute.xlu0 0
        %870 = vperm.xlu0 %869, %v419
        %v871 = vpop.permute.xlu0 %870
        %874 = vset.pattern.permute.xlu0 0
        %875 = vperm.xlu0 %874, %v420
        %v876 = vpop.permute.xlu0 %875
        %879 = vset.pattern.permute.xlu0 0
        %880 = vperm.xlu0 %879, %v421
        %v881 = vpop.permute.xlu0 %880
        %884 = vset.pattern.permute.xlu0 0
        %885 = vperm.xlu0 %884, %v422
        %v886 = vpop.permute.xlu0 %885
        %889 = vset.pattern.permute.xlu0 0
        %890 = vperm.xlu0 %889, %v423
        %v891 = vpop.permute.xlu0 %890
        %v893 = vperm.slane %v432, 0
        %v894 = vmul.f32 %v436, %v893
        %v895 = vmul.f32 %v441, %v893
        %v896 = vmul.f32 %v446, %v893
        %v897 = vmul.f32 %v451, %v893
        %v898 = vmul.f32 %v456, %v893
        %v899 = vmul.f32 %v461, %v893
        %v900 = vmul.f32 %v466, %v893
        %v901 = vmul.f32 %v471, %v893
        %v902 = vmul.f32 %v476, %v893
        %v903 = vmul.f32 %v481, %v893
        %v904 = vmul.f32 %v486, %v893
        %v905 = vmul.f32 %v491, %v893
        %v906 = vmul.f32 %v496, %v893
        %v907 = vmul.f32 %v501, %v893
        %v908 = vmul.f32 %v506, %v893
        %v909 = vmul.f32 %v511, %v893
        %v910 = vmul.f32 %v516, %v893
        %v911 = vmul.f32 %v521, %v893
        %v912 = vmul.f32 %v526, %v893
        %v913 = vmul.f32 %v531, %v893
        %v914 = vmul.f32 %v536, %v893
        %v915 = vmul.f32 %v541, %v893
        %v916 = vmul.f32 %v546, %v893
        %v917 = vmul.f32 %v551, %v893
        %v918 = vmul.f32 %v556, %v893
        %v919 = vmul.f32 %v561, %v893
        %v920 = vmul.f32 %v566, %v893
        %v921 = vmul.f32 %v571, %v893
        %v922 = vmul.f32 %v576, %v893
        %v923 = vmul.f32 %v581, %v893
        %v924 = vmul.f32 %v586, %v893
        %v925 = vmul.f32 %v591, %v893
        %v926 = vmul.f32 %v596, %v893
        %v927 = vmul.f32 %v601, %v893
        %v928 = vmul.f32 %v606, %v893
        %v929 = vmul.f32 %v611, %v893
        %v930 = vmul.f32 %v616, %v893
        %v931 = vmul.f32 %v621, %v893
        %v932 = vmul.f32 %v626, %v893
        %v933 = vmul.f32 %v631, %v893
        %v934 = vmul.f32 %v636, %v893
        %v935 = vmul.f32 %v641, %v893
        %v936 = vmul.f32 %v646, %v893
        %v937 = vmul.f32 %v651, %v893
        %v938 = vmul.f32 %v656, %v893
        %v939 = vmul.f32 %v661, %v893
        %v940 = vmul.f32 %v666, %v893
        %v941 = vmul.f32 %v671, %v893
        %v942 = vmul.f32 %v676, %v893
        %v943 = vmul.f32 %v681, %v893
        %v944 = vmul.f32 %v686, %v893
        %v945 = vmul.f32 %v691, %v893
        %v946 = vmul.f32 %v696, %v893
        %v947 = vmul.f32 %v701, %v893
        %v948 = vmul.f32 %v706, %v893
        %v949 = vmul.f32 %v711, %v893
        %v950 = vmul.f32 %v716, %v893
        %v951 = vmul.f32 %v721, %v893
        %v952 = vmul.f32 %v726, %v893
        %v953 = vmul.f32 %v731, %v893
        %v954 = vmul.f32 %v736, %v893
        %v955 = vmul.f32 %v741, %v893
        %v956 = vmul.f32 %v746, %v893
        %v957 = vmul.f32 %v751, %v893
        %v958 = vmul.f32 %v756, %v893
        %v959 = vmul.f32 %v761, %v893
        %v960 = vmul.f32 %v766, %v893
        %v961 = vmul.f32 %v771, %v893
        %v962 = vmul.f32 %v776, %v893
        %v963 = vmul.f32 %v781, %v893
        %v964 = vmul.f32 %v786, %v893
        %v965 = vmul.f32 %v791, %v893
        %v966 = vmul.f32 %v796, %v893
        %v967 = vmul.f32 %v801, %v893
        %v968 = vmul.f32 %v806, %v893
        %v969 = vmul.f32 %v811, %v893
        %v970 = vmul.f32 %v816, %v893
        %v971 = vmul.f32 %v821, %v893
        %v972 = vmul.f32 %v826, %v893
        %v973 = vmul.f32 %v831, %v893
        %v974 = vmul.f32 %v836, %v893
        %v975 = vmul.f32 %v841, %v893
        %v976 = vmul.f32 %v846, %v893
        %v977 = vmul.f32 %v851, %v893
        %v978 = vmul.f32 %v856, %v893
        %v979 = vmul.f32 %v861, %v893
        %v980 = vmul.f32 %v866, %v893
        %v981 = vmul.f32 %v871, %v893
        %v982 = vmul.f32 %v876, %v893
        %v983 = vmul.f32 %v881, %v893
        %v984 = vmul.f32 %v886, %v893
        %v985 = vmul.f32 %v891, %v893
        %v986 = vadd.f32 %v894, 0.0
        %v987 = vadd.f32 %v895, 0.0
        %v988 = vadd.f32 %v896, 0.0
        %v989 = vadd.f32 %v897, 0.0
        %v990 = vadd.f32 %v898, 0.0
        %v991 = vadd.f32 %v899, 0.0
        %v992 = vadd.f32 %v900, 0.0
        %v993 = vadd.f32 %v901, 0.0
        %v994 = vadd.f32 %v902, 0.0
        %v995 = vadd.f32 %v903, 0.0
        %v996 = vadd.f32 %v904, 0.0
        %v997 = vadd.f32 %v905, 0.0
        %v998 = vadd.f32 %v906, 0.0
        %v999 = vadd.f32 %v907, 0.0
        %v1000 = vadd.f32 %v908, 0.0
        %v1001 = vadd.f32 %v909, 0.0
        %v1002 = vadd.f32 %v910, 0.0
        %v1003 = vadd.f32 %v911, 0.0
        %v1004 = vadd.f32 %v912, 0.0
        %v1005 = vadd.f32 %v913, 0.0
        %v1006 = vadd.f32 %v914, 0.0
        %v1007 = vadd.f32 %v915, 0.0
        %v1008 = vadd.f32 %v916, 0.0
        %v1009 = vadd.f32 %v917, 0.0
        %v1010 = vadd.f32 %v918, 0.0
        %v1011 = vadd.f32 %v919, 0.0
        %v1012 = vadd.f32 %v920, 0.0
        %v1013 = vadd.f32 %v921, 0.0
        %v1014 = vadd.f32 %v922, 0.0
        %v1015 = vadd.f32 %v923, 0.0
        %v1016 = vadd.f32 %v924, 0.0
        %v1017 = vadd.f32 %v925, 0.0
        %v1018 = vadd.f32 %v926, 0.0
        %v1019 = vadd.f32 %v927, 0.0
        %v1020 = vadd.f32 %v928, 0.0
        %v1021 = vadd.f32 %v929, 0.0
        %v1022 = vadd.f32 %v930, 0.0
        %v1023 = vadd.f32 %v931, 0.0
        %v1024 = vadd.f32 %v932, 0.0
        %v1025 = vadd.f32 %v933, 0.0
        %v1026 = vadd.f32 %v934, 0.0
        %v1027 = vadd.f32 %v935, 0.0
        %v1028 = vadd.f32 %v936, 0.0
        %v1029 = vadd.f32 %v937, 0.0
        %v1030 = vadd.f32 %v938, 0.0
        %v1031 = vadd.f32 %v939, 0.0
        %v1032 = vadd.f32 %v940, 0.0
        %v1033 = vadd.f32 %v941, 0.0
        %v1034 = vadd.f32 %v942, 0.0
        %v1035 = vadd.f32 %v943, 0.0
        %v1036 = vadd.f32 %v944, 0.0
        %v1037 = vadd.f32 %v945, 0.0
        %v1038 = vadd.f32 %v946, 0.0
        %v1039 = vadd.f32 %v947, 0.0
        %v1040 = vadd.f32 %v948, 0.0
        %v1041 = vadd.f32 %v949, 0.0
        %v1042 = vadd.f32 %v950, 0.0
        %v1043 = vadd.f32 %v951, 0.0
        %v1044 = vadd.f32 %v952, 0.0
        %v1045 = vadd.f32 %v953, 0.0
        %v1046 = vadd.f32 %v954, 0.0
        %v1047 = vadd.f32 %v955, 0.0
        %v1048 = vadd.f32 %v956, 0.0
        %v1049 = vadd.f32 %v957, 0.0
        %v1050 = vadd.f32 %v958, 0.0
        %v1051 = vadd.f32 %v959, 0.0
        %v1052 = vadd.f32 %v960, 0.0
        %v1053 = vadd.f32 %v961, 0.0
        %v1054 = vadd.f32 %v962, 0.0
        %v1055 = vadd.f32 %v963, 0.0
        %v1056 = vadd.f32 %v964, 0.0
        %v1057 = vadd.f32 %v965, 0.0
        %v1058 = vadd.f32 %v966, 0.0
        %v1059 = vadd.f32 %v967, 0.0
        %v1060 = vadd.f32 %v968, 0.0
        %v1061 = vadd.f32 %v969, 0.0
        %v1062 = vadd.f32 %v970, 0.0
        %v1063 = vadd.f32 %v971, 0.0
        %v1064 = vadd.f32 %v972, 0.0
        %v1065 = vadd.f32 %v973, 0.0
        %v1066 = vadd.f32 %v974, 0.0
        %v1067 = vadd.f32 %v975, 0.0
        %v1068 = vadd.f32 %v976, 0.0
        %v1069 = vadd.f32 %v977, 0.0
        %v1070 = vadd.f32 %v978, 0.0
        %v1071 = vadd.f32 %v979, 0.0
        %v1072 = vadd.f32 %v980, 0.0
        %v1073 = vadd.f32 %v981, 0.0
        %v1074 = vadd.f32 %v982, 0.0
        %v1075 = vadd.f32 %v983, 0.0
        %v1076 = vadd.f32 %v984, 0.0
        %v1077 = vadd.f32 %v985, 0.0
        %v1078 = vld [vmem:[#allocation2 + $0x1] sm:$0x1]
        %1080 = vset.pattern.permute.xlu0 0
        %1081 = vperm.xlu0 %1080, %v424
        %v1082 = vpop.permute.xlu0 %1081
        %v1084 = vperm.slane %v1078, 0
        %v1085 = vmul.f32 %v436, %v1084
        %v1086 = vmul.f32 %v441, %v1084
        %v1087 = vmul.f32 %v446, %v1084
        %v1088 = vmul.f32 %v451, %v1084
        %v1089 = vmul.f32 %v456, %v1084
        %v1090 = vmul.f32 %v461, %v1084
        %v1091 = vmul.f32 %v466, %v1084
        %v1092 = vmul.f32 %v471, %v1084
        %v1093 = vmul.f32 %v476, %v1084
        %v1094 = vmul.f32 %v481, %v1084
        %v1095 = vmul.f32 %v486, %v1084
        %v1096 = vmul.f32 %v491, %v1084
        %v1097 = vmul.f32 %v496, %v1084
        %v1098 = vmul.f32 %v501, %v1084
        %v1099 = vmul.f32 %v506, %v1084
        %v1100 = vmul.f32 %v511, %v1084
        %v1101 = vmul.f32 %v516, %v1084
        %v1102 = vmul.f32 %v521, %v1084
        %v1103 = vmul.f32 %v526, %v1084
        %v1104 = vmul.f32 %v531, %v1084
        %v1105 = vmul.f32 %v536, %v1084
        %v1106 = vmul.f32 %v541, %v1084
        %v1107 = vmul.f32 %v546, %v1084
        %v1108 = vmul.f32 %v551, %v1084
        %v1109 = vmul.f32 %v556, %v1084
        %v1110 = vmul.f32 %v561, %v1084
        %v1111 = vmul.f32 %v566, %v1084
        %v1112 = vmul.f32 %v571, %v1084
        %v1113 = vmul.f32 %v576, %v1084
        %v1114 = vmul.f32 %v581, %v1084
        %v1115 = vmul.f32 %v586, %v1084
        %v1116 = vmul.f32 %v591, %v1084
        %v1117 = vmul.f32 %v596, %v1084
        %v1118 = vmul.f32 %v601, %v1084
        %v1119 = vmul.f32 %v606, %v1084
        %v1120 = vmul.f32 %v611, %v1084
        %v1121 = vmul.f32 %v616, %v1084
        %v1122 = vmul.f32 %v621, %v1084
        %v1123 = vmul.f32 %v626, %v1084
        %v1124 = vmul.f32 %v631, %v1084
        %v1125 = vmul.f32 %v636, %v1084
        %v1126 = vmul.f32 %v641, %v1084
        %v1127 = vmul.f32 %v646, %v1084
        %v1128 = vmul.f32 %v651, %v1084
        %v1129 = vmul.f32 %v656, %v1084
        %v1130 = vmul.f32 %v661, %v1084
        %v1131 = vmul.f32 %v666, %v1084
        %v1132 = vmul.f32 %v671, %v1084
        %v1133 = vmul.f32 %v676, %v1084
        %v1134 = vmul.f32 %v681, %v1084
        %v1135 = vmul.f32 %v686, %v1084
        %v1136 = vmul.f32 %v691, %v1084
        %v1137 = vmul.f32 %v696, %v1084
        %v1138 = vmul.f32 %v701, %v1084
        %v1139 = vmul.f32 %v706, %v1084
        %v1140 = vmul.f32 %v711, %v1084
        %v1141 = vmul.f32 %v716, %v1084
        %v1142 = vmul.f32 %v721, %v1084
        %v1143 = vmul.f32 %v726, %v1084
        %v1144 = vmul.f32 %v731, %v1084
        %v1145 = vmul.f32 %v736, %v1084
        %v1146 = vmul.f32 %v741, %v1084
        %v1147 = vmul.f32 %v746, %v1084
        %v1148 = vmul.f32 %v751, %v1084
        %v1149 = vmul.f32 %v756, %v1084
        %v1150 = vmul.f32 %v761, %v1084
        %v1151 = vmul.f32 %v766, %v1084
        %v1152 = vmul.f32 %v771, %v1084
        %v1153 = vmul.f32 %v776, %v1084
        %v1154 = vmul.f32 %v781, %v1084
        %v1155 = vmul.f32 %v786, %v1084
        %v1156 = vmul.f32 %v791, %v1084
        %v1157 = vmul.f32 %v796, %v1084
        %v1158 = vmul.f32 %v801, %v1084
        %v1159 = vmul.f32 %v806, %v1084
        %v1160 = vmul.f32 %v811, %v1084
        %v1161 = vmul.f32 %v816, %v1084
        %v1162 = vmul.f32 %v821, %v1084
        %v1163 = vmul.f32 %v826, %v1084
        %v1164 = vmul.f32 %v831, %v1084
        %v1165 = vmul.f32 %v836, %v1084
        %v1166 = vmul.f32 %v841, %v1084
        %v1167 = vmul.f32 %v846, %v1084
        %v1168 = vmul.f32 %v851, %v1084
        %v1169 = vmul.f32 %v856, %v1084
        %v1170 = vmul.f32 %v861, %v1084
        %v1171 = vmul.f32 %v866, %v1084
        %v1172 = vmul.f32 %v871, %v1084
        %v1173 = vmul.f32 %v876, %v1084
        %v1174 = vmul.f32 %v881, %v1084
        %v1175 = vmul.f32 %v886, %v1084
        %v1176 = vmul.f32 %v891, %v1084
        %v1177 = vmul.f32 %v1082, %v1084
        %vm1271 = vcmask 1046528
        %v1272 = vrot.slane %v1085, 1
        %v1273 = vrot.slane %v1086, 1
        %v1274 = vsel %vm1271, %v1272, %v1273
        %v1275 = vrot.slane %v1087, 1
        %v1276 = vsel %vm1271, %v1273, %v1275
        %v1277 = vrot.slane %v1088, 1
        %v1278 = vsel %vm1271, %v1275, %v1277
        %v1279 = vrot.slane %v1089, 1
        %v1280 = vsel %vm1271, %v1277, %v1279
        %v1281 = vrot.slane %v1090, 1
        %v1282 = vsel %vm1271, %v1279, %v1281
        %v1283 = vrot.slane %v1091, 1
        %v1284 = vsel %vm1271, %v1281, %v1283
        %v1285 = vrot.slane %v1092, 1
        %v1286 = vsel %vm1271, %v1283, %v1285
        %v1287 = vrot.slane %v1093, 1
        %v1288 = vsel %vm1271, %v1285, %v1287
        %v1289 = vrot.slane %v1094, 1
        %v1290 = vsel %vm1271, %v1287, %v1289
        %v1291 = vrot.slane %v1095, 1
        %v1292 = vsel %vm1271, %v1289, %v1291
        %v1293 = vrot.slane %v1096, 1
        %v1294 = vsel %vm1271, %v1291, %v1293
        %v1295 = vrot.slane %v1097, 1
        %v1296 = vsel %vm1271, %v1293, %v1295
        %v1297 = vrot.slane %v1098, 1
        %v1298 = vsel %vm1271, %v1295, %v1297
        %v1299 = vrot.slane %v1099, 1
        %v1300 = vsel %vm1271, %v1297, %v1299
        %v1301 = vrot.slane %v1100, 1
        %v1302 = vsel %vm1271, %v1299, %v1301
        %v1303 = vrot.slane %v1101, 1
        %v1304 = vsel %vm1271, %v1301, %v1303
        %v1305 = vrot.slane %v1102, 1
        %v1306 = vsel %vm1271, %v1303, %v1305
        %v1307 = vrot.slane %v1103, 1
        %v1308 = vsel %vm1271, %v1305, %v1307
        %v1309 = vrot.slane %v1104, 1
        %v1310 = vsel %vm1271, %v1307, %v1309
        %v1311 = vrot.slane %v1105, 1
        %v1312 = vsel %vm1271, %v1309, %v1311
        %v1313 = vrot.slane %v1106, 1
        %v1314 = vsel %vm1271, %v1311, %v1313
        %v1315 = vrot.slane %v1107, 1
        %v1316 = vsel %vm1271, %v1313, %v1315
        %v1317 = vrot.slane %v1108, 1
        %v1318 = vsel %vm1271, %v1315, %v1317
        %v1319 = vrot.slane %v1109, 1
        %v1320 = vsel %vm1271, %v1317, %v1319
        %v1321 = vrot.slane %v1110, 1
        %v1322 = vsel %vm1271, %v1319, %v1321
        %v1323 = vrot.slane %v1111, 1
        %v1324 = vsel %vm1271, %v1321, %v1323
        %v1325 = vrot.slane %v1112, 1
        %v1326 = vsel %vm1271, %v1323, %v1325
        %v1327 = vrot.slane %v1113, 1
        %v1328 = vsel %vm1271, %v1325, %v1327
        %v1329 = vrot.slane %v1114, 1
        %v1330 = vsel %vm1271, %v1327, %v1329
        %v1331 = vrot.slane %v1115, 1
        %v1332 = vsel %vm1271, %v1329, %v1331
        %v1333 = vrot.slane %v1116, 1
        %v1334 = vsel %vm1271, %v1331, %v1333
        %v1335 = vrot.slane %v1117, 1
        %v1336 = vsel %vm1271, %v1333, %v1335
        %v1337 = vrot.slane %v1118, 1
        %v1338 = vsel %vm1271, %v1335, %v1337
        %v1339 = vrot.slane %v1119, 1
        %v1340 = vsel %vm1271, %v1337, %v1339
        %v1341 = vrot.slane %v1120, 1
        %v1342 = vsel %vm1271, %v1339, %v1341
        %v1343 = vrot.slane %v1121, 1
        %v1344 = vsel %vm1271, %v1341, %v1343
        %v1345 = vrot.slane %v1122, 1
        %v1346 = vsel %vm1271, %v1343, %v1345
        %v1347 = vrot.slane %v1123, 1
        %v1348 = vsel %vm1271, %v1345, %v1347
        %v1349 = vrot.slane %v1124, 1
        %v1350 = vsel %vm1271, %v1347, %v1349
        %v1351 = vrot.slane %v1125, 1
        %v1352 = vsel %vm1271, %v1349, %v1351
        %v1353 = vrot.slane %v1126, 1
        %v1354 = vsel %vm1271, %v1351, %v1353
        %v1355 = vrot.slane %v1127, 1
        %v1356 = vsel %vm1271, %v1353, %v1355
        %v1357 = vrot.slane %v1128, 1
        %v1358 = vsel %vm1271, %v1355, %v1357
        %v1359 = vrot.slane %v1129, 1
        %v1360 = vsel %vm1271, %v1357, %v1359
        %v1361 = vrot.slane %v1130, 1
        %v1362 = vsel %vm1271, %v1359, %v1361
        %v1363 = vrot.slane %v1131, 1
        %v1364 = vsel %vm1271, %v1361, %v1363
        %v1365 = vrot.slane %v1132, 1
        %v1366 = vsel %vm1271, %v1363, %v1365
        %v1367 = vrot.slane %v1133, 1
        %v1368 = vsel %vm1271, %v1365, %v1367
        %v1369 = vrot.slane %v1134, 1
        %v1370 = vsel %vm1271, %v1367, %v1369
        %v1371 = vrot.slane %v1135, 1
        %v1372 = vsel %vm1271, %v1369, %v1371
        %v1373 = vrot.slane %v1136, 1
        %v1374 = vsel %vm1271, %v1371, %v1373
        %v1375 = vrot.slane %v1137, 1
        %v1376 = vsel %vm1271, %v1373, %v1375
        %v1377 = vrot.slane %v1138, 1
        %v1378 = vsel %vm1271, %v1375, %v1377
        %v1379 = vrot.slane %v1139, 1
        %v1380 = vsel %vm1271, %v1377, %v1379
        %v1381 = vrot.slane %v1140, 1
        %v1382 = vsel %vm1271, %v1379, %v1381
        %v1383 = vrot.slane %v1141, 1
        %v1384 = vsel %vm1271, %v1381, %v1383
        %v1385 = vrot.slane %v1142, 1
        %v1386 = vsel %vm1271, %v1383, %v1385
        %v1387 = vrot.slane %v1143, 1
        %v1388 = vsel %vm1271, %v1385, %v1387
        %v1389 = vrot.slane %v1144, 1
        %v1390 = vsel %vm1271, %v1387, %v1389
        %v1391 = vrot.slane %v1145, 1
        %v1392 = vsel %vm1271, %v1389, %v1391
        %v1393 = vrot.slane %v1146, 1
        %v1394 = vsel %vm1271, %v1391, %v1393
        %v1395 = vrot.slane %v1147, 1
        %v1396 = vsel %vm1271, %v1393, %v1395
        %v1397 = vrot.slane %v1148, 1
        %v1398 = vsel %vm1271, %v1395, %v1397
        %v1399 = vrot.slane %v1149, 1
        %v1400 = vsel %vm1271, %v1397, %v1399
        %v1401 = vrot.slane %v1150, 1
        %v1402 = vsel %vm1271, %v1399, %v1401
        %v1403 = vrot.slane %v1151, 1
        %v1404 = vsel %vm1271, %v1401, %v1403
        %v1405 = vrot.slane %v1152, 1
        %v1406 = vsel %vm1271, %v1403, %v1405
        %v1407 = vrot.slane %v1153, 1
        %v1408 = vsel %vm1271, %v1405, %v1407
        %v1409 = vrot.slane %v1154, 1
        %v1410 = vsel %vm1271, %v1407, %v1409
        %v1411 = vrot.slane %v1155, 1
        %v1412 = vsel %vm1271, %v1409, %v1411
        %v1413 = vrot.slane %v1156, 1
        %v1414 = vsel %vm1271, %v1411, %v1413
        %v1415 = vrot.slane %v1157, 1
        %v1416 = vsel %vm1271, %v1413, %v1415
        %v1417 = vrot.slane %v1158, 1
        %v1418 = vsel %vm1271, %v1415, %v1417
        %v1419 = vrot.slane %v1159, 1
        %v1420 = vsel %vm1271, %v1417, %v1419
        %v1421 = vrot.slane %v1160, 1
        %v1422 = vsel %vm1271, %v1419, %v1421
        %v1423 = vrot.slane %v1161, 1
        %v1424 = vsel %vm1271, %v1421, %v1423
        %v1425 = vrot.slane %v1162, 1
        %v1426 = vsel %vm1271, %v1423, %v1425
        %v1427 = vrot.slane %v1163, 1
        %v1428 = vsel %vm1271, %v1425, %v1427
        %v1429 = vrot.slane %v1164, 1
        %v1430 = vsel %vm1271, %v1427, %v1429
        %v1431 = vrot.slane %v1165, 1
        %v1432 = vsel %vm1271, %v1429, %v1431
        %v1433 = vrot.slane %v1166, 1
        %v1434 = vsel %vm1271, %v1431, %v1433
        %v1435 = vrot.slane %v1167, 1
        %v1436 = vsel %vm1271, %v1433, %v1435
        %v1437 = vrot.slane %v1168, 1
        %v1438 = vsel %vm1271, %v1435, %v1437
        %v1439 = vrot.slane %v1169, 1
        %v1440 = vsel %vm1271, %v1437, %v1439
        %v1441 = vrot.slane %v1170, 1
        %v1442 = vsel %vm1271, %v1439, %v1441
        %v1443 = vrot.slane %v1171, 1
        %v1444 = vsel %vm1271, %v1441, %v1443
        %v1445 = vrot.slane %v1172, 1
        %v1446 = vsel %vm1271, %v1443, %v1445
        %v1447 = vrot.slane %v1173, 1
        %v1448 = vsel %vm1271, %v1445, %v1447
        %v1449 = vrot.slane %v1174, 1
        %v1450 = vsel %vm1271, %v1447, %v1449
        %v1451 = vrot.slane %v1175, 1
        %v1452 = vsel %vm1271, %v1449, %v1451
        %v1453 = vrot.slane %v1176, 1
        %v1454 = vsel %vm1271, %v1451, %v1453
        %v1455 = vrot.slane %v1177, 1
        %v1456 = vsel %vm1271, %v1453, %v1455
        %v1549 = vadd.f32 %v986, %v1274
        %v1550 = vadd.f32 %v987, %v1276
        %v1551 = vadd.f32 %v988, %v1278
        %v1552 = vadd.f32 %v989, %v1280
        %v1553 = vadd.f32 %v990, %v1282
        %v1554 = vadd.f32 %v991, %v1284
        %v1555 = vadd.f32 %v992, %v1286
        %v1556 = vadd.f32 %v993, %v1288
        %v1557 = vadd.f32 %v994, %v1290
        %v1558 = vadd.f32 %v995, %v1292
        %v1559 = vadd.f32 %v996, %v1294
        %v1560 = vadd.f32 %v997, %v1296
        %v1561 = vadd.f32 %v998, %v1298
        %v1562 = vadd.f32 %v999, %v1300
        %v1563 = vadd.f32 %v1000, %v1302
        %v1564 = vadd.f32 %v1001, %v1304
        %v1565 = vadd.f32 %v1002, %v1306
        %v1566 = vadd.f32 %v1003, %v1308
        %v1567 = vadd.f32 %v1004, %v1310
        %v1568 = vadd.f32 %v1005, %v1312
        %v1569 = vadd.f32 %v1006, %v1314
        %v1570 = vadd.f32 %v1007, %v1316
        %v1571 = vadd.f32 %v1008, %v1318
        %v1572 = vadd.f32 %v1009, %v1320
        %v1573 = vadd.f32 %v1010, %v1322
        %v1574 = vadd.f32 %v1011, %v1324
        %v1575 = vadd.f32 %v1012, %v1326
        %v1576 = vadd.f32 %v1013, %v1328
        %v1577 = vadd.f32 %v1014, %v1330
        %v1578 = vadd.f32 %v1015, %v1332
        %v1579 = vadd.f32 %v1016, %v1334
        %v1580 = vadd.f32 %v1017, %v1336
        %v1581 = vadd.f32 %v1018, %v1338
        %v1582 = vadd.f32 %v1019, %v1340
        %v1583 = vadd.f32 %v1020, %v1342
        %v1584 = vadd.f32 %v1021, %v1344
        %v1585 = vadd.f32 %v1022, %v1346
        %v1586 = vadd.f32 %v1023, %v1348
        %v1587 = vadd.f32 %v1024, %v1350
        %v1588 = vadd.f32 %v1025, %v1352
        %v1589 = vadd.f32 %v1026, %v1354
        %v1590 = vadd.f32 %v1027, %v1356
        %v1591 = vadd.f32 %v1028, %v1358
        %v1592 = vadd.f32 %v1029, %v1360
        %v1593 = vadd.f32 %v1030, %v1362
        %v1594 = vadd.f32 %v1031, %v1364
        %v1595 = vadd.f32 %v1032, %v1366
        %v1596 = vadd.f32 %v1033, %v1368
        %v1597 = vadd.f32 %v1034, %v1370
        %v1598 = vadd.f32 %v1035, %v1372
        %v1599 = vadd.f32 %v1036, %v1374
        %v1600 = vadd.f32 %v1037, %v1376
        %v1601 = vadd.f32 %v1038, %v1378
        %v1602 = vadd.f32 %v1039, %v1380
        %v1603 = vadd.f32 %v1040, %v1382
        %v1604 = vadd.f32 %v1041, %v1384
        %v1605 = vadd.f32 %v1042, %v1386
        %v1606 = vadd.f32 %v1043, %v1388
        %v1607 = vadd.f32 %v1044, %v1390
        %v1608 = vadd.f32 %v1045, %v1392
        %v1609 = vadd.f32 %v1046, %v1394
        %v1610 = vadd.f32 %v1047, %v1396
        %v1611 = vadd.f32 %v1048, %v1398
        %v1612 = vadd.f32 %v1049, %v1400
        %v1613 = vadd.f32 %v1050, %v1402
        %v1614 = vadd.f32 %v1051, %v1404
        %v1615 = vadd.f32 %v1052, %v1406
        %v1616 = vadd.f32 %v1053, %v1408
        %v1617 = vadd.f32 %v1054, %v1410
        %v1618 = vadd.f32 %v1055, %v1412
        %v1619 = vadd.f32 %v1056, %v1414
        %v1620 = vadd.f32 %v1057, %v1416
        %v1621 = vadd.f32 %v1058, %v1418
        %v1622 = vadd.f32 %v1059, %v1420
        %v1623 = vadd.f32 %v1060, %v1422
        %v1624 = vadd.f32 %v1061, %v1424
        %v1625 = vadd.f32 %v1062, %v1426
        %v1626 = vadd.f32 %v1063, %v1428
        %v1627 = vadd.f32 %v1064, %v1430
        %v1628 = vadd.f32 %v1065, %v1432
        %v1629 = vadd.f32 %v1066, %v1434
        %v1630 = vadd.f32 %v1067, %v1436
        %v1631 = vadd.f32 %v1068, %v1438
        %v1632 = vadd.f32 %v1069, %v1440
        %v1633 = vadd.f32 %v1070, %v1442
        %v1634 = vadd.f32 %v1071, %v1444
        %v1635 = vadd.f32 %v1072, %v1446
        %v1636 = vadd.f32 %v1073, %v1448
        %v1637 = vadd.f32 %v1074, %v1450
        %v1638 = vadd.f32 %v1075, %v1452
        %v1639 = vadd.f32 %v1076, %v1454
        %v1640 = vadd.f32 %v1077, %v1456
        %v1641 = vld [vmem:[#allocation2 + $0x2] sm:$0x1]
        %v1642 = vperm.slane %v1641, 0
        %v1643 = vmul.f32 %v436, %v1642
        %v1644 = vmul.f32 %v441, %v1642
        %v1645 = vmul.f32 %v446, %v1642
        %v1646 = vmul.f32 %v451, %v1642
        %v1647 = vmul.f32 %v456, %v1642
        %v1648 = vmul.f32 %v461, %v1642
        %v1649 = vmul.f32 %v466, %v1642
        %v1650 = vmul.f32 %v471, %v1642
        %v1651 = vmul.f32 %v476, %v1642
        %v1652 = vmul.f32 %v481, %v1642
        %v1653 = vmul.f32 %v486, %v1642
        %v1654 = vmul.f32 %v491, %v1642
        %v1655 = vmul.f32 %v496, %v1642
        %v1656 = vmul.f32 %v501, %v1642
        %v1657 = vmul.f32 %v506, %v1642
        %v1658 = vmul.f32 %v511, %v1642
        %v1659 = vmul.f32 %v516, %v1642
        %v1660 = vmul.f32 %v521, %v1642
        %v1661 = vmul.f32 %v526, %v1642
        %v1662 = vmul.f32 %v531, %v1642
        %v1663 = vmul.f32 %v536, %v1642
        %v1664 = vmul.f32 %v541, %v1642
        %v1665 = vmul.f32 %v546, %v1642
        %v1666 = vmul.f32 %v551, %v1642
        %v1667 = vmul.f32 %v556, %v1642
        %v1668 = vmul.f32 %v561, %v1642
        %v1669 = vmul.f32 %v566, %v1642
        %v1670 = vmul.f32 %v571, %v1642
        %v1671 = vmul.f32 %v576, %v1642
        %v1672 = vmul.f32 %v581, %v1642
        %v1673 = vmul.f32 %v586, %v1642
        %v1674 = vmul.f32 %v591, %v1642
        %v1675 = vmul.f32 %v596, %v1642
        %v1676 = vmul.f32 %v601, %v1642
        %v1677 = vmul.f32 %v606, %v1642
        %v1678 = vmul.f32 %v611, %v1642
        %v1679 = vmul.f32 %v616, %v1642
        %v1680 = vmul.f32 %v621, %v1642
        %v1681 = vmul.f32 %v626, %v1642
        %v1682 = vmul.f32 %v631, %v1642
        %v1683 = vmul.f32 %v636, %v1642
        %v1684 = vmul.f32 %v641, %v1642
        %v1685 = vmul.f32 %v646, %v1642
        %v1686 = vmul.f32 %v651, %v1642
        %v1687 = vmul.f32 %v656, %v1642
        %v1688 = vmul.f32 %v661, %v1642
        %v1689 = vmul.f32 %v666, %v1642
        %v1690 = vmul.f32 %v671, %v1642
        %v1691 = vmul.f32 %v676, %v1642
        %v1692 = vmul.f32 %v681, %v1642
        %v1693 = vmul.f32 %v686, %v1642
        %v1694 = vmul.f32 %v691, %v1642
        %v1695 = vmul.f32 %v696, %v1642
        %v1696 = vmul.f32 %v701, %v1642
        %v1697 = vmul.f32 %v706, %v1642
        %v1698 = vmul.f32 %v711, %v1642
        %v1699 = vmul.f32 %v716, %v1642
        %v1700 = vmul.f32 %v721, %v1642
        %v1701 = vmul.f32 %v726, %v1642
        %v1702 = vmul.f32 %v731, %v1642
        %v1703 = vmul.f32 %v736, %v1642
        %v1704 = vmul.f32 %v741, %v1642
        %v1705 = vmul.f32 %v746, %v1642
        %v1706 = vmul.f32 %v751, %v1642
        %v1707 = vmul.f32 %v756, %v1642
        %v1708 = vmul.f32 %v761, %v1642
        %v1709 = vmul.f32 %v766, %v1642
        %v1710 = vmul.f32 %v771, %v1642
        %v1711 = vmul.f32 %v776, %v1642
        %v1712 = vmul.f32 %v781, %v1642
        %v1713 = vmul.f32 %v786, %v1642
        %v1714 = vmul.f32 %v791, %v1642
        %v1715 = vmul.f32 %v796, %v1642
        %v1716 = vmul.f32 %v801, %v1642
        %v1717 = vmul.f32 %v806, %v1642
        %v1718 = vmul.f32 %v811, %v1642
        %v1719 = vmul.f32 %v816, %v1642
        %v1720 = vmul.f32 %v821, %v1642
        %v1721 = vmul.f32 %v826, %v1642
        %v1722 = vmul.f32 %v831, %v1642
        %v1723 = vmul.f32 %v836, %v1642
        %v1724 = vmul.f32 %v841, %v1642
        %v1725 = vmul.f32 %v846, %v1642
        %v1726 = vmul.f32 %v851, %v1642
        %v1727 = vmul.f32 %v856, %v1642
        %v1728 = vmul.f32 %v861, %v1642
        %v1729 = vmul.f32 %v866, %v1642
        %v1730 = vmul.f32 %v871, %v1642
        %v1731 = vmul.f32 %v876, %v1642
        %v1732 = vmul.f32 %v881, %v1642
        %v1733 = vmul.f32 %v886, %v1642
        %v1734 = vmul.f32 %v891, %v1642
        %v1735 = vmul.f32 %v1082, %v1642
        %vm1829 = vcmask 1045504
        %v1830 = vrot.slane %v1643, 2
        %v1831 = vrot.slane %v1644, 2
        %v1832 = vsel %vm1829, %v1830, %v1831
        %v1833 = vrot.slane %v1645, 2
        %v1834 = vsel %vm1829, %v1831, %v1833
        %v1835 = vrot.slane %v1646, 2
        %v1836 = vsel %vm1829, %v1833, %v1835
        %v1837 = vrot.slane %v1647, 2
        %v1838 = vsel %vm1829, %v1835, %v1837
        %v1839 = vrot.slane %v1648, 2
        %v1840 = vsel %vm1829, %v1837, %v1839
        %v1841 = vrot.slane %v1649, 2
        %v1842 = vsel %vm1829, %v1839, %v1841
        %v1843 = vrot.slane %v1650, 2
        %v1844 = vsel %vm1829, %v1841, %v1843
        %v1845 = vrot.slane %v1651, 2
        %v1846 = vsel %vm1829, %v1843, %v1845
        %v1847 = vrot.slane %v1652, 2
        %v1848 = vsel %vm1829, %v1845, %v1847
        %v1849 = vrot.slane %v1653, 2
        %v1850 = vsel %vm1829, %v1847, %v1849
        %v1851 = vrot.slane %v1654, 2
        %v1852 = vsel %vm1829, %v1849, %v1851
        %v1853 = vrot.slane %v1655, 2
        %v1854 = vsel %vm1829, %v1851, %v1853
        %v1855 = vrot.slane %v1656, 2
        %v1856 = vsel %vm1829, %v1853, %v1855
        %v1857 = vrot.slane %v1657, 2
        %v1858 = vsel %vm1829, %v1855, %v1857
        %v1859 = vrot.slane %v1658, 2
        %v1860 = vsel %vm1829, %v1857, %v1859
        %v1861 = vrot.slane %v1659, 2
        %v1862 = vsel %vm1829, %v1859, %v1861
        %v1863 = vrot.slane %v1660, 2
        %v1864 = vsel %vm1829, %v1861, %v1863
        %v1865 = vrot.slane %v1661, 2
        %v1866 = vsel %vm1829, %v1863, %v1865
        %v1867 = vrot.slane %v1662, 2
        %v1868 = vsel %vm1829, %v1865, %v1867
        %v1869 = vrot.slane %v1663, 2
        %v1870 = vsel %vm1829, %v1867, %v1869
        %v1871 = vrot.slane %v1664, 2
        %v1872 = vsel %vm1829, %v1869, %v1871
        %v1873 = vrot.slane %v1665, 2
        %v1874 = vsel %vm1829, %v1871, %v1873
        %v1875 = vrot.slane %v1666, 2
        %v1876 = vsel %vm1829, %v1873, %v1875
        %v1877 = vrot.slane %v1667, 2
        %v1878 = vsel %vm1829, %v1875, %v1877
        %v1879 = vrot.slane %v1668, 2
        %v1880 = vsel %vm1829, %v1877, %v1879
        %v1881 = vrot.slane %v1669, 2
        %v1882 = vsel %vm1829, %v1879, %v1881
        %v1883 = vrot.slane %v1670, 2
        %v1884 = vsel %vm1829, %v1881, %v1883
        %v1885 = vrot.slane %v1671, 2
        %v1886 = vsel %vm1829, %v1883, %v1885
        %v1887 = vrot.slane %v1672, 2
        %v1888 = vsel %vm1829, %v1885, %v1887
        %v1889 = vrot.slane %v1673, 2
        %v1890 = vsel %vm1829, %v1887, %v1889
        %v1891 = vrot.slane %v1674, 2
        %v1892 = vsel %vm1829, %v1889, %v1891
        %v1893 = vrot.slane %v1675, 2
        %v1894 = vsel %vm1829, %v1891, %v1893
        %v1895 = vrot.slane %v1676, 2
        %v1896 = vsel %vm1829, %v1893, %v1895
        %v1897 = vrot.slane %v1677, 2
        %v1898 = vsel %vm1829, %v1895, %v1897
        %v1899 = vrot.slane %v1678, 2
        %v1900 = vsel %vm1829, %v1897, %v1899
        %v1901 = vrot.slane %v1679, 2
        %v1902 = vsel %vm1829, %v1899, %v1901
        %v1903 = vrot.slane %v1680, 2
        %v1904 = vsel %vm1829, %v1901, %v1903
        %v1905 = vrot.slane %v1681, 2
        %v1906 = vsel %vm1829, %v1903, %v1905
        %v1907 = vrot.slane %v1682, 2
        %v1908 = vsel %vm1829, %v1905, %v1907
        %v1909 = vrot.slane %v1683, 2
        %v1910 = vsel %vm1829, %v1907, %v1909
        %v1911 = vrot.slane %v1684, 2
        %v1912 = vsel %vm1829, %v1909, %v1911
        %v1913 = vrot.slane %v1685, 2
        %v1914 = vsel %vm1829, %v1911, %v1913
        %v1915 = vrot.slane %v1686, 2
        %v1916 = vsel %vm1829, %v1913, %v1915
        %v1917 = vrot.slane %v1687, 2
        %v1918 = vsel %vm1829, %v1915, %v1917
        %v1919 = vrot.slane %v1688, 2
        %v1920 = vsel %vm1829, %v1917, %v1919
        %v1921 = vrot.slane %v1689, 2
        %v1922 = vsel %vm1829, %v1919, %v1921
        %v1923 = vrot.slane %v1690, 2
        %v1924 = vsel %vm1829, %v1921, %v1923
        %v1925 = vrot.slane %v1691, 2
        %v1926 = vsel %vm1829, %v1923, %v1925
        %v1927 = vrot.slane %v1692, 2
        %v1928 = vsel %vm1829, %v1925, %v1927
        %v1929 = vrot.slane %v1693, 2
        %v1930 = vsel %vm1829, %v1927, %v1929
        %v1931 = vrot.slane %v1694, 2
        %v1932 = vsel %vm1829, %v1929, %v1931
        %v1933 = vrot.slane %v1695, 2
        %v1934 = vsel %vm1829, %v1931, %v1933
        %v1935 = vrot.slane %v1696, 2
        %v1936 = vsel %vm1829, %v1933, %v1935
        %v1937 = vrot.slane %v1697, 2
        %v1938 = vsel %vm1829, %v1935, %v1937
        %v1939 = vrot.slane %v1698, 2
        %v1940 = vsel %vm1829, %v1937, %v1939
        %v1941 = vrot.slane %v1699, 2
        %v1942 = vsel %vm1829, %v1939, %v1941
        %v1943 = vrot.slane %v1700, 2
        %v1944 = vsel %vm1829, %v1941, %v1943
        %v1945 = vrot.slane %v1701, 2
        %v1946 = vsel %vm1829, %v1943, %v1945
        %v1947 = vrot.slane %v1702, 2
        %v1948 = vsel %vm1829, %v1945, %v1947
        %v1949 = vrot.slane %v1703, 2
        %v1950 = vsel %vm1829, %v1947, %v1949
        %v1951 = vrot.slane %v1704, 2
        %v1952 = vsel %vm1829, %v1949, %v1951
        %v1953 = vrot.slane %v1705, 2
        %v1954 = vsel %vm1829, %v1951, %v1953
        %v1955 = vrot.slane %v1706, 2
        %v1956 = vsel %vm1829, %v1953, %v1955
        %v1957 = vrot.slane %v1707, 2
        %v1958 = vsel %vm1829, %v1955, %v1957
        %v1959 = vrot.slane %v1708, 2
        %v1960 = vsel %vm1829, %v1957, %v1959
        %v1961 = vrot.slane %v1709, 2
        %v1962 = vsel %vm1829, %v1959, %v1961
        %v1963 = vrot.slane %v1710, 2
        %v1964 = vsel %vm1829, %v1961, %v1963
        %v1965 = vrot.slane %v1711, 2
        %v1966 = vsel %vm1829, %v1963, %v1965
        %v1967 = vrot.slane %v1712, 2
        %v1968 = vsel %vm1829, %v1965, %v1967
        %v1969 = vrot.slane %v1713, 2
        %v1970 = vsel %vm1829, %v1967, %v1969
        %v1971 = vrot.slane %v1714, 2
        %v1972 = vsel %vm1829, %v1969, %v1971
        %v1973 = vrot.slane %v1715, 2
        %v1974 = vsel %vm1829, %v1971, %v1973
        %v1975 = vrot.slane %v1716, 2
        %v1976 = vsel %vm1829, %v1973, %v1975
        %v1977 = vrot.slane %v1717, 2
        %v1978 = vsel %vm1829, %v1975, %v1977
        %v1979 = vrot.slane %v1718, 2
        %v1980 = vsel %vm1829, %v1977, %v1979
        %v1981 = vrot.slane %v1719, 2
        %v1982 = vsel %vm1829, %v1979, %v1981
        %v1983 = vrot.slane %v1720, 2
        %v1984 = vsel %vm1829, %v1981, %v1983
        %v1985 = vrot.slane %v1721, 2
        %v1986 = vsel %vm1829, %v1983, %v1985
        %v1987 = vrot.slane %v1722, 2
        %v1988 = vsel %vm1829, %v1985, %v1987
        %v1989 = vrot.slane %v1723, 2
        %v1990 = vsel %vm1829, %v1987, %v1989
        %v1991 = vrot.slane %v1724, 2
        %v1992 = vsel %vm1829, %v1989, %v1991
        %v1993 = vrot.slane %v1725, 2
        %v1994 = vsel %vm1829, %v1991, %v1993
        %v1995 = vrot.slane %v1726, 2
        %v1996 = vsel %vm1829, %v1993, %v1995
        %v1997 = vrot.slane %v1727, 2
        %v1998 = vsel %vm1829, %v1995, %v1997
        %v1999 = vrot.slane %v1728, 2
        %v2000 = vsel %vm1829, %v1997, %v1999
        %v2001 = vrot.slane %v1729, 2
        %v2002 = vsel %vm1829, %v1999, %v2001
        %v2003 = vrot.slane %v1730, 2
        %v2004 = vsel %vm1829, %v2001, %v2003
        %v2005 = vrot.slane %v1731, 2
        %v2006 = vsel %vm1829, %v2003, %v2005
        %v2007 = vrot.slane %v1732, 2
        %v2008 = vsel %vm1829, %v2005, %v2007
        %v2009 = vrot.slane %v1733, 2
        %v2010 = vsel %vm1829, %v2007, %v2009
        %v2011 = vrot.slane %v1734, 2
        %v2012 = vsel %vm1829, %v2009, %v2011
        %v2013 = vrot.slane %v1735, 2
        %v2014 = vsel %vm1829, %v2011, %v2013
        %v2107 = vadd.f32 %v1549, %v1832
        %v2108 = vadd.f32 %v1550, %v1834
        %v2109 = vadd.f32 %v1551, %v1836
        %v2110 = vadd.f32 %v1552, %v1838
        %v2111 = vadd.f32 %v1553, %v1840
        %v2112 = vadd.f32 %v1554, %v1842
        %v2113 = vadd.f32 %v1555, %v1844
        %v2114 = vadd.f32 %v1556, %v1846
        %v2115 = vadd.f32 %v1557, %v1848
        %v2116 = vadd.f32 %v1558, %v1850
        %v2117 = vadd.f32 %v1559, %v1852
        %v2118 = vadd.f32 %v1560, %v1854
        %v2119 = vadd.f32 %v1561, %v1856
        %v2120 = vadd.f32 %v1562, %v1858
        %v2121 = vadd.f32 %v1563, %v1860
        %v2122 = vadd.f32 %v1564, %v1862
        %v2123 = vadd.f32 %v1565, %v1864
        %v2124 = vadd.f32 %v1566, %v1866
        %v2125 = vadd.f32 %v1567, %v1868
        %v2126 = vadd.f32 %v1568, %v1870
        %v2127 = vadd.f32 %v1569, %v1872
        %v2128 = vadd.f32 %v1570, %v1874
        %v2129 = vadd.f32 %v1571, %v1876
        %v2130 = vadd.f32 %v1572, %v1878
        %v2131 = vadd.f32 %v1573, %v1880
        %v2132 = vadd.f32 %v1574, %v1882
        %v2133 = vadd.f32 %v1575, %v1884
        %v2134 = vadd.f32 %v1576, %v1886
        %v2135 = vadd.f32 %v1577, %v1888
        %v2136 = vadd.f32 %v1578, %v1890
        %v2137 = vadd.f32 %v1579, %v1892
        %v2138 = vadd.f32 %v1580, %v1894
        %v2139 = vadd.f32 %v1581, %v1896
        %v2140 = vadd.f32 %v1582, %v1898
        %v2141 = vadd.f32 %v1583, %v1900
        %v2142 = vadd.f32 %v1584, %v1902
        %v2143 = vadd.f32 %v1585, %v1904
        %v2144 = vadd.f32 %v1586, %v1906
        %v2145 = vadd.f32 %v1587, %v1908
        %v2146 = vadd.f32 %v1588, %v1910
        %v2147 = vadd.f32 %v1589, %v1912
        %v2148 = vadd.f32 %v1590, %v1914
        %v2149 = vadd.f32 %v1591, %v1916
        %v2150 = vadd.f32 %v1592, %v1918
        %v2151 = vadd.f32 %v1593, %v1920
        %v2152 = vadd.f32 %v1594, %v1922
        %v2153 = vadd.f32 %v1595, %v1924
        %v2154 = vadd.f32 %v1596, %v1926
        %v2155 = vadd.f32 %v1597, %v1928
        %v2156 = vadd.f32 %v1598, %v1930
        %v2157 = vadd.f32 %v1599, %v1932
        %v2158 = vadd.f32 %v1600, %v1934
        %v2159 = vadd.f32 %v1601, %v1936
        %v2160 = vadd.f32 %v1602, %v1938
        %v2161 = vadd.f32 %v1603, %v1940
        %v2162 = vadd.f32 %v1604, %v1942
        %v2163 = vadd.f32 %v1605, %v1944
        %v2164 = vadd.f32 %v1606, %v1946
        %v2165 = vadd.f32 %v1607, %v1948
        %v2166 = vadd.f32 %v1608, %v1950
        %v2167 = vadd.f32 %v1609, %v1952
        %v2168 = vadd.f32 %v1610, %v1954
        %v2169 = vadd.f32 %v1611, %v1956
        %v2170 = vadd.f32 %v1612, %v1958
        %v2171 = vadd.f32 %v1613, %v1960
        %v2172 = vadd.f32 %v1614, %v1962
        %v2173 = vadd.f32 %v1615, %v1964
        %v2174 = vadd.f32 %v1616, %v1966
        %v2175 = vadd.f32 %v1617, %v1968
        %v2176 = vadd.f32 %v1618, %v1970
        %v2177 = vadd.f32 %v1619, %v1972
        %v2178 = vadd.f32 %v1620, %v1974
        %v2179 = vadd.f32 %v1621, %v1976
        %v2180 = vadd.f32 %v1622, %v1978
        %v2181 = vadd.f32 %v1623, %v1980
        %v2182 = vadd.f32 %v1624, %v1982
        %v2183 = vadd.f32 %v1625, %v1984
        %v2184 = vadd.f32 %v1626, %v1986
        %v2185 = vadd.f32 %v1627, %v1988
        %v2186 = vadd.f32 %v1628, %v1990
        %v2187 = vadd.f32 %v1629, %v1992
        %v2188 = vadd.f32 %v1630, %v1994
        %v2189 = vadd.f32 %v1631, %v1996
        %v2190 = vadd.f32 %v1632, %v1998
        %v2191 = vadd.f32 %v1633, %v2000
        %v2192 = vadd.f32 %v1634, %v2002
        %v2193 = vadd.f32 %v1635, %v2004
        %v2194 = vadd.f32 %v1636, %v2006
        %v2195 = vadd.f32 %v1637, %v2008
        %v2196 = vadd.f32 %v1638, %v2010
        %v2197 = vadd.f32 %v1639, %v2012
        %v2198 = vadd.f32 %v1640, %v2014
        %v2199 = vld [vmem:[#allocation2 + $0x3] sm:$0x1]
        %2201 = vset.pattern.permute.xlu0 0
        %2202 = vperm.xlu0 %2201, %v425
        %v2203 = vpop.permute.xlu0 %2202
        %2206 = vset.pattern.permute.xlu0 0
        %2207 = vperm.xlu0 %2206, %v426
        %v2208 = vpop.permute.xlu0 %2207
        %2211 = vset.pattern.permute.xlu0 0
        %2212 = vperm.xlu0 %2211, %v427
        %v2213 = vpop.permute.xlu0 %2212
        %v2215 = vperm.slane %v2199, 0
        %v2216 = vmul.f32 %v451, %v2215
        %v2217 = vmul.f32 %v456, %v2215
        %v2218 = vmul.f32 %v461, %v2215
        %v2219 = vmul.f32 %v466, %v2215
        %v2220 = vmul.f32 %v471, %v2215
        %v2221 = vmul.f32 %v476, %v2215
        %v2222 = vmul.f32 %v481, %v2215
        %v2223 = vmul.f32 %v486, %v2215
        %v2224 = vmul.f32 %v491, %v2215
        %v2225 = vmul.f32 %v496, %v2215
        %v2226 = vmul.f32 %v501, %v2215
        %v2227 = vmul.f32 %v506, %v2215
        %v2228 = vmul.f32 %v511, %v2215
        %v2229 = vmul.f32 %v516, %v2215
        %v2230 = vmul.f32 %v521, %v2215
        %v2231 = vmul.f32 %v526, %v2215
        %v2232 = vmul.f32 %v531, %v2215
        %v2233 = vmul.f32 %v536, %v2215
        %v2234 = vmul.f32 %v541, %v2215
        %v2235 = vmul.f32 %v546, %v2215
        %v2236 = vmul.f32 %v551, %v2215
        %v2237 = vmul.f32 %v556, %v2215
        %v2238 = vmul.f32 %v561, %v2215
        %v2239 = vmul.f32 %v566, %v2215
        %v2240 = vmul.f32 %v571, %v2215
        %v2241 = vmul.f32 %v576, %v2215
        %v2242 = vmul.f32 %v581, %v2215
        %v2243 = vmul.f32 %v586, %v2215
        %v2244 = vmul.f32 %v591, %v2215
        %v2245 = vmul.f32 %v596, %v2215
        %v2246 = vmul.f32 %v601, %v2215
        %v2247 = vmul.f32 %v606, %v2215
        %v2248 = vmul.f32 %v611, %v2215
        %v2249 = vmul.f32 %v616, %v2215
        %v2250 = vmul.f32 %v621, %v2215
        %v2251 = vmul.f32 %v626, %v2215
        %v2252 = vmul.f32 %v631, %v2215
        %v2253 = vmul.f32 %v636, %v2215
        %v2254 = vmul.f32 %v641, %v2215
        %v2255 = vmul.f32 %v646, %v2215
        %v2256 = vmul.f32 %v651, %v2215
        %v2257 = vmul.f32 %v656, %v2215
        %v2258 = vmul.f32 %v661, %v2215
        %v2259 = vmul.f32 %v666, %v2215
        %v2260 = vmul.f32 %v671, %v2215
        %v2261 = vmul.f32 %v676, %v2215
        %v2262 = vmul.f32 %v681, %v2215
        %v2263 = vmul.f32 %v686, %v2215
        %v2264 = vmul.f32 %v691, %v2215
        %v2265 = vmul.f32 %v696, %v2215
        %v2266 = vmul.f32 %v701, %v2215
        %v2267 = vmul.f32 %v706, %v2215
        %v2268 = vmul.f32 %v711, %v2215
        %v2269 = vmul.f32 %v716, %v2215
        %v2270 = vmul.f32 %v721, %v2215
        %v2271 = vmul.f32 %v726, %v2215
        %v2272 = vmul.f32 %v731, %v2215
        %v2273 = vmul.f32 %v736, %v2215
        %v2274 = vmul.f32 %v741, %v2215
        %v2275 = vmul.f32 %v746, %v2215
        %v2276 = vmul.f32 %v751, %v2215
        %v2277 = vmul.f32 %v756, %v2215
        %v2278 = vmul.f32 %v761, %v2215
        %v2279 = vmul.f32 %v766, %v2215
        %v2280 = vmul.f32 %v771, %v2215
        %v2281 = vmul.f32 %v776, %v2215
        %v2282 = vmul.f32 %v781, %v2215
        %v2283 = vmul.f32 %v786, %v2215
        %v2284 = vmul.f32 %v791, %v2215
        %v2285 = vmul.f32 %v796, %v2215
        %v2286 = vmul.f32 %v801, %v2215
        %v2287 = vmul.f32 %v806, %v2215
        %v2288 = vmul.f32 %v811, %v2215
        %v2289 = vmul.f32 %v816, %v2215
        %v2290 = vmul.f32 %v821, %v2215
        %v2291 = vmul.f32 %v826, %v2215
        %v2292 = vmul.f32 %v831, %v2215
        %v2293 = vmul.f32 %v836, %v2215
        %v2294 = vmul.f32 %v841, %v2215
        %v2295 = vmul.f32 %v846, %v2215
        %v2296 = vmul.f32 %v851, %v2215
        %v2297 = vmul.f32 %v856, %v2215
        %v2298 = vmul.f32 %v861, %v2215
        %v2299 = vmul.f32 %v866, %v2215
        %v2300 = vmul.f32 %v871, %v2215
        %v2301 = vmul.f32 %v876, %v2215
        %v2302 = vmul.f32 %v881, %v2215
        %v2303 = vmul.f32 %v886, %v2215
        %v2304 = vmul.f32 %v891, %v2215
        %v2305 = vmul.f32 %v1082, %v2215
        %v2306 = vmul.f32 %v2203, %v2215
        %v2307 = vmul.f32 %v2208, %v2215
        %v2308 = vmul.f32 %v2213, %v2215
        %vm2402 = vcmask 1043456
        %v2403 = vrot.slane %v2216, 4
        %v2404 = vrot.slane %v2217, 4
        %v2405 = vsel %vm2402, %v2403, %v2404
        %v2406 = vrot.slane %v2218, 4
        %v2407 = vsel %vm2402, %v2404, %v2406
        %v2408 = vrot.slane %v2219, 4
        %v2409 = vsel %vm2402, %v2406, %v2408
        %v2410 = vrot.slane %v2220, 4
        %v2411 = vsel %vm2402, %v2408, %v2410
        %v2412 = vrot.slane %v2221, 4
        %v2413 = vsel %vm2402, %v2410, %v2412
        %v2414 = vrot.slane %v2222, 4
        %v2415 = vsel %vm2402, %v2412, %v2414
        %v2416 = vrot.slane %v2223, 4
        %v2417 = vsel %vm2402, %v2414, %v2416
        %v2418 = vrot.slane %v2224, 4
        %v2419 = vsel %vm2402, %v2416, %v2418
        %v2420 = vrot.slane %v2225, 4
        %v2421 = vsel %vm2402, %v2418, %v2420
        %v2422 = vrot.slane %v2226, 4
        %v2423 = vsel %vm2402, %v2420, %v2422
        %v2424 = vrot.slane %v2227, 4
        %v2425 = vsel %vm2402, %v2422, %v2424
        %v2426 = vrot.slane %v2228, 4
        %v2427 = vsel %vm2402, %v2424, %v2426
        %v2428 = vrot.slane %v2229, 4
        %v2429 = vsel %vm2402, %v2426, %v2428
        %v2430 = vrot.slane %v2230, 4
        %v2431 = vsel %vm2402, %v2428, %v2430
        %v2432 = vrot.slane %v2231, 4
        %v2433 = vsel %vm2402, %v2430, %v2432
        %v2434 = vrot.slane %v2232, 4
        %v2435 = vsel %vm2402, %v2432, %v2434
        %v2436 = vrot.slane %v2233, 4
        %v2437 = vsel %vm2402, %v2434, %v2436
        %v2438 = vrot.slane %v2234, 4
        %v2439 = vsel %vm2402, %v2436, %v2438
        %v2440 = vrot.slane %v2235, 4
        %v2441 = vsel %vm2402, %v2438, %v2440
        %v2442 = vrot.slane %v2236, 4
        %v2443 = vsel %vm2402, %v2440, %v2442
        %v2444 = vrot.slane %v2237, 4
        %v2445 = vsel %vm2402, %v2442, %v2444
        %v2446 = vrot.slane %v2238, 4
        %v2447 = vsel %vm2402, %v2444, %v2446
        %v2448 = vrot.slane %v2239, 4
        %v2449 = vsel %vm2402, %v2446, %v2448
        %v2450 = vrot.slane %v2240, 4
        %v2451 = vsel %vm2402, %v2448, %v2450
        %v2452 = vrot.slane %v2241, 4
        %v2453 = vsel %vm2402, %v2450, %v2452
        %v2454 = vrot.slane %v2242, 4
        %v2455 = vsel %vm2402, %v2452, %v2454
        %v2456 = vrot.slane %v2243, 4
        %v2457 = vsel %vm2402, %v2454, %v2456
        %v2458 = vrot.slane %v2244, 4
        %v2459 = vsel %vm2402, %v2456, %v2458
        %v2460 = vrot.slane %v2245, 4
        %v2461 = vsel %vm2402, %v2458, %v2460
        %v2462 = vrot.slane %v2246, 4
        %v2463 = vsel %vm2402, %v2460, %v2462
        %v2464 = vrot.slane %v2247, 4
        %v2465 = vsel %vm2402, %v2462, %v2464
        %v2466 = vrot.slane %v2248, 4
        %v2467 = vsel %vm2402, %v2464, %v2466
        %v2468 = vrot.slane %v2249, 4
        %v2469 = vsel %vm2402, %v2466, %v2468
        %v2470 = vrot.slane %v2250, 4
        %v2471 = vsel %vm2402, %v2468, %v2470
        %v2472 = vrot.slane %v2251, 4
        %v2473 = vsel %vm2402, %v2470, %v2472
        %v2474 = vrot.slane %v2252, 4
        %v2475 = vsel %vm2402, %v2472, %v2474
        %v2476 = vrot.slane %v2253, 4
        %v2477 = vsel %vm2402, %v2474, %v2476
        %v2478 = vrot.slane %v2254, 4
        %v2479 = vsel %vm2402, %v2476, %v2478
        %v2480 = vrot.slane %v2255, 4
        %v2481 = vsel %vm2402, %v2478, %v2480
        %v2482 = vrot.slane %v2256, 4
        %v2483 = vsel %vm2402, %v2480, %v2482
        %v2484 = vrot.slane %v2257, 4
        %v2485 = vsel %vm2402, %v2482, %v2484
        %v2486 = vrot.slane %v2258, 4
        %v2487 = vsel %vm2402, %v2484, %v2486
        %v2488 = vrot.slane %v2259, 4
        %v2489 = vsel %vm2402, %v2486, %v2488
        %v2490 = vrot.slane %v2260, 4
        %v2491 = vsel %vm2402, %v2488, %v2490
        %v2492 = vrot.slane %v2261, 4
        %v2493 = vsel %vm2402, %v2490, %v2492
        %v2494 = vrot.slane %v2262, 4
        %v2495 = vsel %vm2402, %v2492, %v2494
        %v2496 = vrot.slane %v2263, 4
        %v2497 = vsel %vm2402, %v2494, %v2496
        %v2498 = vrot.slane %v2264, 4
        %v2499 = vsel %vm2402, %v2496, %v2498
        %v2500 = vrot.slane %v2265, 4
        %v2501 = vsel %vm2402, %v2498, %v2500
        %v2502 = vrot.slane %v2266, 4
        %v2503 = vsel %vm2402, %v2500, %v2502
        %v2504 = vrot.slane %v2267, 4
        %v2505 = vsel %vm2402, %v2502, %v2504
        %v2506 = vrot.slane %v2268, 4
        %v2507 = vsel %vm2402, %v2504, %v2506
        %v2508 = vrot.slane %v2269, 4
        %v2509 = vsel %vm2402, %v2506, %v2508
        %v2510 = vrot.slane %v2270, 4
        %v2511 = vsel %vm2402, %v2508, %v2510
        %v2512 = vrot.slane %v2271, 4
        %v2513 = vsel %vm2402, %v2510, %v2512
        %v2514 = vrot.slane %v2272, 4
        %v2515 = vsel %vm2402, %v2512, %v2514
        %v2516 = vrot.slane %v2273, 4
        %v2517 = vsel %vm2402, %v2514, %v2516
        %v2518 = vrot.slane %v2274, 4
        %v2519 = vsel %vm2402, %v2516, %v2518
        %v2520 = vrot.slane %v2275, 4
        %v2521 = vsel %vm2402, %v2518, %v2520
        %v2522 = vrot.slane %v2276, 4
        %v2523 = vsel %vm2402, %v2520, %v2522
        %v2524 = vrot.slane %v2277, 4
        %v2525 = vsel %vm2402, %v2522, %v2524
        %v2526 = vrot.slane %v2278, 4
        %v2527 = vsel %vm2402, %v2524, %v2526
        %v2528 = vrot.slane %v2279, 4
        %v2529 = vsel %vm2402, %v2526, %v2528
        %v2530 = vrot.slane %v2280, 4
        %v2531 = vsel %vm2402, %v2528, %v2530
        %v2532 = vrot.slane %v2281, 4
        %v2533 = vsel %vm2402, %v2530, %v2532
        %v2534 = vrot.slane %v2282, 4
        %v2535 = vsel %vm2402, %v2532, %v2534
        %v2536 = vrot.slane %v2283, 4
        %v2537 = vsel %vm2402, %v2534, %v2536
        %v2538 = vrot.slane %v2284, 4
        %v2539 = vsel %vm2402, %v2536, %v2538
        %v2540 = vrot.slane %v2285, 4
        %v2541 = vsel %vm2402, %v2538, %v2540
        %v2542 = vrot.slane %v2286, 4
        %v2543 = vsel %vm2402, %v2540, %v2542
        %v2544 = vrot.slane %v2287, 4
        %v2545 = vsel %vm2402, %v2542, %v2544
        %v2546 = vrot.slane %v2288, 4
        %v2547 = vsel %vm2402, %v2544, %v2546
        %v2548 = vrot.slane %v2289, 4
        %v2549 = vsel %vm2402, %v2546, %v2548
        %v2550 = vrot.slane %v2290, 4
        %v2551 = vsel %vm2402, %v2548, %v2550
        %v2552 = vrot.slane %v2291, 4
        %v2553 = vsel %vm2402, %v2550, %v2552
        %v2554 = vrot.slane %v2292, 4
        %v2555 = vsel %vm2402, %v2552, %v2554
        %v2556 = vrot.slane %v2293, 4
        %v2557 = vsel %vm2402, %v2554, %v2556
        %v2558 = vrot.slane %v2294, 4
        %v2559 = vsel %vm2402, %v2556, %v2558
        %v2560 = vrot.slane %v2295, 4
        %v2561 = vsel %vm2402, %v2558, %v2560
        %v2562 = vrot.slane %v2296, 4
        %v2563 = vsel %vm2402, %v2560, %v2562
        %v2564 = vrot.slane %v2297, 4
        %v2565 = vsel %vm2402, %v2562, %v2564
        %v2566 = vrot.slane %v2298, 4
        %v2567 = vsel %vm2402, %v2564, %v2566
        %v2568 = vrot.slane %v2299, 4
        %v2569 = vsel %vm2402, %v2566, %v2568
        %v2570 = vrot.slane %v2300, 4
        %v2571 = vsel %vm2402, %v2568, %v2570
        %v2572 = vrot.slane %v2301, 4
        %v2573 = vsel %vm2402, %v2570, %v2572
        %v2574 = vrot.slane %v2302, 4
        %v2575 = vsel %vm2402, %v2572, %v2574
        %v2576 = vrot.slane %v2303, 4
        %v2577 = vsel %vm2402, %v2574, %v2576
        %v2578 = vrot.slane %v2304, 4
        %v2579 = vsel %vm2402, %v2576, %v2578
        %v2580 = vrot.slane %v2305, 4
        %v2581 = vsel %vm2402, %v2578, %v2580
        %v2582 = vrot.slane %v2306, 4
        %v2583 = vsel %vm2402, %v2580, %v2582
        %v2584 = vrot.slane %v2307, 4
        %v2585 = vsel %vm2402, %v2582, %v2584
        %v2586 = vrot.slane %v2308, 4
        %v2587 = vsel %vm2402, %v2584, %v2586
        %v2680 = vadd.f32 %v2107, %v2405
        %v2681 = vadd.f32 %v2108, %v2407
        %v2682 = vadd.f32 %v2109, %v2409
        %v2683 = vadd.f32 %v2110, %v2411
        %v2684 = vadd.f32 %v2111, %v2413
        %v2685 = vadd.f32 %v2112, %v2415
        %v2686 = vadd.f32 %v2113, %v2417
        %v2687 = vadd.f32 %v2114, %v2419
        %v2688 = vadd.f32 %v2115, %v2421
        %v2689 = vadd.f32 %v2116, %v2423
        %v2690 = vadd.f32 %v2117, %v2425
        %v2691 = vadd.f32 %v2118, %v2427
        %v2692 = vadd.f32 %v2119, %v2429
        %v2693 = vadd.f32 %v2120, %v2431
        %v2694 = vadd.f32 %v2121, %v2433
        %v2695 = vadd.f32 %v2122, %v2435
        %v2696 = vadd.f32 %v2123, %v2437
        %v2697 = vadd.f32 %v2124, %v2439
        %v2698 = vadd.f32 %v2125, %v2441
        %v2699 = vadd.f32 %v2126, %v2443
        %v2700 = vadd.f32 %v2127, %v2445
        %v2701 = vadd.f32 %v2128, %v2447
        %v2702 = vadd.f32 %v2129, %v2449
        %v2703 = vadd.f32 %v2130, %v2451
        %v2704 = vadd.f32 %v2131, %v2453
        %v2705 = vadd.f32 %v2132, %v2455
        %v2706 = vadd.f32 %v2133, %v2457
        %v2707 = vadd.f32 %v2134, %v2459
        %v2708 = vadd.f32 %v2135, %v2461
        %v2709 = vadd.f32 %v2136, %v2463
        %v2710 = vadd.f32 %v2137, %v2465
        %v2711 = vadd.f32 %v2138, %v2467
        %v2712 = vadd.f32 %v2139, %v2469
        %v2713 = vadd.f32 %v2140, %v2471
        %v2714 = vadd.f32 %v2141, %v2473
        %v2715 = vadd.f32 %v2142, %v2475
        %v2716 = vadd.f32 %v2143, %v2477
        %v2717 = vadd.f32 %v2144, %v2479
        %v2718 = vadd.f32 %v2145, %v2481
        %v2719 = vadd.f32 %v2146, %v2483
        %v2720 = vadd.f32 %v2147, %v2485
        %v2721 = vadd.f32 %v2148, %v2487
        %v2722 = vadd.f32 %v2149, %v2489
        %v2723 = vadd.f32 %v2150, %v2491
        %v2724 = vadd.f32 %v2151, %v2493
        %v2725 = vadd.f32 %v2152, %v2495
        %v2726 = vadd.f32 %v2153, %v2497
        %v2727 = vadd.f32 %v2154, %v2499
        %v2728 = vadd.f32 %v2155, %v2501
        %v2729 = vadd.f32 %v2156, %v2503
        %v2730 = vadd.f32 %v2157, %v2505
        %v2731 = vadd.f32 %v2158, %v2507
        %v2732 = vadd.f32 %v2159, %v2509
        %v2733 = vadd.f32 %v2160, %v2511
        %v2734 = vadd.f32 %v2161, %v2513
        %v2735 = vadd.f32 %v2162, %v2515
        %v2736 = vadd.f32 %v2163, %v2517
        %v2737 = vadd.f32 %v2164, %v2519
        %v2738 = vadd.f32 %v2165, %v2521
        %v2739 = vadd.f32 %v2166, %v2523
        %v2740 = vadd.f32 %v2167, %v2525
        %v2741 = vadd.f32 %v2168, %v2527
        %v2742 = vadd.f32 %v2169, %v2529
        %v2743 = vadd.f32 %v2170, %v2531
        %v2744 = vadd.f32 %v2171, %v2533
        %v2745 = vadd.f32 %v2172, %v2535
        %v2746 = vadd.f32 %v2173, %v2537
        %v2747 = vadd.f32 %v2174, %v2539
        %v2748 = vadd.f32 %v2175, %v2541
        %v2749 = vadd.f32 %v2176, %v2543
        %v2750 = vadd.f32 %v2177, %v2545
        %v2751 = vadd.f32 %v2178, %v2547
        %v2752 = vadd.f32 %v2179, %v2549
        %v2753 = vadd.f32 %v2180, %v2551
        %v2754 = vadd.f32 %v2181, %v2553
        %v2755 = vadd.f32 %v2182, %v2555
        %v2756 = vadd.f32 %v2183, %v2557
        %v2757 = vadd.f32 %v2184, %v2559
        %v2758 = vadd.f32 %v2185, %v2561
        %v2759 = vadd.f32 %v2186, %v2563
        %v2760 = vadd.f32 %v2187, %v2565
        %v2761 = vadd.f32 %v2188, %v2567
        %v2762 = vadd.f32 %v2189, %v2569
        %v2763 = vadd.f32 %v2190, %v2571
        %v2764 = vadd.f32 %v2191, %v2573
        %v2765 = vadd.f32 %v2192, %v2575
        %v2766 = vadd.f32 %v2193, %v2577
        %v2767 = vadd.f32 %v2194, %v2579
        %v2768 = vadd.f32 %v2195, %v2581
        %v2769 = vadd.f32 %v2196, %v2583
        %v2770 = vadd.f32 %v2197, %v2585
        %v2771 = vadd.f32 %v2198, %v2587
        %v2772 = vld [vmem:[#allocation2 + $0x4] sm:$0x1]
        %v2773 = vperm.slane %v2772, 0
        %v2774 = vmul.f32 %v451, %v2773
        %v2775 = vmul.f32 %v456, %v2773
        %v2776 = vmul.f32 %v461, %v2773
        %v2777 = vmul.f32 %v466, %v2773
        %v2778 = vmul.f32 %v471, %v2773
        %v2779 = vmul.f32 %v476, %v2773
        %v2780 = vmul.f32 %v481, %v2773
        %v2781 = vmul.f32 %v486, %v2773
        %v2782 = vmul.f32 %v491, %v2773
        %v2783 = vmul.f32 %v496, %v2773
        %v2784 = vmul.f32 %v501, %v2773
        %v2785 = vmul.f32 %v506, %v2773
        %v2786 = vmul.f32 %v511, %v2773
        %v2787 = vmul.f32 %v516, %v2773
        %v2788 = vmul.f32 %v521, %v2773
        %v2789 = vmul.f32 %v526, %v2773
        %v2790 = vmul.f32 %v531, %v2773
        %v2791 = vmul.f32 %v536, %v2773
        %v2792 = vmul.f32 %v541, %v2773
        %v2793 = vmul.f32 %v546, %v2773
        %v2794 = vmul.f32 %v551, %v2773
        %v2795 = vmul.f32 %v556, %v2773
        %v2796 = vmul.f32 %v561, %v2773
        %v2797 = vmul.f32 %v566, %v2773
        %v2798 = vmul.f32 %v571, %v2773
        %v2799 = vmul.f32 %v576, %v2773
        %v2800 = vmul.f32 %v581, %v2773
        %v2801 = vmul.f32 %v586, %v2773
        %v2802 = vmul.f32 %v591, %v2773
        %v2803 = vmul.f32 %v596, %v2773
        %v2804 = vmul.f32 %v601, %v2773
        %v2805 = vmul.f32 %v606, %v2773
        %v2806 = vmul.f32 %v611, %v2773
        %v2807 = vmul.f32 %v616, %v2773
        %v2808 = vmul.f32 %v621, %v2773
        %v2809 = vmul.f32 %v626, %v2773
        %v2810 = vmul.f32 %v631, %v2773
        %v2811 = vmul.f32 %v636, %v2773
        %v2812 = vmul.f32 %v641, %v2773
        %v2813 = vmul.f32 %v646, %v2773
        %v2814 = vmul.f32 %v651, %v2773
        %v2815 = vmul.f32 %v656, %v2773
        %v2816 = vmul.f32 %v661, %v2773
        %v2817 = vmul.f32 %v666, %v2773
        %v2818 = vmul.f32 %v671, %v2773
        %v2819 = vmul.f32 %v676, %v2773
        %v2820 = vmul.f32 %v681, %v2773
        %v2821 = vmul.f32 %v686, %v2773
        %v2822 = vmul.f32 %v691, %v2773
        %v2823 = vmul.f32 %v696, %v2773
        %v2824 = vmul.f32 %v701, %v2773
        %v2825 = vmul.f32 %v706, %v2773
        %v2826 = vmul.f32 %v711, %v2773
        %v2827 = vmul.f32 %v716, %v2773
        %v2828 = vmul.f32 %v721, %v2773
        %v2829 = vmul.f32 %v726, %v2773
        %v2830 = vmul.f32 %v731, %v2773
        %v2831 = vmul.f32 %v736, %v2773
        %v2832 = vmul.f32 %v741, %v2773
        %v2833 = vmul.f32 %v746, %v2773
        %v2834 = vmul.f32 %v751, %v2773
        %v2835 = vmul.f32 %v756, %v2773
        %v2836 = vmul.f32 %v761, %v2773
        %v2837 = vmul.f32 %v766, %v2773
        %v2838 = vmul.f32 %v771, %v2773
        %v2839 = vmul.f32 %v776, %v2773
        %v2840 = vmul.f32 %v781, %v2773
        %v2841 = vmul.f32 %v786, %v2773
        %v2842 = vmul.f32 %v791, %v2773
        %v2843 = vmul.f32 %v796, %v2773
        %v2844 = vmul.f32 %v801, %v2773
        %v2845 = vmul.f32 %v806, %v2773
        %v2846 = vmul.f32 %v811, %v2773
        %v2847 = vmul.f32 %v816, %v2773
        %v2848 = vmul.f32 %v821, %v2773
        %v2849 = vmul.f32 %v826, %v2773
        %v2850 = vmul.f32 %v831, %v2773
        %v2851 = vmul.f32 %v836, %v2773
        %v2852 = vmul.f32 %v841, %v2773
        %v2853 = vmul.f32 %v846, %v2773
        %v2854 = vmul.f32 %v851, %v2773
        %v2855 = vmul.f32 %v856, %v2773
        %v2856 = vmul.f32 %v861, %v2773
        %v2857 = vmul.f32 %v866, %v2773
        %v2858 = vmul.f32 %v871, %v2773
        %v2859 = vmul.f32 %v876, %v2773
        %v2860 = vmul.f32 %v881, %v2773
        %v2861 = vmul.f32 %v886, %v2773
        %v2862 = vmul.f32 %v891, %v2773
        %v2863 = vmul.f32 %v1082, %v2773
        %v2864 = vmul.f32 %v2203, %v2773
        %v2865 = vmul.f32 %v2208, %v2773
        %v2866 = vmul.f32 %v2213, %v2773
        %vm2960 = vcmask 1042432
        %v2961 = vrot.slane %v2774, 5
        %v2962 = vrot.slane %v2775, 5
        %v2963 = vsel %vm2960, %v2961, %v2962
        %v2964 = vrot.slane %v2776, 5
        %v2965 = vsel %vm2960, %v2962, %v2964
        %v2966 = vrot.slane %v2777, 5
        %v2967 = vsel %vm2960, %v2964, %v2966
        %v2968 = vrot.slane %v2778, 5
        %v2969 = vsel %vm2960, %v2966, %v2968
        %v2970 = vrot.slane %v2779, 5
        %v2971 = vsel %vm2960, %v2968, %v2970
        %v2972 = vrot.slane %v2780, 5
        %v2973 = vsel %vm2960, %v2970, %v2972
        %v2974 = vrot.slane %v2781, 5
        %v2975 = vsel %vm2960, %v2972, %v2974
        %v2976 = vrot.slane %v2782, 5
        %v2977 = vsel %vm2960, %v2974, %v2976
        %v2978 = vrot.slane %v2783, 5
        %v2979 = vsel %vm2960, %v2976, %v2978
        %v2980 = vrot.slane %v2784, 5
        %v2981 = vsel %vm2960, %v2978, %v2980
        %v2982 = vrot.slane %v2785, 5
        %v2983 = vsel %vm2960, %v2980, %v2982
        %v2984 = vrot.slane %v2786, 5
        %v2985 = vsel %vm2960, %v2982, %v2984
        %v2986 = vrot.slane %v2787, 5
        %v2987 = vsel %vm2960, %v2984, %v2986
        %v2988 = vrot.slane %v2788, 5
        %v2989 = vsel %vm2960, %v2986, %v2988
        %v2990 = vrot.slane %v2789, 5
        %v2991 = vsel %vm2960, %v2988, %v2990
        %v2992 = vrot.slane %v2790, 5
        %v2993 = vsel %vm2960, %v2990, %v2992
        %v2994 = vrot.slane %v2791, 5
        %v2995 = vsel %vm2960, %v2992, %v2994
        %v2996 = vrot.slane %v2792, 5
        %v2997 = vsel %vm2960, %v2994, %v2996
        %v2998 = vrot.slane %v2793, 5
        %v2999 = vsel %vm2960, %v2996, %v2998
        %v3000 = vrot.slane %v2794, 5
        %v3001 = vsel %vm2960, %v2998, %v3000
        %v3002 = vrot.slane %v2795, 5
        %v3003 = vsel %vm2960, %v3000, %v3002
        %v3004 = vrot.slane %v2796, 5
        %v3005 = vsel %vm2960, %v3002, %v3004
        %v3006 = vrot.slane %v2797, 5
        %v3007 = vsel %vm2960, %v3004, %v3006
        %v3008 = vrot.slane %v2798, 5
        %v3009 = vsel %vm2960, %v3006, %v3008
        %v3010 = vrot.slane %v2799, 5
        %v3011 = vsel %vm2960, %v3008, %v3010
        %v3012 = vrot.slane %v2800, 5
        %v3013 = vsel %vm2960, %v3010, %v3012
        %v3014 = vrot.slane %v2801, 5
        %v3015 = vsel %vm2960, %v3012, %v3014
        %v3016 = vrot.slane %v2802, 5
        %v3017 = vsel %vm2960, %v3014, %v3016
        %v3018 = vrot.slane %v2803, 5
        %v3019 = vsel %vm2960, %v3016, %v3018
        %v3020 = vrot.slane %v2804, 5
        %v3021 = vsel %vm2960, %v3018, %v3020
        %v3022 = vrot.slane %v2805, 5
        %v3023 = vsel %vm2960, %v3020, %v3022
        %v3024 = vrot.slane %v2806, 5
        %v3025 = vsel %vm2960, %v3022, %v3024
        %v3026 = vrot.slane %v2807, 5
        %v3027 = vsel %vm2960, %v3024, %v3026
        %v3028 = vrot.slane %v2808, 5
        %v3029 = vsel %vm2960, %v3026, %v3028
        %v3030 = vrot.slane %v2809, 5
        %v3031 = vsel %vm2960, %v3028, %v3030
        %v3032 = vrot.slane %v2810, 5
        %v3033 = vsel %vm2960, %v3030, %v3032
        %v3034 = vrot.slane %v2811, 5
        %v3035 = vsel %vm2960, %v3032, %v3034
        %v3036 = vrot.slane %v2812, 5
        %v3037 = vsel %vm2960, %v3034, %v3036
        %v3038 = vrot.slane %v2813, 5
        %v3039 = vsel %vm2960, %v3036, %v3038
        %v3040 = vrot.slane %v2814, 5
        %v3041 = vsel %vm2960, %v3038, %v3040
        %v3042 = vrot.slane %v2815, 5
        %v3043 = vsel %vm2960, %v3040, %v3042
        %v3044 = vrot.slane %v2816, 5
        %v3045 = vsel %vm2960, %v3042, %v3044
        %v3046 = vrot.slane %v2817, 5
        %v3047 = vsel %vm2960, %v3044, %v3046
        %v3048 = vrot.slane %v2818, 5
        %v3049 = vsel %vm2960, %v3046, %v3048
        %v3050 = vrot.slane %v2819, 5
        %v3051 = vsel %vm2960, %v3048, %v3050
        %v3052 = vrot.slane %v2820, 5
        %v3053 = vsel %vm2960, %v3050, %v3052
        %v3054 = vrot.slane %v2821, 5
        %v3055 = vsel %vm2960, %v3052, %v3054
        %v3056 = vrot.slane %v2822, 5
        %v3057 = vsel %vm2960, %v3054, %v3056
        %v3058 = vrot.slane %v2823, 5
        %v3059 = vsel %vm2960, %v3056, %v3058
        %v3060 = vrot.slane %v2824, 5
        %v3061 = vsel %vm2960, %v3058, %v3060
        %v3062 = vrot.slane %v2825, 5
        %v3063 = vsel %vm2960, %v3060, %v3062
        %v3064 = vrot.slane %v2826, 5
        %v3065 = vsel %vm2960, %v3062, %v3064
        %v3066 = vrot.slane %v2827, 5
        %v3067 = vsel %vm2960, %v3064, %v3066
        %v3068 = vrot.slane %v2828, 5
        %v3069 = vsel %vm2960, %v3066, %v3068
        %v3070 = vrot.slane %v2829, 5
        %v3071 = vsel %vm2960, %v3068, %v3070
        %v3072 = vrot.slane %v2830, 5
        %v3073 = vsel %vm2960, %v3070, %v3072
        %v3074 = vrot.slane %v2831, 5
        %v3075 = vsel %vm2960, %v3072, %v3074
        %v3076 = vrot.slane %v2832, 5
        %v3077 = vsel %vm2960, %v3074, %v3076
        %v3078 = vrot.slane %v2833, 5
        %v3079 = vsel %vm2960, %v3076, %v3078
        %v3080 = vrot.slane %v2834, 5
        %v3081 = vsel %vm2960, %v3078, %v3080
        %v3082 = vrot.slane %v2835, 5
        %v3083 = vsel %vm2960, %v3080, %v3082
        %v3084 = vrot.slane %v2836, 5
        %v3085 = vsel %vm2960, %v3082, %v3084
        %v3086 = vrot.slane %v2837, 5
        %v3087 = vsel %vm2960, %v3084, %v3086
        %v3088 = vrot.slane %v2838, 5
        %v3089 = vsel %vm2960, %v3086, %v3088
        %v3090 = vrot.slane %v2839, 5
        %v3091 = vsel %vm2960, %v3088, %v3090
        %v3092 = vrot.slane %v2840, 5
        %v3093 = vsel %vm2960, %v3090, %v3092
        %v3094 = vrot.slane %v2841, 5
        %v3095 = vsel %vm2960, %v3092, %v3094
        %v3096 = vrot.slane %v2842, 5
        %v3097 = vsel %vm2960, %v3094, %v3096
        %v3098 = vrot.slane %v2843, 5
        %v3099 = vsel %vm2960, %v3096, %v3098
        %v3100 = vrot.slane %v2844, 5
        %v3101 = vsel %vm2960, %v3098, %v3100
        %v3102 = vrot.slane %v2845, 5
        %v3103 = vsel %vm2960, %v3100, %v3102
        %v3104 = vrot.slane %v2846, 5
        %v3105 = vsel %vm2960, %v3102, %v3104
        %v3106 = vrot.slane %v2847, 5
        %v3107 = vsel %vm2960, %v3104, %v3106
        %v3108 = vrot.slane %v2848, 5
        %v3109 = vsel %vm2960, %v3106, %v3108
        %v3110 = vrot.slane %v2849, 5
        %v3111 = vsel %vm2960, %v3108, %v3110
        %v3112 = vrot.slane %v2850, 5
        %v3113 = vsel %vm2960, %v3110, %v3112
        %v3114 = vrot.slane %v2851, 5
        %v3115 = vsel %vm2960, %v3112, %v3114
        %v3116 = vrot.slane %v2852, 5
        %v3117 = vsel %vm2960, %v3114, %v3116
        %v3118 = vrot.slane %v2853, 5
        %v3119 = vsel %vm2960, %v3116, %v3118
        %v3120 = vrot.slane %v2854, 5
        %v3121 = vsel %vm2960, %v3118, %v3120
        %v3122 = vrot.slane %v2855, 5
        %v3123 = vsel %vm2960, %v3120, %v3122
        %v3124 = vrot.slane %v2856, 5
        %v3125 = vsel %vm2960, %v3122, %v3124
        %v3126 = vrot.slane %v2857, 5
        %v3127 = vsel %vm2960, %v3124, %v3126
        %v3128 = vrot.slane %v2858, 5
        %v3129 = vsel %vm2960, %v3126, %v3128
        %v3130 = vrot.slane %v2859, 5
        %v3131 = vsel %vm2960, %v3128, %v3130
        %v3132 = vrot.slane %v2860, 5
        %v3133 = vsel %vm2960, %v3130, %v3132
        %v3134 = vrot.slane %v2861, 5
        %v3135 = vsel %vm2960, %v3132, %v3134
        %v3136 = vrot.slane %v2862, 5
        %v3137 = vsel %vm2960, %v3134, %v3136
        %v3138 = vrot.slane %v2863, 5
        %v3139 = vsel %vm2960, %v3136, %v3138
        %v3140 = vrot.slane %v2864, 5
        %v3141 = vsel %vm2960, %v3138, %v3140
        %v3142 = vrot.slane %v2865, 5
        %v3143 = vsel %vm2960, %v3140, %v3142
        %v3144 = vrot.slane %v2866, 5
        %v3145 = vsel %vm2960, %v3142, %v3144
        %v3238 = vadd.f32 %v2680, %v2963
        %v3239 = vadd.f32 %v2681, %v2965
        %v3240 = vadd.f32 %v2682, %v2967
        %v3241 = vadd.f32 %v2683, %v2969
        %v3242 = vadd.f32 %v2684, %v2971
        %v3243 = vadd.f32 %v2685, %v2973
        %v3244 = vadd.f32 %v2686, %v2975
        %v3245 = vadd.f32 %v2687, %v2977
        %v3246 = vadd.f32 %v2688, %v2979
        %v3247 = vadd.f32 %v2689, %v2981
        %v3248 = vadd.f32 %v2690, %v2983
        %v3249 = vadd.f32 %v2691, %v2985
        %v3250 = vadd.f32 %v2692, %v2987
        %v3251 = vadd.f32 %v2693, %v2989
        %v3252 = vadd.f32 %v2694, %v2991
        %v3253 = vadd.f32 %v2695, %v2993
        %v3254 = vadd.f32 %v2696, %v2995
        %v3255 = vadd.f32 %v2697, %v2997
        %v3256 = vadd.f32 %v2698, %v2999
        %v3257 = vadd.f32 %v2699, %v3001
        %v3258 = vadd.f32 %v2700, %v3003
        %v3259 = vadd.f32 %v2701, %v3005
        %v3260 = vadd.f32 %v2702, %v3007
        %v3261 = vadd.f32 %v2703, %v3009
        %v3262 = vadd.f32 %v2704, %v3011
        %v3263 = vadd.f32 %v2705, %v3013
        %v3264 = vadd.f32 %v2706, %v3015
        %v3265 = vadd.f32 %v2707, %v3017
        %v3266 = vadd.f32 %v2708, %v3019
        %v3267 = vadd.f32 %v2709, %v3021
        %v3268 = vadd.f32 %v2710, %v3023
        %v3269 = vadd.f32 %v2711, %v3025
        %v3270 = vadd.f32 %v2712, %v3027
        %v3271 = vadd.f32 %v2713, %v3029
        %v3272 = vadd.f32 %v2714, %v3031
        %v3273 = vadd.f32 %v2715, %v3033
        %v3274 = vadd.f32 %v2716, %v3035
        %v3275 = vadd.f32 %v2717, %v3037
        %v3276 = vadd.f32 %v2718, %v3039
        %v3277 = vadd.f32 %v2719, %v3041
        %v3278 = vadd.f32 %v2720, %v3043
        %v3279 = vadd.f32 %v2721, %v3045
        %v3280 = vadd.f32 %v2722, %v3047
        %v3281 = vadd.f32 %v2723, %v3049
        %v3282 = vadd.f32 %v2724, %v3051
        %v3283 = vadd.f32 %v2725, %v3053
        %v3284 = vadd.f32 %v2726, %v3055
        %v3285 = vadd.f32 %v2727, %v3057
        %v3286 = vadd.f32 %v2728, %v3059
        %v3287 = vadd.f32 %v2729, %v3061
        %v3288 = vadd.f32 %v2730, %v3063
        %v3289 = vadd.f32 %v2731, %v3065
        %v3290 = vadd.f32 %v2732, %v3067
        %v3291 = vadd.f32 %v2733, %v3069
        %v3292 = vadd.f32 %v2734, %v3071
        %v3293 = vadd.f32 %v2735, %v3073
        %v3294 = vadd.f32 %v2736, %v3075
        %v3295 = vadd.f32 %v2737, %v3077
        %v3296 = vadd.f32 %v2738, %v3079
        %v3297 = vadd.f32 %v2739, %v3081
        %v3298 = vadd.f32 %v2740, %v3083
        %v3299 = vadd.f32 %v2741, %v3085
        %v3300 = vadd.f32 %v2742, %v3087
        %v3301 = vadd.f32 %v2743, %v3089
        %v3302 = vadd.f32 %v2744, %v3091
        %v3303 = vadd.f32 %v2745, %v3093
        %v3304 = vadd.f32 %v2746, %v3095
        %v3305 = vadd.f32 %v2747, %v3097
        %v3306 = vadd.f32 %v2748, %v3099
        %v3307 = vadd.f32 %v2749, %v3101
        %v3308 = vadd.f32 %v2750, %v3103
        %v3309 = vadd.f32 %v2751, %v3105
        %v3310 = vadd.f32 %v2752, %v3107
        %v3311 = vadd.f32 %v2753, %v3109
        %v3312 = vadd.f32 %v2754, %v3111
        %v3313 = vadd.f32 %v2755, %v3113
        %v3314 = vadd.f32 %v2756, %v3115
        %v3315 = vadd.f32 %v2757, %v3117
        %v3316 = vadd.f32 %v2758, %v3119
        %v3317 = vadd.f32 %v2759, %v3121
        %v3318 = vadd.f32 %v2760, %v3123
        %v3319 = vadd.f32 %v2761, %v3125
        %v3320 = vadd.f32 %v2762, %v3127
        %v3321 = vadd.f32 %v2763, %v3129
        %v3322 = vadd.f32 %v2764, %v3131
        %v3323 = vadd.f32 %v2765, %v3133
        %v3324 = vadd.f32 %v2766, %v3135
        %v3325 = vadd.f32 %v2767, %v3137
        %v3326 = vadd.f32 %v2768, %v3139
        %v3327 = vadd.f32 %v2769, %v3141
        %v3328 = vadd.f32 %v2770, %v3143
        %v3329 = vadd.f32 %v2771, %v3145
        %v3330 = vld [vmem:[#allocation2 + $0x5] sm:$0x1]
        %v3331 = vperm.slane %v3330, 0
        %v3332 = vmul.f32 %v451, %v3331
        %v3333 = vmul.f32 %v456, %v3331
        %v3334 = vmul.f32 %v461, %v3331
        %v3335 = vmul.f32 %v466, %v3331
        %v3336 = vmul.f32 %v471, %v3331
        %v3337 = vmul.f32 %v476, %v3331
        %v3338 = vmul.f32 %v481, %v3331
        %v3339 = vmul.f32 %v486, %v3331
        %v3340 = vmul.f32 %v491, %v3331
        %v3341 = vmul.f32 %v496, %v3331
        %v3342 = vmul.f32 %v501, %v3331
        %v3343 = vmul.f32 %v506, %v3331
        %v3344 = vmul.f32 %v511, %v3331
        %v3345 = vmul.f32 %v516, %v3331
        %v3346 = vmul.f32 %v521, %v3331
        %v3347 = vmul.f32 %v526, %v3331
        %v3348 = vmul.f32 %v531, %v3331
        %v3349 = vmul.f32 %v536, %v3331
        %v3350 = vmul.f32 %v541, %v3331
        %v3351 = vmul.f32 %v546, %v3331
        %v3352 = vmul.f32 %v551, %v3331
        %v3353 = vmul.f32 %v556, %v3331
        %v3354 = vmul.f32 %v561, %v3331
        %v3355 = vmul.f32 %v566, %v3331
        %v3356 = vmul.f32 %v571, %v3331
        %v3357 = vmul.f32 %v576, %v3331
        %v3358 = vmul.f32 %v581, %v3331
        %v3359 = vmul.f32 %v586, %v3331
        %v3360 = vmul.f32 %v591, %v3331
        %v3361 = vmul.f32 %v596, %v3331
        %v3362 = vmul.f32 %v601, %v3331
        %v3363 = vmul.f32 %v606, %v3331
        %v3364 = vmul.f32 %v611, %v3331
        %v3365 = vmul.f32 %v616, %v3331
        %v3366 = vmul.f32 %v621, %v3331
        %v3367 = vmul.f32 %v626, %v3331
        %v3368 = vmul.f32 %v631, %v3331
        %v3369 = vmul.f32 %v636, %v3331
        %v3370 = vmul.f32 %v641, %v3331
        %v3371 = vmul.f32 %v646, %v3331
        %v3372 = vmul.f32 %v651, %v3331
        %v3373 = vmul.f32 %v656, %v3331
        %v3374 = vmul.f32 %v661, %v3331
        %v3375 = vmul.f32 %v666, %v3331
        %v3376 = vmul.f32 %v671, %v3331
        %v3377 = vmul.f32 %v676, %v3331
        %v3378 = vmul.f32 %v681, %v3331
        %v3379 = vmul.f32 %v686, %v3331
        %v3380 = vmul.f32 %v691, %v3331
        %v3381 = vmul.f32 %v696, %v3331
        %v3382 = vmul.f32 %v701, %v3331
        %v3383 = vmul.f32 %v706, %v3331
        %v3384 = vmul.f32 %v711, %v3331
        %v3385 = vmul.f32 %v716, %v3331
        %v3386 = vmul.f32 %v721, %v3331
        %v3387 = vmul.f32 %v726, %v3331
        %v3388 = vmul.f32 %v731, %v3331
        %v3389 = vmul.f32 %v736, %v3331
        %v3390 = vmul.f32 %v741, %v3331
        %v3391 = vmul.f32 %v746, %v3331
        %v3392 = vmul.f32 %v751, %v3331
        %v3393 = vmul.f32 %v756, %v3331
        %v3394 = vmul.f32 %v761, %v3331
        %v3395 = vmul.f32 %v766, %v3331
        %v3396 = vmul.f32 %v771, %v3331
        %v3397 = vmul.f32 %v776, %v3331
        %v3398 = vmul.f32 %v781, %v3331
        %v3399 = vmul.f32 %v786, %v3331
        %v3400 = vmul.f32 %v791, %v3331
        %v3401 = vmul.f32 %v796, %v3331
        %v3402 = vmul.f32 %v801, %v3331
        %v3403 = vmul.f32 %v806, %v3331
        %v3404 = vmul.f32 %v811, %v3331
        %v3405 = vmul.f32 %v816, %v3331
        %v3406 = vmul.f32 %v821, %v3331
        %v3407 = vmul.f32 %v826, %v3331
        %v3408 = vmul.f32 %v831, %v3331
        %v3409 = vmul.f32 %v836, %v3331
        %v3410 = vmul.f32 %v841, %v3331
        %v3411 = vmul.f32 %v846, %v3331
        %v3412 = vmul.f32 %v851, %v3331
        %v3413 = vmul.f32 %v856, %v3331
        %v3414 = vmul.f32 %v861, %v3331
        %v3415 = vmul.f32 %v866, %v3331
        %v3416 = vmul.f32 %v871, %v3331
        %v3417 = vmul.f32 %v876, %v3331
        %v3418 = vmul.f32 %v881, %v3331
        %v3419 = vmul.f32 %v886, %v3331
        %v3420 = vmul.f32 %v891, %v3331
        %v3421 = vmul.f32 %v1082, %v3331
        %v3422 = vmul.f32 %v2203, %v3331
        %v3423 = vmul.f32 %v2208, %v3331
        %v3424 = vmul.f32 %v2213, %v3331
        %vm3518 = vcmask 1041408
        %v3519 = vrot.slane %v3332, 6
        %v3520 = vrot.slane %v3333, 6
        %v3521 = vsel %vm3518, %v3519, %v3520
        %v3522 = vrot.slane %v3334, 6
        %v3523 = vsel %vm3518, %v3520, %v3522
        %v3524 = vrot.slane %v3335, 6
        %v3525 = vsel %vm3518, %v3522, %v3524
        %v3526 = vrot.slane %v3336, 6
        %v3527 = vsel %vm3518, %v3524, %v3526
        %v3528 = vrot.slane %v3337, 6
        %v3529 = vsel %vm3518, %v3526, %v3528
        %v3530 = vrot.slane %v3338, 6
        %v3531 = vsel %vm3518, %v3528, %v3530
        %v3532 = vrot.slane %v3339, 6
        %v3533 = vsel %vm3518, %v3530, %v3532
        %v3534 = vrot.slane %v3340, 6
        %v3535 = vsel %vm3518, %v3532, %v3534
        %v3536 = vrot.slane %v3341, 6
        %v3537 = vsel %vm3518, %v3534, %v3536
        %v3538 = vrot.slane %v3342, 6
        %v3539 = vsel %vm3518, %v3536, %v3538
        %v3540 = vrot.slane %v3343, 6
        %v3541 = vsel %vm3518, %v3538, %v3540
        %v3542 = vrot.slane %v3344, 6
        %v3543 = vsel %vm3518, %v3540, %v3542
        %v3544 = vrot.slane %v3345, 6
        %v3545 = vsel %vm3518, %v3542, %v3544
        %v3546 = vrot.slane %v3346, 6
        %v3547 = vsel %vm3518, %v3544, %v3546
        %v3548 = vrot.slane %v3347, 6
        %v3549 = vsel %vm3518, %v3546, %v3548
        %v3550 = vrot.slane %v3348, 6
        %v3551 = vsel %vm3518, %v3548, %v3550
        %v3552 = vrot.slane %v3349, 6
        %v3553 = vsel %vm3518, %v3550, %v3552
        %v3554 = vrot.slane %v3350, 6
        %v3555 = vsel %vm3518, %v3552, %v3554
        %v3556 = vrot.slane %v3351, 6
        %v3557 = vsel %vm3518, %v3554, %v3556
        %v3558 = vrot.slane %v3352, 6
        %v3559 = vsel %vm3518, %v3556, %v3558
        %v3560 = vrot.slane %v3353, 6
        %v3561 = vsel %vm3518, %v3558, %v3560
        %v3562 = vrot.slane %v3354, 6
        %v3563 = vsel %vm3518, %v3560, %v3562
        %v3564 = vrot.slane %v3355, 6
        %v3565 = vsel %vm3518, %v3562, %v3564
        %v3566 = vrot.slane %v3356, 6
        %v3567 = vsel %vm3518, %v3564, %v3566
        %v3568 = vrot.slane %v3357, 6
        %v3569 = vsel %vm3518, %v3566, %v3568
        %v3570 = vrot.slane %v3358, 6
        %v3571 = vsel %vm3518, %v3568, %v3570
        %v3572 = vrot.slane %v3359, 6
        %v3573 = vsel %vm3518, %v3570, %v3572
        %v3574 = vrot.slane %v3360, 6
        %v3575 = vsel %vm3518, %v3572, %v3574
        %v3576 = vrot.slane %v3361, 6
        %v3577 = vsel %vm3518, %v3574, %v3576
        %v3578 = vrot.slane %v3362, 6
        %v3579 = vsel %vm3518, %v3576, %v3578
        %v3580 = vrot.slane %v3363, 6
        %v3581 = vsel %vm3518, %v3578, %v3580
        %v3582 = vrot.slane %v3364, 6
        %v3583 = vsel %vm3518, %v3580, %v3582
        %v3584 = vrot.slane %v3365, 6
        %v3585 = vsel %vm3518, %v3582, %v3584
        %v3586 = vrot.slane %v3366, 6
        %v3587 = vsel %vm3518, %v3584, %v3586
        %v3588 = vrot.slane %v3367, 6
        %v3589 = vsel %vm3518, %v3586, %v3588
        %v3590 = vrot.slane %v3368, 6
        %v3591 = vsel %vm3518, %v3588, %v3590
        %v3592 = vrot.slane %v3369, 6
        %v3593 = vsel %vm3518, %v3590, %v3592
        %v3594 = vrot.slane %v3370, 6
        %v3595 = vsel %vm3518, %v3592, %v3594
        %v3596 = vrot.slane %v3371, 6
        %v3597 = vsel %vm3518, %v3594, %v3596
        %v3598 = vrot.slane %v3372, 6
        %v3599 = vsel %vm3518, %v3596, %v3598
        %v3600 = vrot.slane %v3373, 6
        %v3601 = vsel %vm3518, %v3598, %v3600
        %v3602 = vrot.slane %v3374, 6
        %v3603 = vsel %vm3518, %v3600, %v3602
        %v3604 = vrot.slane %v3375, 6
        %v3605 = vsel %vm3518, %v3602, %v3604
        %v3606 = vrot.slane %v3376, 6
        %v3607 = vsel %vm3518, %v3604, %v3606
        %v3608 = vrot.slane %v3377, 6
        %v3609 = vsel %vm3518, %v3606, %v3608
        %v3610 = vrot.slane %v3378, 6
        %v3611 = vsel %vm3518, %v3608, %v3610
        %v3612 = vrot.slane %v3379, 6
        %v3613 = vsel %vm3518, %v3610, %v3612
        %v3614 = vrot.slane %v3380, 6
        %v3615 = vsel %vm3518, %v3612, %v3614
        %v3616 = vrot.slane %v3381, 6
        %v3617 = vsel %vm3518, %v3614, %v3616
        %v3618 = vrot.slane %v3382, 6
        %v3619 = vsel %vm3518, %v3616, %v3618
        %v3620 = vrot.slane %v3383, 6
        %v3621 = vsel %vm3518, %v3618, %v3620
        %v3622 = vrot.slane %v3384, 6
        %v3623 = vsel %vm3518, %v3620, %v3622
        %v3624 = vrot.slane %v3385, 6
        %v3625 = vsel %vm3518, %v3622, %v3624
        %v3626 = vrot.slane %v3386, 6
        %v3627 = vsel %vm3518, %v3624, %v3626
        %v3628 = vrot.slane %v3387, 6
        %v3629 = vsel %vm3518, %v3626, %v3628
        %v3630 = vrot.slane %v3388, 6
        %v3631 = vsel %vm3518, %v3628, %v3630
        %v3632 = vrot.slane %v3389, 6
        %v3633 = vsel %vm3518, %v3630, %v3632
        %v3634 = vrot.slane %v3390, 6
        %v3635 = vsel %vm3518, %v3632, %v3634
        %v3636 = vrot.slane %v3391, 6
        %v3637 = vsel %vm3518, %v3634, %v3636
        %v3638 = vrot.slane %v3392, 6
        %v3639 = vsel %vm3518, %v3636, %v3638
        %v3640 = vrot.slane %v3393, 6
        %v3641 = vsel %vm3518, %v3638, %v3640
        %v3642 = vrot.slane %v3394, 6
        %v3643 = vsel %vm3518, %v3640, %v3642
        %v3644 = vrot.slane %v3395, 6
        %v3645 = vsel %vm3518, %v3642, %v3644
        %v3646 = vrot.slane %v3396, 6
        %v3647 = vsel %vm3518, %v3644, %v3646
        %v3648 = vrot.slane %v3397, 6
        %v3649 = vsel %vm3518, %v3646, %v3648
        %v3650 = vrot.slane %v3398, 6
        %v3651 = vsel %vm3518, %v3648, %v3650
        %v3652 = vrot.slane %v3399, 6
        %v3653 = vsel %vm3518, %v3650, %v3652
        %v3654 = vrot.slane %v3400, 6
        %v3655 = vsel %vm3518, %v3652, %v3654
        %v3656 = vrot.slane %v3401, 6
        %v3657 = vsel %vm3518, %v3654, %v3656
        %v3658 = vrot.slane %v3402, 6
        %v3659 = vsel %vm3518, %v3656, %v3658
        %v3660 = vrot.slane %v3403, 6
        %v3661 = vsel %vm3518, %v3658, %v3660
        %v3662 = vrot.slane %v3404, 6
        %v3663 = vsel %vm3518, %v3660, %v3662
        %v3664 = vrot.slane %v3405, 6
        %v3665 = vsel %vm3518, %v3662, %v3664
        %v3666 = vrot.slane %v3406, 6
        %v3667 = vsel %vm3518, %v3664, %v3666
        %v3668 = vrot.slane %v3407, 6
        %v3669 = vsel %vm3518, %v3666, %v3668
        %v3670 = vrot.slane %v3408, 6
        %v3671 = vsel %vm3518, %v3668, %v3670
        %v3672 = vrot.slane %v3409, 6
        %v3673 = vsel %vm3518, %v3670, %v3672
        %v3674 = vrot.slane %v3410, 6
        %v3675 = vsel %vm3518, %v3672, %v3674
        %v3676 = vrot.slane %v3411, 6
        %v3677 = vsel %vm3518, %v3674, %v3676
        %v3678 = vrot.slane %v3412, 6
        %v3679 = vsel %vm3518, %v3676, %v3678
        %v3680 = vrot.slane %v3413, 6
        %v3681 = vsel %vm3518, %v3678, %v3680
        %v3682 = vrot.slane %v3414, 6
        %v3683 = vsel %vm3518, %v3680, %v3682
        %v3684 = vrot.slane %v3415, 6
        %v3685 = vsel %vm3518, %v3682, %v3684
        %v3686 = vrot.slane %v3416, 6
        %v3687 = vsel %vm3518, %v3684, %v3686
        %v3688 = vrot.slane %v3417, 6
        %v3689 = vsel %vm3518, %v3686, %v3688
        %v3690 = vrot.slane %v3418, 6
        %v3691 = vsel %vm3518, %v3688, %v3690
        %v3692 = vrot.slane %v3419, 6
        %v3693 = vsel %vm3518, %v3690, %v3692
        %v3694 = vrot.slane %v3420, 6
        %v3695 = vsel %vm3518, %v3692, %v3694
        %v3696 = vrot.slane %v3421, 6
        %v3697 = vsel %vm3518, %v3694, %v3696
        %v3698 = vrot.slane %v3422, 6
        %v3699 = vsel %vm3518, %v3696, %v3698
        %v3700 = vrot.slane %v3423, 6
        %v3701 = vsel %vm3518, %v3698, %v3700
        %v3702 = vrot.slane %v3424, 6
        %v3703 = vsel %vm3518, %v3700, %v3702
        %v3796 = vadd.f32 %v3238, %v3521
        %v3797 = vadd.f32 %v3239, %v3523
        %v3798 = vadd.f32 %v3240, %v3525
        %v3799 = vadd.f32 %v3241, %v3527
        %v3800 = vadd.f32 %v3242, %v3529
        %v3801 = vadd.f32 %v3243, %v3531
        %v3802 = vadd.f32 %v3244, %v3533
        %v3803 = vadd.f32 %v3245, %v3535
        %v3804 = vadd.f32 %v3246, %v3537
        %v3805 = vadd.f32 %v3247, %v3539
        %v3806 = vadd.f32 %v3248, %v3541
        %v3807 = vadd.f32 %v3249, %v3543
        %v3808 = vadd.f32 %v3250, %v3545
        %v3809 = vadd.f32 %v3251, %v3547
        %v3810 = vadd.f32 %v3252, %v3549
        %v3811 = vadd.f32 %v3253, %v3551
        %v3812 = vadd.f32 %v3254, %v3553
        %v3813 = vadd.f32 %v3255, %v3555
        %v3814 = vadd.f32 %v3256, %v3557
        %v3815 = vadd.f32 %v3257, %v3559
        %v3816 = vadd.f32 %v3258, %v3561
        %v3817 = vadd.f32 %v3259, %v3563
        %v3818 = vadd.f32 %v3260, %v3565
        %v3819 = vadd.f32 %v3261, %v3567
        %v3820 = vadd.f32 %v3262, %v3569
        %v3821 = vadd.f32 %v3263, %v3571
        %v3822 = vadd.f32 %v3264, %v3573
        %v3823 = vadd.f32 %v3265, %v3575
        %v3824 = vadd.f32 %v3266, %v3577
        %v3825 = vadd.f32 %v3267, %v3579
        %v3826 = vadd.f32 %v3268, %v3581
        %v3827 = vadd.f32 %v3269, %v3583
        %v3828 = vadd.f32 %v3270, %v3585
        %v3829 = vadd.f32 %v3271, %v3587
        %v3830 = vadd.f32 %v3272, %v3589
        %v3831 = vadd.f32 %v3273, %v3591
        %v3832 = vadd.f32 %v3274, %v3593
        %v3833 = vadd.f32 %v3275, %v3595
        %v3834 = vadd.f32 %v3276, %v3597
        %v3835 = vadd.f32 %v3277, %v3599
        %v3836 = vadd.f32 %v3278, %v3601
        %v3837 = vadd.f32 %v3279, %v3603
        %v3838 = vadd.f32 %v3280, %v3605
        %v3839 = vadd.f32 %v3281, %v3607
        %v3840 = vadd.f32 %v3282, %v3609
        %v3841 = vadd.f32 %v3283, %v3611
        %v3842 = vadd.f32 %v3284, %v3613
        %v3843 = vadd.f32 %v3285, %v3615
        %v3844 = vadd.f32 %v3286, %v3617
        %v3845 = vadd.f32 %v3287, %v3619
        %v3846 = vadd.f32 %v3288, %v3621
        %v3847 = vadd.f32 %v3289, %v3623
        %v3848 = vadd.f32 %v3290, %v3625
        %v3849 = vadd.f32 %v3291, %v3627
        %v3850 = vadd.f32 %v3292, %v3629
        %v3851 = vadd.f32 %v3293, %v3631
        %v3852 = vadd.f32 %v3294, %v3633
        %v3853 = vadd.f32 %v3295, %v3635
        %v3854 = vadd.f32 %v3296, %v3637
        %v3855 = vadd.f32 %v3297, %v3639
        %v3856 = vadd.f32 %v3298, %v3641
        %v3857 = vadd.f32 %v3299, %v3643
        %v3858 = vadd.f32 %v3300, %v3645
        %v3859 = vadd.f32 %v3301, %v3647
        %v3860 = vadd.f32 %v3302, %v3649
        %v3861 = vadd.f32 %v3303, %v3651
        %v3862 = vadd.f32 %v3304, %v3653
        %v3863 = vadd.f32 %v3305, %v3655
        %v3864 = vadd.f32 %v3306, %v3657
        %v3865 = vadd.f32 %v3307, %v3659
        %v3866 = vadd.f32 %v3308, %v3661
        %v3867 = vadd.f32 %v3309, %v3663
        %v3868 = vadd.f32 %v3310, %v3665
        %v3869 = vadd.f32 %v3311, %v3667
        %v3870 = vadd.f32 %v3312, %v3669
        %v3871 = vadd.f32 %v3313, %v3671
        %v3872 = vadd.f32 %v3314, %v3673
        %v3873 = vadd.f32 %v3315, %v3675
        %v3874 = vadd.f32 %v3316, %v3677
        %v3875 = vadd.f32 %v3317, %v3679
        %v3876 = vadd.f32 %v3318, %v3681
        %v3877 = vadd.f32 %v3319, %v3683
        %v3878 = vadd.f32 %v3320, %v3685
        %v3879 = vadd.f32 %v3321, %v3687
        %v3880 = vadd.f32 %v3322, %v3689
        %v3881 = vadd.f32 %v3323, %v3691
        %v3882 = vadd.f32 %v3324, %v3693
        %v3883 = vadd.f32 %v3325, %v3695
        %v3884 = vadd.f32 %v3326, %v3697
        %v3885 = vadd.f32 %v3327, %v3699
        %v3886 = vadd.f32 %v3328, %v3701
        %v3887 = vadd.f32 %v3329, %v3703
        %v3888 = vld [vmem:[#allocation2 + $0x6] sm:$0x1]
        %3890 = vset.pattern.permute.xlu0 0
        %3891 = vperm.xlu0 %3890, %v428
        %v3892 = vpop.permute.xlu0 %3891
        %3895 = vset.pattern.permute.xlu0 0
        %3896 = vperm.xlu0 %3895, %v429
        %v3897 = vpop.permute.xlu0 %3896
        %3900 = vset.pattern.permute.xlu0 0
        %3901 = vperm.xlu0 %3900, %v430
        %v3902 = vpop.permute.xlu0 %3901
        %v3904 = vperm.slane %v3888, 0
        %v3905 = vmul.f32 %v471, %v3904
        %v3906 = vmul.f32 %v476, %v3904
        %v3907 = vmul.f32 %v481, %v3904
        %v3908 = vmul.f32 %v486, %v3904
        %v3909 = vmul.f32 %v491, %v3904
        %v3910 = vmul.f32 %v496, %v3904
        %v3911 = vmul.f32 %v501, %v3904
        %v3912 = vmul.f32 %v506, %v3904
        %v3913 = vmul.f32 %v511, %v3904
        %v3914 = vmul.f32 %v516, %v3904
        %v3915 = vmul.f32 %v521, %v3904
        %v3916 = vmul.f32 %v526, %v3904
        %v3917 = vmul.f32 %v531, %v3904
        %v3918 = vmul.f32 %v536, %v3904
        %v3919 = vmul.f32 %v541, %v3904
        %v3920 = vmul.f32 %v546, %v3904
        %v3921 = vmul.f32 %v551, %v3904
        %v3922 = vmul.f32 %v556, %v3904
        %v3923 = vmul.f32 %v561, %v3904
        %v3924 = vmul.f32 %v566, %v3904
        %v3925 = vmul.f32 %v571, %v3904
        %v3926 = vmul.f32 %v576, %v3904
        %v3927 = vmul.f32 %v581, %v3904
        %v3928 = vmul.f32 %v586, %v3904
        %v3929 = vmul.f32 %v591, %v3904
        %v3930 = vmul.f32 %v596, %v3904
        %v3931 = vmul.f32 %v601, %v3904
        %v3932 = vmul.f32 %v606, %v3904
        %v3933 = vmul.f32 %v611, %v3904
        %v3934 = vmul.f32 %v616, %v3904
        %v3935 = vmul.f32 %v621, %v3904
        %v3936 = vmul.f32 %v626, %v3904
        %v3937 = vmul.f32 %v631, %v3904
        %v3938 = vmul.f32 %v636, %v3904
        %v3939 = vmul.f32 %v641, %v3904
        %v3940 = vmul.f32 %v646, %v3904
        %v3941 = vmul.f32 %v651, %v3904
        %v3942 = vmul.f32 %v656, %v3904
        %v3943 = vmul.f32 %v661, %v3904
        %v3944 = vmul.f32 %v666, %v3904
        %v3945 = vmul.f32 %v671, %v3904
        %v3946 = vmul.f32 %v676, %v3904
        %v3947 = vmul.f32 %v681, %v3904
        %v3948 = vmul.f32 %v686, %v3904
        %v3949 = vmul.f32 %v691, %v3904
        %v3950 = vmul.f32 %v696, %v3904
        %v3951 = vmul.f32 %v701, %v3904
        %v3952 = vmul.f32 %v706, %v3904
        %v3953 = vmul.f32 %v711, %v3904
        %v3954 = vmul.f32 %v716, %v3904
        %v3955 = vmul.f32 %v721, %v3904
        %v3956 = vmul.f32 %v726, %v3904
        %v3957 = vmul.f32 %v731, %v3904
        %v3958 = vmul.f32 %v736, %v3904
        %v3959 = vmul.f32 %v741, %v3904
        %v3960 = vmul.f32 %v746, %v3904
        %v3961 = vmul.f32 %v751, %v3904
        %v3962 = vmul.f32 %v756, %v3904
        %v3963 = vmul.f32 %v761, %v3904
        %v3964 = vmul.f32 %v766, %v3904
        %v3965 = vmul.f32 %v771, %v3904
        %v3966 = vmul.f32 %v776, %v3904
        %v3967 = vmul.f32 %v781, %v3904
        %v3968 = vmul.f32 %v786, %v3904
        %v3969 = vmul.f32 %v791, %v3904
        %v3970 = vmul.f32 %v796, %v3904
        %v3971 = vmul.f32 %v801, %v3904
        %v3972 = vmul.f32 %v806, %v3904
        %v3973 = vmul.f32 %v811, %v3904
        %v3974 = vmul.f32 %v816, %v3904
        %v3975 = vmul.f32 %v821, %v3904
        %v3976 = vmul.f32 %v826, %v3904
        %v3977 = vmul.f32 %v831, %v3904
        %v3978 = vmul.f32 %v836, %v3904
        %v3979 = vmul.f32 %v841, %v3904
        %v3980 = vmul.f32 %v846, %v3904
        %v3981 = vmul.f32 %v851, %v3904
        %v3982 = vmul.f32 %v856, %v3904
        %v3983 = vmul.f32 %v861, %v3904
        %v3984 = vmul.f32 %v866, %v3904
        %v3985 = vmul.f32 %v871, %v3904
        %v3986 = vmul.f32 %v876, %v3904
        %v3987 = vmul.f32 %v881, %v3904
        %v3988 = vmul.f32 %v886, %v3904
        %v3989 = vmul.f32 %v891, %v3904
        %v3990 = vmul.f32 %v1082, %v3904
        %v3991 = vmul.f32 %v2203, %v3904
        %v3992 = vmul.f32 %v2208, %v3904
        %v3993 = vmul.f32 %v2213, %v3904
        %v3994 = vmul.f32 %v3892, %v3904
        %v3995 = vmul.f32 %v3897, %v3904
        %v3996 = vmul.f32 %v3902, %v3904
        %v3997 = vadd.f32 %v3796, %v3905
        %v3998 = vadd.f32 %v3797, %v3906
        %v3999 = vadd.f32 %v3798, %v3907
        %v4000 = vadd.f32 %v3799, %v3908
        %v4001 = vadd.f32 %v3800, %v3909
        %v4002 = vadd.f32 %v3801, %v3910
        %v4003 = vadd.f32 %v3802, %v3911
        %v4004 = vadd.f32 %v3803, %v3912
        %v4005 = vadd.f32 %v3804, %v3913
        %v4006 = vadd.f32 %v3805, %v3914
        %v4007 = vadd.f32 %v3806, %v3915
        %v4008 = vadd.f32 %v3807, %v3916
        %v4009 = vadd.f32 %v3808, %v3917
        %v4010 = vadd.f32 %v3809, %v3918
        %v4011 = vadd.f32 %v3810, %v3919
        %v4012 = vadd.f32 %v3811, %v3920
        %v4013 = vadd.f32 %v3812, %v3921
        %v4014 = vadd.f32 %v3813, %v3922
        %v4015 = vadd.f32 %v3814, %v3923
        %v4016 = vadd.f32 %v3815, %v3924
        %v4017 = vadd.f32 %v3816, %v3925
        %v4018 = vadd.f32 %v3817, %v3926
        %v4019 = vadd.f32 %v3818, %v3927
        %v4020 = vadd.f32 %v3819, %v3928
        %v4021 = vadd.f32 %v3820, %v3929
        %v4022 = vadd.f32 %v3821, %v3930
        %v4023 = vadd.f32 %v3822, %v3931
        %v4024 = vadd.f32 %v3823, %v3932
        %v4025 = vadd.f32 %v3824, %v3933
        %v4026 = vadd.f32 %v3825, %v3934
        %v4027 = vadd.f32 %v3826, %v3935
        %v4028 = vadd.f32 %v3827, %v3936
        %v4029 = vadd.f32 %v3828, %v3937
        %v4030 = vadd.f32 %v3829, %v3938
        %v4031 = vadd.f32 %v3830, %v3939
        %v4032 = vadd.f32 %v3831, %v3940
        %v4033 = vadd.f32 %v3832, %v3941
        %v4034 = vadd.f32 %v3833, %v3942
        %v4035 = vadd.f32 %v3834, %v3943
        %v4036 = vadd.f32 %v3835, %v3944
        %v4037 = vadd.f32 %v3836, %v3945
        %v4038 = vadd.f32 %v3837, %v3946
        %v4039 = vadd.f32 %v3838, %v3947
        %v4040 = vadd.f32 %v3839, %v3948
        %v4041 = vadd.f32 %v3840, %v3949
        %v4042 = vadd.f32 %v3841, %v3950
        %v4043 = vadd.f32 %v3842, %v3951
        %v4044 = vadd.f32 %v3843, %v3952
        %v4045 = vadd.f32 %v3844, %v3953
        %v4046 = vadd.f32 %v3845, %v3954
        %v4047 = vadd.f32 %v3846, %v3955
        %v4048 = vadd.f32 %v3847, %v3956
        %v4049 = vadd.f32 %v3848, %v3957
        %v4050 = vadd.f32 %v3849, %v3958
        %v4051 = vadd.f32 %v3850, %v3959
        %v4052 = vadd.f32 %v3851, %v3960
        %v4053 = vadd.f32 %v3852, %v3961
        %v4054 = vadd.f32 %v3853, %v3962
        %v4055 = vadd.f32 %v3854, %v3963
        %v4056 = vadd.f32 %v3855, %v3964
        %v4057 = vadd.f32 %v3856, %v3965
        %v4058 = vadd.f32 %v3857, %v3966
        %v4059 = vadd.f32 %v3858, %v3967
        %v4060 = vadd.f32 %v3859, %v3968
        %v4061 = vadd.f32 %v3860, %v3969
        %v4062 = vadd.f32 %v3861, %v3970
        %v4063 = vadd.f32 %v3862, %v3971
        %v4064 = vadd.f32 %v3863, %v3972
        %v4065 = vadd.f32 %v3864, %v3973
        %v4066 = vadd.f32 %v3865, %v3974
        %v4067 = vadd.f32 %v3866, %v3975
        %v4068 = vadd.f32 %v3867, %v3976
        %v4069 = vadd.f32 %v3868, %v3977
        %v4070 = vadd.f32 %v3869, %v3978
        %v4071 = vadd.f32 %v3870, %v3979
        %v4072 = vadd.f32 %v3871, %v3980
        %v4073 = vadd.f32 %v3872, %v3981
        %v4074 = vadd.f32 %v3873, %v3982
        %v4075 = vadd.f32 %v3874, %v3983
        %v4076 = vadd.f32 %v3875, %v3984
        %v4077 = vadd.f32 %v3876, %v3985
        %v4078 = vadd.f32 %v3877, %v3986
        %v4079 = vadd.f32 %v3878, %v3987
        %v4080 = vadd.f32 %v3879, %v3988
        %v4081 = vadd.f32 %v3880, %v3989
        %v4082 = vadd.f32 %v3881, %v3990
        %v4083 = vadd.f32 %v3882, %v3991
        %v4084 = vadd.f32 %v3883, %v3992
        %v4085 = vadd.f32 %v3884, %v3993
        %v4086 = vadd.f32 %v3885, %v3994
        %v4087 = vadd.f32 %v3886, %v3995
        %v4088 = vadd.f32 %v3887, %v3996
        %v4089 = vld [vmem:[#allocation2 + $0x7] sm:$0x1]
        %4091 = vset.pattern.permute.xlu0 0
        %4092 = vperm.xlu0 %4091, %v431
        %v4093 = vpop.permute.xlu0 %4092
        %v4095 = vperm.slane %v4089, 0
        %v4096 = vmul.f32 %v471, %v4095
        %v4097 = vmul.f32 %v476, %v4095
        %v4098 = vmul.f32 %v481, %v4095
        %v4099 = vmul.f32 %v486, %v4095
        %v4100 = vmul.f32 %v491, %v4095
        %v4101 = vmul.f32 %v496, %v4095
        %v4102 = vmul.f32 %v501, %v4095
        %v4103 = vmul.f32 %v506, %v4095
        %v4104 = vmul.f32 %v511, %v4095
        %v4105 = vmul.f32 %v516, %v4095
        %v4106 = vmul.f32 %v521, %v4095
        %v4107 = vmul.f32 %v526, %v4095
        %v4108 = vmul.f32 %v531, %v4095
        %v4109 = vmul.f32 %v536, %v4095
        %v4110 = vmul.f32 %v541, %v4095
        %v4111 = vmul.f32 %v546, %v4095
        %v4112 = vmul.f32 %v551, %v4095
        %v4113 = vmul.f32 %v556, %v4095
        %v4114 = vmul.f32 %v561, %v4095
        %v4115 = vmul.f32 %v566, %v4095
        %v4116 = vmul.f32 %v571, %v4095
        %v4117 = vmul.f32 %v576, %v4095
        %v4118 = vmul.f32 %v581, %v4095
        %v4119 = vmul.f32 %v586, %v4095
        %v4120 = vmul.f32 %v591, %v4095
        %v4121 = vmul.f32 %v596, %v4095
        %v4122 = vmul.f32 %v601, %v4095
        %v4123 = vmul.f32 %v606, %v4095
        %v4124 = vmul.f32 %v611, %v4095
        %v4125 = vmul.f32 %v616, %v4095
        %v4126 = vmul.f32 %v621, %v4095
        %v4127 = vmul.f32 %v626, %v4095
        %v4128 = vmul.f32 %v631, %v4095
        %v4129 = vmul.f32 %v636, %v4095
        %v4130 = vmul.f32 %v641, %v4095
        %v4131 = vmul.f32 %v646, %v4095
        %v4132 = vmul.f32 %v651, %v4095
        %v4133 = vmul.f32 %v656, %v4095
        %v4134 = vmul.f32 %v661, %v4095
        %v4135 = vmul.f32 %v666, %v4095
        %v4136 = vmul.f32 %v671, %v4095
        %v4137 = vmul.f32 %v676, %v4095
        %v4138 = vmul.f32 %v681, %v4095
        %v4139 = vmul.f32 %v686, %v4095
        %v4140 = vmul.f32 %v691, %v4095
        %v4141 = vmul.f32 %v696, %v4095
        %v4142 = vmul.f32 %v701, %v4095
        %v4143 = vmul.f32 %v706, %v4095
        %v4144 = vmul.f32 %v711, %v4095
        %v4145 = vmul.f32 %v716, %v4095
        %v4146 = vmul.f32 %v721, %v4095
        %v4147 = vmul.f32 %v726, %v4095
        %v4148 = vmul.f32 %v731, %v4095
        %v4149 = vmul.f32 %v736, %v4095
        %v4150 = vmul.f32 %v741, %v4095
        %v4151 = vmul.f32 %v746, %v4095
        %v4152 = vmul.f32 %v751, %v4095
        %v4153 = vmul.f32 %v756, %v4095
        %v4154 = vmul.f32 %v761, %v4095
        %v4155 = vmul.f32 %v766, %v4095
        %v4156 = vmul.f32 %v771, %v4095
        %v4157 = vmul.f32 %v776, %v4095
        %v4158 = vmul.f32 %v781, %v4095
        %v4159 = vmul.f32 %v786, %v4095
        %v4160 = vmul.f32 %v791, %v4095
        %v4161 = vmul.f32 %v796, %v4095
        %v4162 = vmul.f32 %v801, %v4095
        %v4163 = vmul.f32 %v806, %v4095
        %v4164 = vmul.f32 %v811, %v4095
        %v4165 = vmul.f32 %v816, %v4095
        %v4166 = vmul.f32 %v821, %v4095
        %v4167 = vmul.f32 %v826, %v4095
        %v4168 = vmul.f32 %v831, %v4095
        %v4169 = vmul.f32 %v836, %v4095
        %v4170 = vmul.f32 %v841, %v4095
        %v4171 = vmul.f32 %v846, %v4095
        %v4172 = vmul.f32 %v851, %v4095
        %v4173 = vmul.f32 %v856, %v4095
        %v4174 = vmul.f32 %v861, %v4095
        %v4175 = vmul.f32 %v866, %v4095
        %v4176 = vmul.f32 %v871, %v4095
        %v4177 = vmul.f32 %v876, %v4095
        %v4178 = vmul.f32 %v881, %v4095
        %v4179 = vmul.f32 %v886, %v4095
        %v4180 = vmul.f32 %v891, %v4095
        %v4181 = vmul.f32 %v1082, %v4095
        %v4182 = vmul.f32 %v2203, %v4095
        %v4183 = vmul.f32 %v2208, %v4095
        %v4184 = vmul.f32 %v2213, %v4095
        %v4185 = vmul.f32 %v3892, %v4095
        %v4186 = vmul.f32 %v3897, %v4095
        %v4187 = vmul.f32 %v3902, %v4095
        %v4188 = vmul.f32 %v4093, %v4095
        %v4282 = vrot.slane %v4096, 1
        %v4283 = vrot.slane %v4097, 1
        %v4284 = vsel %vm1271, %v4282, %v4283
        %v4285 = vrot.slane %v4098, 1
        %v4286 = vsel %vm1271, %v4283, %v4285
        %v4287 = vrot.slane %v4099, 1
        %v4288 = vsel %vm1271, %v4285, %v4287
        %v4289 = vrot.slane %v4100, 1
        %v4290 = vsel %vm1271, %v4287, %v4289
        %v4291 = vrot.slane %v4101, 1
        %v4292 = vsel %vm1271, %v4289, %v4291
        %v4293 = vrot.slane %v4102, 1
        %v4294 = vsel %vm1271, %v4291, %v4293
        %v4295 = vrot.slane %v4103, 1
        %v4296 = vsel %vm1271, %v4293, %v4295
        %v4297 = vrot.slane %v4104, 1
        %v4298 = vsel %vm1271, %v4295, %v4297
        %v4299 = vrot.slane %v4105, 1
        %v4300 = vsel %vm1271, %v4297, %v4299
        %v4301 = vrot.slane %v4106, 1
        %v4302 = vsel %vm1271, %v4299, %v4301
        %v4303 = vrot.slane %v4107, 1
        %v4304 = vsel %vm1271, %v4301, %v4303
        %v4305 = vrot.slane %v4108, 1
        %v4306 = vsel %vm1271, %v4303, %v4305
        %v4307 = vrot.slane %v4109, 1
        %v4308 = vsel %vm1271, %v4305, %v4307
        %v4309 = vrot.slane %v4110, 1
        %v4310 = vsel %vm1271, %v4307, %v4309
        %v4311 = vrot.slane %v4111, 1
        %v4312 = vsel %vm1271, %v4309, %v4311
        %v4313 = vrot.slane %v4112, 1
        %v4314 = vsel %vm1271, %v4311, %v4313
        %v4315 = vrot.slane %v4113, 1
        %v4316 = vsel %vm1271, %v4313, %v4315
        %v4317 = vrot.slane %v4114, 1
        %v4318 = vsel %vm1271, %v4315, %v4317
        %v4319 = vrot.slane %v4115, 1
        %v4320 = vsel %vm1271, %v4317, %v4319
        %v4321 = vrot.slane %v4116, 1
        %v4322 = vsel %vm1271, %v4319, %v4321
        %v4323 = vrot.slane %v4117, 1
        %v4324 = vsel %vm1271, %v4321, %v4323
        %v4325 = vrot.slane %v4118, 1
        %v4326 = vsel %vm1271, %v4323, %v4325
        %v4327 = vrot.slane %v4119, 1
        %v4328 = vsel %vm1271, %v4325, %v4327
        %v4329 = vrot.slane %v4120, 1
        %v4330 = vsel %vm1271, %v4327, %v4329
        %v4331 = vrot.slane %v4121, 1
        %v4332 = vsel %vm1271, %v4329, %v4331
        %v4333 = vrot.slane %v4122, 1
        %v4334 = vsel %vm1271, %v4331, %v4333
        %v4335 = vrot.slane %v4123, 1
        %v4336 = vsel %vm1271, %v4333, %v4335
        %v4337 = vrot.slane %v4124, 1
        %v4338 = vsel %vm1271, %v4335, %v4337
        %v4339 = vrot.slane %v4125, 1
        %v4340 = vsel %vm1271, %v4337, %v4339
        %v4341 = vrot.slane %v4126, 1
        %v4342 = vsel %vm1271, %v4339, %v4341
        %v4343 = vrot.slane %v4127, 1
        %v4344 = vsel %vm1271, %v4341, %v4343
        %v4345 = vrot.slane %v4128, 1
        %v4346 = vsel %vm1271, %v4343, %v4345
        %v4347 = vrot.slane %v4129, 1
        %v4348 = vsel %vm1271, %v4345, %v4347
        %v4349 = vrot.slane %v4130, 1
        %v4350 = vsel %vm1271, %v4347, %v4349
        %v4351 = vrot.slane %v4131, 1
        %v4352 = vsel %vm1271, %v4349, %v4351
        %v4353 = vrot.slane %v4132, 1
        %v4354 = vsel %vm1271, %v4351, %v4353
        %v4355 = vrot.slane %v4133, 1
        %v4356 = vsel %vm1271, %v4353, %v4355
        %v4357 = vrot.slane %v4134, 1
        %v4358 = vsel %vm1271, %v4355, %v4357
        %v4359 = vrot.slane %v4135, 1
        %v4360 = vsel %vm1271, %v4357, %v4359
        %v4361 = vrot.slane %v4136, 1
        %v4362 = vsel %vm1271, %v4359, %v4361
        %v4363 = vrot.slane %v4137, 1
        %v4364 = vsel %vm1271, %v4361, %v4363
        %v4365 = vrot.slane %v4138, 1
        %v4366 = vsel %vm1271, %v4363, %v4365
        %v4367 = vrot.slane %v4139, 1
        %v4368 = vsel %vm1271, %v4365, %v4367
        %v4369 = vrot.slane %v4140, 1
        %v4370 = vsel %vm1271, %v4367, %v4369
        %v4371 = vrot.slane %v4141, 1
        %v4372 = vsel %vm1271, %v4369, %v4371
        %v4373 = vrot.slane %v4142, 1
        %v4374 = vsel %vm1271, %v4371, %v4373
        %v4375 = vrot.slane %v4143, 1
        %v4376 = vsel %vm1271, %v4373, %v4375
        %v4377 = vrot.slane %v4144, 1
        %v4378 = vsel %vm1271, %v4375, %v4377
        %v4379 = vrot.slane %v4145, 1
        %v4380 = vsel %vm1271, %v4377, %v4379
        %v4381 = vrot.slane %v4146, 1
        %v4382 = vsel %vm1271, %v4379, %v4381
        %v4383 = vrot.slane %v4147, 1
        %v4384 = vsel %vm1271, %v4381, %v4383
        %v4385 = vrot.slane %v4148, 1
        %v4386 = vsel %vm1271, %v4383, %v4385
        %v4387 = vrot.slane %v4149, 1
        %v4388 = vsel %vm1271, %v4385, %v4387
        %v4389 = vrot.slane %v4150, 1
        %v4390 = vsel %vm1271, %v4387, %v4389
        %v4391 = vrot.slane %v4151, 1
        %v4392 = vsel %vm1271, %v4389, %v4391
        %v4393 = vrot.slane %v4152, 1
        %v4394 = vsel %vm1271, %v4391, %v4393
        %v4395 = vrot.slane %v4153, 1
        %v4396 = vsel %vm1271, %v4393, %v4395
        %v4397 = vrot.slane %v4154, 1
        %v4398 = vsel %vm1271, %v4395, %v4397
        %v4399 = vrot.slane %v4155, 1
        %v4400 = vsel %vm1271, %v4397, %v4399
        %v4401 = vrot.slane %v4156, 1
        %v4402 = vsel %vm1271, %v4399, %v4401
        %v4403 = vrot.slane %v4157, 1
        %v4404 = vsel %vm1271, %v4401, %v4403
        %v4405 = vrot.slane %v4158, 1
        %v4406 = vsel %vm1271, %v4403, %v4405
        %v4407 = vrot.slane %v4159, 1
        %v4408 = vsel %vm1271, %v4405, %v4407
        %v4409 = vrot.slane %v4160, 1
        %v4410 = vsel %vm1271, %v4407, %v4409
        %v4411 = vrot.slane %v4161, 1
        %v4412 = vsel %vm1271, %v4409, %v4411
        %v4413 = vrot.slane %v4162, 1
        %v4414 = vsel %vm1271, %v4411, %v4413
        %v4415 = vrot.slane %v4163, 1
        %v4416 = vsel %vm1271, %v4413, %v4415
        %v4417 = vrot.slane %v4164, 1
        %v4418 = vsel %vm1271, %v4415, %v4417
        %v4419 = vrot.slane %v4165, 1
        %v4420 = vsel %vm1271, %v4417, %v4419
        %v4421 = vrot.slane %v4166, 1
        %v4422 = vsel %vm1271, %v4419, %v4421
        %v4423 = vrot.slane %v4167, 1
        %v4424 = vsel %vm1271, %v4421, %v4423
        %v4425 = vrot.slane %v4168, 1
        %v4426 = vsel %vm1271, %v4423, %v4425
        %v4427 = vrot.slane %v4169, 1
        %v4428 = vsel %vm1271, %v4425, %v4427
        %v4429 = vrot.slane %v4170, 1
        %v4430 = vsel %vm1271, %v4427, %v4429
        %v4431 = vrot.slane %v4171, 1
        %v4432 = vsel %vm1271, %v4429, %v4431
        %v4433 = vrot.slane %v4172, 1
        %v4434 = vsel %vm1271, %v4431, %v4433
        %v4435 = vrot.slane %v4173, 1
        %v4436 = vsel %vm1271, %v4433, %v4435
        %v4437 = vrot.slane %v4174, 1
        %v4438 = vsel %vm1271, %v4435, %v4437
        %v4439 = vrot.slane %v4175, 1
        %v4440 = vsel %vm1271, %v4437, %v4439
        %v4441 = vrot.slane %v4176, 1
        %v4442 = vsel %vm1271, %v4439, %v4441
        %v4443 = vrot.slane %v4177, 1
        %v4444 = vsel %vm1271, %v4441, %v4443
        %v4445 = vrot.slane %v4178, 1
        %v4446 = vsel %vm1271, %v4443, %v4445
        %v4447 = vrot.slane %v4179, 1
        %v4448 = vsel %vm1271, %v4445, %v4447
        %v4449 = vrot.slane %v4180, 1
        %v4450 = vsel %vm1271, %v4447, %v4449
        %v4451 = vrot.slane %v4181, 1
        %v4452 = vsel %vm1271, %v4449, %v4451
        %v4453 = vrot.slane %v4182, 1
        %v4454 = vsel %vm1271, %v4451, %v4453
        %v4455 = vrot.slane %v4183, 1
        %v4456 = vsel %vm1271, %v4453, %v4455
        %v4457 = vrot.slane %v4184, 1
        %v4458 = vsel %vm1271, %v4455, %v4457
        %v4459 = vrot.slane %v4185, 1
        %v4460 = vsel %vm1271, %v4457, %v4459
        %v4461 = vrot.slane %v4186, 1
        %v4462 = vsel %vm1271, %v4459, %v4461
        %v4463 = vrot.slane %v4187, 1
        %v4464 = vsel %vm1271, %v4461, %v4463
        %v4465 = vrot.slane %v4188, 1
        %v4466 = vsel %vm1271, %v4463, %v4465
        %v4559 = vadd.f32 %v3997, %v4284
        %v4560 = vadd.f32 %v3998, %v4286
        %v4561 = vadd.f32 %v3999, %v4288
        %v4562 = vadd.f32 %v4000, %v4290
        %v4563 = vadd.f32 %v4001, %v4292
        %v4564 = vadd.f32 %v4002, %v4294
        %v4565 = vadd.f32 %v4003, %v4296
        %v4566 = vadd.f32 %v4004, %v4298
        %v4567 = vadd.f32 %v4005, %v4300
        %v4568 = vadd.f32 %v4006, %v4302
        %v4569 = vadd.f32 %v4007, %v4304
        %v4570 = vadd.f32 %v4008, %v4306
        %v4571 = vadd.f32 %v4009, %v4308
        %v4572 = vadd.f32 %v4010, %v4310
        %v4573 = vadd.f32 %v4011, %v4312
        %v4574 = vadd.f32 %v4012, %v4314
        %v4575 = vadd.f32 %v4013, %v4316
        %v4576 = vadd.f32 %v4014, %v4318
        %v4577 = vadd.f32 %v4015, %v4320
        %v4578 = vadd.f32 %v4016, %v4322
        %v4579 = vadd.f32 %v4017, %v4324
        %v4580 = vadd.f32 %v4018, %v4326
        %v4581 = vadd.f32 %v4019, %v4328
        %v4582 = vadd.f32 %v4020, %v4330
        %v4583 = vadd.f32 %v4021, %v4332
        %v4584 = vadd.f32 %v4022, %v4334
        %v4585 = vadd.f32 %v4023, %v4336
        %v4586 = vadd.f32 %v4024, %v4338
        %v4587 = vadd.f32 %v4025, %v4340
        %v4588 = vadd.f32 %v4026, %v4342
        %v4589 = vadd.f32 %v4027, %v4344
        %v4590 = vadd.f32 %v4028, %v4346
        %v4591 = vadd.f32 %v4029, %v4348
        %v4592 = vadd.f32 %v4030, %v4350
        %v4593 = vadd.f32 %v4031, %v4352
        %v4594 = vadd.f32 %v4032, %v4354
        %v4595 = vadd.f32 %v4033, %v4356
        %v4596 = vadd.f32 %v4034, %v4358
        %v4597 = vadd.f32 %v4035, %v4360
        %v4598 = vadd.f32 %v4036, %v4362
        %v4599 = vadd.f32 %v4037, %v4364
        %v4600 = vadd.f32 %v4038, %v4366
        %v4601 = vadd.f32 %v4039, %v4368
        %v4602 = vadd.f32 %v4040, %v4370
        %v4603 = vadd.f32 %v4041, %v4372
        %v4604 = vadd.f32 %v4042, %v4374
        %v4605 = vadd.f32 %v4043, %v4376
        %v4606 = vadd.f32 %v4044, %v4378
        %v4607 = vadd.f32 %v4045, %v4380
        %v4608 = vadd.f32 %v4046, %v4382
        %v4609 = vadd.f32 %v4047, %v4384
        %v4610 = vadd.f32 %v4048, %v4386
        %v4611 = vadd.f32 %v4049, %v4388
        %v4612 = vadd.f32 %v4050, %v4390
        %v4613 = vadd.f32 %v4051, %v4392
        %v4614 = vadd.f32 %v4052, %v4394
        %v4615 = vadd.f32 %v4053, %v4396
        %v4616 = vadd.f32 %v4054, %v4398
        %v4617 = vadd.f32 %v4055, %v4400
        %v4618 = vadd.f32 %v4056, %v4402
        %v4619 = vadd.f32 %v4057, %v4404
        %v4620 = vadd.f32 %v4058, %v4406
        %v4621 = vadd.f32 %v4059, %v4408
        %v4622 = vadd.f32 %v4060, %v4410
        %v4623 = vadd.f32 %v4061, %v4412
        %v4624 = vadd.f32 %v4062, %v4414
        %v4625 = vadd.f32 %v4063, %v4416
        %v4626 = vadd.f32 %v4064, %v4418
        %v4627 = vadd.f32 %v4065, %v4420
        %v4628 = vadd.f32 %v4066, %v4422
        %v4629 = vadd.f32 %v4067, %v4424
        %v4630 = vadd.f32 %v4068, %v4426
        %v4631 = vadd.f32 %v4069, %v4428
        %v4632 = vadd.f32 %v4070, %v4430
        %v4633 = vadd.f32 %v4071, %v4432
        %v4634 = vadd.f32 %v4072, %v4434
        %v4635 = vadd.f32 %v4073, %v4436
        %v4636 = vadd.f32 %v4074, %v4438
        %v4637 = vadd.f32 %v4075, %v4440
        %v4638 = vadd.f32 %v4076, %v4442
        %v4639 = vadd.f32 %v4077, %v4444
        %v4640 = vadd.f32 %v4078, %v4446
        %v4641 = vadd.f32 %v4079, %v4448
        %v4642 = vadd.f32 %v4080, %v4450
        %v4643 = vadd.f32 %v4081, %v4452
        %v4644 = vadd.f32 %v4082, %v4454
        %v4645 = vadd.f32 %v4083, %v4456
        %v4646 = vadd.f32 %v4084, %v4458
        %v4647 = vadd.f32 %v4085, %v4460
        %v4648 = vadd.f32 %v4086, %v4462
        %v4649 = vadd.f32 %v4087, %v4464
        %v4650 = vadd.f32 %v4088, %v4466
        %v4651 = vld [vmem:[#allocation2 + $0x8] sm:$0x1]
        %v4652 = vperm.slane %v4651, 0
        %v4653 = vmul.f32 %v471, %v4652
        %v4654 = vmul.f32 %v476, %v4652
        %v4655 = vmul.f32 %v481, %v4652
        %v4656 = vmul.f32 %v486, %v4652
        %v4657 = vmul.f32 %v491, %v4652
        %v4658 = vmul.f32 %v496, %v4652
        %v4659 = vmul.f32 %v501, %v4652
        %v4660 = vmul.f32 %v506, %v4652
        %v4661 = vmul.f32 %v511, %v4652
        %v4662 = vmul.f32 %v516, %v4652
        %v4663 = vmul.f32 %v521, %v4652
        %v4664 = vmul.f32 %v526, %v4652
        %v4665 = vmul.f32 %v531, %v4652
        %v4666 = vmul.f32 %v536, %v4652
        %v4667 = vmul.f32 %v541, %v4652
        %v4668 = vmul.f32 %v546, %v4652
        %v4669 = vmul.f32 %v551, %v4652
        %v4670 = vmul.f32 %v556, %v4652
        %v4671 = vmul.f32 %v561, %v4652
        %v4672 = vmul.f32 %v566, %v4652
        %v4673 = vmul.f32 %v571, %v4652
        %v4674 = vmul.f32 %v576, %v4652
        %v4675 = vmul.f32 %v581, %v4652
        %v4676 = vmul.f32 %v586, %v4652
        %v4677 = vmul.f32 %v591, %v4652
        %v4678 = vmul.f32 %v596, %v4652
        %v4679 = vmul.f32 %v601, %v4652
        %v4680 = vmul.f32 %v606, %v4652
        %v4681 = vmul.f32 %v611, %v4652
        %v4682 = vmul.f32 %v616, %v4652
        %v4683 = vmul.f32 %v621, %v4652
        %v4684 = vmul.f32 %v626, %v4652
        %v4685 = vmul.f32 %v631, %v4652
        %v4686 = vmul.f32 %v636, %v4652
        %v4687 = vmul.f32 %v641, %v4652
        %v4688 = vmul.f32 %v646, %v4652
        %v4689 = vmul.f32 %v651, %v4652
        %v4690 = vmul.f32 %v656, %v4652
        %v4691 = vmul.f32 %v661, %v4652
        %v4692 = vmul.f32 %v666, %v4652
        %v4693 = vmul.f32 %v671, %v4652
        %v4694 = vmul.f32 %v676, %v4652
        %v4695 = vmul.f32 %v681, %v4652
        %v4696 = vmul.f32 %v686, %v4652
        %v4697 = vmul.f32 %v691, %v4652
        %v4698 = vmul.f32 %v696, %v4652
        %v4699 = vmul.f32 %v701, %v4652
        %v4700 = vmul.f32 %v706, %v4652
        %v4701 = vmul.f32 %v711, %v4652
        %v4702 = vmul.f32 %v716, %v4652
        %v4703 = vmul.f32 %v721, %v4652
        %v4704 = vmul.f32 %v726, %v4652
        %v4705 = vmul.f32 %v731, %v4652
        %v4706 = vmul.f32 %v736, %v4652
        %v4707 = vmul.f32 %v741, %v4652
        %v4708 = vmul.f32 %v746, %v4652
        %v4709 = vmul.f32 %v751, %v4652
        %v4710 = vmul.f32 %v756, %v4652
        %v4711 = vmul.f32 %v761, %v4652
        %v4712 = vmul.f32 %v766, %v4652
        %v4713 = vmul.f32 %v771, %v4652
        %v4714 = vmul.f32 %v776, %v4652
        %v4715 = vmul.f32 %v781, %v4652
        %v4716 = vmul.f32 %v786, %v4652
        %v4717 = vmul.f32 %v791, %v4652
        %v4718 = vmul.f32 %v796, %v4652
        %v4719 = vmul.f32 %v801, %v4652
        %v4720 = vmul.f32 %v806, %v4652
        %v4721 = vmul.f32 %v811, %v4652
        %v4722 = vmul.f32 %v816, %v4652
        %v4723 = vmul.f32 %v821, %v4652
        %v4724 = vmul.f32 %v826, %v4652
        %v4725 = vmul.f32 %v831, %v4652
        %v4726 = vmul.f32 %v836, %v4652
        %v4727 = vmul.f32 %v841, %v4652
        %v4728 = vmul.f32 %v846, %v4652
        %v4729 = vmul.f32 %v851, %v4652
        %v4730 = vmul.f32 %v856, %v4652
        %v4731 = vmul.f32 %v861, %v4652
        %v4732 = vmul.f32 %v866, %v4652
        %v4733 = vmul.f32 %v871, %v4652
        %v4734 = vmul.f32 %v876, %v4652
        %v4735 = vmul.f32 %v881, %v4652
        %v4736 = vmul.f32 %v886, %v4652
        %v4737 = vmul.f32 %v891, %v4652
        %v4738 = vmul.f32 %v1082, %v4652
        %v4739 = vmul.f32 %v2203, %v4652
        %v4740 = vmul.f32 %v2208, %v4652
        %v4741 = vmul.f32 %v2213, %v4652
        %v4742 = vmul.f32 %v3892, %v4652
        %v4743 = vmul.f32 %v3897, %v4652
        %v4744 = vmul.f32 %v3902, %v4652
        %v4745 = vmul.f32 %v4093, %v4652
        %v4839 = vrot.slane %v4653, 2
        %v4840 = vrot.slane %v4654, 2
        %v4841 = vsel %vm1829, %v4839, %v4840
        %v4842 = vrot.slane %v4655, 2
        %v4843 = vsel %vm1829, %v4840, %v4842
        %v4844 = vrot.slane %v4656, 2
        %v4845 = vsel %vm1829, %v4842, %v4844
        %v4846 = vrot.slane %v4657, 2
        %v4847 = vsel %vm1829, %v4844, %v4846
        %v4848 = vrot.slane %v4658, 2
        %v4849 = vsel %vm1829, %v4846, %v4848
        %v4850 = vrot.slane %v4659, 2
        %v4851 = vsel %vm1829, %v4848, %v4850
        %v4852 = vrot.slane %v4660, 2
        %v4853 = vsel %vm1829, %v4850, %v4852
        %v4854 = vrot.slane %v4661, 2
        %v4855 = vsel %vm1829, %v4852, %v4854
        %v4856 = vrot.slane %v4662, 2
        %v4857 = vsel %vm1829, %v4854, %v4856
        %v4858 = vrot.slane %v4663, 2
        %v4859 = vsel %vm1829, %v4856, %v4858
        %v4860 = vrot.slane %v4664, 2
        %v4861 = vsel %vm1829, %v4858, %v4860
        %v4862 = vrot.slane %v4665, 2
        %v4863 = vsel %vm1829, %v4860, %v4862
        %v4864 = vrot.slane %v4666, 2
        %v4865 = vsel %vm1829, %v4862, %v4864
        %v4866 = vrot.slane %v4667, 2
        %v4867 = vsel %vm1829, %v4864, %v4866
        %v4868 = vrot.slane %v4668, 2
        %v4869 = vsel %vm1829, %v4866, %v4868
        %v4870 = vrot.slane %v4669, 2
        %v4871 = vsel %vm1829, %v4868, %v4870
        %v4872 = vrot.slane %v4670, 2
        %v4873 = vsel %vm1829, %v4870, %v4872
        %v4874 = vrot.slane %v4671, 2
        %v4875 = vsel %vm1829, %v4872, %v4874
        %v4876 = vrot.slane %v4672, 2
        %v4877 = vsel %vm1829, %v4874, %v4876
        %v4878 = vrot.slane %v4673, 2
        %v4879 = vsel %vm1829, %v4876, %v4878
        %v4880 = vrot.slane %v4674, 2
        %v4881 = vsel %vm1829, %v4878, %v4880
        %v4882 = vrot.slane %v4675, 2
        %v4883 = vsel %vm1829, %v4880, %v4882
        %v4884 = vrot.slane %v4676, 2
        %v4885 = vsel %vm1829, %v4882, %v4884
        %v4886 = vrot.slane %v4677, 2
        %v4887 = vsel %vm1829, %v4884, %v4886
        %v4888 = vrot.slane %v4678, 2
        %v4889 = vsel %vm1829, %v4886, %v4888
        %v4890 = vrot.slane %v4679, 2
        %v4891 = vsel %vm1829, %v4888, %v4890
        %v4892 = vrot.slane %v4680, 2
        %v4893 = vsel %vm1829, %v4890, %v4892
        %v4894 = vrot.slane %v4681, 2
        %v4895 = vsel %vm1829, %v4892, %v4894
        %v4896 = vrot.slane %v4682, 2
        %v4897 = vsel %vm1829, %v4894, %v4896
        %v4898 = vrot.slane %v4683, 2
        %v4899 = vsel %vm1829, %v4896, %v4898
        %v4900 = vrot.slane %v4684, 2
        %v4901 = vsel %vm1829, %v4898, %v4900
        %v4902 = vrot.slane %v4685, 2
        %v4903 = vsel %vm1829, %v4900, %v4902
        %v4904 = vrot.slane %v4686, 2
        %v4905 = vsel %vm1829, %v4902, %v4904
        %v4906 = vrot.slane %v4687, 2
        %v4907 = vsel %vm1829, %v4904, %v4906
        %v4908 = vrot.slane %v4688, 2
        %v4909 = vsel %vm1829, %v4906, %v4908
        %v4910 = vrot.slane %v4689, 2
        %v4911 = vsel %vm1829, %v4908, %v4910
        %v4912 = vrot.slane %v4690, 2
        %v4913 = vsel %vm1829, %v4910, %v4912
        %v4914 = vrot.slane %v4691, 2
        %v4915 = vsel %vm1829, %v4912, %v4914
        %v4916 = vrot.slane %v4692, 2
        %v4917 = vsel %vm1829, %v4914, %v4916
        %v4918 = vrot.slane %v4693, 2
        %v4919 = vsel %vm1829, %v4916, %v4918
        %v4920 = vrot.slane %v4694, 2
        %v4921 = vsel %vm1829, %v4918, %v4920
        %v4922 = vrot.slane %v4695, 2
        %v4923 = vsel %vm1829, %v4920, %v4922
        %v4924 = vrot.slane %v4696, 2
        %v4925 = vsel %vm1829, %v4922, %v4924
        %v4926 = vrot.slane %v4697, 2
        %v4927 = vsel %vm1829, %v4924, %v4926
        %v4928 = vrot.slane %v4698, 2
        %v4929 = vsel %vm1829, %v4926, %v4928
        %v4930 = vrot.slane %v4699, 2
        %v4931 = vsel %vm1829, %v4928, %v4930
        %v4932 = vrot.slane %v4700, 2
        %v4933 = vsel %vm1829, %v4930, %v4932
        %v4934 = vrot.slane %v4701, 2
        %v4935 = vsel %vm1829, %v4932, %v4934
        %v4936 = vrot.slane %v4702, 2
        %v4937 = vsel %vm1829, %v4934, %v4936
        %v4938 = vrot.slane %v4703, 2
        %v4939 = vsel %vm1829, %v4936, %v4938
        %v4940 = vrot.slane %v4704, 2
        %v4941 = vsel %vm1829, %v4938, %v4940
        %v4942 = vrot.slane %v4705, 2
        %v4943 = vsel %vm1829, %v4940, %v4942
        %v4944 = vrot.slane %v4706, 2
        %v4945 = vsel %vm1829, %v4942, %v4944
        %v4946 = vrot.slane %v4707, 2
        %v4947 = vsel %vm1829, %v4944, %v4946
        %v4948 = vrot.slane %v4708, 2
        %v4949 = vsel %vm1829, %v4946, %v4948
        %v4950 = vrot.slane %v4709, 2
        %v4951 = vsel %vm1829, %v4948, %v4950
        %v4952 = vrot.slane %v4710, 2
        %v4953 = vsel %vm1829, %v4950, %v4952
        %v4954 = vrot.slane %v4711, 2
        %v4955 = vsel %vm1829, %v4952, %v4954
        %v4956 = vrot.slane %v4712, 2
        %v4957 = vsel %vm1829, %v4954, %v4956
        %v4958 = vrot.slane %v4713, 2
        %v4959 = vsel %vm1829, %v4956, %v4958
        %v4960 = vrot.slane %v4714, 2
        %v4961 = vsel %vm1829, %v4958, %v4960
        %v4962 = vrot.slane %v4715, 2
        %v4963 = vsel %vm1829, %v4960, %v4962
        %v4964 = vrot.slane %v4716, 2
        %v4965 = vsel %vm1829, %v4962, %v4964
        %v4966 = vrot.slane %v4717, 2
        %v4967 = vsel %vm1829, %v4964, %v4966
        %v4968 = vrot.slane %v4718, 2
        %v4969 = vsel %vm1829, %v4966, %v4968
        %v4970 = vrot.slane %v4719, 2
        %v4971 = vsel %vm1829, %v4968, %v4970
        %v4972 = vrot.slane %v4720, 2
        %v4973 = vsel %vm1829, %v4970, %v4972
        %v4974 = vrot.slane %v4721, 2
        %v4975 = vsel %vm1829, %v4972, %v4974
        %v4976 = vrot.slane %v4722, 2
        %v4977 = vsel %vm1829, %v4974, %v4976
        %v4978 = vrot.slane %v4723, 2
        %v4979 = vsel %vm1829, %v4976, %v4978
        %v4980 = vrot.slane %v4724, 2
        %v4981 = vsel %vm1829, %v4978, %v4980
        %v4982 = vrot.slane %v4725, 2
        %v4983 = vsel %vm1829, %v4980, %v4982
        %v4984 = vrot.slane %v4726, 2
        %v4985 = vsel %vm1829, %v4982, %v4984
        %v4986 = vrot.slane %v4727, 2
        %v4987 = vsel %vm1829, %v4984, %v4986
        %v4988 = vrot.slane %v4728, 2
        %v4989 = vsel %vm1829, %v4986, %v4988
        %v4990 = vrot.slane %v4729, 2
        %v4991 = vsel %vm1829, %v4988, %v4990
        %v4992 = vrot.slane %v4730, 2
        %v4993 = vsel %vm1829, %v4990, %v4992
        %v4994 = vrot.slane %v4731, 2
        %v4995 = vsel %vm1829, %v4992, %v4994
        %v4996 = vrot.slane %v4732, 2
        %v4997 = vsel %vm1829, %v4994, %v4996
        %v4998 = vrot.slane %v4733, 2
        %v4999 = vsel %vm1829, %v4996, %v4998
        %v5000 = vrot.slane %v4734, 2
        %v5001 = vsel %vm1829, %v4998, %v5000
        %v5002 = vrot.slane %v4735, 2
        %v5003 = vsel %vm1829, %v5000, %v5002
        %v5004 = vrot.slane %v4736, 2
        %v5005 = vsel %vm1829, %v5002, %v5004
        %v5006 = vrot.slane %v4737, 2
        %v5007 = vsel %vm1829, %v5004, %v5006
        %v5008 = vrot.slane %v4738, 2
        %v5009 = vsel %vm1829, %v5006, %v5008
        %v5010 = vrot.slane %v4739, 2
        %v5011 = vsel %vm1829, %v5008, %v5010
        %v5012 = vrot.slane %v4740, 2
        %v5013 = vsel %vm1829, %v5010, %v5012
        %v5014 = vrot.slane %v4741, 2
        %v5015 = vsel %vm1829, %v5012, %v5014
        %v5016 = vrot.slane %v4742, 2
        %v5017 = vsel %vm1829, %v5014, %v5016
        %v5018 = vrot.slane %v4743, 2
        %v5019 = vsel %vm1829, %v5016, %v5018
        %v5020 = vrot.slane %v4744, 2
        %v5021 = vsel %vm1829, %v5018, %v5020
        %v5022 = vrot.slane %v4745, 2
        %v5023 = vsel %vm1829, %v5020, %v5022
        %v5116 = vadd.f32 %v4559, %v4841
        %v5117 = vadd.f32 %v4560, %v4843
        %v5118 = vadd.f32 %v4561, %v4845
        %v5119 = vadd.f32 %v4562, %v4847
        %v5120 = vadd.f32 %v4563, %v4849
        %v5121 = vadd.f32 %v4564, %v4851
        %v5122 = vadd.f32 %v4565, %v4853
        %v5123 = vadd.f32 %v4566, %v4855
        %v5124 = vadd.f32 %v4567, %v4857
        %v5125 = vadd.f32 %v4568, %v4859
        %v5126 = vadd.f32 %v4569, %v4861
        %v5127 = vadd.f32 %v4570, %v4863
        %v5128 = vadd.f32 %v4571, %v4865
        %v5129 = vadd.f32 %v4572, %v4867
        %v5130 = vadd.f32 %v4573, %v4869
        %v5131 = vadd.f32 %v4574, %v4871
        %v5132 = vadd.f32 %v4575, %v4873
        %v5133 = vadd.f32 %v4576, %v4875
        %v5134 = vadd.f32 %v4577, %v4877
        %v5135 = vadd.f32 %v4578, %v4879
        %v5136 = vadd.f32 %v4579, %v4881
        %v5137 = vadd.f32 %v4580, %v4883
        %v5138 = vadd.f32 %v4581, %v4885
        %v5139 = vadd.f32 %v4582, %v4887
        %v5140 = vadd.f32 %v4583, %v4889
        %v5141 = vadd.f32 %v4584, %v4891
        %v5142 = vadd.f32 %v4585, %v4893
        %v5143 = vadd.f32 %v4586, %v4895
        %v5144 = vadd.f32 %v4587, %v4897
        %v5145 = vadd.f32 %v4588, %v4899
        %v5146 = vadd.f32 %v4589, %v4901
        %v5147 = vadd.f32 %v4590, %v4903
        %v5148 = vadd.f32 %v4591, %v4905
        %v5149 = vadd.f32 %v4592, %v4907
        %v5150 = vadd.f32 %v4593, %v4909
        %v5151 = vadd.f32 %v4594, %v4911
        %v5152 = vadd.f32 %v4595, %v4913
        %v5153 = vadd.f32 %v4596, %v4915
        %v5154 = vadd.f32 %v4597, %v4917
        %v5155 = vadd.f32 %v4598, %v4919
        %v5156 = vadd.f32 %v4599, %v4921
        %v5157 = vadd.f32 %v4600, %v4923
        %v5158 = vadd.f32 %v4601, %v4925
        %v5159 = vadd.f32 %v4602, %v4927
        %v5160 = vadd.f32 %v4603, %v4929
        %v5161 = vadd.f32 %v4604, %v4931
        %v5162 = vadd.f32 %v4605, %v4933
        %v5163 = vadd.f32 %v4606, %v4935
        %v5164 = vadd.f32 %v4607, %v4937
        %v5165 = vadd.f32 %v4608, %v4939
        %v5166 = vadd.f32 %v4609, %v4941
        %v5167 = vadd.f32 %v4610, %v4943
        %v5168 = vadd.f32 %v4611, %v4945
        %v5169 = vadd.f32 %v4612, %v4947
        %v5170 = vadd.f32 %v4613, %v4949
        %v5171 = vadd.f32 %v4614, %v4951
        %v5172 = vadd.f32 %v4615, %v4953
        %v5173 = vadd.f32 %v4616, %v4955
        %v5174 = vadd.f32 %v4617, %v4957
        %v5175 = vadd.f32 %v4618, %v4959
        %v5176 = vadd.f32 %v4619, %v4961
        %v5177 = vadd.f32 %v4620, %v4963
        %v5178 = vadd.f32 %v4621, %v4965
        %v5179 = vadd.f32 %v4622, %v4967
        %v5180 = vadd.f32 %v4623, %v4969
        %v5181 = vadd.f32 %v4624, %v4971
        %v5182 = vadd.f32 %v4625, %v4973
        %v5183 = vadd.f32 %v4626, %v4975
        %v5184 = vadd.f32 %v4627, %v4977
        %v5185 = vadd.f32 %v4628, %v4979
        %v5186 = vadd.f32 %v4629, %v4981
        %v5187 = vadd.f32 %v4630, %v4983
        %v5188 = vadd.f32 %v4631, %v4985
        %v5189 = vadd.f32 %v4632, %v4987
        %v5190 = vadd.f32 %v4633, %v4989
        %v5191 = vadd.f32 %v4634, %v4991
        %v5192 = vadd.f32 %v4635, %v4993
        %v5193 = vadd.f32 %v4636, %v4995
        %v5194 = vadd.f32 %v4637, %v4997
        %v5195 = vadd.f32 %v4638, %v4999
        %v5196 = vadd.f32 %v4639, %v5001
        %v5197 = vadd.f32 %v4640, %v5003
        %v5198 = vadd.f32 %v4641, %v5005
        %v5199 = vadd.f32 %v4642, %v5007
        %v5200 = vadd.f32 %v4643, %v5009
        %v5201 = vadd.f32 %v4644, %v5011
        %v5202 = vadd.f32 %v4645, %v5013
        %v5203 = vadd.f32 %v4646, %v5015
        %v5204 = vadd.f32 %v4647, %v5017
        %v5205 = vadd.f32 %v4648, %v5019
        %v5206 = vadd.f32 %v4649, %v5021
        %v5207 = vadd.f32 %v4650, %v5023
        %v5208 = vld [vmem:[#allocation4] sm:$0x1]
        %v5210 = vperm.slane %v5208, 0
        %v5212 = vadd.f32 %v5116, %v5210
        %v5213 = vadd.f32 %v5117, %v5210
        %v5214 = vadd.f32 %v5118, %v5210
        %v5215 = vadd.f32 %v5119, %v5210
        %v5216 = vadd.f32 %v5120, %v5210
        %v5217 = vadd.f32 %v5121, %v5210
        %v5218 = vadd.f32 %v5122, %v5210
        %v5219 = vadd.f32 %v5123, %v5210
        %v5220 = vadd.f32 %v5124, %v5210
        %v5221 = vadd.f32 %v5125, %v5210
        %v5222 = vadd.f32 %v5126, %v5210
        %v5223 = vadd.f32 %v5127, %v5210
        %v5224 = vadd.f32 %v5128, %v5210
        %v5225 = vadd.f32 %v5129, %v5210
        %v5226 = vadd.f32 %v5130, %v5210
        %v5227 = vadd.f32 %v5131, %v5210
        %v5228 = vadd.f32 %v5132, %v5210
        %v5229 = vadd.f32 %v5133, %v5210
        %v5230 = vadd.f32 %v5134, %v5210
        %v5231 = vadd.f32 %v5135, %v5210
        %v5232 = vadd.f32 %v5136, %v5210
        %v5233 = vadd.f32 %v5137, %v5210
        %v5234 = vadd.f32 %v5138, %v5210
        %v5235 = vadd.f32 %v5139, %v5210
        %v5236 = vadd.f32 %v5140, %v5210
        %v5237 = vadd.f32 %v5141, %v5210
        %v5238 = vadd.f32 %v5142, %v5210
        %v5239 = vadd.f32 %v5143, %v5210
        %v5240 = vadd.f32 %v5144, %v5210
        %v5241 = vadd.f32 %v5145, %v5210
        %v5242 = vadd.f32 %v5146, %v5210
        %v5243 = vadd.f32 %v5147, %v5210
        %v5244 = vadd.f32 %v5148, %v5210
        %v5245 = vadd.f32 %v5149, %v5210
        %v5246 = vadd.f32 %v5150, %v5210
        %v5247 = vadd.f32 %v5151, %v5210
        %v5248 = vadd.f32 %v5152, %v5210
        %v5249 = vadd.f32 %v5153, %v5210
        %v5250 = vadd.f32 %v5154, %v5210
        %v5251 = vadd.f32 %v5155, %v5210
        %v5252 = vadd.f32 %v5156, %v5210
        %v5253 = vadd.f32 %v5157, %v5210
        %v5254 = vadd.f32 %v5158, %v5210
        %v5255 = vadd.f32 %v5159, %v5210
        %v5256 = vadd.f32 %v5160, %v5210
        %v5257 = vadd.f32 %v5161, %v5210
        %v5258 = vadd.f32 %v5162, %v5210
        %v5259 = vadd.f32 %v5163, %v5210
        %v5260 = vadd.f32 %v5164, %v5210
        %v5261 = vadd.f32 %v5165, %v5210
        %v5262 = vadd.f32 %v5166, %v5210
        %v5263 = vadd.f32 %v5167, %v5210
        %v5264 = vadd.f32 %v5168, %v5210
        %v5265 = vadd.f32 %v5169, %v5210
        %v5266 = vadd.f32 %v5170, %v5210
        %v5267 = vadd.f32 %v5171, %v5210
        %v5268 = vadd.f32 %v5172, %v5210
        %v5269 = vadd.f32 %v5173, %v5210
        %v5270 = vadd.f32 %v5174, %v5210
        %v5271 = vadd.f32 %v5175, %v5210
        %v5272 = vadd.f32 %v5176, %v5210
        %v5273 = vadd.f32 %v5177, %v5210
        %v5274 = vadd.f32 %v5178, %v5210
        %v5275 = vadd.f32 %v5179, %v5210
        %v5276 = vadd.f32 %v5180, %v5210
        %v5277 = vadd.f32 %v5181, %v5210
        %v5278 = vadd.f32 %v5182, %v5210
        %v5279 = vadd.f32 %v5183, %v5210
        %v5280 = vadd.f32 %v5184, %v5210
        %v5281 = vadd.f32 %v5185, %v5210
        %v5282 = vadd.f32 %v5186, %v5210
        %v5283 = vadd.f32 %v5187, %v5210
        %v5284 = vadd.f32 %v5188, %v5210
        %v5285 = vadd.f32 %v5189, %v5210
        %v5286 = vadd.f32 %v5190, %v5210
        %v5287 = vadd.f32 %v5191, %v5210
        %v5288 = vadd.f32 %v5192, %v5210
        %v5289 = vadd.f32 %v5193, %v5210
        %v5290 = vadd.f32 %v5194, %v5210
        %v5291 = vadd.f32 %v5195, %v5210
        %v5292 = vadd.f32 %v5196, %v5210
        %v5293 = vadd.f32 %v5197, %v5210
        %v5294 = vadd.f32 %v5198, %v5210
        %v5295 = vadd.f32 %v5199, %v5210
        %v5296 = vadd.f32 %v5200, %v5210
        %v5297 = vadd.f32 %v5201, %v5210
        %v5298 = vadd.f32 %v5202, %v5210
        %v5299 = vadd.f32 %v5203, %v5210
        %v5300 = vadd.f32 %v5204, %v5210
        %v5301 = vadd.f32 %v5205, %v5210
        %v5302 = vadd.f32 %v5206, %v5210
        %v5303 = vadd.f32 %v5207, %v5210
        %v5304 = vmax.f32 %v5212, 0.0
        %v5305 = vmax.f32 %v5213, 0.0
        %v5306 = vmax.f32 %v5214, 0.0
        %v5307 = vmax.f32 %v5215, 0.0
        %v5308 = vmax.f32 %v5216, 0.0
        %v5309 = vmax.f32 %v5217, 0.0
        %v5310 = vmax.f32 %v5218, 0.0
        %v5311 = vmax.f32 %v5219, 0.0
        %v5312 = vmax.f32 %v5220, 0.0
        %v5313 = vmax.f32 %v5221, 0.0
        %v5314 = vmax.f32 %v5222, 0.0
        %v5315 = vmax.f32 %v5223, 0.0
        %v5316 = vmax.f32 %v5224, 0.0
        %v5317 = vmax.f32 %v5225, 0.0
        %v5318 = vmax.f32 %v5226, 0.0
        %v5319 = vmax.f32 %v5227, 0.0
        %v5320 = vmax.f32 %v5228, 0.0
        %v5321 = vmax.f32 %v5229, 0.0
        %v5322 = vmax.f32 %v5230, 0.0
        %v5323 = vmax.f32 %v5231, 0.0
        %v5324 = vmax.f32 %v5232, 0.0
        %v5325 = vmax.f32 %v5233, 0.0
        %v5326 = vmax.f32 %v5234, 0.0
        %v5327 = vmax.f32 %v5235, 0.0
        %v5328 = vmax.f32 %v5236, 0.0
        %v5329 = vmax.f32 %v5237, 0.0
        %v5330 = vmax.f32 %v5238, 0.0
        %v5331 = vmax.f32 %v5239, 0.0
        %v5332 = vmax.f32 %v5240, 0.0
        %v5333 = vmax.f32 %v5241, 0.0
        %v5334 = vmax.f32 %v5242, 0.0
        %v5335 = vmax.f32 %v5243, 0.0
        %v5336 = vmax.f32 %v5244, 0.0
        %v5337 = vmax.f32 %v5245, 0.0
        %v5338 = vmax.f32 %v5246, 0.0
        %v5339 = vmax.f32 %v5247, 0.0
        %v5340 = vmax.f32 %v5248, 0.0
        %v5341 = vmax.f32 %v5249, 0.0
        %v5342 = vmax.f32 %v5250, 0.0
        %v5343 = vmax.f32 %v5251, 0.0
        %v5344 = vmax.f32 %v5252, 0.0
        %v5345 = vmax.f32 %v5253, 0.0
        %v5346 = vmax.f32 %v5254, 0.0
        %v5347 = vmax.f32 %v5255, 0.0
        %v5348 = vmax.f32 %v5256, 0.0
        %v5349 = vmax.f32 %v5257, 0.0
        %v5350 = vmax.f32 %v5258, 0.0
        %v5351 = vmax.f32 %v5259, 0.0
        %v5352 = vmax.f32 %v5260, 0.0
        %v5353 = vmax.f32 %v5261, 0.0
        %v5354 = vmax.f32 %v5262, 0.0
        %v5355 = vmax.f32 %v5263, 0.0
        %v5356 = vmax.f32 %v5264, 0.0
        %v5357 = vmax.f32 %v5265, 0.0
        %v5358 = vmax.f32 %v5266, 0.0
        %v5359 = vmax.f32 %v5267, 0.0
        %v5360 = vmax.f32 %v5268, 0.0
        %v5361 = vmax.f32 %v5269, 0.0
        %v5362 = vmax.f32 %v5270, 0.0
        %v5363 = vmax.f32 %v5271, 0.0
        %v5364 = vmax.f32 %v5272, 0.0
        %v5365 = vmax.f32 %v5273, 0.0
        %v5366 = vmax.f32 %v5274, 0.0
        %v5367 = vmax.f32 %v5275, 0.0
        %v5368 = vmax.f32 %v5276, 0.0
        %v5369 = vmax.f32 %v5277, 0.0
        %v5370 = vmax.f32 %v5278, 0.0
        %v5371 = vmax.f32 %v5279, 0.0
        %v5372 = vmax.f32 %v5280, 0.0
        %v5373 = vmax.f32 %v5281, 0.0
        %v5374 = vmax.f32 %v5282, 0.0
        %v5375 = vmax.f32 %v5283, 0.0
        %v5376 = vmax.f32 %v5284, 0.0
        %v5377 = vmax.f32 %v5285, 0.0
        %v5378 = vmax.f32 %v5286, 0.0
        %v5379 = vmax.f32 %v5287, 0.0
        %v5380 = vmax.f32 %v5288, 0.0
        %v5381 = vmax.f32 %v5289, 0.0
        %v5382 = vmax.f32 %v5290, 0.0
        %v5383 = vmax.f32 %v5291, 0.0
        %v5384 = vmax.f32 %v5292, 0.0
        %v5385 = vmax.f32 %v5293, 0.0
        %v5386 = vmax.f32 %v5294, 0.0
        %v5387 = vmax.f32 %v5295, 0.0
        %v5388 = vmax.f32 %v5296, 0.0
        %v5389 = vmax.f32 %v5297, 0.0
        %v5390 = vmax.f32 %v5298, 0.0
        %v5391 = vmax.f32 %v5299, 0.0
        %v5392 = vmax.f32 %v5300, 0.0
        %v5393 = vmax.f32 %v5301, 0.0
        %v5394 = vmax.f32 %v5302, 0.0
        %v5395 = vmax.f32 %v5303, 0.0
        %v5396 = vpack.c.bf16 %v5305, %v5304
        %v5397 = vpack.c.bf16 %v5307, %v5306
        %v5398 = vpack.c.bf16 %v5309, %v5308
        %v5399 = vpack.c.bf16 %v5311, %v5310
        %v5400 = vpack.c.bf16 %v5313, %v5312
        %v5401 = vpack.c.bf16 %v5315, %v5314
        %v5402 = vpack.c.bf16 %v5317, %v5316
        %v5403 = vpack.c.bf16 %v5319, %v5318
        %v5404 = vpack.c.bf16 %v5321, %v5320
        %v5405 = vpack.c.bf16 %v5323, %v5322
        %v5406 = vpack.c.bf16 %v5325, %v5324
        %v5407 = vpack.c.bf16 %v5327, %v5326
        %v5408 = vpack.c.bf16 %v5329, %v5328
        %v5409 = vpack.c.bf16 %v5331, %v5330
        %v5410 = vpack.c.bf16 %v5333, %v5332
        %v5411 = vpack.c.bf16 %v5335, %v5334
        %v5412 = vpack.c.bf16 %v5337, %v5336
        %v5413 = vpack.c.bf16 %v5339, %v5338
        %v5414 = vpack.c.bf16 %v5341, %v5340
        %v5415 = vpack.c.bf16 %v5343, %v5342
        %v5416 = vpack.c.bf16 %v5345, %v5344
        %v5417 = vpack.c.bf16 %v5347, %v5346
        %v5418 = vpack.c.bf16 %v5349, %v5348
        %v5419 = vpack.c.bf16 %v5351, %v5350
        %v5420 = vpack.c.bf16 %v5353, %v5352
        %v5421 = vpack.c.bf16 %v5355, %v5354
        %v5422 = vpack.c.bf16 %v5357, %v5356
        %v5423 = vpack.c.bf16 %v5359, %v5358
        %v5424 = vpack.c.bf16 %v5361, %v5360
        %v5425 = vpack.c.bf16 %v5363, %v5362
        %v5426 = vpack.c.bf16 %v5365, %v5364
        %v5427 = vpack.c.bf16 %v5367, %v5366
        %v5428 = vpack.c.bf16 %v5369, %v5368
        %v5429 = vpack.c.bf16 %v5371, %v5370
        %v5430 = vpack.c.bf16 %v5373, %v5372
        %v5431 = vpack.c.bf16 %v5375, %v5374
        %v5432 = vpack.c.bf16 %v5377, %v5376
        %v5433 = vpack.c.bf16 %v5379, %v5378
        %v5434 = vpack.c.bf16 %v5381, %v5380
        %v5435 = vpack.c.bf16 %v5383, %v5382
        %v5436 = vpack.c.bf16 %v5385, %v5384
        %v5437 = vpack.c.bf16 %v5387, %v5386
        %v5438 = vld [vmem:[#allocation6] sm:$0xf]
        %v5439 = vld [vmem:[#allocation6 + $0x4] sm:$0xf]
        %v5440 = vld [vmem:[#allocation6 + $0x8] sm:$0xf]
        %v5441 = vld [vmem:[#allocation6 + $0xc] sm:$0xf]
        %v5442 = vpack.c.bf16 %v5388, %v5388
        %s5443 = scalar_lea.vmem [#allocation6], 16
        %v5444 = vld [vmem:[%s5443] sm:$0xf]
        %v5445 = vld [vmem:[%s5443 + $0x4] sm:$0xf]
        %v5446 = vld [vmem:[%s5443 + $0x8] sm:$0xf]
        %v5447 = vld [vmem:[%s5443 + $0xc] sm:$0xf]
        %vm5448 = vsmask.f32 7424
        %v5450 = vshrl.u32 %v5396, 16
        %v5452 = vshll.u32 %v5396, 16
        %v5454 = vrot.slane %v5452, 1
        %v5455 = vor.u32 %v5450, %v5454
        %v5457 = vshll.u32 %v5397, 16
        %v5459 = vrot.slane %v5457, 1
        %v5460 = vsel %vm5448, %v5455, %v5459
        %v5461 = vshrl.u32 %v5397, 16
        %v5463 = vor.u32 %v5461, %v5459
        %v5465 = vshll.u32 %v5398, 16
        %v5467 = vrot.slane %v5465, 1
        %v5468 = vsel %vm5448, %v5463, %v5467
        %v5469 = vshrl.u32 %v5398, 16
        %v5471 = vor.u32 %v5469, %v5467
        %v5473 = vshll.u32 %v5399, 16
        %v5475 = vrot.slane %v5473, 1
        %v5476 = vsel %vm5448, %v5471, %v5475
        %v5477 = vshrl.u32 %v5399, 16
        %v5479 = vor.u32 %v5477, %v5475
        %v5481 = vshll.u32 %v5400, 16
        %v5483 = vrot.slane %v5481, 1
        %v5484 = vsel %vm5448, %v5479, %v5483
        %v5485 = vshrl.u32 %v5400, 16
        %v5487 = vor.u32 %v5485, %v5483
        %v5489 = vshll.u32 %v5401, 16
        %v5491 = vrot.slane %v5489, 1
        %v5492 = vsel %vm5448, %v5487, %v5491
        %v5493 = vshrl.u32 %v5401, 16
        %v5495 = vor.u32 %v5493, %v5491
        %v5497 = vshll.u32 %v5402, 16
        %v5499 = vrot.slane %v5497, 1
        %v5500 = vsel %vm5448, %v5495, %v5499
        %v5501 = vshrl.u32 %v5402, 16
        %v5503 = vor.u32 %v5501, %v5499
        %v5505 = vshll.u32 %v5403, 16
        %v5507 = vrot.slane %v5505, 1
        %v5508 = vsel %vm5448, %v5503, %v5507
        %v5509 = vshrl.u32 %v5403, 16
        %v5511 = vor.u32 %v5509, %v5507
        %v5513 = vshll.u32 %v5404, 16
        %v5515 = vrot.slane %v5513, 1
        %v5516 = vsel %vm5448, %v5511, %v5515
        %v5517 = vshrl.u32 %v5404, 16
        %v5519 = vor.u32 %v5517, %v5515
        %v5521 = vshll.u32 %v5405, 16
        %v5523 = vrot.slane %v5521, 1
        %v5524 = vsel %vm5448, %v5519, %v5523
        %v5525 = vshrl.u32 %v5405, 16
        %v5527 = vor.u32 %v5525, %v5523
        %v5529 = vshll.u32 %v5406, 16
        %v5531 = vrot.slane %v5529, 1
        %v5532 = vsel %vm5448, %v5527, %v5531
        %v5533 = vshrl.u32 %v5406, 16
        %v5535 = vor.u32 %v5533, %v5531
        %v5537 = vshll.u32 %v5407, 16
        %v5539 = vrot.slane %v5537, 1
        %v5540 = vsel %vm5448, %v5535, %v5539
        %v5541 = vshrl.u32 %v5407, 16
        %v5543 = vor.u32 %v5541, %v5539
        %v5545 = vshll.u32 %v5408, 16
        %v5547 = vrot.slane %v5545, 1
        %v5548 = vsel %vm5448, %v5543, %v5547
        %v5549 = vshrl.u32 %v5408, 16
        %v5551 = vor.u32 %v5549, %v5547
        %v5553 = vshll.u32 %v5409, 16
        %v5555 = vrot.slane %v5553, 1
        %v5556 = vsel %vm5448, %v5551, %v5555
        %v5557 = vshrl.u32 %v5409, 16
        %v5559 = vor.u32 %v5557, %v5555
        %v5561 = vshll.u32 %v5410, 16
        %v5563 = vrot.slane %v5561, 1
        %v5564 = vsel %vm5448, %v5559, %v5563
        %v5565 = vshrl.u32 %v5410, 16
        %v5567 = vor.u32 %v5565, %v5563
        %v5569 = vshll.u32 %v5411, 16
        %v5571 = vrot.slane %v5569, 1
        %v5572 = vsel %vm5448, %v5567, %v5571
        %v5573 = vshrl.u32 %v5411, 16
        %v5575 = vor.u32 %v5573, %v5571
        %v5577 = vshll.u32 %v5412, 16
        %v5579 = vrot.slane %v5577, 1
        %v5580 = vsel %vm5448, %v5575, %v5579
        %v5581 = vshrl.u32 %v5412, 16
        %v5583 = vor.u32 %v5581, %v5579
        %v5585 = vshll.u32 %v5413, 16
        %v5587 = vrot.slane %v5585, 1
        %v5588 = vsel %vm5448, %v5583, %v5587
        %v5589 = vshrl.u32 %v5413, 16
        %v5591 = vor.u32 %v5589, %v5587
        %v5593 = vshll.u32 %v5414, 16
        %v5595 = vrot.slane %v5593, 1
        %v5596 = vsel %vm5448, %v5591, %v5595
        %v5597 = vshrl.u32 %v5414, 16
        %v5599 = vor.u32 %v5597, %v5595
        %v5601 = vshll.u32 %v5415, 16
        %v5603 = vrot.slane %v5601, 1
        %v5604 = vsel %vm5448, %v5599, %v5603
        %v5605 = vshrl.u32 %v5415, 16
        %v5607 = vor.u32 %v5605, %v5603
        %v5609 = vshll.u32 %v5416, 16
        %v5611 = vrot.slane %v5609, 1
        %v5612 = vsel %vm5448, %v5607, %v5611
        %v5613 = vshrl.u32 %v5416, 16
        %v5615 = vor.u32 %v5613, %v5611
        %v5617 = vshll.u32 %v5417, 16
        %v5619 = vrot.slane %v5617, 1
        %v5620 = vsel %vm5448, %v5615, %v5619
        %v5621 = vshrl.u32 %v5417, 16
        %v5623 = vor.u32 %v5621, %v5619
        %v5625 = vshll.u32 %v5418, 16
        %v5627 = vrot.slane %v5625, 1
        %v5628 = vsel %vm5448, %v5623, %v5627
        %v5629 = vshrl.u32 %v5418, 16
        %v5631 = vor.u32 %v5629, %v5627
        %v5633 = vshll.u32 %v5419, 16
        %v5635 = vrot.slane %v5633, 1
        %v5636 = vsel %vm5448, %v5631, %v5635
        %v5637 = vshrl.u32 %v5419, 16
        %v5639 = vor.u32 %v5637, %v5635
        %v5641 = vshll.u32 %v5420, 16
        %v5643 = vrot.slane %v5641, 1
        %v5644 = vsel %vm5448, %v5639, %v5643
        %v5645 = vshrl.u32 %v5420, 16
        %v5647 = vor.u32 %v5645, %v5643
        %v5649 = vshll.u32 %v5421, 16
        %v5651 = vrot.slane %v5649, 1
        %v5652 = vsel %vm5448, %v5647, %v5651
        %v5653 = vshrl.u32 %v5421, 16
        %v5655 = vor.u32 %v5653, %v5651
        %v5657 = vshll.u32 %v5422, 16
        %v5659 = vrot.slane %v5657, 1
        %v5660 = vsel %vm5448, %v5655, %v5659
        %v5661 = vshrl.u32 %v5422, 16
        %v5663 = vor.u32 %v5661, %v5659
        %v5665 = vshll.u32 %v5423, 16
        %v5667 = vrot.slane %v5665, 1
        %v5668 = vsel %vm5448, %v5663, %v5667
        %v5669 = vshrl.u32 %v5423, 16
        %v5671 = vor.u32 %v5669, %v5667
        %v5673 = vshll.u32 %v5424, 16
        %v5675 = vrot.slane %v5673, 1
        %v5676 = vsel %vm5448, %v5671, %v5675
        %v5677 = vshrl.u32 %v5424, 16
        %v5679 = vor.u32 %v5677, %v5675
        %v5681 = vshll.u32 %v5425, 16
        %v5683 = vrot.slane %v5681, 1
        %v5684 = vsel %vm5448, %v5679, %v5683
        %v5685 = vshrl.u32 %v5425, 16
        %v5687 = vor.u32 %v5685, %v5683
        %v5689 = vshll.u32 %v5426, 16
        %v5691 = vrot.slane %v5689, 1
        %v5692 = vsel %vm5448, %v5687, %v5691
        %v5693 = vshrl.u32 %v5426, 16
        %v5695 = vor.u32 %v5693, %v5691
        %v5697 = vshll.u32 %v5427, 16
        %v5699 = vrot.slane %v5697, 1
        %v5700 = vsel %vm5448, %v5695, %v5699
        %v5701 = vshrl.u32 %v5427, 16
        %v5703 = vor.u32 %v5701, %v5699
        %v5705 = vshll.u32 %v5428, 16
        %v5707 = vrot.slane %v5705, 1
        %v5708 = vsel %vm5448, %v5703, %v5707
        %v5709 = vshrl.u32 %v5428, 16
        %v5711 = vor.u32 %v5709, %v5707
        %v5713 = vshll.u32 %v5429, 16
        %v5715 = vrot.slane %v5713, 1
        %v5716 = vsel %vm5448, %v5711, %v5715
        %v5717 = vshrl.u32 %v5429, 16
        %v5719 = vor.u32 %v5717, %v5715
        %v5721 = vshll.u32 %v5430, 16
        %v5723 = vrot.slane %v5721, 1
        %v5724 = vsel %vm5448, %v5719, %v5723
        %v5725 = vshrl.u32 %v5430, 16
        %v5727 = vor.u32 %v5725, %v5723
        %v5729 = vshll.u32 %v5431, 16
        %v5731 = vrot.slane %v5729, 1
        %v5732 = vsel %vm5448, %v5727, %v5731
        %v5733 = vshrl.u32 %v5431, 16
        %v5735 = vor.u32 %v5733, %v5731
        %v5737 = vshll.u32 %v5432, 16
        %v5739 = vrot.slane %v5737, 1
        %v5740 = vsel %vm5448, %v5735, %v5739
        %v5741 = vshrl.u32 %v5432, 16
        %v5743 = vor.u32 %v5741, %v5739
        %v5745 = vshll.u32 %v5433, 16
        %v5747 = vrot.slane %v5745, 1
        %v5748 = vsel %vm5448, %v5743, %v5747
        %v5749 = vshrl.u32 %v5433, 16
        %v5751 = vor.u32 %v5749, %v5747
        %v5753 = vshll.u32 %v5434, 16
        %v5755 = vrot.slane %v5753, 1
        %v5756 = vsel %vm5448, %v5751, %v5755
        %v5757 = vshrl.u32 %v5434, 16
        %v5759 = vor.u32 %v5757, %v5755
        %v5761 = vshll.u32 %v5435, 16
        %v5763 = vrot.slane %v5761, 1
        %v5764 = vsel %vm5448, %v5759, %v5763
        %v5765 = vshrl.u32 %v5435, 16
        %v5767 = vor.u32 %v5765, %v5763
        %v5769 = vshll.u32 %v5436, 16
        %v5771 = vrot.slane %v5769, 1
        %v5772 = vsel %vm5448, %v5767, %v5771
        %v5773 = vshrl.u32 %v5436, 16
        %v5775 = vor.u32 %v5773, %v5771
        %v5777 = vshll.u32 %v5437, 16
        %v5779 = vrot.slane %v5777, 1
        %v5780 = vsel %vm5448, %v5775, %v5779
        %v5781 = vshrl.u32 %v5437, 16
        %v5783 = vor.u32 %v5781, %v5779
        %v5785 = vshll.u32 %v5442, 16
        %v5787 = vrot.slane %v5785, 1
        %v5788 = vsel %vm5448, %v5783, %v5787
        %v5793 = vunpack.c.l.b16 %v5444
        %v5794 = vunpack.c.l.b16 %v5445
        %v5795 = vunpack.c.l.b16 %v5446
        %v5796 = vunpack.c.l.b16 %v5447
        %v5797 = vpack.c.b16 %v5794, %v5793
        %v5798 = vpack.c.b16 %v5796, %v5795
        %vm5801 = vcmask 261120
        %v5803 = vsel %vm5801, %v5460, 0
        %v5806 = vsel %vm5801, %v5468, 0
        %v5809 = vsel %vm5801, %v5476, 0
        %v5812 = vsel %vm5801, %v5484, 0
        %v5815 = vsel %vm5801, %v5492, 0
        %v5818 = vsel %vm5801, %v5500, 0
        %v5821 = vsel %vm5801, %v5508, 0
        %v5824 = vsel %vm5801, %v5516, 0
        %v5827 = vsel %vm5801, %v5524, 0
        %v5830 = vsel %vm5801, %v5532, 0
        %v5833 = vsel %vm5801, %v5540, 0
        %v5836 = vsel %vm5801, %v5548, 0
        %v5839 = vsel %vm5801, %v5556, 0
        %v5842 = vsel %vm5801, %v5564, 0
        %v5845 = vsel %vm5801, %v5572, 0
        %v5848 = vsel %vm5801, %v5580, 0
        %v5851 = vsel %vm5801, %v5588, 0
        %v5854 = vsel %vm5801, %v5596, 0
        %v5857 = vsel %vm5801, %v5604, 0
        %v5860 = vsel %vm5801, %v5612, 0
        %v5863 = vsel %vm5801, %v5620, 0
        %v5866 = vsel %vm5801, %v5628, 0
        %v5869 = vsel %vm5801, %v5636, 0
        %v5872 = vsel %vm5801, %v5644, 0
        %v5875 = vsel %vm5801, %v5652, 0
        %v5878 = vsel %vm5801, %v5660, 0
        %v5881 = vsel %vm5801, %v5668, 0
        %v5884 = vsel %vm5801, %v5676, 0
        %v5887 = vsel %vm5801, %v5684, 0
        %v5890 = vsel %vm5801, %v5692, 0
        %v5893 = vsel %vm5801, %v5700, 0
        %v5896 = vsel %vm5801, %v5708, 0
        %v5899 = vsel %vm5801, %v5716, 0
        %v5902 = vsel %vm5801, %v5724, 0
        %v5905 = vsel %vm5801, %v5732, 0
        %v5908 = vsel %vm5801, %v5740, 0
        %v5911 = vsel %vm5801, %v5748, 0
        %v5914 = vsel %vm5801, %v5756, 0
        %v5917 = vsel %vm5801, %v5764, 0
        %v5920 = vsel %vm5801, %v5772, 0
        %v5923 = vsel %vm5801, %v5780, 0
        %v5926 = vsel %vm5801, %v5788, 0
        %5928 = vmatpush.bf16.msra.mxu0 0
        %5929 = vmatpush.bf16.msra.mxu0 0
        %5930 = vmatpush.bf16.msra.mxu0 0
        %5931 = vmatpush.bf16.msra.mxu0 0
        %5932 = vmatpush.bf16.msra.mxu0 0
        %5933 = vmatpush.bf16.msra.mxu0 0
        %5934 = vmatpush.bf16.msra.mxu0 %v5798
        %5935 = vmatpush.bf16.msra.mxu0 %v5797
        %5936 = vmatmul.bf16.gmra.mxu0 %v5803
        %v5937 = vpop.f32.mrf.mxu0
        %v5938 = vadd.f32 0.0, %v5937
        %v5939 = vpop.f32.mrf.mxu0
        %v5940 = vadd.f32 0.0, %v5939
        %5941 = vmatmul.bf16.gmra.mxu0 %v5806
        %v5942 = vpop.f32.mrf.mxu0
        %v5943 = vadd.f32 0.0, %v5942
        %v5944 = vpop.f32.mrf.mxu0
        %v5945 = vadd.f32 0.0, %v5944
        %5946 = vmatmul.bf16.gmra.mxu0 %v5809
        %v5947 = vpop.f32.mrf.mxu0
        %v5948 = vadd.f32 0.0, %v5947
        %v5949 = vpop.f32.mrf.mxu0
        %v5950 = vadd.f32 0.0, %v5949
        %5951 = vmatmul.bf16.gmra.mxu0 %v5812
        %v5952 = vpop.f32.mrf.mxu0
        %v5953 = vadd.f32 0.0, %v5952
        %v5954 = vpop.f32.mrf.mxu0
        %v5955 = vadd.f32 0.0, %v5954
        %5956 = vmatmul.bf16.gmra.mxu0 %v5815
        %v5957 = vpop.f32.mrf.mxu0
        %v5958 = vadd.f32 0.0, %v5957
        %v5959 = vpop.f32.mrf.mxu0
        %v5960 = vadd.f32 0.0, %v5959
        %5961 = vmatmul.bf16.gmra.mxu0 %v5818
        %v5962 = vpop.f32.mrf.mxu0
        %v5963 = vadd.f32 0.0, %v5962
        %v5964 = vpop.f32.mrf.mxu0
        %v5965 = vadd.f32 0.0, %v5964
        %5966 = vmatmul.bf16.gmra.mxu0 %v5821
        %v5967 = vpop.f32.mrf.mxu0
        %v5968 = vadd.f32 0.0, %v5967
        %v5969 = vpop.f32.mrf.mxu0
        %v5970 = vadd.f32 0.0, %v5969
        %5971 = vmatmul.bf16.gmra.mxu0 %v5824
        %v5972 = vpop.f32.mrf.mxu0
        %v5973 = vadd.f32 0.0, %v5972
        %v5974 = vpop.f32.mrf.mxu0
        %v5975 = vadd.f32 0.0, %v5974
        %5976 = vmatmul.bf16.gmra.mxu0 %v5827
        %v5977 = vpop.f32.mrf.mxu0
        %v5978 = vadd.f32 0.0, %v5977
        %v5979 = vpop.f32.mrf.mxu0
        %v5980 = vadd.f32 0.0, %v5979
        %5981 = vmatmul.bf16.gmra.mxu0 %v5830
        %v5982 = vpop.f32.mrf.mxu0
        %v5983 = vadd.f32 0.0, %v5982
        %v5984 = vpop.f32.mrf.mxu0
        %v5985 = vadd.f32 0.0, %v5984
        %5986 = vmatmul.bf16.gmra.mxu0 %v5833
        %v5987 = vpop.f32.mrf.mxu0
        %v5988 = vadd.f32 0.0, %v5987
        %v5989 = vpop.f32.mrf.mxu0
        %v5990 = vadd.f32 0.0, %v5989
        %5991 = vmatmul.bf16.gmra.mxu0 %v5836
        %v5992 = vpop.f32.mrf.mxu0
        %v5993 = vadd.f32 0.0, %v5992
        %v5994 = vpop.f32.mrf.mxu0
        %v5995 = vadd.f32 0.0, %v5994
        %5996 = vmatmul.bf16.gmra.mxu0 %v5839
        %v5997 = vpop.f32.mrf.mxu0
        %v5998 = vadd.f32 0.0, %v5997
        %v5999 = vpop.f32.mrf.mxu0
        %v6000 = vadd.f32 0.0, %v5999
        %6001 = vmatmul.bf16.gmra.mxu0 %v5842
        %v6002 = vpop.f32.mrf.mxu0
        %v6003 = vadd.f32 0.0, %v6002
        %v6004 = vpop.f32.mrf.mxu0
        %v6005 = vadd.f32 0.0, %v6004
        %6006 = vmatmul.bf16.gmra.mxu0 %v5845
        %v6007 = vpop.f32.mrf.mxu0
        %v6008 = vadd.f32 0.0, %v6007
        %v6009 = vpop.f32.mrf.mxu0
        %v6010 = vadd.f32 0.0, %v6009
        %6011 = vmatmul.bf16.gmra.mxu0 %v5848
        %v6012 = vpop.f32.mrf.mxu0
        %v6013 = vadd.f32 0.0, %v6012
        %v6014 = vpop.f32.mrf.mxu0
        %v6015 = vadd.f32 0.0, %v6014
        %6016 = vmatmul.bf16.gmra.mxu0 %v5851
        %v6017 = vpop.f32.mrf.mxu0
        %v6018 = vadd.f32 0.0, %v6017
        %v6019 = vpop.f32.mrf.mxu0
        %v6020 = vadd.f32 0.0, %v6019
        %6021 = vmatmul.bf16.gmra.mxu0 %v5854
        %v6022 = vpop.f32.mrf.mxu0
        %v6023 = vadd.f32 0.0, %v6022
        %v6024 = vpop.f32.mrf.mxu0
        %v6025 = vadd.f32 0.0, %v6024
        %6026 = vmatmul.bf16.gmra.mxu0 %v5857
        %v6027 = vpop.f32.mrf.mxu0
        %v6028 = vadd.f32 0.0, %v6027
        %v6029 = vpop.f32.mrf.mxu0
        %v6030 = vadd.f32 0.0, %v6029
        %6031 = vmatmul.bf16.gmra.mxu0 %v5860
        %v6032 = vpop.f32.mrf.mxu0
        %v6033 = vadd.f32 0.0, %v6032
        %v6034 = vpop.f32.mrf.mxu0
        %v6035 = vadd.f32 0.0, %v6034
        %6036 = vmatmul.bf16.gmra.mxu0 %v5863
        %v6037 = vpop.f32.mrf.mxu0
        %v6038 = vadd.f32 0.0, %v6037
        %v6039 = vpop.f32.mrf.mxu0
        %v6040 = vadd.f32 0.0, %v6039
        %6041 = vmatmul.bf16.gmra.mxu0 %v5866
        %v6042 = vpop.f32.mrf.mxu0
        %v6043 = vadd.f32 0.0, %v6042
        %v6044 = vpop.f32.mrf.mxu0
        %v6045 = vadd.f32 0.0, %v6044
        %6046 = vmatmul.bf16.gmra.mxu0 %v5869
        %v6047 = vpop.f32.mrf.mxu0
        %v6048 = vadd.f32 0.0, %v6047
        %v6049 = vpop.f32.mrf.mxu0
        %v6050 = vadd.f32 0.0, %v6049
        %6051 = vmatmul.bf16.gmra.mxu0 %v5872
        %v6052 = vpop.f32.mrf.mxu0
        %v6053 = vadd.f32 0.0, %v6052
        %v6054 = vpop.f32.mrf.mxu0
        %v6055 = vadd.f32 0.0, %v6054
        %6056 = vmatmul.bf16.gmra.mxu0 %v5875
        %v6057 = vpop.f32.mrf.mxu0
        %v6058 = vadd.f32 0.0, %v6057
        %v6059 = vpop.f32.mrf.mxu0
        %v6060 = vadd.f32 0.0, %v6059
        %6061 = vmatmul.bf16.gmra.mxu0 %v5878
        %v6062 = vpop.f32.mrf.mxu0
        %v6063 = vadd.f32 0.0, %v6062
        %v6064 = vpop.f32.mrf.mxu0
        %v6065 = vadd.f32 0.0, %v6064
        %6066 = vmatmul.bf16.gmra.mxu0 %v5881
        %v6067 = vpop.f32.mrf.mxu0
        %v6068 = vadd.f32 0.0, %v6067
        %v6069 = vpop.f32.mrf.mxu0
        %v6070 = vadd.f32 0.0, %v6069
        %6071 = vmatmul.bf16.gmra.mxu0 %v5884
        %v6072 = vpop.f32.mrf.mxu0
        %v6073 = vadd.f32 0.0, %v6072
        %v6074 = vpop.f32.mrf.mxu0
        %v6075 = vadd.f32 0.0, %v6074
        %6076 = vmatmul.bf16.gmra.mxu0 %v5887
        %v6077 = vpop.f32.mrf.mxu0
        %v6078 = vadd.f32 0.0, %v6077
        %v6079 = vpop.f32.mrf.mxu0
        %v6080 = vadd.f32 0.0, %v6079
        %6081 = vmatmul.bf16.gmra.mxu0 %v5890
        %v6082 = vpop.f32.mrf.mxu0
        %v6083 = vadd.f32 0.0, %v6082
        %v6084 = vpop.f32.mrf.mxu0
        %v6085 = vadd.f32 0.0, %v6084
        %6086 = vmatmul.bf16.gmra.mxu0 %v5893
        %v6087 = vpop.f32.mrf.mxu0
        %v6088 = vadd.f32 0.0, %v6087
        %v6089 = vpop.f32.mrf.mxu0
        %v6090 = vadd.f32 0.0, %v6089
        %6091 = vmatmul.bf16.gmra.mxu0 %v5896
        %v6092 = vpop.f32.mrf.mxu0
        %v6093 = vadd.f32 0.0, %v6092
        %v6094 = vpop.f32.mrf.mxu0
        %v6095 = vadd.f32 0.0, %v6094
        %6096 = vmatmul.bf16.gmra.mxu0 %v5899
        %v6097 = vpop.f32.mrf.mxu0
        %v6098 = vadd.f32 0.0, %v6097
        %v6099 = vpop.f32.mrf.mxu0
        %v6100 = vadd.f32 0.0, %v6099
        %6101 = vmatmul.bf16.gmra.mxu0 %v5902
        %v6102 = vpop.f32.mrf.mxu0
        %v6103 = vadd.f32 0.0, %v6102
        %v6104 = vpop.f32.mrf.mxu0
        %v6105 = vadd.f32 0.0, %v6104
        %6106 = vmatmul.bf16.gmra.mxu0 %v5905
        %v6107 = vpop.f32.mrf.mxu0
        %v6108 = vadd.f32 0.0, %v6107
        %v6109 = vpop.f32.mrf.mxu0
        %v6110 = vadd.f32 0.0, %v6109
        %6111 = vmatmul.bf16.gmra.mxu0 %v5908
        %v6112 = vpop.f32.mrf.mxu0
        %v6113 = vadd.f32 0.0, %v6112
        %v6114 = vpop.f32.mrf.mxu0
        %v6115 = vadd.f32 0.0, %v6114
        %6116 = vmatmul.bf16.gmra.mxu0 %v5911
        %v6117 = vpop.f32.mrf.mxu0
        %v6118 = vadd.f32 0.0, %v6117
        %v6119 = vpop.f32.mrf.mxu0
        %v6120 = vadd.f32 0.0, %v6119
        %6121 = vmatmul.bf16.gmra.mxu0 %v5914
        %v6122 = vpop.f32.mrf.mxu0
        %v6123 = vadd.f32 0.0, %v6122
        %v6124 = vpop.f32.mrf.mxu0
        %v6125 = vadd.f32 0.0, %v6124
        %6126 = vmatmul.bf16.gmra.mxu0 %v5917
        %v6127 = vpop.f32.mrf.mxu0
        %v6128 = vadd.f32 0.0, %v6127
        %v6129 = vpop.f32.mrf.mxu0
        %v6130 = vadd.f32 0.0, %v6129
        %6131 = vmatmul.bf16.gmra.mxu0 %v5920
        %v6132 = vpop.f32.mrf.mxu0
        %v6133 = vadd.f32 0.0, %v6132
        %v6134 = vpop.f32.mrf.mxu0
        %v6135 = vadd.f32 0.0, %v6134
        %6136 = vmatmul.bf16.gmra.mxu0 %v5923
        %v6137 = vpop.f32.mrf.mxu0
        %v6138 = vadd.f32 0.0, %v6137
        %v6139 = vpop.f32.mrf.mxu0
        %v6140 = vadd.f32 0.0, %v6139
        %6141 = vmatmul.bf16.gmra.mxu0 %v5926
        %v6142 = vpop.f32.mrf.mxu0
        %v6143 = vadd.f32 0.0, %v6142
        %v6144 = vpop.f32.mrf.mxu0
        %v6145 = vadd.f32 0.0, %v6144
        %6146 = vdwg.mxu0
        %v6151 = vunpack.c.l.b16 %v5438
        %v6152 = vunpack.c.l.b16 %v5439
        %v6153 = vunpack.c.l.b16 %v5440
        %v6154 = vunpack.c.l.b16 %v5441
        %v6155 = vpack.c.b16 %v6152, %v6151
        %v6156 = vpack.c.b16 %v6154, %v6153
        %v6159 = vsel %vm5801, %v5396, 0
        %v6161 = vsel %vm5801, %v5397, 0
        %v6163 = vsel %vm5801, %v5398, 0
        %v6165 = vsel %vm5801, %v5399, 0
        %v6167 = vsel %vm5801, %v5400, 0
        %v6169 = vsel %vm5801, %v5401, 0
        %v6171 = vsel %vm5801, %v5402, 0
        %v6173 = vsel %vm5801, %v5403, 0
        %v6175 = vsel %vm5801, %v5404, 0
        %v6177 = vsel %vm5801, %v5405, 0
        %v6179 = vsel %vm5801, %v5406, 0
        %v6181 = vsel %vm5801, %v5407, 0
        %v6183 = vsel %vm5801, %v5408, 0
        %v6185 = vsel %vm5801, %v5409, 0
        %v6187 = vsel %vm5801, %v5410, 0
        %v6189 = vsel %vm5801, %v5411, 0
        %v6191 = vsel %vm5801, %v5412, 0
        %v6193 = vsel %vm5801, %v5413, 0
        %v6195 = vsel %vm5801, %v5414, 0
        %v6197 = vsel %vm5801, %v5415, 0
        %v6199 = vsel %vm5801, %v5416, 0
        %v6201 = vsel %vm5801, %v5417, 0
        %v6203 = vsel %vm5801, %v5418, 0
        %v6205 = vsel %vm5801, %v5419, 0
        %v6207 = vsel %vm5801, %v5420, 0
        %v6209 = vsel %vm5801, %v5421, 0
        %v6211 = vsel %vm5801, %v5422, 0
        %v6213 = vsel %vm5801, %v5423, 0
        %v6215 = vsel %vm5801, %v5424, 0
        %v6217 = vsel %vm5801, %v5425, 0
        %v6219 = vsel %vm5801, %v5426, 0
        %v6221 = vsel %vm5801, %v5427, 0
        %v6223 = vsel %vm5801, %v5428, 0
        %v6225 = vsel %vm5801, %v5429, 0
        %v6227 = vsel %vm5801, %v5430, 0
        %v6229 = vsel %vm5801, %v5431, 0
        %v6231 = vsel %vm5801, %v5432, 0
        %v6233 = vsel %vm5801, %v5433, 0
        %v6235 = vsel %vm5801, %v5434, 0
        %v6237 = vsel %vm5801, %v5435, 0
        %v6239 = vsel %vm5801, %v5436, 0
        %v6241 = vsel %vm5801, %v5437, 0
        %6243 = vmatpush.bf16.msra.mxu0 0
        %6244 = vmatpush.bf16.msra.mxu0 0
        %6245 = vmatpush.bf16.msra.mxu0 0
        %6246 = vmatpush.bf16.msra.mxu0 0
        %6247 = vmatpush.bf16.msra.mxu0 0
        %6248 = vmatpush.bf16.msra.mxu0 0
        %6249 = vmatpush.bf16.msra.mxu0 %v6156
        %6250 = vmatpush.bf16.msra.mxu0 %v6155
        %6251 = vmatmul.bf16.gmra.mxu0 %v6159
        %v6252 = vpop.f32.mrf.mxu0
        %v6253 = vadd.f32 %v5938, %v6252
        %v6254 = vpop.f32.mrf.mxu0
        %v6255 = vadd.f32 %v5940, %v6254
        %6256 = vmatmul.bf16.gmra.mxu0 %v6161
        %v6257 = vpop.f32.mrf.mxu0
        %v6258 = vadd.f32 %v5943, %v6257
        %v6259 = vpop.f32.mrf.mxu0
        %v6260 = vadd.f32 %v5945, %v6259
        %6261 = vmatmul.bf16.gmra.mxu0 %v6163
        %v6262 = vpop.f32.mrf.mxu0
        %v6263 = vadd.f32 %v5948, %v6262
        %v6264 = vpop.f32.mrf.mxu0
        %v6265 = vadd.f32 %v5950, %v6264
        %6266 = vmatmul.bf16.gmra.mxu0 %v6165
        %v6267 = vpop.f32.mrf.mxu0
        %v6268 = vadd.f32 %v5953, %v6267
        %v6269 = vpop.f32.mrf.mxu0
        %v6270 = vadd.f32 %v5955, %v6269
        %6271 = vmatmul.bf16.gmra.mxu0 %v6167
        %v6272 = vpop.f32.mrf.mxu0
        %v6273 = vadd.f32 %v5958, %v6272
        %v6274 = vpop.f32.mrf.mxu0
        %v6275 = vadd.f32 %v5960, %v6274
        %6276 = vmatmul.bf16.gmra.mxu0 %v6169
        %v6277 = vpop.f32.mrf.mxu0
        %v6278 = vadd.f32 %v5963, %v6277
        %v6279 = vpop.f32.mrf.mxu0
        %v6280 = vadd.f32 %v5965, %v6279
        %6281 = vmatmul.bf16.gmra.mxu0 %v6171
        %v6282 = vpop.f32.mrf.mxu0
        %v6283 = vadd.f32 %v5968, %v6282
        %v6284 = vpop.f32.mrf.mxu0
        %v6285 = vadd.f32 %v5970, %v6284
        %6286 = vmatmul.bf16.gmra.mxu0 %v6173
        %v6287 = vpop.f32.mrf.mxu0
        %v6288 = vadd.f32 %v5973, %v6287
        %v6289 = vpop.f32.mrf.mxu0
        %v6290 = vadd.f32 %v5975, %v6289
        %6291 = vmatmul.bf16.gmra.mxu0 %v6175
        %v6292 = vpop.f32.mrf.mxu0
        %v6293 = vadd.f32 %v5978, %v6292
        %v6294 = vpop.f32.mrf.mxu0
        %v6295 = vadd.f32 %v5980, %v6294
        %6296 = vmatmul.bf16.gmra.mxu0 %v6177
        %v6297 = vpop.f32.mrf.mxu0
        %v6298 = vadd.f32 %v5983, %v6297
        %v6299 = vpop.f32.mrf.mxu0
        %v6300 = vadd.f32 %v5985, %v6299
        %6301 = vmatmul.bf16.gmra.mxu0 %v6179
        %v6302 = vpop.f32.mrf.mxu0
        %v6303 = vadd.f32 %v5988, %v6302
        %v6304 = vpop.f32.mrf.mxu0
        %v6305 = vadd.f32 %v5990, %v6304
        %6306 = vmatmul.bf16.gmra.mxu0 %v6181
        %v6307 = vpop.f32.mrf.mxu0
        %v6308 = vadd.f32 %v5993, %v6307
        %v6309 = vpop.f32.mrf.mxu0
        %v6310 = vadd.f32 %v5995, %v6309
        %6311 = vmatmul.bf16.gmra.mxu0 %v6183
        %v6312 = vpop.f32.mrf.mxu0
        %v6313 = vadd.f32 %v5998, %v6312
        %v6314 = vpop.f32.mrf.mxu0
        %v6315 = vadd.f32 %v6000, %v6314
        %6316 = vmatmul.bf16.gmra.mxu0 %v6185
        %v6317 = vpop.f32.mrf.mxu0
        %v6318 = vadd.f32 %v6003, %v6317
        %v6319 = vpop.f32.mrf.mxu0
        %v6320 = vadd.f32 %v6005, %v6319
        %6321 = vmatmul.bf16.gmra.mxu0 %v6187
        %v6322 = vpop.f32.mrf.mxu0
        %v6323 = vadd.f32 %v6008, %v6322
        %v6324 = vpop.f32.mrf.mxu0
        %v6325 = vadd.f32 %v6010, %v6324
        %6326 = vmatmul.bf16.gmra.mxu0 %v6189
        %v6327 = vpop.f32.mrf.mxu0
        %v6328 = vadd.f32 %v6013, %v6327
        %v6329 = vpop.f32.mrf.mxu0
        %v6330 = vadd.f32 %v6015, %v6329
        %6331 = vmatmul.bf16.gmra.mxu0 %v6191
        %v6332 = vpop.f32.mrf.mxu0
        %v6333 = vadd.f32 %v6018, %v6332
        %v6334 = vpop.f32.mrf.mxu0
        %v6335 = vadd.f32 %v6020, %v6334
        %6336 = vmatmul.bf16.gmra.mxu0 %v6193
        %v6337 = vpop.f32.mrf.mxu0
        %v6338 = vadd.f32 %v6023, %v6337
        %v6339 = vpop.f32.mrf.mxu0
        %v6340 = vadd.f32 %v6025, %v6339
        %6341 = vmatmul.bf16.gmra.mxu0 %v6195
        %v6342 = vpop.f32.mrf.mxu0
        %v6343 = vadd.f32 %v6028, %v6342
        %v6344 = vpop.f32.mrf.mxu0
        %v6345 = vadd.f32 %v6030, %v6344
        %6346 = vmatmul.bf16.gmra.mxu0 %v6197
        %v6347 = vpop.f32.mrf.mxu0
        %v6348 = vadd.f32 %v6033, %v6347
        %v6349 = vpop.f32.mrf.mxu0
        %v6350 = vadd.f32 %v6035, %v6349
        %6351 = vmatmul.bf16.gmra.mxu0 %v6199
        %v6352 = vpop.f32.mrf.mxu0
        %v6353 = vadd.f32 %v6038, %v6352
        %v6354 = vpop.f32.mrf.mxu0
        %v6355 = vadd.f32 %v6040, %v6354
        %6356 = vmatmul.bf16.gmra.mxu0 %v6201
        %v6357 = vpop.f32.mrf.mxu0
        %v6358 = vadd.f32 %v6043, %v6357
        %v6359 = vpop.f32.mrf.mxu0
        %v6360 = vadd.f32 %v6045, %v6359
        %6361 = vmatmul.bf16.gmra.mxu0 %v6203
        %v6362 = vpop.f32.mrf.mxu0
        %v6363 = vadd.f32 %v6048, %v6362
        %v6364 = vpop.f32.mrf.mxu0
        %v6365 = vadd.f32 %v6050, %v6364
        %6366 = vmatmul.bf16.gmra.mxu0 %v6205
        %v6367 = vpop.f32.mrf.mxu0
        %v6368 = vadd.f32 %v6053, %v6367
        %v6369 = vpop.f32.mrf.mxu0
        %v6370 = vadd.f32 %v6055, %v6369
        %6371 = vmatmul.bf16.gmra.mxu0 %v6207
        %v6372 = vpop.f32.mrf.mxu0
        %v6373 = vadd.f32 %v6058, %v6372
        %v6374 = vpop.f32.mrf.mxu0
        %v6375 = vadd.f32 %v6060, %v6374
        %6376 = vmatmul.bf16.gmra.mxu0 %v6209
        %v6377 = vpop.f32.mrf.mxu0
        %v6378 = vadd.f32 %v6063, %v6377
        %v6379 = vpop.f32.mrf.mxu0
        %v6380 = vadd.f32 %v6065, %v6379
        %6381 = vmatmul.bf16.gmra.mxu0 %v6211
        %v6382 = vpop.f32.mrf.mxu0
        %v6383 = vadd.f32 %v6068, %v6382
        %v6384 = vpop.f32.mrf.mxu0
        %v6385 = vadd.f32 %v6070, %v6384
        %6386 = vmatmul.bf16.gmra.mxu0 %v6213
        %v6387 = vpop.f32.mrf.mxu0
        %v6388 = vadd.f32 %v6073, %v6387
        %v6389 = vpop.f32.mrf.mxu0
        %v6390 = vadd.f32 %v6075, %v6389
        %6391 = vmatmul.bf16.gmra.mxu0 %v6215
        %v6392 = vpop.f32.mrf.mxu0
        %v6393 = vadd.f32 %v6078, %v6392
        %v6394 = vpop.f32.mrf.mxu0
        %v6395 = vadd.f32 %v6080, %v6394
        %6396 = vmatmul.bf16.gmra.mxu0 %v6217
        %v6397 = vpop.f32.mrf.mxu0
        %v6398 = vadd.f32 %v6083, %v6397
        %v6399 = vpop.f32.mrf.mxu0
        %v6400 = vadd.f32 %v6085, %v6399
        %6401 = vmatmul.bf16.gmra.mxu0 %v6219
        %v6402 = vpop.f32.mrf.mxu0
        %v6403 = vadd.f32 %v6088, %v6402
        %v6404 = vpop.f32.mrf.mxu0
        %v6405 = vadd.f32 %v6090, %v6404
        %6406 = vmatmul.bf16.gmra.mxu0 %v6221
        %v6407 = vpop.f32.mrf.mxu0
        %v6408 = vadd.f32 %v6093, %v6407
        %v6409 = vpop.f32.mrf.mxu0
        %v6410 = vadd.f32 %v6095, %v6409
        %6411 = vmatmul.bf16.gmra.mxu0 %v6223
        %v6412 = vpop.f32.mrf.mxu0
        %v6413 = vadd.f32 %v6098, %v6412
        %v6414 = vpop.f32.mrf.mxu0
        %v6415 = vadd.f32 %v6100, %v6414
        %6416 = vmatmul.bf16.gmra.mxu0 %v6225
        %v6417 = vpop.f32.mrf.mxu0
        %v6418 = vadd.f32 %v6103, %v6417
        %v6419 = vpop.f32.mrf.mxu0
        %v6420 = vadd.f32 %v6105, %v6419
        %6421 = vmatmul.bf16.gmra.mxu0 %v6227
        %v6422 = vpop.f32.mrf.mxu0
        %v6423 = vadd.f32 %v6108, %v6422
        %v6424 = vpop.f32.mrf.mxu0
        %v6425 = vadd.f32 %v6110, %v6424
        %6426 = vmatmul.bf16.gmra.mxu0 %v6229
        %v6427 = vpop.f32.mrf.mxu0
        %v6428 = vadd.f32 %v6113, %v6427
        %v6429 = vpop.f32.mrf.mxu0
        %v6430 = vadd.f32 %v6115, %v6429
        %6431 = vmatmul.bf16.gmra.mxu0 %v6231
        %v6432 = vpop.f32.mrf.mxu0
        %v6433 = vadd.f32 %v6118, %v6432
        %v6434 = vpop.f32.mrf.mxu0
        %v6435 = vadd.f32 %v6120, %v6434
        %6436 = vmatmul.bf16.gmra.mxu0 %v6233
        %v6437 = vpop.f32.mrf.mxu0
        %v6438 = vadd.f32 %v6123, %v6437
        %v6439 = vpop.f32.mrf.mxu0
        %v6440 = vadd.f32 %v6125, %v6439
        %6441 = vmatmul.bf16.gmra.mxu0 %v6235
        %v6442 = vpop.f32.mrf.mxu0
        %v6443 = vadd.f32 %v6128, %v6442
        %v6444 = vpop.f32.mrf.mxu0
        %v6445 = vadd.f32 %v6130, %v6444
        %6446 = vmatmul.bf16.gmra.mxu0 %v6237
        %v6447 = vpop.f32.mrf.mxu0
        %v6448 = vadd.f32 %v6133, %v6447
        %v6449 = vpop.f32.mrf.mxu0
        %v6450 = vadd.f32 %v6135, %v6449
        %6451 = vmatmul.bf16.gmra.mxu0 %v6239
        %v6452 = vpop.f32.mrf.mxu0
        %v6453 = vadd.f32 %v6138, %v6452
        %v6454 = vpop.f32.mrf.mxu0
        %v6455 = vadd.f32 %v6140, %v6454
        %6456 = vmatmul.bf16.gmra.mxu0 %v6241
        %v6457 = vpop.f32.mrf.mxu0
        %v6458 = vadd.f32 %v6143, %v6457
        %v6459 = vpop.f32.mrf.mxu0
        %v6460 = vadd.f32 %v6145, %v6459
        %6461 = vdwg.mxu0
        %s6462 = scalar_lea.vmem [#allocation6], 32
        %v6463 = vld [vmem:[%s6462] sm:$0xf]
        %v6464 = vld [vmem:[%s6462 + $0x4] sm:$0xf]
        %v6465 = vld [vmem:[%s6462 + $0x8] sm:$0xf]
        %v6466 = vld [vmem:[%s6462 + $0xc] sm:$0xf]
        %vm6510 = vcmask 1046528
        %v6511 = vrot.slane %v5396, 1
        %v6512 = vrot.slane %v5397, 1
        %v6513 = vsel %vm6510, %v6511, %v6512
        %v6514 = vrot.slane %v5398, 1
        %v6515 = vsel %vm6510, %v6512, %v6514
        %v6516 = vrot.slane %v5399, 1
        %v6517 = vsel %vm6510, %v6514, %v6516
        %v6518 = vrot.slane %v5400, 1
        %v6519 = vsel %vm6510, %v6516, %v6518
        %v6520 = vrot.slane %v5401, 1
        %v6521 = vsel %vm6510, %v6518, %v6520
        %v6522 = vrot.slane %v5402, 1
        %v6523 = vsel %vm6510, %v6520, %v6522
        %v6524 = vrot.slane %v5403, 1
        %v6525 = vsel %vm6510, %v6522, %v6524
        %v6526 = vrot.slane %v5404, 1
        %v6527 = vsel %vm6510, %v6524, %v6526
        %v6528 = vrot.slane %v5405, 1
        %v6529 = vsel %vm6510, %v6526, %v6528
        %v6530 = vrot.slane %v5406, 1
        %v6531 = vsel %vm6510, %v6528, %v6530
        %v6532 = vrot.slane %v5407, 1
        %v6533 = vsel %vm6510, %v6530, %v6532
        %v6534 = vrot.slane %v5408, 1
        %v6535 = vsel %vm6510, %v6532, %v6534
        %v6536 = vrot.slane %v5409, 1
        %v6537 = vsel %vm6510, %v6534, %v6536
        %v6538 = vrot.slane %v5410, 1
        %v6539 = vsel %vm6510, %v6536, %v6538
        %v6540 = vrot.slane %v5411, 1
        %v6541 = vsel %vm6510, %v6538, %v6540
        %v6542 = vrot.slane %v5412, 1
        %v6543 = vsel %vm6510, %v6540, %v6542
        %v6544 = vrot.slane %v5413, 1
        %v6545 = vsel %vm6510, %v6542, %v6544
        %v6546 = vrot.slane %v5414, 1
        %v6547 = vsel %vm6510, %v6544, %v6546
        %v6548 = vrot.slane %v5415, 1
        %v6549 = vsel %vm6510, %v6546, %v6548
        %v6550 = vrot.slane %v5416, 1
        %v6551 = vsel %vm6510, %v6548, %v6550
        %v6552 = vrot.slane %v5417, 1
        %v6553 = vsel %vm6510, %v6550, %v6552
        %v6554 = vrot.slane %v5418, 1
        %v6555 = vsel %vm6510, %v6552, %v6554
        %v6556 = vrot.slane %v5419, 1
        %v6557 = vsel %vm6510, %v6554, %v6556
        %v6558 = vrot.slane %v5420, 1
        %v6559 = vsel %vm6510, %v6556, %v6558
        %v6560 = vrot.slane %v5421, 1
        %v6561 = vsel %vm6510, %v6558, %v6560
        %v6562 = vrot.slane %v5422, 1
        %v6563 = vsel %vm6510, %v6560, %v6562
        %v6564 = vrot.slane %v5423, 1
        %v6565 = vsel %vm6510, %v6562, %v6564
        %v6566 = vrot.slane %v5424, 1
        %v6567 = vsel %vm6510, %v6564, %v6566
        %v6568 = vrot.slane %v5425, 1
        %v6569 = vsel %vm6510, %v6566, %v6568
        %v6570 = vrot.slane %v5426, 1
        %v6571 = vsel %vm6510, %v6568, %v6570
        %v6572 = vrot.slane %v5427, 1
        %v6573 = vsel %vm6510, %v6570, %v6572
        %v6574 = vrot.slane %v5428, 1
        %v6575 = vsel %vm6510, %v6572, %v6574
        %v6576 = vrot.slane %v5429, 1
        %v6577 = vsel %vm6510, %v6574, %v6576
        %v6578 = vrot.slane %v5430, 1
        %v6579 = vsel %vm6510, %v6576, %v6578
        %v6580 = vrot.slane %v5431, 1
        %v6581 = vsel %vm6510, %v6578, %v6580
        %v6582 = vrot.slane %v5432, 1
        %v6583 = vsel %vm6510, %v6580, %v6582
        %v6584 = vrot.slane %v5433, 1
        %v6585 = vsel %vm6510, %v6582, %v6584
        %v6586 = vrot.slane %v5434, 1
        %v6587 = vsel %vm6510, %v6584, %v6586
        %v6588 = vrot.slane %v5435, 1
        %v6589 = vsel %vm6510, %v6586, %v6588
        %v6590 = vrot.slane %v5436, 1
        %v6591 = vsel %vm6510, %v6588, %v6590
        %v6592 = vrot.slane %v5437, 1
        %v6593 = vsel %vm6510, %v6590, %v6592
        %v6594 = vrot.slane %v5442, 1
        %v6595 = vsel %vm6510, %v6592, %v6594
        %v6600 = vunpack.c.l.b16 %v6463
        %v6601 = vunpack.c.l.b16 %v6464
        %v6602 = vunpack.c.l.b16 %v6465
        %v6603 = vunpack.c.l.b16 %v6466
        %v6604 = vpack.c.b16 %v6601, %v6600
        %v6605 = vpack.c.b16 %v6603, %v6602
        %v6609 = vsel %vm5801, %v6513, 0
        %v6612 = vsel %vm5801, %v6515, 0
        %v6615 = vsel %vm5801, %v6517, 0
        %v6618 = vsel %vm5801, %v6519, 0
        %v6621 = vsel %vm5801, %v6521, 0
        %v6624 = vsel %vm5801, %v6523, 0
        %v6627 = vsel %vm5801, %v6525, 0
        %v6630 = vsel %vm5801, %v6527, 0
        %v6633 = vsel %vm5801, %v6529, 0
        %v6636 = vsel %vm5801, %v6531, 0
        %v6639 = vsel %vm5801, %v6533, 0
        %v6642 = vsel %vm5801, %v6535, 0
        %v6645 = vsel %vm5801, %v6537, 0
        %v6648 = vsel %vm5801, %v6539, 0
        %v6651 = vsel %vm5801, %v6541, 0
        %v6654 = vsel %vm5801, %v6543, 0
        %v6657 = vsel %vm5801, %v6545, 0
        %v6660 = vsel %vm5801, %v6547, 0
        %v6663 = vsel %vm5801, %v6549, 0
        %v6666 = vsel %vm5801, %v6551, 0
        %v6669 = vsel %vm5801, %v6553, 0
        %v6672 = vsel %vm5801, %v6555, 0
        %v6675 = vsel %vm5801, %v6557, 0
        %v6678 = vsel %vm5801, %v6559, 0
        %v6681 = vsel %vm5801, %v6561, 0
        %v6684 = vsel %vm5801, %v6563, 0
        %v6687 = vsel %vm5801, %v6565, 0
        %v6690 = vsel %vm5801, %v6567, 0
        %v6693 = vsel %vm5801, %v6569, 0
        %v6696 = vsel %vm5801, %v6571, 0
        %v6699 = vsel %vm5801, %v6573, 0
        %v6702 = vsel %vm5801, %v6575, 0
        %v6705 = vsel %vm5801, %v6577, 0
        %v6708 = vsel %vm5801, %v6579, 0
        %v6711 = vsel %vm5801, %v6581, 0
        %v6714 = vsel %vm5801, %v6583, 0
        %v6717 = vsel %vm5801, %v6585, 0
        %v6720 = vsel %vm5801, %v6587, 0
        %v6723 = vsel %vm5801, %v6589, 0
        %v6726 = vsel %vm5801, %v6591, 0
        %v6729 = vsel %vm5801, %v6593, 0
        %v6732 = vsel %vm5801, %v6595, 0
        %6734 = vmatpush.bf16.msra.mxu0 0
        %6735 = vmatpush.bf16.msra.mxu0 0
        %6736 = vmatpush.bf16.msra.mxu0 0
        %6737 = vmatpush.bf16.msra.mxu0 0
        %6738 = vmatpush.bf16.msra.mxu0 0
        %6739 = vmatpush.bf16.msra.mxu0 0
        %6740 = vmatpush.bf16.msra.mxu0 %v6605
        %6741 = vmatpush.bf16.msra.mxu0 %v6604
        %6742 = vmatmul.bf16.gmra.mxu0 %v6609
        %v6743 = vpop.f32.mrf.mxu0
        %v6744 = vadd.f32 0.0, %v6743
        %v6745 = vpop.f32.mrf.mxu0
        %v6746 = vadd.f32 0.0, %v6745
        %6747 = vmatmul.bf16.gmra.mxu0 %v6612
        %v6748 = vpop.f32.mrf.mxu0
        %v6749 = vadd.f32 0.0, %v6748
        %v6750 = vpop.f32.mrf.mxu0
        %v6751 = vadd.f32 0.0, %v6750
        %6752 = vmatmul.bf16.gmra.mxu0 %v6615
        %v6753 = vpop.f32.mrf.mxu0
        %v6754 = vadd.f32 0.0, %v6753
        %v6755 = vpop.f32.mrf.mxu0
        %v6756 = vadd.f32 0.0, %v6755
        %6757 = vmatmul.bf16.gmra.mxu0 %v6618
        %v6758 = vpop.f32.mrf.mxu0
        %v6759 = vadd.f32 0.0, %v6758
        %v6760 = vpop.f32.mrf.mxu0
        %v6761 = vadd.f32 0.0, %v6760
        %6762 = vmatmul.bf16.gmra.mxu0 %v6621
        %v6763 = vpop.f32.mrf.mxu0
        %v6764 = vadd.f32 0.0, %v6763
        %v6765 = vpop.f32.mrf.mxu0
        %v6766 = vadd.f32 0.0, %v6765
        %6767 = vmatmul.bf16.gmra.mxu0 %v6624
        %v6768 = vpop.f32.mrf.mxu0
        %v6769 = vadd.f32 0.0, %v6768
        %v6770 = vpop.f32.mrf.mxu0
        %v6771 = vadd.f32 0.0, %v6770
        %6772 = vmatmul.bf16.gmra.mxu0 %v6627
        %v6773 = vpop.f32.mrf.mxu0
        %v6774 = vadd.f32 0.0, %v6773
        %v6775 = vpop.f32.mrf.mxu0
        %v6776 = vadd.f32 0.0, %v6775
        %6777 = vmatmul.bf16.gmra.mxu0 %v6630
        %v6778 = vpop.f32.mrf.mxu0
        %v6779 = vadd.f32 0.0, %v6778
        %v6780 = vpop.f32.mrf.mxu0
        %v6781 = vadd.f32 0.0, %v6780
        %6782 = vmatmul.bf16.gmra.mxu0 %v6633
        %v6783 = vpop.f32.mrf.mxu0
        %v6784 = vadd.f32 0.0, %v6783
        %v6785 = vpop.f32.mrf.mxu0
        %v6786 = vadd.f32 0.0, %v6785
        %6787 = vmatmul.bf16.gmra.mxu0 %v6636
        %v6788 = vpop.f32.mrf.mxu0
        %v6789 = vadd.f32 0.0, %v6788
        %v6790 = vpop.f32.mrf.mxu0
        %v6791 = vadd.f32 0.0, %v6790
        %6792 = vmatmul.bf16.gmra.mxu0 %v6639
        %v6793 = vpop.f32.mrf.mxu0
        %v6794 = vadd.f32 0.0, %v6793
        %v6795 = vpop.f32.mrf.mxu0
        %v6796 = vadd.f32 0.0, %v6795
        %6797 = vmatmul.bf16.gmra.mxu0 %v6642
        %v6798 = vpop.f32.mrf.mxu0
        %v6799 = vadd.f32 0.0, %v6798
        %v6800 = vpop.f32.mrf.mxu0
        %v6801 = vadd.f32 0.0, %v6800
        %6802 = vmatmul.bf16.gmra.mxu0 %v6645
        %v6803 = vpop.f32.mrf.mxu0
        %v6804 = vadd.f32 0.0, %v6803
        %v6805 = vpop.f32.mrf.mxu0
        %v6806 = vadd.f32 0.0, %v6805
        %6807 = vmatmul.bf16.gmra.mxu0 %v6648
        %v6808 = vpop.f32.mrf.mxu0
        %v6809 = vadd.f32 0.0, %v6808
        %v6810 = vpop.f32.mrf.mxu0
        %v6811 = vadd.f32 0.0, %v6810
        %6812 = vmatmul.bf16.gmra.mxu0 %v6651
        %v6813 = vpop.f32.mrf.mxu0
        %v6814 = vadd.f32 0.0, %v6813
        %v6815 = vpop.f32.mrf.mxu0
        %v6816 = vadd.f32 0.0, %v6815
        %6817 = vmatmul.bf16.gmra.mxu0 %v6654
        %v6818 = vpop.f32.mrf.mxu0
        %v6819 = vadd.f32 0.0, %v6818
        %v6820 = vpop.f32.mrf.mxu0
        %v6821 = vadd.f32 0.0, %v6820
        %6822 = vmatmul.bf16.gmra.mxu0 %v6657
        %v6823 = vpop.f32.mrf.mxu0
        %v6824 = vadd.f32 0.0, %v6823
        %v6825 = vpop.f32.mrf.mxu0
        %v6826 = vadd.f32 0.0, %v6825
        %6827 = vmatmul.bf16.gmra.mxu0 %v6660
        %v6828 = vpop.f32.mrf.mxu0
        %v6829 = vadd.f32 0.0, %v6828
        %v6830 = vpop.f32.mrf.mxu0
        %v6831 = vadd.f32 0.0, %v6830
        %6832 = vmatmul.bf16.gmra.mxu0 %v6663
        %v6833 = vpop.f32.mrf.mxu0
        %v6834 = vadd.f32 0.0, %v6833
        %v6835 = vpop.f32.mrf.mxu0
        %v6836 = vadd.f32 0.0, %v6835
        %6837 = vmatmul.bf16.gmra.mxu0 %v6666
        %v6838 = vpop.f32.mrf.mxu0
        %v6839 = vadd.f32 0.0, %v6838
        %v6840 = vpop.f32.mrf.mxu0
        %v6841 = vadd.f32 0.0, %v6840
        %6842 = vmatmul.bf16.gmra.mxu0 %v6669
        %v6843 = vpop.f32.mrf.mxu0
        %v6844 = vadd.f32 0.0, %v6843
        %v6845 = vpop.f32.mrf.mxu0
        %v6846 = vadd.f32 0.0, %v6845
        %6847 = vmatmul.bf16.gmra.mxu0 %v6672
        %v6848 = vpop.f32.mrf.mxu0
        %v6849 = vadd.f32 0.0, %v6848
        %v6850 = vpop.f32.mrf.mxu0
        %v6851 = vadd.f32 0.0, %v6850
        %6852 = vmatmul.bf16.gmra.mxu0 %v6675
        %v6853 = vpop.f32.mrf.mxu0
        %v6854 = vadd.f32 0.0, %v6853
        %v6855 = vpop.f32.mrf.mxu0
        %v6856 = vadd.f32 0.0, %v6855
        %6857 = vmatmul.bf16.gmra.mxu0 %v6678
        %v6858 = vpop.f32.mrf.mxu0
        %v6859 = vadd.f32 0.0, %v6858
        %v6860 = vpop.f32.mrf.mxu0
        %v6861 = vadd.f32 0.0, %v6860
        %6862 = vmatmul.bf16.gmra.mxu0 %v6681
        %v6863 = vpop.f32.mrf.mxu0
        %v6864 = vadd.f32 0.0, %v6863
        %v6865 = vpop.f32.mrf.mxu0
        %v6866 = vadd.f32 0.0, %v6865
        %6867 = vmatmul.bf16.gmra.mxu0 %v6684
        %v6868 = vpop.f32.mrf.mxu0
        %v6869 = vadd.f32 0.0, %v6868
        %v6870 = vpop.f32.mrf.mxu0
        %v6871 = vadd.f32 0.0, %v6870
        %6872 = vmatmul.bf16.gmra.mxu0 %v6687
        %v6873 = vpop.f32.mrf.mxu0
        %v6874 = vadd.f32 0.0, %v6873
        %v6875 = vpop.f32.mrf.mxu0
        %v6876 = vadd.f32 0.0, %v6875
        %6877 = vmatmul.bf16.gmra.mxu0 %v6690
        %v6878 = vpop.f32.mrf.mxu0
        %v6879 = vadd.f32 0.0, %v6878
        %v6880 = vpop.f32.mrf.mxu0
        %v6881 = vadd.f32 0.0, %v6880
        %6882 = vmatmul.bf16.gmra.mxu0 %v6693
        %v6883 = vpop.f32.mrf.mxu0
        %v6884 = vadd.f32 0.0, %v6883
        %v6885 = vpop.f32.mrf.mxu0
        %v6886 = vadd.f32 0.0, %v6885
        %6887 = vmatmul.bf16.gmra.mxu0 %v6696
        %v6888 = vpop.f32.mrf.mxu0
        %v6889 = vadd.f32 0.0, %v6888
        %v6890 = vpop.f32.mrf.mxu0
        %v6891 = vadd.f32 0.0, %v6890
        %6892 = vmatmul.bf16.gmra.mxu0 %v6699
        %v6893 = vpop.f32.mrf.mxu0
        %v6894 = vadd.f32 0.0, %v6893
        %v6895 = vpop.f32.mrf.mxu0
        %v6896 = vadd.f32 0.0, %v6895
        %6897 = vmatmul.bf16.gmra.mxu0 %v6702
        %v6898 = vpop.f32.mrf.mxu0
        %v6899 = vadd.f32 0.0, %v6898
        %v6900 = vpop.f32.mrf.mxu0
        %v6901 = vadd.f32 0.0, %v6900
        %6902 = vmatmul.bf16.gmra.mxu0 %v6705
        %v6903 = vpop.f32.mrf.mxu0
        %v6904 = vadd.f32 0.0, %v6903
        %v6905 = vpop.f32.mrf.mxu0
        %v6906 = vadd.f32 0.0, %v6905
        %6907 = vmatmul.bf16.gmra.mxu0 %v6708
        %v6908 = vpop.f32.mrf.mxu0
        %v6909 = vadd.f32 0.0, %v6908
        %v6910 = vpop.f32.mrf.mxu0
        %v6911 = vadd.f32 0.0, %v6910
        %6912 = vmatmul.bf16.gmra.mxu0 %v6711
        %v6913 = vpop.f32.mrf.mxu0
        %v6914 = vadd.f32 0.0, %v6913
        %v6915 = vpop.f32.mrf.mxu0
        %v6916 = vadd.f32 0.0, %v6915
        %6917 = vmatmul.bf16.gmra.mxu0 %v6714
        %v6918 = vpop.f32.mrf.mxu0
        %v6919 = vadd.f32 0.0, %v6918
        %v6920 = vpop.f32.mrf.mxu0
        %v6921 = vadd.f32 0.0, %v6920
        %6922 = vmatmul.bf16.gmra.mxu0 %v6717
        %v6923 = vpop.f32.mrf.mxu0
        %v6924 = vadd.f32 0.0, %v6923
        %v6925 = vpop.f32.mrf.mxu0
        %v6926 = vadd.f32 0.0, %v6925
        %6927 = vmatmul.bf16.gmra.mxu0 %v6720
        %v6928 = vpop.f32.mrf.mxu0
        %v6929 = vadd.f32 0.0, %v6928
        %v6930 = vpop.f32.mrf.mxu0
        %v6931 = vadd.f32 0.0, %v6930
        %6932 = vmatmul.bf16.gmra.mxu0 %v6723
        %v6933 = vpop.f32.mrf.mxu0
        %v6934 = vadd.f32 0.0, %v6933
        %v6935 = vpop.f32.mrf.mxu0
        %v6936 = vadd.f32 0.0, %v6935
        %6937 = vmatmul.bf16.gmra.mxu0 %v6726
        %v6938 = vpop.f32.mrf.mxu0
        %v6939 = vadd.f32 0.0, %v6938
        %v6940 = vpop.f32.mrf.mxu0
        %v6941 = vadd.f32 0.0, %v6940
        %6942 = vmatmul.bf16.gmra.mxu0 %v6729
        %v6943 = vpop.f32.mrf.mxu0
        %v6944 = vadd.f32 0.0, %v6943
        %v6945 = vpop.f32.mrf.mxu0
        %v6946 = vadd.f32 0.0, %v6945
        %6947 = vmatmul.bf16.gmra.mxu0 %v6732
        %v6948 = vpop.f32.mrf.mxu0
        %v6949 = vadd.f32 0.0, %v6948
        %v6950 = vpop.f32.mrf.mxu0
        %v6951 = vadd.f32 0.0, %v6950
        %6952 = vdwg.mxu0
        %v6953 = vadd.f32 %v6253, %v6744
        %v6954 = vadd.f32 %v6255, %v6746
        %v6955 = vadd.f32 %v6258, %v6749
        %v6956 = vadd.f32 %v6260, %v6751
        %v6957 = vadd.f32 %v6263, %v6754
        %v6958 = vadd.f32 %v6265, %v6756
        %v6959 = vadd.f32 %v6268, %v6759
        %v6960 = vadd.f32 %v6270, %v6761
        %v6961 = vadd.f32 %v6273, %v6764
        %v6962 = vadd.f32 %v6275, %v6766
        %v6963 = vadd.f32 %v6278, %v6769
        %v6964 = vadd.f32 %v6280, %v6771
        %v6965 = vadd.f32 %v6283, %v6774
        %v6966 = vadd.f32 %v6285, %v6776
        %v6967 = vadd.f32 %v6288, %v6779
        %v6968 = vadd.f32 %v6290, %v6781
        %v6969 = vadd.f32 %v6293, %v6784
        %v6970 = vadd.f32 %v6295, %v6786
        %v6971 = vadd.f32 %v6298, %v6789
        %v6972 = vadd.f32 %v6300, %v6791
        %v6973 = vadd.f32 %v6303, %v6794
        %v6974 = vadd.f32 %v6305, %v6796
        %v6975 = vadd.f32 %v6308, %v6799
        %v6976 = vadd.f32 %v6310, %v6801
        %v6977 = vadd.f32 %v6313, %v6804
        %v6978 = vadd.f32 %v6315, %v6806
        %v6979 = vadd.f32 %v6318, %v6809
        %v6980 = vadd.f32 %v6320, %v6811
        %v6981 = vadd.f32 %v6323, %v6814
        %v6982 = vadd.f32 %v6325, %v6816
        %v6983 = vadd.f32 %v6328, %v6819
        %v6984 = vadd.f32 %v6330, %v6821
        %v6985 = vadd.f32 %v6333, %v6824
        %v6986 = vadd.f32 %v6335, %v6826
        %v6987 = vadd.f32 %v6338, %v6829
        %v6988 = vadd.f32 %v6340, %v6831
        %v6989 = vadd.f32 %v6343, %v6834
        %v6990 = vadd.f32 %v6345, %v6836
        %v6991 = vadd.f32 %v6348, %v6839
        %v6992 = vadd.f32 %v6350, %v6841
        %v6993 = vadd.f32 %v6353, %v6844
        %v6994 = vadd.f32 %v6355, %v6846
        %v6995 = vadd.f32 %v6358, %v6849
        %v6996 = vadd.f32 %v6360, %v6851
        %v6997 = vadd.f32 %v6363, %v6854
        %v6998 = vadd.f32 %v6365, %v6856
        %v6999 = vadd.f32 %v6368, %v6859
        %v7000 = vadd.f32 %v6370, %v6861
        %v7001 = vadd.f32 %v6373, %v6864
        %v7002 = vadd.f32 %v6375, %v6866
        %v7003 = vadd.f32 %v6378, %v6869
        %v7004 = vadd.f32 %v6380, %v6871
        %v7005 = vadd.f32 %v6383, %v6874
        %v7006 = vadd.f32 %v6385, %v6876
        %v7007 = vadd.f32 %v6388, %v6879
        %v7008 = vadd.f32 %v6390, %v6881
        %v7009 = vadd.f32 %v6393, %v6884
        %v7010 = vadd.f32 %v6395, %v6886
        %v7011 = vadd.f32 %v6398, %v6889
        %v7012 = vadd.f32 %v6400, %v6891
        %v7013 = vadd.f32 %v6403, %v6894
        %v7014 = vadd.f32 %v6405, %v6896
        %v7015 = vadd.f32 %v6408, %v6899
        %v7016 = vadd.f32 %v6410, %v6901
        %v7017 = vadd.f32 %v6413, %v6904
        %v7018 = vadd.f32 %v6415, %v6906
        %v7019 = vadd.f32 %v6418, %v6909
        %v7020 = vadd.f32 %v6420, %v6911
        %v7021 = vadd.f32 %v6423, %v6914
        %v7022 = vadd.f32 %v6425, %v6916
        %v7023 = vadd.f32 %v6428, %v6919
        %v7024 = vadd.f32 %v6430, %v6921
        %v7025 = vadd.f32 %v6433, %v6924
        %v7026 = vadd.f32 %v6435, %v6926
        %v7027 = vadd.f32 %v6438, %v6929
        %v7028 = vadd.f32 %v6440, %v6931
        %v7029 = vadd.f32 %v6443, %v6934
        %v7030 = vadd.f32 %v6445, %v6936
        %v7031 = vadd.f32 %v6448, %v6939
        %v7032 = vadd.f32 %v6450, %v6941
        %v7033 = vadd.f32 %v6453, %v6944
        %v7034 = vadd.f32 %v6455, %v6946
        %v7035 = vadd.f32 %v6458, %v6949
        %v7036 = vadd.f32 %v6460, %v6951
        %v7037 = vpack.c.bf16 %v5308, %v5307
        %v7038 = vpack.c.bf16 %v5310, %v5309
        %v7039 = vpack.c.bf16 %v5312, %v5311
        %v7040 = vpack.c.bf16 %v5314, %v5313
        %v7041 = vpack.c.bf16 %v5316, %v5315
        %v7042 = vpack.c.bf16 %v5318, %v5317
        %v7043 = vpack.c.bf16 %v5320, %v5319
        %v7044 = vpack.c.bf16 %v5322, %v5321
        %v7045 = vpack.c.bf16 %v5324, %v5323
        %v7046 = vpack.c.bf16 %v5326, %v5325
        %v7047 = vpack.c.bf16 %v5328, %v5327
        %v7048 = vpack.c.bf16 %v5330, %v5329
        %v7049 = vpack.c.bf16 %v5332, %v5331
        %v7050 = vpack.c.bf16 %v5334, %v5333
        %v7051 = vpack.c.bf16 %v5336, %v5335
        %v7052 = vpack.c.bf16 %v5338, %v5337
        %v7053 = vpack.c.bf16 %v5340, %v5339
        %v7054 = vpack.c.bf16 %v5342, %v5341
        %v7055 = vpack.c.bf16 %v5344, %v5343
        %v7056 = vpack.c.bf16 %v5346, %v5345
        %v7057 = vpack.c.bf16 %v5348, %v5347
        %v7058 = vpack.c.bf16 %v5350, %v5349
        %v7059 = vpack.c.bf16 %v5352, %v5351
        %v7060 = vpack.c.bf16 %v5354, %v5353
        %v7061 = vpack.c.bf16 %v5356, %v5355
        %v7062 = vpack.c.bf16 %v5358, %v5357
        %v7063 = vpack.c.bf16 %v5360, %v5359
        %v7064 = vpack.c.bf16 %v5362, %v5361
        %v7065 = vpack.c.bf16 %v5364, %v5363
        %v7066 = vpack.c.bf16 %v5366, %v5365
        %v7067 = vpack.c.bf16 %v5368, %v5367
        %v7068 = vpack.c.bf16 %v5370, %v5369
        %v7069 = vpack.c.bf16 %v5372, %v5371
        %v7070 = vpack.c.bf16 %v5374, %v5373
        %v7071 = vpack.c.bf16 %v5376, %v5375
        %v7072 = vpack.c.bf16 %v5378, %v5377
        %v7073 = vpack.c.bf16 %v5380, %v5379
        %v7074 = vpack.c.bf16 %v5382, %v5381
        %v7075 = vpack.c.bf16 %v5384, %v5383
        %v7076 = vpack.c.bf16 %v5386, %v5385
        %v7077 = vpack.c.bf16 %v5388, %v5387
        %v7078 = vpack.c.bf16 %v5390, %v5389
        %v7079 = vpack.c.bf16 %v5391, %v5391
        %s7080 = scalar_lea.vmem [#allocation6], 48
        %v7081 = vld [vmem:[%s7080] sm:$0xf]
        %v7082 = vld [vmem:[%s7080 + $0x4] sm:$0xf]
        %v7083 = vld [vmem:[%s7080 + $0x8] sm:$0xf]
        %v7084 = vld [vmem:[%s7080 + $0xc] sm:$0xf]
        %vm7128 = vcmask 1045504
        %v7129 = vrot.slane %v7037, 2
        %v7130 = vrot.slane %v7038, 2
        %v7131 = vsel %vm7128, %v7129, %v7130
        %v7132 = vrot.slane %v7039, 2
        %v7133 = vsel %vm7128, %v7130, %v7132
        %v7134 = vrot.slane %v7040, 2
        %v7135 = vsel %vm7128, %v7132, %v7134
        %v7136 = vrot.slane %v7041, 2
        %v7137 = vsel %vm7128, %v7134, %v7136
        %v7138 = vrot.slane %v7042, 2
        %v7139 = vsel %vm7128, %v7136, %v7138
        %v7140 = vrot.slane %v7043, 2
        %v7141 = vsel %vm7128, %v7138, %v7140
        %v7142 = vrot.slane %v7044, 2
        %v7143 = vsel %vm7128, %v7140, %v7142
        %v7144 = vrot.slane %v7045, 2
        %v7145 = vsel %vm7128, %v7142, %v7144
        %v7146 = vrot.slane %v7046, 2
        %v7147 = vsel %vm7128, %v7144, %v7146
        %v7148 = vrot.slane %v7047, 2
        %v7149 = vsel %vm7128, %v7146, %v7148
        %v7150 = vrot.slane %v7048, 2
        %v7151 = vsel %vm7128, %v7148, %v7150
        %v7152 = vrot.slane %v7049, 2
        %v7153 = vsel %vm7128, %v7150, %v7152
        %v7154 = vrot.slane %v7050, 2
        %v7155 = vsel %vm7128, %v7152, %v7154
        %v7156 = vrot.slane %v7051, 2
        %v7157 = vsel %vm7128, %v7154, %v7156
        %v7158 = vrot.slane %v7052, 2
        %v7159 = vsel %vm7128, %v7156, %v7158
        %v7160 = vrot.slane %v7053, 2
        %v7161 = vsel %vm7128, %v7158, %v7160
        %v7162 = vrot.slane %v7054, 2
        %v7163 = vsel %vm7128, %v7160, %v7162
        %v7164 = vrot.slane %v7055, 2
        %v7165 = vsel %vm7128, %v7162, %v7164
        %v7166 = vrot.slane %v7056, 2
        %v7167 = vsel %vm7128, %v7164, %v7166
        %v7168 = vrot.slane %v7057, 2
        %v7169 = vsel %vm7128, %v7166, %v7168
        %v7170 = vrot.slane %v7058, 2
        %v7171 = vsel %vm7128, %v7168, %v7170
        %v7172 = vrot.slane %v7059, 2
        %v7173 = vsel %vm7128, %v7170, %v7172
        %v7174 = vrot.slane %v7060, 2
        %v7175 = vsel %vm7128, %v7172, %v7174
        %v7176 = vrot.slane %v7061, 2
        %v7177 = vsel %vm7128, %v7174, %v7176
        %v7178 = vrot.slane %v7062, 2
        %v7179 = vsel %vm7128, %v7176, %v7178
        %v7180 = vrot.slane %v7063, 2
        %v7181 = vsel %vm7128, %v7178, %v7180
        %v7182 = vrot.slane %v7064, 2
        %v7183 = vsel %vm7128, %v7180, %v7182
        %v7184 = vrot.slane %v7065, 2
        %v7185 = vsel %vm7128, %v7182, %v7184
        %v7186 = vrot.slane %v7066, 2
        %v7187 = vsel %vm7128, %v7184, %v7186
        %v7188 = vrot.slane %v7067, 2
        %v7189 = vsel %vm7128, %v7186, %v7188
        %v7190 = vrot.slane %v7068, 2
        %v7191 = vsel %vm7128, %v7188, %v7190
        %v7192 = vrot.slane %v7069, 2
        %v7193 = vsel %vm7128, %v7190, %v7192
        %v7194 = vrot.slane %v7070, 2
        %v7195 = vsel %vm7128, %v7192, %v7194
        %v7196 = vrot.slane %v7071, 2
        %v7197 = vsel %vm7128, %v7194, %v7196
        %v7198 = vrot.slane %v7072, 2
        %v7199 = vsel %vm7128, %v7196, %v7198
        %v7200 = vrot.slane %v7073, 2
        %v7201 = vsel %vm7128, %v7198, %v7200
        %v7202 = vrot.slane %v7074, 2
        %v7203 = vsel %vm7128, %v7200, %v7202
        %v7204 = vrot.slane %v7075, 2
        %v7205 = vsel %vm7128, %v7202, %v7204
        %v7206 = vrot.slane %v7076, 2
        %v7207 = vsel %vm7128, %v7204, %v7206
        %v7208 = vrot.slane %v7077, 2
        %v7209 = vsel %vm7128, %v7206, %v7208
        %v7210 = vrot.slane %v7078, 2
        %v7211 = vsel %vm7128, %v7208, %v7210
        %v7212 = vrot.slane %v7079, 2
        %v7213 = vsel %vm7128, %v7210, %v7212
        %v7218 = vunpack.c.l.b16 %v7081
        %v7219 = vunpack.c.l.b16 %v7082
        %v7220 = vunpack.c.l.b16 %v7083
        %v7221 = vunpack.c.l.b16 %v7084
        %v7222 = vpack.c.b16 %v7219, %v7218
        %v7223 = vpack.c.b16 %v7221, %v7220
        %v7227 = vsel %vm5801, %v7131, 0
        %v7230 = vsel %vm5801, %v7133, 0
        %v7233 = vsel %vm5801, %v7135, 0
        %v7236 = vsel %vm5801, %v7137, 0
        %v7239 = vsel %vm5801, %v7139, 0
        %v7242 = vsel %vm5801, %v7141, 0
        %v7245 = vsel %vm5801, %v7143, 0
        %v7248 = vsel %vm5801, %v7145, 0
        %v7251 = vsel %vm5801, %v7147, 0
        %v7254 = vsel %vm5801, %v7149, 0
        %v7257 = vsel %vm5801, %v7151, 0
        %v7260 = vsel %vm5801, %v7153, 0
        %v7263 = vsel %vm5801, %v7155, 0
        %v7266 = vsel %vm5801, %v7157, 0
        %v7269 = vsel %vm5801, %v7159, 0
        %v7272 = vsel %vm5801, %v7161, 0
        %v7275 = vsel %vm5801, %v7163, 0
        %v7278 = vsel %vm5801, %v7165, 0
        %v7281 = vsel %vm5801, %v7167, 0
        %v7284 = vsel %vm5801, %v7169, 0
        %v7287 = vsel %vm5801, %v7171, 0
        %v7290 = vsel %vm5801, %v7173, 0
        %v7293 = vsel %vm5801, %v7175, 0
        %v7296 = vsel %vm5801, %v7177, 0
        %v7299 = vsel %vm5801, %v7179, 0
        %v7302 = vsel %vm5801, %v7181, 0
        %v7305 = vsel %vm5801, %v7183, 0
        %v7308 = vsel %vm5801, %v7185, 0
        %v7311 = vsel %vm5801, %v7187, 0
        %v7314 = vsel %vm5801, %v7189, 0
        %v7317 = vsel %vm5801, %v7191, 0
        %v7320 = vsel %vm5801, %v7193, 0
        %v7323 = vsel %vm5801, %v7195, 0
        %v7326 = vsel %vm5801, %v7197, 0
        %v7329 = vsel %vm5801, %v7199, 0
        %v7332 = vsel %vm5801, %v7201, 0
        %v7335 = vsel %vm5801, %v7203, 0
        %v7338 = vsel %vm5801, %v7205, 0
        %v7341 = vsel %vm5801, %v7207, 0
        %v7344 = vsel %vm5801, %v7209, 0
        %v7347 = vsel %vm5801, %v7211, 0
        %v7350 = vsel %vm5801, %v7213, 0
        %7352 = vmatpush.bf16.msra.mxu0 0
        %7353 = vmatpush.bf16.msra.mxu0 0
        %7354 = vmatpush.bf16.msra.mxu0 0
        %7355 = vmatpush.bf16.msra.mxu0 0
        %7356 = vmatpush.bf16.msra.mxu0 0
        %7357 = vmatpush.bf16.msra.mxu0 0
        %7358 = vmatpush.bf16.msra.mxu0 %v7223
        %7359 = vmatpush.bf16.msra.mxu0 %v7222
        %7360 = vmatmul.bf16.gmra.mxu0 %v7227
        %v7361 = vpop.f32.mrf.mxu0
        %v7362 = vadd.f32 0.0, %v7361
        %v7363 = vpop.f32.mrf.mxu0
        %v7364 = vadd.f32 0.0, %v7363
        %7365 = vmatmul.bf16.gmra.mxu0 %v7230
        %v7366 = vpop.f32.mrf.mxu0
        %v7367 = vadd.f32 0.0, %v7366
        %v7368 = vpop.f32.mrf.mxu0
        %v7369 = vadd.f32 0.0, %v7368
        %7370 = vmatmul.bf16.gmra.mxu0 %v7233
        %v7371 = vpop.f32.mrf.mxu0
        %v7372 = vadd.f32 0.0, %v7371
        %v7373 = vpop.f32.mrf.mxu0
        %v7374 = vadd.f32 0.0, %v7373
        %7375 = vmatmul.bf16.gmra.mxu0 %v7236
        %v7376 = vpop.f32.mrf.mxu0
        %v7377 = vadd.f32 0.0, %v7376
        %v7378 = vpop.f32.mrf.mxu0
        %v7379 = vadd.f32 0.0, %v7378
        %7380 = vmatmul.bf16.gmra.mxu0 %v7239
        %v7381 = vpop.f32.mrf.mxu0
        %v7382 = vadd.f32 0.0, %v7381
        %v7383 = vpop.f32.mrf.mxu0
        %v7384 = vadd.f32 0.0, %v7383
        %7385 = vmatmul.bf16.gmra.mxu0 %v7242
        %v7386 = vpop.f32.mrf.mxu0
        %v7387 = vadd.f32 0.0, %v7386
        %v7388 = vpop.f32.mrf.mxu0
        %v7389 = vadd.f32 0.0, %v7388
        %7390 = vmatmul.bf16.gmra.mxu0 %v7245
        %v7391 = vpop.f32.mrf.mxu0
        %v7392 = vadd.f32 0.0, %v7391
        %v7393 = vpop.f32.mrf.mxu0
        %v7394 = vadd.f32 0.0, %v7393
        %7395 = vmatmul.bf16.gmra.mxu0 %v7248
        %v7396 = vpop.f32.mrf.mxu0
        %v7397 = vadd.f32 0.0, %v7396
        %v7398 = vpop.f32.mrf.mxu0
        %v7399 = vadd.f32 0.0, %v7398
        %7400 = vmatmul.bf16.gmra.mxu0 %v7251
        %v7401 = vpop.f32.mrf.mxu0
        %v7402 = vadd.f32 0.0, %v7401
        %v7403 = vpop.f32.mrf.mxu0
        %v7404 = vadd.f32 0.0, %v7403
        %7405 = vmatmul.bf16.gmra.mxu0 %v7254
        %v7406 = vpop.f32.mrf.mxu0
        %v7407 = vadd.f32 0.0, %v7406
        %v7408 = vpop.f32.mrf.mxu0
        %v7409 = vadd.f32 0.0, %v7408
        %7410 = vmatmul.bf16.gmra.mxu0 %v7257
        %v7411 = vpop.f32.mrf.mxu0
        %v7412 = vadd.f32 0.0, %v7411
        %v7413 = vpop.f32.mrf.mxu0
        %v7414 = vadd.f32 0.0, %v7413
        %7415 = vmatmul.bf16.gmra.mxu0 %v7260
        %v7416 = vpop.f32.mrf.mxu0
        %v7417 = vadd.f32 0.0, %v7416
        %v7418 = vpop.f32.mrf.mxu0
        %v7419 = vadd.f32 0.0, %v7418
        %7420 = vmatmul.bf16.gmra.mxu0 %v7263
        %v7421 = vpop.f32.mrf.mxu0
        %v7422 = vadd.f32 0.0, %v7421
        %v7423 = vpop.f32.mrf.mxu0
        %v7424 = vadd.f32 0.0, %v7423
        %7425 = vmatmul.bf16.gmra.mxu0 %v7266
        %v7426 = vpop.f32.mrf.mxu0
        %v7427 = vadd.f32 0.0, %v7426
        %v7428 = vpop.f32.mrf.mxu0
        %v7429 = vadd.f32 0.0, %v7428
        %7430 = vmatmul.bf16.gmra.mxu0 %v7269
        %v7431 = vpop.f32.mrf.mxu0
        %v7432 = vadd.f32 0.0, %v7431
        %v7433 = vpop.f32.mrf.mxu0
        %v7434 = vadd.f32 0.0, %v7433
        %7435 = vmatmul.bf16.gmra.mxu0 %v7272
        %v7436 = vpop.f32.mrf.mxu0
        %v7437 = vadd.f32 0.0, %v7436
        %v7438 = vpop.f32.mrf.mxu0
        %v7439 = vadd.f32 0.0, %v7438
        %7440 = vmatmul.bf16.gmra.mxu0 %v7275
        %v7441 = vpop.f32.mrf.mxu0
        %v7442 = vadd.f32 0.0, %v7441
        %v7443 = vpop.f32.mrf.mxu0
        %v7444 = vadd.f32 0.0, %v7443
        %7445 = vmatmul.bf16.gmra.mxu0 %v7278
        %v7446 = vpop.f32.mrf.mxu0
        %v7447 = vadd.f32 0.0, %v7446
        %v7448 = vpop.f32.mrf.mxu0
        %v7449 = vadd.f32 0.0, %v7448
        %7450 = vmatmul.bf16.gmra.mxu0 %v7281
        %v7451 = vpop.f32.mrf.mxu0
        %v7452 = vadd.f32 0.0, %v7451
        %v7453 = vpop.f32.mrf.mxu0
        %v7454 = vadd.f32 0.0, %v7453
        %7455 = vmatmul.bf16.gmra.mxu0 %v7284
        %v7456 = vpop.f32.mrf.mxu0
        %v7457 = vadd.f32 0.0, %v7456
        %v7458 = vpop.f32.mrf.mxu0
        %v7459 = vadd.f32 0.0, %v7458
        %7460 = vmatmul.bf16.gmra.mxu0 %v7287
        %v7461 = vpop.f32.mrf.mxu0
        %v7462 = vadd.f32 0.0, %v7461
        %v7463 = vpop.f32.mrf.mxu0
        %v7464 = vadd.f32 0.0, %v7463
        %7465 = vmatmul.bf16.gmra.mxu0 %v7290
        %v7466 = vpop.f32.mrf.mxu0
        %v7467 = vadd.f32 0.0, %v7466
        %v7468 = vpop.f32.mrf.mxu0
        %v7469 = vadd.f32 0.0, %v7468
        %7470 = vmatmul.bf16.gmra.mxu0 %v7293
        %v7471 = vpop.f32.mrf.mxu0
        %v7472 = vadd.f32 0.0, %v7471
        %v7473 = vpop.f32.mrf.mxu0
        %v7474 = vadd.f32 0.0, %v7473
        %7475 = vmatmul.bf16.gmra.mxu0 %v7296
        %v7476 = vpop.f32.mrf.mxu0
        %v7477 = vadd.f32 0.0, %v7476
        %v7478 = vpop.f32.mrf.mxu0
        %v7479 = vadd.f32 0.0, %v7478
        %7480 = vmatmul.bf16.gmra.mxu0 %v7299
        %v7481 = vpop.f32.mrf.mxu0
        %v7482 = vadd.f32 0.0, %v7481
        %v7483 = vpop.f32.mrf.mxu0
        %v7484 = vadd.f32 0.0, %v7483
        %7485 = vmatmul.bf16.gmra.mxu0 %v7302
        %v7486 = vpop.f32.mrf.mxu0
        %v7487 = vadd.f32 0.0, %v7486
        %v7488 = vpop.f32.mrf.mxu0
        %v7489 = vadd.f32 0.0, %v7488
        %7490 = vmatmul.bf16.gmra.mxu0 %v7305
        %v7491 = vpop.f32.mrf.mxu0
        %v7492 = vadd.f32 0.0, %v7491
        %v7493 = vpop.f32.mrf.mxu0
        %v7494 = vadd.f32 0.0, %v7493
        %7495 = vmatmul.bf16.gmra.mxu0 %v7308
        %v7496 = vpop.f32.mrf.mxu0
        %v7497 = vadd.f32 0.0, %v7496
        %v7498 = vpop.f32.mrf.mxu0
        %v7499 = vadd.f32 0.0, %v7498
        %7500 = vmatmul.bf16.gmra.mxu0 %v7311
        %v7501 = vpop.f32.mrf.mxu0
        %v7502 = vadd.f32 0.0, %v7501
        %v7503 = vpop.f32.mrf.mxu0
        %v7504 = vadd.f32 0.0, %v7503
        %7505 = vmatmul.bf16.gmra.mxu0 %v7314
        %v7506 = vpop.f32.mrf.mxu0
        %v7507 = vadd.f32 0.0, %v7506
        %v7508 = vpop.f32.mrf.mxu0
        %v7509 = vadd.f32 0.0, %v7508
        %7510 = vmatmul.bf16.gmra.mxu0 %v7317
        %v7511 = vpop.f32.mrf.mxu0
        %v7512 = vadd.f32 0.0, %v7511
        %v7513 = vpop.f32.mrf.mxu0
        %v7514 = vadd.f32 0.0, %v7513
        %7515 = vmatmul.bf16.gmra.mxu0 %v7320
        %v7516 = vpop.f32.mrf.mxu0
        %v7517 = vadd.f32 0.0, %v7516
        %v7518 = vpop.f32.mrf.mxu0
        %v7519 = vadd.f32 0.0, %v7518
        %7520 = vmatmul.bf16.gmra.mxu0 %v7323
        %v7521 = vpop.f32.mrf.mxu0
        %v7522 = vadd.f32 0.0, %v7521
        %v7523 = vpop.f32.mrf.mxu0
        %v7524 = vadd.f32 0.0, %v7523
        %7525 = vmatmul.bf16.gmra.mxu0 %v7326
        %v7526 = vpop.f32.mrf.mxu0
        %v7527 = vadd.f32 0.0, %v7526
        %v7528 = vpop.f32.mrf.mxu0
        %v7529 = vadd.f32 0.0, %v7528
        %7530 = vmatmul.bf16.gmra.mxu0 %v7329
        %v7531 = vpop.f32.mrf.mxu0
        %v7532 = vadd.f32 0.0, %v7531
        %v7533 = vpop.f32.mrf.mxu0
        %v7534 = vadd.f32 0.0, %v7533
        %7535 = vmatmul.bf16.gmra.mxu0 %v7332
        %v7536 = vpop.f32.mrf.mxu0
        %v7537 = vadd.f32 0.0, %v7536
        %v7538 = vpop.f32.mrf.mxu0
        %v7539 = vadd.f32 0.0, %v7538
        %7540 = vmatmul.bf16.gmra.mxu0 %v7335
        %v7541 = vpop.f32.mrf.mxu0
        %v7542 = vadd.f32 0.0, %v7541
        %v7543 = vpop.f32.mrf.mxu0
        %v7544 = vadd.f32 0.0, %v7543
        %7545 = vmatmul.bf16.gmra.mxu0 %v7338
        %v7546 = vpop.f32.mrf.mxu0
        %v7547 = vadd.f32 0.0, %v7546
        %v7548 = vpop.f32.mrf.mxu0
        %v7549 = vadd.f32 0.0, %v7548
        %7550 = vmatmul.bf16.gmra.mxu0 %v7341
        %v7551 = vpop.f32.mrf.mxu0
        %v7552 = vadd.f32 0.0, %v7551
        %v7553 = vpop.f32.mrf.mxu0
        %v7554 = vadd.f32 0.0, %v7553
        %7555 = vmatmul.bf16.gmra.mxu0 %v7344
        %v7556 = vpop.f32.mrf.mxu0
        %v7557 = vadd.f32 0.0, %v7556
        %v7558 = vpop.f32.mrf.mxu0
        %v7559 = vadd.f32 0.0, %v7558
        %7560 = vmatmul.bf16.gmra.mxu0 %v7347
        %v7561 = vpop.f32.mrf.mxu0
        %v7562 = vadd.f32 0.0, %v7561
        %v7563 = vpop.f32.mrf.mxu0
        %v7564 = vadd.f32 0.0, %v7563
        %7565 = vmatmul.bf16.gmra.mxu0 %v7350
        %v7566 = vpop.f32.mrf.mxu0
        %v7567 = vadd.f32 0.0, %v7566
        %v7568 = vpop.f32.mrf.mxu0
        %v7569 = vadd.f32 0.0, %v7568
        %7570 = vdwg.mxu0
        %v7571 = vadd.f32 %v6953, %v7362
        %v7572 = vadd.f32 %v6954, %v7364
        %v7573 = vadd.f32 %v6955, %v7367
        %v7574 = vadd.f32 %v6956, %v7369
        %v7575 = vadd.f32 %v6957, %v7372
        %v7576 = vadd.f32 %v6958, %v7374
        %v7577 = vadd.f32 %v6959, %v7377
        %v7578 = vadd.f32 %v6960, %v7379
        %v7579 = vadd.f32 %v6961, %v7382
        %v7580 = vadd.f32 %v6962, %v7384
        %v7581 = vadd.f32 %v6963, %v7387
        %v7582 = vadd.f32 %v6964, %v7389
        %v7583 = vadd.f32 %v6965, %v7392
        %v7584 = vadd.f32 %v6966, %v7394
        %v7585 = vadd.f32 %v6967, %v7397
        %v7586 = vadd.f32 %v6968, %v7399
        %v7587 = vadd.f32 %v6969, %v7402
        %v7588 = vadd.f32 %v6970, %v7404
        %v7589 = vadd.f32 %v6971, %v7407
        %v7590 = vadd.f32 %v6972, %v7409
        %v7591 = vadd.f32 %v6973, %v7412
        %v7592 = vadd.f32 %v6974, %v7414
        %v7593 = vadd.f32 %v6975, %v7417
        %v7594 = vadd.f32 %v6976, %v7419
        %v7595 = vadd.f32 %v6977, %v7422
        %v7596 = vadd.f32 %v6978, %v7424
        %v7597 = vadd.f32 %v6979, %v7427
        %v7598 = vadd.f32 %v6980, %v7429
        %v7599 = vadd.f32 %v6981, %v7432
        %v7600 = vadd.f32 %v6982, %v7434
        %v7601 = vadd.f32 %v6983, %v7437
        %v7602 = vadd.f32 %v6984, %v7439
        %v7603 = vadd.f32 %v6985, %v7442
        %v7604 = vadd.f32 %v6986, %v7444
        %v7605 = vadd.f32 %v6987, %v7447
        %v7606 = vadd.f32 %v6988, %v7449
        %v7607 = vadd.f32 %v6989, %v7452
        %v7608 = vadd.f32 %v6990, %v7454
        %v7609 = vadd.f32 %v6991, %v7457
        %v7610 = vadd.f32 %v6992, %v7459
        %v7611 = vadd.f32 %v6993, %v7462
        %v7612 = vadd.f32 %v6994, %v7464
        %v7613 = vadd.f32 %v6995, %v7467
        %v7614 = vadd.f32 %v6996, %v7469
        %v7615 = vadd.f32 %v6997, %v7472
        %v7616 = vadd.f32 %v6998, %v7474
        %v7617 = vadd.f32 %v6999, %v7477
        %v7618 = vadd.f32 %v7000, %v7479
        %v7619 = vadd.f32 %v7001, %v7482
        %v7620 = vadd.f32 %v7002, %v7484
        %v7621 = vadd.f32 %v7003, %v7487
        %v7622 = vadd.f32 %v7004, %v7489
        %v7623 = vadd.f32 %v7005, %v7492
        %v7624 = vadd.f32 %v7006, %v7494
        %v7625 = vadd.f32 %v7007, %v7497
        %v7626 = vadd.f32 %v7008, %v7499
        %v7627 = vadd.f32 %v7009, %v7502
        %v7628 = vadd.f32 %v7010, %v7504
        %v7629 = vadd.f32 %v7011, %v7507
        %v7630 = vadd.f32 %v7012, %v7509
        %v7631 = vadd.f32 %v7013, %v7512
        %v7632 = vadd.f32 %v7014, %v7514
        %v7633 = vadd.f32 %v7015, %v7517
        %v7634 = vadd.f32 %v7016, %v7519
        %v7635 = vadd.f32 %v7017, %v7522
        %v7636 = vadd.f32 %v7018, %v7524
        %v7637 = vadd.f32 %v7019, %v7527
        %v7638 = vadd.f32 %v7020, %v7529
        %v7639 = vadd.f32 %v7021, %v7532
        %v7640 = vadd.f32 %v7022, %v7534
        %v7641 = vadd.f32 %v7023, %v7537
        %v7642 = vadd.f32 %v7024, %v7539
        %v7643 = vadd.f32 %v7025, %v7542
        %v7644 = vadd.f32 %v7026, %v7544
        %v7645 = vadd.f32 %v7027, %v7547
        %v7646 = vadd.f32 %v7028, %v7549
        %v7647 = vadd.f32 %v7029, %v7552
        %v7648 = vadd.f32 %v7030, %v7554
        %v7649 = vadd.f32 %v7031, %v7557
        %v7650 = vadd.f32 %v7032, %v7559
        %v7651 = vadd.f32 %v7033, %v7562
        %v7652 = vadd.f32 %v7034, %v7564
        %v7653 = vadd.f32 %v7035, %v7567
        %v7654 = vadd.f32 %v7036, %v7569
        %s7655 = scalar_lea.vmem [#allocation6], 64
        %v7656 = vld [vmem:[%s7655] sm:$0xf]
        %v7657 = vld [vmem:[%s7655 + $0x4] sm:$0xf]
        %v7658 = vld [vmem:[%s7655 + $0x8] sm:$0xf]
        %v7659 = vld [vmem:[%s7655 + $0xc] sm:$0xf]
        %vm7660 = vsmask.f32 5376
        %v7662 = vshrl.u32 %v7037, 16
        %v7664 = vrot.slane %v7662, 2
        %v7665 = vshll.u32 %v7037, 16
        %v7667 = vrot.slane %v7665, 3
        %v7668 = vor.u32 %v7664, %v7667
        %v7670 = vshrl.u32 %v7038, 16
        %v7672 = vrot.slane %v7670, 2
        %v7673 = vshll.u32 %v7038, 16
        %v7675 = vrot.slane %v7673, 3
        %v7676 = vor.u32 %v7672, %v7675
        %v7677 = vsel %vm7660, %v7668, %v7676
        %v7679 = vshrl.u32 %v7039, 16
        %v7681 = vrot.slane %v7679, 2
        %v7682 = vshll.u32 %v7039, 16
        %v7684 = vrot.slane %v7682, 3
        %v7685 = vor.u32 %v7681, %v7684
        %v7686 = vsel %vm7660, %v7676, %v7685
        %v7688 = vshrl.u32 %v7040, 16
        %v7690 = vrot.slane %v7688, 2
        %v7691 = vshll.u32 %v7040, 16
        %v7693 = vrot.slane %v7691, 3
        %v7694 = vor.u32 %v7690, %v7693
        %v7695 = vsel %vm7660, %v7685, %v7694
        %v7697 = vshrl.u32 %v7041, 16
        %v7699 = vrot.slane %v7697, 2
        %v7700 = vshll.u32 %v7041, 16
        %v7702 = vrot.slane %v7700, 3
        %v7703 = vor.u32 %v7699, %v7702
        %v7704 = vsel %vm7660, %v7694, %v7703
        %v7706 = vshrl.u32 %v7042, 16
        %v7708 = vrot.slane %v7706, 2
        %v7709 = vshll.u32 %v7042, 16
        %v7711 = vrot.slane %v7709, 3
        %v7712 = vor.u32 %v7708, %v7711
        %v7713 = vsel %vm7660, %v7703, %v7712
        %v7715 = vshrl.u32 %v7043, 16
        %v7717 = vrot.slane %v7715, 2
        %v7718 = vshll.u32 %v7043, 16
        %v7720 = vrot.slane %v7718, 3
        %v7721 = vor.u32 %v7717, %v7720
        %v7722 = vsel %vm7660, %v7712, %v7721
        %v7724 = vshrl.u32 %v7044, 16
        %v7726 = vrot.slane %v7724, 2
        %v7727 = vshll.u32 %v7044, 16
        %v7729 = vrot.slane %v7727, 3
        %v7730 = vor.u32 %v7726, %v7729
        %v7731 = vsel %vm7660, %v7721, %v7730
        %v7733 = vshrl.u32 %v7045, 16
        %v7735 = vrot.slane %v7733, 2
        %v7736 = vshll.u32 %v7045, 16
        %v7738 = vrot.slane %v7736, 3
        %v7739 = vor.u32 %v7735, %v7738
        %v7740 = vsel %vm7660, %v7730, %v7739
        %v7742 = vshrl.u32 %v7046, 16
        %v7744 = vrot.slane %v7742, 2
        %v7745 = vshll.u32 %v7046, 16
        %v7747 = vrot.slane %v7745, 3
        %v7748 = vor.u32 %v7744, %v7747
        %v7749 = vsel %vm7660, %v7739, %v7748
        %v7751 = vshrl.u32 %v7047, 16
        %v7753 = vrot.slane %v7751, 2
        %v7754 = vshll.u32 %v7047, 16
        %v7756 = vrot.slane %v7754, 3
        %v7757 = vor.u32 %v7753, %v7756
        %v7758 = vsel %vm7660, %v7748, %v7757
        %v7760 = vshrl.u32 %v7048, 16
        %v7762 = vrot.slane %v7760, 2
        %v7763 = vshll.u32 %v7048, 16
        %v7765 = vrot.slane %v7763, 3
        %v7766 = vor.u32 %v7762, %v7765
        %v7767 = vsel %vm7660, %v7757, %v7766
        %v7769 = vshrl.u32 %v7049, 16
        %v7771 = vrot.slane %v7769, 2
        %v7772 = vshll.u32 %v7049, 16
        %v7774 = vrot.slane %v7772, 3
        %v7775 = vor.u32 %v7771, %v7774
        %v7776 = vsel %vm7660, %v7766, %v7775
        %v7778 = vshrl.u32 %v7050, 16
        %v7780 = vrot.slane %v7778, 2
        %v7781 = vshll.u32 %v7050, 16
        %v7783 = vrot.slane %v7781, 3
        %v7784 = vor.u32 %v7780, %v7783
        %v7785 = vsel %vm7660, %v7775, %v7784
        %v7787 = vshrl.u32 %v7051, 16
        %v7789 = vrot.slane %v7787, 2
        %v7790 = vshll.u32 %v7051, 16
        %v7792 = vrot.slane %v7790, 3
        %v7793 = vor.u32 %v7789, %v7792
        %v7794 = vsel %vm7660, %v7784, %v7793
        %v7796 = vshrl.u32 %v7052, 16
        %v7798 = vrot.slane %v7796, 2
        %v7799 = vshll.u32 %v7052, 16
        %v7801 = vrot.slane %v7799, 3
        %v7802 = vor.u32 %v7798, %v7801
        %v7803 = vsel %vm7660, %v7793, %v7802
        %v7805 = vshrl.u32 %v7053, 16
        %v7807 = vrot.slane %v7805, 2
        %v7808 = vshll.u32 %v7053, 16
        %v7810 = vrot.slane %v7808, 3
        %v7811 = vor.u32 %v7807, %v7810
        %v7812 = vsel %vm7660, %v7802, %v7811
        %v7814 = vshrl.u32 %v7054, 16
        %v7816 = vrot.slane %v7814, 2
        %v7817 = vshll.u32 %v7054, 16
        %v7819 = vrot.slane %v7817, 3
        %v7820 = vor.u32 %v7816, %v7819
        %v7821 = vsel %vm7660, %v7811, %v7820
        %v7823 = vshrl.u32 %v7055, 16
        %v7825 = vrot.slane %v7823, 2
        %v7826 = vshll.u32 %v7055, 16
        %v7828 = vrot.slane %v7826, 3
        %v7829 = vor.u32 %v7825, %v7828
        %v7830 = vsel %vm7660, %v7820, %v7829
        %v7832 = vshrl.u32 %v7056, 16
        %v7834 = vrot.slane %v7832, 2
        %v7835 = vshll.u32 %v7056, 16
        %v7837 = vrot.slane %v7835, 3
        %v7838 = vor.u32 %v7834, %v7837
        %v7839 = vsel %vm7660, %v7829, %v7838
        %v7841 = vshrl.u32 %v7057, 16
        %v7843 = vrot.slane %v7841, 2
        %v7844 = vshll.u32 %v7057, 16
        %v7846 = vrot.slane %v7844, 3
        %v7847 = vor.u32 %v7843, %v7846
        %v7848 = vsel %vm7660, %v7838, %v7847
        %v7850 = vshrl.u32 %v7058, 16
        %v7852 = vrot.slane %v7850, 2
        %v7853 = vshll.u32 %v7058, 16
        %v7855 = vrot.slane %v7853, 3
        %v7856 = vor.u32 %v7852, %v7855
        %v7857 = vsel %vm7660, %v7847, %v7856
        %v7859 = vshrl.u32 %v7059, 16
        %v7861 = vrot.slane %v7859, 2
        %v7862 = vshll.u32 %v7059, 16
        %v7864 = vrot.slane %v7862, 3
        %v7865 = vor.u32 %v7861, %v7864
        %v7866 = vsel %vm7660, %v7856, %v7865
        %v7868 = vshrl.u32 %v7060, 16
        %v7870 = vrot.slane %v7868, 2
        %v7871 = vshll.u32 %v7060, 16
        %v7873 = vrot.slane %v7871, 3
        %v7874 = vor.u32 %v7870, %v7873
        %v7875 = vsel %vm7660, %v7865, %v7874
        %v7877 = vshrl.u32 %v7061, 16
        %v7879 = vrot.slane %v7877, 2
        %v7880 = vshll.u32 %v7061, 16
        %v7882 = vrot.slane %v7880, 3
        %v7883 = vor.u32 %v7879, %v7882
        %v7884 = vsel %vm7660, %v7874, %v7883
        %v7886 = vshrl.u32 %v7062, 16
        %v7888 = vrot.slane %v7886, 2
        %v7889 = vshll.u32 %v7062, 16
        %v7891 = vrot.slane %v7889, 3
        %v7892 = vor.u32 %v7888, %v7891
        %v7893 = vsel %vm7660, %v7883, %v7892
        %v7895 = vshrl.u32 %v7063, 16
        %v7897 = vrot.slane %v7895, 2
        %v7898 = vshll.u32 %v7063, 16
        %v7900 = vrot.slane %v7898, 3
        %v7901 = vor.u32 %v7897, %v7900
        %v7902 = vsel %vm7660, %v7892, %v7901
        %v7904 = vshrl.u32 %v7064, 16
        %v7906 = vrot.slane %v7904, 2
        %v7907 = vshll.u32 %v7064, 16
        %v7909 = vrot.slane %v7907, 3
        %v7910 = vor.u32 %v7906, %v7909
        %v7911 = vsel %vm7660, %v7901, %v7910
        %v7913 = vshrl.u32 %v7065, 16
        %v7915 = vrot.slane %v7913, 2
        %v7916 = vshll.u32 %v7065, 16
        %v7918 = vrot.slane %v7916, 3
        %v7919 = vor.u32 %v7915, %v7918
        %v7920 = vsel %vm7660, %v7910, %v7919
        %v7922 = vshrl.u32 %v7066, 16
        %v7924 = vrot.slane %v7922, 2
        %v7925 = vshll.u32 %v7066, 16
        %v7927 = vrot.slane %v7925, 3
        %v7928 = vor.u32 %v7924, %v7927
        %v7929 = vsel %vm7660, %v7919, %v7928
        %v7931 = vshrl.u32 %v7067, 16
        %v7933 = vrot.slane %v7931, 2
        %v7934 = vshll.u32 %v7067, 16
        %v7936 = vrot.slane %v7934, 3
        %v7937 = vor.u32 %v7933, %v7936
        %v7938 = vsel %vm7660, %v7928, %v7937
        %v7940 = vshrl.u32 %v7068, 16
        %v7942 = vrot.slane %v7940, 2
        %v7943 = vshll.u32 %v7068, 16
        %v7945 = vrot.slane %v7943, 3
        %v7946 = vor.u32 %v7942, %v7945
        %v7947 = vsel %vm7660, %v7937, %v7946
        %v7949 = vshrl.u32 %v7069, 16
        %v7951 = vrot.slane %v7949, 2
        %v7952 = vshll.u32 %v7069, 16
        %v7954 = vrot.slane %v7952, 3
        %v7955 = vor.u32 %v7951, %v7954
        %v7956 = vsel %vm7660, %v7946, %v7955
        %v7958 = vshrl.u32 %v7070, 16
        %v7960 = vrot.slane %v7958, 2
        %v7961 = vshll.u32 %v7070, 16
        %v7963 = vrot.slane %v7961, 3
        %v7964 = vor.u32 %v7960, %v7963
        %v7965 = vsel %vm7660, %v7955, %v7964
        %v7967 = vshrl.u32 %v7071, 16
        %v7969 = vrot.slane %v7967, 2
        %v7970 = vshll.u32 %v7071, 16
        %v7972 = vrot.slane %v7970, 3
        %v7973 = vor.u32 %v7969, %v7972
        %v7974 = vsel %vm7660, %v7964, %v7973
        %v7976 = vshrl.u32 %v7072, 16
        %v7978 = vrot.slane %v7976, 2
        %v7979 = vshll.u32 %v7072, 16
        %v7981 = vrot.slane %v7979, 3
        %v7982 = vor.u32 %v7978, %v7981
        %v7983 = vsel %vm7660, %v7973, %v7982
        %v7985 = vshrl.u32 %v7073, 16
        %v7987 = vrot.slane %v7985, 2
        %v7988 = vshll.u32 %v7073, 16
        %v7990 = vrot.slane %v7988, 3
        %v7991 = vor.u32 %v7987, %v7990
        %v7992 = vsel %vm7660, %v7982, %v7991
        %v7994 = vshrl.u32 %v7074, 16
        %v7996 = vrot.slane %v7994, 2
        %v7997 = vshll.u32 %v7074, 16
        %v7999 = vrot.slane %v7997, 3
        %v8000 = vor.u32 %v7996, %v7999
        %v8001 = vsel %vm7660, %v7991, %v8000
        %v8003 = vshrl.u32 %v7075, 16
        %v8005 = vrot.slane %v8003, 2
        %v8006 = vshll.u32 %v7075, 16
        %v8008 = vrot.slane %v8006, 3
        %v8009 = vor.u32 %v8005, %v8008
        %v8010 = vsel %vm7660, %v8000, %v8009
        %v8012 = vshrl.u32 %v7076, 16
        %v8014 = vrot.slane %v8012, 2
        %v8015 = vshll.u32 %v7076, 16
        %v8017 = vrot.slane %v8015, 3
        %v8018 = vor.u32 %v8014, %v8017
        %v8019 = vsel %vm7660, %v8009, %v8018
        %v8021 = vshrl.u32 %v7077, 16
        %v8023 = vrot.slane %v8021, 2
        %v8024 = vshll.u32 %v7077, 16
        %v8026 = vrot.slane %v8024, 3
        %v8027 = vor.u32 %v8023, %v8026
        %v8028 = vsel %vm7660, %v8018, %v8027
        %v8030 = vshrl.u32 %v7078, 16
        %v8032 = vrot.slane %v8030, 2
        %v8033 = vshll.u32 %v7078, 16
        %v8035 = vrot.slane %v8033, 3
        %v8036 = vor.u32 %v8032, %v8035
        %v8037 = vsel %vm7660, %v8027, %v8036
        %v8039 = vshrl.u32 %v7079, 16
        %v8041 = vrot.slane %v8039, 2
        %v8042 = vshll.u32 %v7079, 16
        %v8044 = vrot.slane %v8042, 3
        %v8045 = vor.u32 %v8041, %v8044
        %v8046 = vsel %vm7660, %v8036, %v8045
        %v8051 = vunpack.c.l.b16 %v7656
        %v8052 = vunpack.c.l.b16 %v7657
        %v8053 = vunpack.c.l.b16 %v7658
        %v8054 = vunpack.c.l.b16 %v7659
        %v8055 = vpack.c.b16 %v8052, %v8051
        %v8056 = vpack.c.b16 %v8054, %v8053
        %v8060 = vsel %vm5801, %v7677, 0
        %v8063 = vsel %vm5801, %v7686, 0
        %v8066 = vsel %vm5801, %v7695, 0
        %v8069 = vsel %vm5801, %v7704, 0
        %v8072 = vsel %vm5801, %v7713, 0
        %v8075 = vsel %vm5801, %v7722, 0
        %v8078 = vsel %vm5801, %v7731, 0
        %v8081 = vsel %vm5801, %v7740, 0
        %v8084 = vsel %vm5801, %v7749, 0
        %v8087 = vsel %vm5801, %v7758, 0
        %v8090 = vsel %vm5801, %v7767, 0
        %v8093 = vsel %vm5801, %v7776, 0
        %v8096 = vsel %vm5801, %v7785, 0
        %v8099 = vsel %vm5801, %v7794, 0
        %v8102 = vsel %vm5801, %v7803, 0
        %v8105 = vsel %vm5801, %v7812, 0
        %v8108 = vsel %vm5801, %v7821, 0
        %v8111 = vsel %vm5801, %v7830, 0
        %v8114 = vsel %vm5801, %v7839, 0
        %v8117 = vsel %vm5801, %v7848, 0
        %v8120 = vsel %vm5801, %v7857, 0
        %v8123 = vsel %vm5801, %v7866, 0
        %v8126 = vsel %vm5801, %v7875, 0
        %v8129 = vsel %vm5801, %v7884, 0
        %v8132 = vsel %vm5801, %v7893, 0
        %v8135 = vsel %vm5801, %v7902, 0
        %v8138 = vsel %vm5801, %v7911, 0
        %v8141 = vsel %vm5801, %v7920, 0
        %v8144 = vsel %vm5801, %v7929, 0
        %v8147 = vsel %vm5801, %v7938, 0
        %v8150 = vsel %vm5801, %v7947, 0
        %v8153 = vsel %vm5801, %v7956, 0
        %v8156 = vsel %vm5801, %v7965, 0
        %v8159 = vsel %vm5801, %v7974, 0
        %v8162 = vsel %vm5801, %v7983, 0
        %v8165 = vsel %vm5801, %v7992, 0
        %v8168 = vsel %vm5801, %v8001, 0
        %v8171 = vsel %vm5801, %v8010, 0
        %v8174 = vsel %vm5801, %v8019, 0
        %v8177 = vsel %vm5801, %v8028, 0
        %v8180 = vsel %vm5801, %v8037, 0
        %v8183 = vsel %vm5801, %v8046, 0
        %8185 = vmatpush.bf16.msra.mxu0 0
        %8186 = vmatpush.bf16.msra.mxu0 0
        %8187 = vmatpush.bf16.msra.mxu0 0
        %8188 = vmatpush.bf16.msra.mxu0 0
        %8189 = vmatpush.bf16.msra.mxu0 0
        %8190 = vmatpush.bf16.msra.mxu0 0
        %8191 = vmatpush.bf16.msra.mxu0 %v8056
        %8192 = vmatpush.bf16.msra.mxu0 %v8055
        %8193 = vmatmul.bf16.gmra.mxu0 %v8060
        %v8194 = vpop.f32.mrf.mxu0
        %v8195 = vadd.f32 0.0, %v8194
        %v8196 = vpop.f32.mrf.mxu0
        %v8197 = vadd.f32 0.0, %v8196
        %8198 = vmatmul.bf16.gmra.mxu0 %v8063
        %v8199 = vpop.f32.mrf.mxu0
        %v8200 = vadd.f32 0.0, %v8199
        %v8201 = vpop.f32.mrf.mxu0
        %v8202 = vadd.f32 0.0, %v8201
        %8203 = vmatmul.bf16.gmra.mxu0 %v8066
        %v8204 = vpop.f32.mrf.mxu0
        %v8205 = vadd.f32 0.0, %v8204
        %v8206 = vpop.f32.mrf.mxu0
        %v8207 = vadd.f32 0.0, %v8206
        %8208 = vmatmul.bf16.gmra.mxu0 %v8069
        %v8209 = vpop.f32.mrf.mxu0
        %v8210 = vadd.f32 0.0, %v8209
        %v8211 = vpop.f32.mrf.mxu0
        %v8212 = vadd.f32 0.0, %v8211
        %8213 = vmatmul.bf16.gmra.mxu0 %v8072
        %v8214 = vpop.f32.mrf.mxu0
        %v8215 = vadd.f32 0.0, %v8214
        %v8216 = vpop.f32.mrf.mxu0
        %v8217 = vadd.f32 0.0, %v8216
        %8218 = vmatmul.bf16.gmra.mxu0 %v8075
        %v8219 = vpop.f32.mrf.mxu0
        %v8220 = vadd.f32 0.0, %v8219
        %v8221 = vpop.f32.mrf.mxu0
        %v8222 = vadd.f32 0.0, %v8221
        %8223 = vmatmul.bf16.gmra.mxu0 %v8078
        %v8224 = vpop.f32.mrf.mxu0
        %v8225 = vadd.f32 0.0, %v8224
        %v8226 = vpop.f32.mrf.mxu0
        %v8227 = vadd.f32 0.0, %v8226
        %8228 = vmatmul.bf16.gmra.mxu0 %v8081
        %v8229 = vpop.f32.mrf.mxu0
        %v8230 = vadd.f32 0.0, %v8229
        %v8231 = vpop.f32.mrf.mxu0
        %v8232 = vadd.f32 0.0, %v8231
        %8233 = vmatmul.bf16.gmra.mxu0 %v8084
        %v8234 = vpop.f32.mrf.mxu0
        %v8235 = vadd.f32 0.0, %v8234
        %v8236 = vpop.f32.mrf.mxu0
        %v8237 = vadd.f32 0.0, %v8236
        %8238 = vmatmul.bf16.gmra.mxu0 %v8087
        %v8239 = vpop.f32.mrf.mxu0
        %v8240 = vadd.f32 0.0, %v8239
        %v8241 = vpop.f32.mrf.mxu0
        %v8242 = vadd.f32 0.0, %v8241
        %8243 = vmatmul.bf16.gmra.mxu0 %v8090
        %v8244 = vpop.f32.mrf.mxu0
        %v8245 = vadd.f32 0.0, %v8244
        %v8246 = vpop.f32.mrf.mxu0
        %v8247 = vadd.f32 0.0, %v8246
        %8248 = vmatmul.bf16.gmra.mxu0 %v8093
        %v8249 = vpop.f32.mrf.mxu0
        %v8250 = vadd.f32 0.0, %v8249
        %v8251 = vpop.f32.mrf.mxu0
        %v8252 = vadd.f32 0.0, %v8251
        %8253 = vmatmul.bf16.gmra.mxu0 %v8096
        %v8254 = vpop.f32.mrf.mxu0
        %v8255 = vadd.f32 0.0, %v8254
        %v8256 = vpop.f32.mrf.mxu0
        %v8257 = vadd.f32 0.0, %v8256
        %8258 = vmatmul.bf16.gmra.mxu0 %v8099
        %v8259 = vpop.f32.mrf.mxu0
        %v8260 = vadd.f32 0.0, %v8259
        %v8261 = vpop.f32.mrf.mxu0
        %v8262 = vadd.f32 0.0, %v8261
        %8263 = vmatmul.bf16.gmra.mxu0 %v8102
        %v8264 = vpop.f32.mrf.mxu0
        %v8265 = vadd.f32 0.0, %v8264
        %v8266 = vpop.f32.mrf.mxu0
        %v8267 = vadd.f32 0.0, %v8266
        %8268 = vmatmul.bf16.gmra.mxu0 %v8105
        %v8269 = vpop.f32.mrf.mxu0
        %v8270 = vadd.f32 0.0, %v8269
        %v8271 = vpop.f32.mrf.mxu0
        %v8272 = vadd.f32 0.0, %v8271
        %8273 = vmatmul.bf16.gmra.mxu0 %v8108
        %v8274 = vpop.f32.mrf.mxu0
        %v8275 = vadd.f32 0.0, %v8274
        %v8276 = vpop.f32.mrf.mxu0
        %v8277 = vadd.f32 0.0, %v8276
        %8278 = vmatmul.bf16.gmra.mxu0 %v8111
        %v8279 = vpop.f32.mrf.mxu0
        %v8280 = vadd.f32 0.0, %v8279
        %v8281 = vpop.f32.mrf.mxu0
        %v8282 = vadd.f32 0.0, %v8281
        %8283 = vmatmul.bf16.gmra.mxu0 %v8114
        %v8284 = vpop.f32.mrf.mxu0
        %v8285 = vadd.f32 0.0, %v8284
        %v8286 = vpop.f32.mrf.mxu0
        %v8287 = vadd.f32 0.0, %v8286
        %8288 = vmatmul.bf16.gmra.mxu0 %v8117
        %v8289 = vpop.f32.mrf.mxu0
        %v8290 = vadd.f32 0.0, %v8289
        %v8291 = vpop.f32.mrf.mxu0
        %v8292 = vadd.f32 0.0, %v8291
        %8293 = vmatmul.bf16.gmra.mxu0 %v8120
        %v8294 = vpop.f32.mrf.mxu0
        %v8295 = vadd.f32 0.0, %v8294
        %v8296 = vpop.f32.mrf.mxu0
        %v8297 = vadd.f32 0.0, %v8296
        %8298 = vmatmul.bf16.gmra.mxu0 %v8123
        %v8299 = vpop.f32.mrf.mxu0
        %v8300 = vadd.f32 0.0, %v8299
        %v8301 = vpop.f32.mrf.mxu0
        %v8302 = vadd.f32 0.0, %v8301
        %8303 = vmatmul.bf16.gmra.mxu0 %v8126
        %v8304 = vpop.f32.mrf.mxu0
        %v8305 = vadd.f32 0.0, %v8304
        %v8306 = vpop.f32.mrf.mxu0
        %v8307 = vadd.f32 0.0, %v8306
        %8308 = vmatmul.bf16.gmra.mxu0 %v8129
        %v8309 = vpop.f32.mrf.mxu0
        %v8310 = vadd.f32 0.0, %v8309
        %v8311 = vpop.f32.mrf.mxu0
        %v8312 = vadd.f32 0.0, %v8311
        %8313 = vmatmul.bf16.gmra.mxu0 %v8132
        %v8314 = vpop.f32.mrf.mxu0
        %v8315 = vadd.f32 0.0, %v8314
        %v8316 = vpop.f32.mrf.mxu0
        %v8317 = vadd.f32 0.0, %v8316
        %8318 = vmatmul.bf16.gmra.mxu0 %v8135
        %v8319 = vpop.f32.mrf.mxu0
        %v8320 = vadd.f32 0.0, %v8319
        %v8321 = vpop.f32.mrf.mxu0
        %v8322 = vadd.f32 0.0, %v8321
        %8323 = vmatmul.bf16.gmra.mxu0 %v8138
        %v8324 = vpop.f32.mrf.mxu0
        %v8325 = vadd.f32 0.0, %v8324
        %v8326 = vpop.f32.mrf.mxu0
        %v8327 = vadd.f32 0.0, %v8326
        %8328 = vmatmul.bf16.gmra.mxu0 %v8141
        %v8329 = vpop.f32.mrf.mxu0
        %v8330 = vadd.f32 0.0, %v8329
        %v8331 = vpop.f32.mrf.mxu0
        %v8332 = vadd.f32 0.0, %v8331
        %8333 = vmatmul.bf16.gmra.mxu0 %v8144
        %v8334 = vpop.f32.mrf.mxu0
        %v8335 = vadd.f32 0.0, %v8334
        %v8336 = vpop.f32.mrf.mxu0
        %v8337 = vadd.f32 0.0, %v8336
        %8338 = vmatmul.bf16.gmra.mxu0 %v8147
        %v8339 = vpop.f32.mrf.mxu0
        %v8340 = vadd.f32 0.0, %v8339
        %v8341 = vpop.f32.mrf.mxu0
        %v8342 = vadd.f32 0.0, %v8341
        %8343 = vmatmul.bf16.gmra.mxu0 %v8150
        %v8344 = vpop.f32.mrf.mxu0
        %v8345 = vadd.f32 0.0, %v8344
        %v8346 = vpop.f32.mrf.mxu0
        %v8347 = vadd.f32 0.0, %v8346
        %8348 = vmatmul.bf16.gmra.mxu0 %v8153
        %v8349 = vpop.f32.mrf.mxu0
        %v8350 = vadd.f32 0.0, %v8349
        %v8351 = vpop.f32.mrf.mxu0
        %v8352 = vadd.f32 0.0, %v8351
        %8353 = vmatmul.bf16.gmra.mxu0 %v8156
        %v8354 = vpop.f32.mrf.mxu0
        %v8355 = vadd.f32 0.0, %v8354
        %v8356 = vpop.f32.mrf.mxu0
        %v8357 = vadd.f32 0.0, %v8356
        %8358 = vmatmul.bf16.gmra.mxu0 %v8159
        %v8359 = vpop.f32.mrf.mxu0
        %v8360 = vadd.f32 0.0, %v8359
        %v8361 = vpop.f32.mrf.mxu0
        %v8362 = vadd.f32 0.0, %v8361
        %8363 = vmatmul.bf16.gmra.mxu0 %v8162
        %v8364 = vpop.f32.mrf.mxu0
        %v8365 = vadd.f32 0.0, %v8364
        %v8366 = vpop.f32.mrf.mxu0
        %v8367 = vadd.f32 0.0, %v8366
        %8368 = vmatmul.bf16.gmra.mxu0 %v8165
        %v8369 = vpop.f32.mrf.mxu0
        %v8370 = vadd.f32 0.0, %v8369
        %v8371 = vpop.f32.mrf.mxu0
        %v8372 = vadd.f32 0.0, %v8371
        %8373 = vmatmul.bf16.gmra.mxu0 %v8168
        %v8374 = vpop.f32.mrf.mxu0
        %v8375 = vadd.f32 0.0, %v8374
        %v8376 = vpop.f32.mrf.mxu0
        %v8377 = vadd.f32 0.0, %v8376
        %8378 = vmatmul.bf16.gmra.mxu0 %v8171
        %v8379 = vpop.f32.mrf.mxu0
        %v8380 = vadd.f32 0.0, %v8379
        %v8381 = vpop.f32.mrf.mxu0
        %v8382 = vadd.f32 0.0, %v8381
        %8383 = vmatmul.bf16.gmra.mxu0 %v8174
        %v8384 = vpop.f32.mrf.mxu0
        %v8385 = vadd.f32 0.0, %v8384
        %v8386 = vpop.f32.mrf.mxu0
        %v8387 = vadd.f32 0.0, %v8386
        %8388 = vmatmul.bf16.gmra.mxu0 %v8177
        %v8389 = vpop.f32.mrf.mxu0
        %v8390 = vadd.f32 0.0, %v8389
        %v8391 = vpop.f32.mrf.mxu0
        %v8392 = vadd.f32 0.0, %v8391
        %8393 = vmatmul.bf16.gmra.mxu0 %v8180
        %v8394 = vpop.f32.mrf.mxu0
        %v8395 = vadd.f32 0.0, %v8394
        %v8396 = vpop.f32.mrf.mxu0
        %v8397 = vadd.f32 0.0, %v8396
        %8398 = vmatmul.bf16.gmra.mxu0 %v8183
        %v8399 = vpop.f32.mrf.mxu0
        %v8400 = vadd.f32 0.0, %v8399
        %v8401 = vpop.f32.mrf.mxu0
        %v8402 = vadd.f32 0.0, %v8401
        %8403 = vdwg.mxu0
        %v8404 = vadd.f32 %v7571, %v8195
        %v8405 = vadd.f32 %v7572, %v8197
        %v8406 = vadd.f32 %v7573, %v8200
        %v8407 = vadd.f32 %v7574, %v8202
        %v8408 = vadd.f32 %v7575, %v8205
        %v8409 = vadd.f32 %v7576, %v8207
        %v8410 = vadd.f32 %v7577, %v8210
        %v8411 = vadd.f32 %v7578, %v8212
        %v8412 = vadd.f32 %v7579, %v8215
        %v8413 = vadd.f32 %v7580, %v8217
        %v8414 = vadd.f32 %v7581, %v8220
        %v8415 = vadd.f32 %v7582, %v8222
        %v8416 = vadd.f32 %v7583, %v8225
        %v8417 = vadd.f32 %v7584, %v8227
        %v8418 = vadd.f32 %v7585, %v8230
        %v8419 = vadd.f32 %v7586, %v8232
        %v8420 = vadd.f32 %v7587, %v8235
        %v8421 = vadd.f32 %v7588, %v8237
        %v8422 = vadd.f32 %v7589, %v8240
        %v8423 = vadd.f32 %v7590, %v8242
        %v8424 = vadd.f32 %v7591, %v8245
        %v8425 = vadd.f32 %v7592, %v8247
        %v8426 = vadd.f32 %v7593, %v8250
        %v8427 = vadd.f32 %v7594, %v8252
        %v8428 = vadd.f32 %v7595, %v8255
        %v8429 = vadd.f32 %v7596, %v8257
        %v8430 = vadd.f32 %v7597, %v8260
        %v8431 = vadd.f32 %v7598, %v8262
        %v8432 = vadd.f32 %v7599, %v8265
        %v8433 = vadd.f32 %v7600, %v8267
        %v8434 = vadd.f32 %v7601, %v8270
        %v8435 = vadd.f32 %v7602, %v8272
        %v8436 = vadd.f32 %v7603, %v8275
        %v8437 = vadd.f32 %v7604, %v8277
        %v8438 = vadd.f32 %v7605, %v8280
        %v8439 = vadd.f32 %v7606, %v8282
        %v8440 = vadd.f32 %v7607, %v8285
        %v8441 = vadd.f32 %v7608, %v8287
        %v8442 = vadd.f32 %v7609, %v8290
        %v8443 = vadd.f32 %v7610, %v8292
        %v8444 = vadd.f32 %v7611, %v8295
        %v8445 = vadd.f32 %v7612, %v8297
        %v8446 = vadd.f32 %v7613, %v8300
        %v8447 = vadd.f32 %v7614, %v8302
        %v8448 = vadd.f32 %v7615, %v8305
        %v8449 = vadd.f32 %v7616, %v8307
        %v8450 = vadd.f32 %v7617, %v8310
        %v8451 = vadd.f32 %v7618, %v8312
        %v8452 = vadd.f32 %v7619, %v8315
        %v8453 = vadd.f32 %v7620, %v8317
        %v8454 = vadd.f32 %v7621, %v8320
        %v8455 = vadd.f32 %v7622, %v8322
        %v8456 = vadd.f32 %v7623, %v8325
        %v8457 = vadd.f32 %v7624, %v8327
        %v8458 = vadd.f32 %v7625, %v8330
        %v8459 = vadd.f32 %v7626, %v8332
        %v8460 = vadd.f32 %v7627, %v8335
        %v8461 = vadd.f32 %v7628, %v8337
        %v8462 = vadd.f32 %v7629, %v8340
        %v8463 = vadd.f32 %v7630, %v8342
        %v8464 = vadd.f32 %v7631, %v8345
        %v8465 = vadd.f32 %v7632, %v8347
        %v8466 = vadd.f32 %v7633, %v8350
        %v8467 = vadd.f32 %v7634, %v8352
        %v8468 = vadd.f32 %v7635, %v8355
        %v8469 = vadd.f32 %v7636, %v8357
        %v8470 = vadd.f32 %v7637, %v8360
        %v8471 = vadd.f32 %v7638, %v8362
        %v8472 = vadd.f32 %v7639, %v8365
        %v8473 = vadd.f32 %v7640, %v8367
        %v8474 = vadd.f32 %v7641, %v8370
        %v8475 = vadd.f32 %v7642, %v8372
        %v8476 = vadd.f32 %v7643, %v8375
        %v8477 = vadd.f32 %v7644, %v8377
        %v8478 = vadd.f32 %v7645, %v8380
        %v8479 = vadd.f32 %v7646, %v8382
        %v8480 = vadd.f32 %v7647, %v8385
        %v8481 = vadd.f32 %v7648, %v8387
        %v8482 = vadd.f32 %v7649, %v8390
        %v8483 = vadd.f32 %v7650, %v8392
        %v8484 = vadd.f32 %v7651, %v8395
        %v8485 = vadd.f32 %v7652, %v8397
        %v8486 = vadd.f32 %v7653, %v8400
        %v8487 = vadd.f32 %v7654, %v8402
        %s8488 = scalar_lea.vmem [#allocation6], 80
        %v8489 = vld [vmem:[%s8488] sm:$0xf]
        %v8490 = vld [vmem:[%s8488 + $0x4] sm:$0xf]
        %v8491 = vld [vmem:[%s8488 + $0x8] sm:$0xf]
        %v8492 = vld [vmem:[%s8488 + $0xc] sm:$0xf]
        %vm8493 = vcmask 1044480
        %v8494 = vrot.slane %v7037, 3
        %v8495 = vrot.slane %v7038, 3
        %v8496 = vsel %vm8493, %v8494, %v8495
        %v8497 = vrot.slane %v7039, 3
        %v8498 = vsel %vm8493, %v8495, %v8497
        %v8499 = vrot.slane %v7040, 3
        %v8500 = vsel %vm8493, %v8497, %v8499
        %v8501 = vrot.slane %v7041, 3
        %v8502 = vsel %vm8493, %v8499, %v8501
        %v8503 = vrot.slane %v7042, 3
        %v8504 = vsel %vm8493, %v8501, %v8503
        %v8505 = vrot.slane %v7043, 3
        %v8506 = vsel %vm8493, %v8503, %v8505
        %v8507 = vrot.slane %v7044, 3
        %v8508 = vsel %vm8493, %v8505, %v8507
        %v8509 = vrot.slane %v7045, 3
        %v8510 = vsel %vm8493, %v8507, %v8509
        %v8511 = vrot.slane %v7046, 3
        %v8512 = vsel %vm8493, %v8509, %v8511
        %v8513 = vrot.slane %v7047, 3
        %v8514 = vsel %vm8493, %v8511, %v8513
        %v8515 = vrot.slane %v7048, 3
        %v8516 = vsel %vm8493, %v8513, %v8515
        %v8517 = vrot.slane %v7049, 3
        %v8518 = vsel %vm8493, %v8515, %v8517
        %v8519 = vrot.slane %v7050, 3
        %v8520 = vsel %vm8493, %v8517, %v8519
        %v8521 = vrot.slane %v7051, 3
        %v8522 = vsel %vm8493, %v8519, %v8521
        %v8523 = vrot.slane %v7052, 3
        %v8524 = vsel %vm8493, %v8521, %v8523
        %v8525 = vrot.slane %v7053, 3
        %v8526 = vsel %vm8493, %v8523, %v8525
        %v8527 = vrot.slane %v7054, 3
        %v8528 = vsel %vm8493, %v8525, %v8527
        %v8529 = vrot.slane %v7055, 3
        %v8530 = vsel %vm8493, %v8527, %v8529
        %v8531 = vrot.slane %v7056, 3
        %v8532 = vsel %vm8493, %v8529, %v8531
        %v8533 = vrot.slane %v7057, 3
        %v8534 = vsel %vm8493, %v8531, %v8533
        %v8535 = vrot.slane %v7058, 3
        %v8536 = vsel %vm8493, %v8533, %v8535
        %v8537 = vrot.slane %v7059, 3
        %v8538 = vsel %vm8493, %v8535, %v8537
        %v8539 = vrot.slane %v7060, 3
        %v8540 = vsel %vm8493, %v8537, %v8539
        %v8541 = vrot.slane %v7061, 3
        %v8542 = vsel %vm8493, %v8539, %v8541
        %v8543 = vrot.slane %v7062, 3
        %v8544 = vsel %vm8493, %v8541, %v8543
        %v8545 = vrot.slane %v7063, 3
        %v8546 = vsel %vm8493, %v8543, %v8545
        %v8547 = vrot.slane %v7064, 3
        %v8548 = vsel %vm8493, %v8545, %v8547
        %v8549 = vrot.slane %v7065, 3
        %v8550 = vsel %vm8493, %v8547, %v8549
        %v8551 = vrot.slane %v7066, 3
        %v8552 = vsel %vm8493, %v8549, %v8551
        %v8553 = vrot.slane %v7067, 3
        %v8554 = vsel %vm8493, %v8551, %v8553
        %v8555 = vrot.slane %v7068, 3
        %v8556 = vsel %vm8493, %v8553, %v8555
        %v8557 = vrot.slane %v7069, 3
        %v8558 = vsel %vm8493, %v8555, %v8557
        %v8559 = vrot.slane %v7070, 3
        %v8560 = vsel %vm8493, %v8557, %v8559
        %v8561 = vrot.slane %v7071, 3
        %v8562 = vsel %vm8493, %v8559, %v8561
        %v8563 = vrot.slane %v7072, 3
        %v8564 = vsel %vm8493, %v8561, %v8563
        %v8565 = vrot.slane %v7073, 3
        %v8566 = vsel %vm8493, %v8563, %v8565
        %v8567 = vrot.slane %v7074, 3
        %v8568 = vsel %vm8493, %v8565, %v8567
        %v8569 = vrot.slane %v7075, 3
        %v8570 = vsel %vm8493, %v8567, %v8569
        %v8571 = vrot.slane %v7076, 3
        %v8572 = vsel %vm8493, %v8569, %v8571
        %v8573 = vrot.slane %v7077, 3
        %v8574 = vsel %vm8493, %v8571, %v8573
        %v8575 = vrot.slane %v7078, 3
        %v8576 = vsel %vm8493, %v8573, %v8575
        %v8577 = vrot.slane %v7079, 3
        %v8578 = vsel %vm8493, %v8575, %v8577
        %v8583 = vunpack.c.l.b16 %v8489
        %v8584 = vunpack.c.l.b16 %v8490
        %v8585 = vunpack.c.l.b16 %v8491
        %v8586 = vunpack.c.l.b16 %v8492
        %v8587 = vpack.c.b16 %v8584, %v8583
        %v8588 = vpack.c.b16 %v8586, %v8585
        %v8592 = vsel %vm5801, %v8496, 0
        %v8595 = vsel %vm5801, %v8498, 0
        %v8598 = vsel %vm5801, %v8500, 0
        %v8601 = vsel %vm5801, %v8502, 0
        %v8604 = vsel %vm5801, %v8504, 0
        %v8607 = vsel %vm5801, %v8506, 0
        %v8610 = vsel %vm5801, %v8508, 0
        %v8613 = vsel %vm5801, %v8510, 0
        %v8616 = vsel %vm5801, %v8512, 0
        %v8619 = vsel %vm5801, %v8514, 0
        %v8622 = vsel %vm5801, %v8516, 0
        %v8625 = vsel %vm5801, %v8518, 0
        %v8628 = vsel %vm5801, %v8520, 0
        %v8631 = vsel %vm5801, %v8522, 0
        %v8634 = vsel %vm5801, %v8524, 0
        %v8637 = vsel %vm5801, %v8526, 0
        %v8640 = vsel %vm5801, %v8528, 0
        %v8643 = vsel %vm5801, %v8530, 0
        %v8646 = vsel %vm5801, %v8532, 0
        %v8649 = vsel %vm5801, %v8534, 0
        %v8652 = vsel %vm5801, %v8536, 0
        %v8655 = vsel %vm5801, %v8538, 0
        %v8658 = vsel %vm5801, %v8540, 0
        %v8661 = vsel %vm5801, %v8542, 0
        %v8664 = vsel %vm5801, %v8544, 0
        %v8667 = vsel %vm5801, %v8546, 0
        %v8670 = vsel %vm5801, %v8548, 0
        %v8673 = vsel %vm5801, %v8550, 0
        %v8676 = vsel %vm5801, %v8552, 0
        %v8679 = vsel %vm5801, %v8554, 0
        %v8682 = vsel %vm5801, %v8556, 0
        %v8685 = vsel %vm5801, %v8558, 0
        %v8688 = vsel %vm5801, %v8560, 0
        %v8691 = vsel %vm5801, %v8562, 0
        %v8694 = vsel %vm5801, %v8564, 0
        %v8697 = vsel %vm5801, %v8566, 0
        %v8700 = vsel %vm5801, %v8568, 0
        %v8703 = vsel %vm5801, %v8570, 0
        %v8706 = vsel %vm5801, %v8572, 0
        %v8709 = vsel %vm5801, %v8574, 0
        %v8712 = vsel %vm5801, %v8576, 0
        %v8715 = vsel %vm5801, %v8578, 0
        %8717 = vmatpush.bf16.msra.mxu0 0
        %8718 = vmatpush.bf16.msra.mxu0 0
        %8719 = vmatpush.bf16.msra.mxu0 0
        %8720 = vmatpush.bf16.msra.mxu0 0
        %8721 = vmatpush.bf16.msra.mxu0 0
        %8722 = vmatpush.bf16.msra.mxu0 0
        %8723 = vmatpush.bf16.msra.mxu0 %v8588
        %8724 = vmatpush.bf16.msra.mxu0 %v8587
        %8725 = vmatmul.bf16.gmra.mxu0 %v8592
        %v8726 = vpop.f32.mrf.mxu0
        %v8727 = vadd.f32 0.0, %v8726
        %v8728 = vpop.f32.mrf.mxu0
        %v8729 = vadd.f32 0.0, %v8728
        %8730 = vmatmul.bf16.gmra.mxu0 %v8595
        %v8731 = vpop.f32.mrf.mxu0
        %v8732 = vadd.f32 0.0, %v8731
        %v8733 = vpop.f32.mrf.mxu0
        %v8734 = vadd.f32 0.0, %v8733
        %8735 = vmatmul.bf16.gmra.mxu0 %v8598
        %v8736 = vpop.f32.mrf.mxu0
        %v8737 = vadd.f32 0.0, %v8736
        %v8738 = vpop.f32.mrf.mxu0
        %v8739 = vadd.f32 0.0, %v8738
        %8740 = vmatmul.bf16.gmra.mxu0 %v8601
        %v8741 = vpop.f32.mrf.mxu0
        %v8742 = vadd.f32 0.0, %v8741
        %v8743 = vpop.f32.mrf.mxu0
        %v8744 = vadd.f32 0.0, %v8743
        %8745 = vmatmul.bf16.gmra.mxu0 %v8604
        %v8746 = vpop.f32.mrf.mxu0
        %v8747 = vadd.f32 0.0, %v8746
        %v8748 = vpop.f32.mrf.mxu0
        %v8749 = vadd.f32 0.0, %v8748
        %8750 = vmatmul.bf16.gmra.mxu0 %v8607
        %v8751 = vpop.f32.mrf.mxu0
        %v8752 = vadd.f32 0.0, %v8751
        %v8753 = vpop.f32.mrf.mxu0
        %v8754 = vadd.f32 0.0, %v8753
        %8755 = vmatmul.bf16.gmra.mxu0 %v8610
        %v8756 = vpop.f32.mrf.mxu0
        %v8757 = vadd.f32 0.0, %v8756
        %v8758 = vpop.f32.mrf.mxu0
        %v8759 = vadd.f32 0.0, %v8758
        %8760 = vmatmul.bf16.gmra.mxu0 %v8613
        %v8761 = vpop.f32.mrf.mxu0
        %v8762 = vadd.f32 0.0, %v8761
        %v8763 = vpop.f32.mrf.mxu0
        %v8764 = vadd.f32 0.0, %v8763
        %8765 = vmatmul.bf16.gmra.mxu0 %v8616
        %v8766 = vpop.f32.mrf.mxu0
        %v8767 = vadd.f32 0.0, %v8766
        %v8768 = vpop.f32.mrf.mxu0
        %v8769 = vadd.f32 0.0, %v8768
        %8770 = vmatmul.bf16.gmra.mxu0 %v8619
        %v8771 = vpop.f32.mrf.mxu0
        %v8772 = vadd.f32 0.0, %v8771
        %v8773 = vpop.f32.mrf.mxu0
        %v8774 = vadd.f32 0.0, %v8773
        %8775 = vmatmul.bf16.gmra.mxu0 %v8622
        %v8776 = vpop.f32.mrf.mxu0
        %v8777 = vadd.f32 0.0, %v8776
        %v8778 = vpop.f32.mrf.mxu0
        %v8779 = vadd.f32 0.0, %v8778
        %8780 = vmatmul.bf16.gmra.mxu0 %v8625
        %v8781 = vpop.f32.mrf.mxu0
        %v8782 = vadd.f32 0.0, %v8781
        %v8783 = vpop.f32.mrf.mxu0
        %v8784 = vadd.f32 0.0, %v8783
        %8785 = vmatmul.bf16.gmra.mxu0 %v8628
        %v8786 = vpop.f32.mrf.mxu0
        %v8787 = vadd.f32 0.0, %v8786
        %v8788 = vpop.f32.mrf.mxu0
        %v8789 = vadd.f32 0.0, %v8788
        %8790 = vmatmul.bf16.gmra.mxu0 %v8631
        %v8791 = vpop.f32.mrf.mxu0
        %v8792 = vadd.f32 0.0, %v8791
        %v8793 = vpop.f32.mrf.mxu0
        %v8794 = vadd.f32 0.0, %v8793
        %8795 = vmatmul.bf16.gmra.mxu0 %v8634
        %v8796 = vpop.f32.mrf.mxu0
        %v8797 = vadd.f32 0.0, %v8796
        %v8798 = vpop.f32.mrf.mxu0
        %v8799 = vadd.f32 0.0, %v8798
        %8800 = vmatmul.bf16.gmra.mxu0 %v8637
        %v8801 = vpop.f32.mrf.mxu0
        %v8802 = vadd.f32 0.0, %v8801
        %v8803 = vpop.f32.mrf.mxu0
        %v8804 = vadd.f32 0.0, %v8803
        %8805 = vmatmul.bf16.gmra.mxu0 %v8640
        %v8806 = vpop.f32.mrf.mxu0
        %v8807 = vadd.f32 0.0, %v8806
        %v8808 = vpop.f32.mrf.mxu0
        %v8809 = vadd.f32 0.0, %v8808
        %8810 = vmatmul.bf16.gmra.mxu0 %v8643
        %v8811 = vpop.f32.mrf.mxu0
        %v8812 = vadd.f32 0.0, %v8811
        %v8813 = vpop.f32.mrf.mxu0
        %v8814 = vadd.f32 0.0, %v8813
        %8815 = vmatmul.bf16.gmra.mxu0 %v8646
        %v8816 = vpop.f32.mrf.mxu0
        %v8817 = vadd.f32 0.0, %v8816
        %v8818 = vpop.f32.mrf.mxu0
        %v8819 = vadd.f32 0.0, %v8818
        %8820 = vmatmul.bf16.gmra.mxu0 %v8649
        %v8821 = vpop.f32.mrf.mxu0
        %v8822 = vadd.f32 0.0, %v8821
        %v8823 = vpop.f32.mrf.mxu0
        %v8824 = vadd.f32 0.0, %v8823
        %8825 = vmatmul.bf16.gmra.mxu0 %v8652
        %v8826 = vpop.f32.mrf.mxu0
        %v8827 = vadd.f32 0.0, %v8826
        %v8828 = vpop.f32.mrf.mxu0
        %v8829 = vadd.f32 0.0, %v8828
        %8830 = vmatmul.bf16.gmra.mxu0 %v8655
        %v8831 = vpop.f32.mrf.mxu0
        %v8832 = vadd.f32 0.0, %v8831
        %v8833 = vpop.f32.mrf.mxu0
        %v8834 = vadd.f32 0.0, %v8833
        %8835 = vmatmul.bf16.gmra.mxu0 %v8658
        %v8836 = vpop.f32.mrf.mxu0
        %v8837 = vadd.f32 0.0, %v8836
        %v8838 = vpop.f32.mrf.mxu0
        %v8839 = vadd.f32 0.0, %v8838
        %8840 = vmatmul.bf16.gmra.mxu0 %v8661
        %v8841 = vpop.f32.mrf.mxu0
        %v8842 = vadd.f32 0.0, %v8841
        %v8843 = vpop.f32.mrf.mxu0
        %v8844 = vadd.f32 0.0, %v8843
        %8845 = vmatmul.bf16.gmra.mxu0 %v8664
        %v8846 = vpop.f32.mrf.mxu0
        %v8847 = vadd.f32 0.0, %v8846
        %v8848 = vpop.f32.mrf.mxu0
        %v8849 = vadd.f32 0.0, %v8848
        %8850 = vmatmul.bf16.gmra.mxu0 %v8667
        %v8851 = vpop.f32.mrf.mxu0
        %v8852 = vadd.f32 0.0, %v8851
        %v8853 = vpop.f32.mrf.mxu0
        %v8854 = vadd.f32 0.0, %v8853
        %8855 = vmatmul.bf16.gmra.mxu0 %v8670
        %v8856 = vpop.f32.mrf.mxu0
        %v8857 = vadd.f32 0.0, %v8856
        %v8858 = vpop.f32.mrf.mxu0
        %v8859 = vadd.f32 0.0, %v8858
        %8860 = vmatmul.bf16.gmra.mxu0 %v8673
        %v8861 = vpop.f32.mrf.mxu0
        %v8862 = vadd.f32 0.0, %v8861
        %v8863 = vpop.f32.mrf.mxu0
        %v8864 = vadd.f32 0.0, %v8863
        %8865 = vmatmul.bf16.gmra.mxu0 %v8676
        %v8866 = vpop.f32.mrf.mxu0
        %v8867 = vadd.f32 0.0, %v8866
        %v8868 = vpop.f32.mrf.mxu0
        %v8869 = vadd.f32 0.0, %v8868
        %8870 = vmatmul.bf16.gmra.mxu0 %v8679
        %v8871 = vpop.f32.mrf.mxu0
        %v8872 = vadd.f32 0.0, %v8871
        %v8873 = vpop.f32.mrf.mxu0
        %v8874 = vadd.f32 0.0, %v8873
        %8875 = vmatmul.bf16.gmra.mxu0 %v8682
        %v8876 = vpop.f32.mrf.mxu0
        %v8877 = vadd.f32 0.0, %v8876
        %v8878 = vpop.f32.mrf.mxu0
        %v8879 = vadd.f32 0.0, %v8878
        %8880 = vmatmul.bf16.gmra.mxu0 %v8685
        %v8881 = vpop.f32.mrf.mxu0
        %v8882 = vadd.f32 0.0, %v8881
        %v8883 = vpop.f32.mrf.mxu0
        %v8884 = vadd.f32 0.0, %v8883
        %8885 = vmatmul.bf16.gmra.mxu0 %v8688
        %v8886 = vpop.f32.mrf.mxu0
        %v8887 = vadd.f32 0.0, %v8886
        %v8888 = vpop.f32.mrf.mxu0
        %v8889 = vadd.f32 0.0, %v8888
        %8890 = vmatmul.bf16.gmra.mxu0 %v8691
        %v8891 = vpop.f32.mrf.mxu0
        %v8892 = vadd.f32 0.0, %v8891
        %v8893 = vpop.f32.mrf.mxu0
        %v8894 = vadd.f32 0.0, %v8893
        %8895 = vmatmul.bf16.gmra.mxu0 %v8694
        %v8896 = vpop.f32.mrf.mxu0
        %v8897 = vadd.f32 0.0, %v8896
        %v8898 = vpop.f32.mrf.mxu0
        %v8899 = vadd.f32 0.0, %v8898
        %8900 = vmatmul.bf16.gmra.mxu0 %v8697
        %v8901 = vpop.f32.mrf.mxu0
        %v8902 = vadd.f32 0.0, %v8901
        %v8903 = vpop.f32.mrf.mxu0
        %v8904 = vadd.f32 0.0, %v8903
        %8905 = vmatmul.bf16.gmra.mxu0 %v8700
        %v8906 = vpop.f32.mrf.mxu0
        %v8907 = vadd.f32 0.0, %v8906
        %v8908 = vpop.f32.mrf.mxu0
        %v8909 = vadd.f32 0.0, %v8908
        %8910 = vmatmul.bf16.gmra.mxu0 %v8703
        %v8911 = vpop.f32.mrf.mxu0
        %v8912 = vadd.f32 0.0, %v8911
        %v8913 = vpop.f32.mrf.mxu0
        %v8914 = vadd.f32 0.0, %v8913
        %8915 = vmatmul.bf16.gmra.mxu0 %v8706
        %v8916 = vpop.f32.mrf.mxu0
        %v8917 = vadd.f32 0.0, %v8916
        %v8918 = vpop.f32.mrf.mxu0
        %v8919 = vadd.f32 0.0, %v8918
        %8920 = vmatmul.bf16.gmra.mxu0 %v8709
        %v8921 = vpop.f32.mrf.mxu0
        %v8922 = vadd.f32 0.0, %v8921
        %v8923 = vpop.f32.mrf.mxu0
        %v8924 = vadd.f32 0.0, %v8923
        %8925 = vmatmul.bf16.gmra.mxu0 %v8712
        %v8926 = vpop.f32.mrf.mxu0
        %v8927 = vadd.f32 0.0, %v8926
        %v8928 = vpop.f32.mrf.mxu0
        %v8929 = vadd.f32 0.0, %v8928
        %8930 = vmatmul.bf16.gmra.mxu0 %v8715
        %v8931 = vpop.f32.mrf.mxu0
        %v8932 = vadd.f32 0.0, %v8931
        %v8933 = vpop.f32.mrf.mxu0
        %v8934 = vadd.f32 0.0, %v8933
        %8935 = vdwg.mxu0
        %v8936 = vadd.f32 %v8404, %v8727
        %v8937 = vadd.f32 %v8405, %v8729
        %v8938 = vadd.f32 %v8406, %v8732
        %v8939 = vadd.f32 %v8407, %v8734
        %v8940 = vadd.f32 %v8408, %v8737
        %v8941 = vadd.f32 %v8409, %v8739
        %v8942 = vadd.f32 %v8410, %v8742
        %v8943 = vadd.f32 %v8411, %v8744
        %v8944 = vadd.f32 %v8412, %v8747
        %v8945 = vadd.f32 %v8413, %v8749
        %v8946 = vadd.f32 %v8414, %v8752
        %v8947 = vadd.f32 %v8415, %v8754
        %v8948 = vadd.f32 %v8416, %v8757
        %v8949 = vadd.f32 %v8417, %v8759
        %v8950 = vadd.f32 %v8418, %v8762
        %v8951 = vadd.f32 %v8419, %v8764
        %v8952 = vadd.f32 %v8420, %v8767
        %v8953 = vadd.f32 %v8421, %v8769
        %v8954 = vadd.f32 %v8422, %v8772
        %v8955 = vadd.f32 %v8423, %v8774
        %v8956 = vadd.f32 %v8424, %v8777
        %v8957 = vadd.f32 %v8425, %v8779
        %v8958 = vadd.f32 %v8426, %v8782
        %v8959 = vadd.f32 %v8427, %v8784
        %v8960 = vadd.f32 %v8428, %v8787
        %v8961 = vadd.f32 %v8429, %v8789
        %v8962 = vadd.f32 %v8430, %v8792
        %v8963 = vadd.f32 %v8431, %v8794
        %v8964 = vadd.f32 %v8432, %v8797
        %v8965 = vadd.f32 %v8433, %v8799
        %v8966 = vadd.f32 %v8434, %v8802
        %v8967 = vadd.f32 %v8435, %v8804
        %v8968 = vadd.f32 %v8436, %v8807
        %v8969 = vadd.f32 %v8437, %v8809
        %v8970 = vadd.f32 %v8438, %v8812
        %v8971 = vadd.f32 %v8439, %v8814
        %v8972 = vadd.f32 %v8440, %v8817
        %v8973 = vadd.f32 %v8441, %v8819
        %v8974 = vadd.f32 %v8442, %v8822
        %v8975 = vadd.f32 %v8443, %v8824
        %v8976 = vadd.f32 %v8444, %v8827
        %v8977 = vadd.f32 %v8445, %v8829
        %v8978 = vadd.f32 %v8446, %v8832
        %v8979 = vadd.f32 %v8447, %v8834
        %v8980 = vadd.f32 %v8448, %v8837
        %v8981 = vadd.f32 %v8449, %v8839
        %v8982 = vadd.f32 %v8450, %v8842
        %v8983 = vadd.f32 %v8451, %v8844
        %v8984 = vadd.f32 %v8452, %v8847
        %v8985 = vadd.f32 %v8453, %v8849
        %v8986 = vadd.f32 %v8454, %v8852
        %v8987 = vadd.f32 %v8455, %v8854
        %v8988 = vadd.f32 %v8456, %v8857
        %v8989 = vadd.f32 %v8457, %v8859
        %v8990 = vadd.f32 %v8458, %v8862
        %v8991 = vadd.f32 %v8459, %v8864
        %v8992 = vadd.f32 %v8460, %v8867
        %v8993 = vadd.f32 %v8461, %v8869
        %v8994 = vadd.f32 %v8462, %v8872
        %v8995 = vadd.f32 %v8463, %v8874
        %v8996 = vadd.f32 %v8464, %v8877
        %v8997 = vadd.f32 %v8465, %v8879
        %v8998 = vadd.f32 %v8466, %v8882
        %v8999 = vadd.f32 %v8467, %v8884
        %v9000 = vadd.f32 %v8468, %v8887
        %v9001 = vadd.f32 %v8469, %v8889
        %v9002 = vadd.f32 %v8470, %v8892
        %v9003 = vadd.f32 %v8471, %v8894
        %v9004 = vadd.f32 %v8472, %v8897
        %v9005 = vadd.f32 %v8473, %v8899
        %v9006 = vadd.f32 %v8474, %v8902
        %v9007 = vadd.f32 %v8475, %v8904
        %v9008 = vadd.f32 %v8476, %v8907
        %v9009 = vadd.f32 %v8477, %v8909
        %v9010 = vadd.f32 %v8478, %v8912
        %v9011 = vadd.f32 %v8479, %v8914
        %v9012 = vadd.f32 %v8480, %v8917
        %v9013 = vadd.f32 %v8481, %v8919
        %v9014 = vadd.f32 %v8482, %v8922
        %v9015 = vadd.f32 %v8483, %v8924
        %v9016 = vadd.f32 %v8484, %v8927
        %v9017 = vadd.f32 %v8485, %v8929
        %v9018 = vadd.f32 %v8486, %v8932
        %v9019 = vadd.f32 %v8487, %v8934
        %v9020 = vpack.c.bf16 %v5392, %v5391
        %v9021 = vpack.c.bf16 %v5394, %v5393
        %s9022 = scalar_lea.vmem [#allocation6], 96
        %v9023 = vld [vmem:[%s9022] sm:$0xf]
        %v9024 = vld [vmem:[%s9022 + $0x4] sm:$0xf]
        %v9025 = vld [vmem:[%s9022 + $0x8] sm:$0xf]
        %v9026 = vld [vmem:[%s9022 + $0xc] sm:$0xf]
        %v9031 = vunpack.c.l.b16 %v9023
        %v9032 = vunpack.c.l.b16 %v9024
        %v9033 = vunpack.c.l.b16 %v9025
        %v9034 = vunpack.c.l.b16 %v9026
        %v9035 = vpack.c.b16 %v9032, %v9031
        %v9036 = vpack.c.b16 %v9034, %v9033
        %v9039 = vsel %vm5801, %v7039, 0
        %v9041 = vsel %vm5801, %v7040, 0
        %v9043 = vsel %vm5801, %v7041, 0
        %v9045 = vsel %vm5801, %v7042, 0
        %v9047 = vsel %vm5801, %v7043, 0
        %v9049 = vsel %vm5801, %v7044, 0
        %v9051 = vsel %vm5801, %v7045, 0
        %v9053 = vsel %vm5801, %v7046, 0
        %v9055 = vsel %vm5801, %v7047, 0
        %v9057 = vsel %vm5801, %v7048, 0
        %v9059 = vsel %vm5801, %v7049, 0
        %v9061 = vsel %vm5801, %v7050, 0
        %v9063 = vsel %vm5801, %v7051, 0
        %v9065 = vsel %vm5801, %v7052, 0
        %v9067 = vsel %vm5801, %v7053, 0
        %v9069 = vsel %vm5801, %v7054, 0
        %v9071 = vsel %vm5801, %v7055, 0
        %v9073 = vsel %vm5801, %v7056, 0
        %v9075 = vsel %vm5801, %v7057, 0
        %v9077 = vsel %vm5801, %v7058, 0
        %v9079 = vsel %vm5801, %v7059, 0
        %v9081 = vsel %vm5801, %v7060, 0
        %v9083 = vsel %vm5801, %v7061, 0
        %v9085 = vsel %vm5801, %v7062, 0
        %v9087 = vsel %vm5801, %v7063, 0
        %v9089 = vsel %vm5801, %v7064, 0
        %v9091 = vsel %vm5801, %v7065, 0
        %v9093 = vsel %vm5801, %v7066, 0
        %v9095 = vsel %vm5801, %v7067, 0
        %v9097 = vsel %vm5801, %v7068, 0
        %v9099 = vsel %vm5801, %v7069, 0
        %v9101 = vsel %vm5801, %v7070, 0
        %v9103 = vsel %vm5801, %v7071, 0
        %v9105 = vsel %vm5801, %v7072, 0
        %v9107 = vsel %vm5801, %v7073, 0
        %v9109 = vsel %vm5801, %v7074, 0
        %v9111 = vsel %vm5801, %v7075, 0
        %v9113 = vsel %vm5801, %v7076, 0
        %v9115 = vsel %vm5801, %v7077, 0
        %v9117 = vsel %vm5801, %v7078, 0
        %v9120 = vsel %vm5801, %v9020, 0
        %v9123 = vsel %vm5801, %v9021, 0
        %9125 = vmatpush.bf16.msra.mxu0 0
        %9126 = vmatpush.bf16.msra.mxu0 0
        %9127 = vmatpush.bf16.msra.mxu0 0
        %9128 = vmatpush.bf16.msra.mxu0 0
        %9129 = vmatpush.bf16.msra.mxu0 0
        %9130 = vmatpush.bf16.msra.mxu0 0
        %9131 = vmatpush.bf16.msra.mxu0 %v9036
        %9132 = vmatpush.bf16.msra.mxu0 %v9035
        %9133 = vmatmul.bf16.gmra.mxu0 %v9039
        %v9134 = vpop.f32.mrf.mxu0
        %v9135 = vadd.f32 0.0, %v9134
        %v9136 = vpop.f32.mrf.mxu0
        %v9137 = vadd.f32 0.0, %v9136
        %9138 = vmatmul.bf16.gmra.mxu0 %v9041
        %v9139 = vpop.f32.mrf.mxu0
        %v9140 = vadd.f32 0.0, %v9139
        %v9141 = vpop.f32.mrf.mxu0
        %v9142 = vadd.f32 0.0, %v9141
        %9143 = vmatmul.bf16.gmra.mxu0 %v9043
        %v9144 = vpop.f32.mrf.mxu0
        %v9145 = vadd.f32 0.0, %v9144
        %v9146 = vpop.f32.mrf.mxu0
        %v9147 = vadd.f32 0.0, %v9146
        %9148 = vmatmul.bf16.gmra.mxu0 %v9045
        %v9149 = vpop.f32.mrf.mxu0
        %v9150 = vadd.f32 0.0, %v9149
        %v9151 = vpop.f32.mrf.mxu0
        %v9152 = vadd.f32 0.0, %v9151
        %9153 = vmatmul.bf16.gmra.mxu0 %v9047
        %v9154 = vpop.f32.mrf.mxu0
        %v9155 = vadd.f32 0.0, %v9154
        %v9156 = vpop.f32.mrf.mxu0
        %v9157 = vadd.f32 0.0, %v9156
        %9158 = vmatmul.bf16.gmra.mxu0 %v9049
        %v9159 = vpop.f32.mrf.mxu0
        %v9160 = vadd.f32 0.0, %v9159
        %v9161 = vpop.f32.mrf.mxu0
        %v9162 = vadd.f32 0.0, %v9161
        %9163 = vmatmul.bf16.gmra.mxu0 %v9051
        %v9164 = vpop.f32.mrf.mxu0
        %v9165 = vadd.f32 0.0, %v9164
        %v9166 = vpop.f32.mrf.mxu0
        %v9167 = vadd.f32 0.0, %v9166
        %9168 = vmatmul.bf16.gmra.mxu0 %v9053
        %v9169 = vpop.f32.mrf.mxu0
        %v9170 = vadd.f32 0.0, %v9169
        %v9171 = vpop.f32.mrf.mxu0
        %v9172 = vadd.f32 0.0, %v9171
        %9173 = vmatmul.bf16.gmra.mxu0 %v9055
        %v9174 = vpop.f32.mrf.mxu0
        %v9175 = vadd.f32 0.0, %v9174
        %v9176 = vpop.f32.mrf.mxu0
        %v9177 = vadd.f32 0.0, %v9176
        %9178 = vmatmul.bf16.gmra.mxu0 %v9057
        %v9179 = vpop.f32.mrf.mxu0
        %v9180 = vadd.f32 0.0, %v9179
        %v9181 = vpop.f32.mrf.mxu0
        %v9182 = vadd.f32 0.0, %v9181
        %9183 = vmatmul.bf16.gmra.mxu0 %v9059
        %v9184 = vpop.f32.mrf.mxu0
        %v9185 = vadd.f32 0.0, %v9184
        %v9186 = vpop.f32.mrf.mxu0
        %v9187 = vadd.f32 0.0, %v9186
        %9188 = vmatmul.bf16.gmra.mxu0 %v9061
        %v9189 = vpop.f32.mrf.mxu0
        %v9190 = vadd.f32 0.0, %v9189
        %v9191 = vpop.f32.mrf.mxu0
        %v9192 = vadd.f32 0.0, %v9191
        %9193 = vmatmul.bf16.gmra.mxu0 %v9063
        %v9194 = vpop.f32.mrf.mxu0
        %v9195 = vadd.f32 0.0, %v9194
        %v9196 = vpop.f32.mrf.mxu0
        %v9197 = vadd.f32 0.0, %v9196
        %9198 = vmatmul.bf16.gmra.mxu0 %v9065
        %v9199 = vpop.f32.mrf.mxu0
        %v9200 = vadd.f32 0.0, %v9199
        %v9201 = vpop.f32.mrf.mxu0
        %v9202 = vadd.f32 0.0, %v9201
        %9203 = vmatmul.bf16.gmra.mxu0 %v9067
        %v9204 = vpop.f32.mrf.mxu0
        %v9205 = vadd.f32 0.0, %v9204
        %v9206 = vpop.f32.mrf.mxu0
        %v9207 = vadd.f32 0.0, %v9206
        %9208 = vmatmul.bf16.gmra.mxu0 %v9069
        %v9209 = vpop.f32.mrf.mxu0
        %v9210 = vadd.f32 0.0, %v9209
        %v9211 = vpop.f32.mrf.mxu0
        %v9212 = vadd.f32 0.0, %v9211
        %9213 = vmatmul.bf16.gmra.mxu0 %v9071
        %v9214 = vpop.f32.mrf.mxu0
        %v9215 = vadd.f32 0.0, %v9214
        %v9216 = vpop.f32.mrf.mxu0
        %v9217 = vadd.f32 0.0, %v9216
        %9218 = vmatmul.bf16.gmra.mxu0 %v9073
        %v9219 = vpop.f32.mrf.mxu0
        %v9220 = vadd.f32 0.0, %v9219
        %v9221 = vpop.f32.mrf.mxu0
        %v9222 = vadd.f32 0.0, %v9221
        %9223 = vmatmul.bf16.gmra.mxu0 %v9075
        %v9224 = vpop.f32.mrf.mxu0
        %v9225 = vadd.f32 0.0, %v9224
        %v9226 = vpop.f32.mrf.mxu0
        %v9227 = vadd.f32 0.0, %v9226
        %9228 = vmatmul.bf16.gmra.mxu0 %v9077
        %v9229 = vpop.f32.mrf.mxu0
        %v9230 = vadd.f32 0.0, %v9229
        %v9231 = vpop.f32.mrf.mxu0
        %v9232 = vadd.f32 0.0, %v9231
        %9233 = vmatmul.bf16.gmra.mxu0 %v9079
        %v9234 = vpop.f32.mrf.mxu0
        %v9235 = vadd.f32 0.0, %v9234
        %v9236 = vpop.f32.mrf.mxu0
        %v9237 = vadd.f32 0.0, %v9236
        %9238 = vmatmul.bf16.gmra.mxu0 %v9081
        %v9239 = vpop.f32.mrf.mxu0
        %v9240 = vadd.f32 0.0, %v9239
        %v9241 = vpop.f32.mrf.mxu0
        %v9242 = vadd.f32 0.0, %v9241
        %9243 = vmatmul.bf16.gmra.mxu0 %v9083
        %v9244 = vpop.f32.mrf.mxu0
        %v9245 = vadd.f32 0.0, %v9244
        %v9246 = vpop.f32.mrf.mxu0
        %v9247 = vadd.f32 0.0, %v9246
        %9248 = vmatmul.bf16.gmra.mxu0 %v9085
        %v9249 = vpop.f32.mrf.mxu0
        %v9250 = vadd.f32 0.0, %v9249
        %v9251 = vpop.f32.mrf.mxu0
        %v9252 = vadd.f32 0.0, %v9251
        %9253 = vmatmul.bf16.gmra.mxu0 %v9087
        %v9254 = vpop.f32.mrf.mxu0
        %v9255 = vadd.f32 0.0, %v9254
        %v9256 = vpop.f32.mrf.mxu0
        %v9257 = vadd.f32 0.0, %v9256
        %9258 = vmatmul.bf16.gmra.mxu0 %v9089
        %v9259 = vpop.f32.mrf.mxu0
        %v9260 = vadd.f32 0.0, %v9259
        %v9261 = vpop.f32.mrf.mxu0
        %v9262 = vadd.f32 0.0, %v9261
        %9263 = vmatmul.bf16.gmra.mxu0 %v9091
        %v9264 = vpop.f32.mrf.mxu0
        %v9265 = vadd.f32 0.0, %v9264
        %v9266 = vpop.f32.mrf.mxu0
        %v9267 = vadd.f32 0.0, %v9266
        %9268 = vmatmul.bf16.gmra.mxu0 %v9093
        %v9269 = vpop.f32.mrf.mxu0
        %v9270 = vadd.f32 0.0, %v9269
        %v9271 = vpop.f32.mrf.mxu0
        %v9272 = vadd.f32 0.0, %v9271
        %9273 = vmatmul.bf16.gmra.mxu0 %v9095
        %v9274 = vpop.f32.mrf.mxu0
        %v9275 = vadd.f32 0.0, %v9274
        %v9276 = vpop.f32.mrf.mxu0
        %v9277 = vadd.f32 0.0, %v9276
        %9278 = vmatmul.bf16.gmra.mxu0 %v9097
        %v9279 = vpop.f32.mrf.mxu0
        %v9280 = vadd.f32 0.0, %v9279
        %v9281 = vpop.f32.mrf.mxu0
        %v9282 = vadd.f32 0.0, %v9281
        %9283 = vmatmul.bf16.gmra.mxu0 %v9099
        %v9284 = vpop.f32.mrf.mxu0
        %v9285 = vadd.f32 0.0, %v9284
        %v9286 = vpop.f32.mrf.mxu0
        %v9287 = vadd.f32 0.0, %v9286
        %9288 = vmatmul.bf16.gmra.mxu0 %v9101
        %v9289 = vpop.f32.mrf.mxu0
        %v9290 = vadd.f32 0.0, %v9289
        %v9291 = vpop.f32.mrf.mxu0
        %v9292 = vadd.f32 0.0, %v9291
        %9293 = vmatmul.bf16.gmra.mxu0 %v9103
        %v9294 = vpop.f32.mrf.mxu0
        %v9295 = vadd.f32 0.0, %v9294
        %v9296 = vpop.f32.mrf.mxu0
        %v9297 = vadd.f32 0.0, %v9296
        %9298 = vmatmul.bf16.gmra.mxu0 %v9105
        %v9299 = vpop.f32.mrf.mxu0
        %v9300 = vadd.f32 0.0, %v9299
        %v9301 = vpop.f32.mrf.mxu0
        %v9302 = vadd.f32 0.0, %v9301
        %9303 = vmatmul.bf16.gmra.mxu0 %v9107
        %v9304 = vpop.f32.mrf.mxu0
        %v9305 = vadd.f32 0.0, %v9304
        %v9306 = vpop.f32.mrf.mxu0
        %v9307 = vadd.f32 0.0, %v9306
        %9308 = vmatmul.bf16.gmra.mxu0 %v9109
        %v9309 = vpop.f32.mrf.mxu0
        %v9310 = vadd.f32 0.0, %v9309
        %v9311 = vpop.f32.mrf.mxu0
        %v9312 = vadd.f32 0.0, %v9311
        %9313 = vmatmul.bf16.gmra.mxu0 %v9111
        %v9314 = vpop.f32.mrf.mxu0
        %v9315 = vadd.f32 0.0, %v9314
        %v9316 = vpop.f32.mrf.mxu0
        %v9317 = vadd.f32 0.0, %v9316
        %9318 = vmatmul.bf16.gmra.mxu0 %v9113
        %v9319 = vpop.f32.mrf.mxu0
        %v9320 = vadd.f32 0.0, %v9319
        %v9321 = vpop.f32.mrf.mxu0
        %v9322 = vadd.f32 0.0, %v9321
        %9323 = vmatmul.bf16.gmra.mxu0 %v9115
        %v9324 = vpop.f32.mrf.mxu0
        %v9325 = vadd.f32 0.0, %v9324
        %v9326 = vpop.f32.mrf.mxu0
        %v9327 = vadd.f32 0.0, %v9326
        %9328 = vmatmul.bf16.gmra.mxu0 %v9117
        %v9329 = vpop.f32.mrf.mxu0
        %v9330 = vadd.f32 0.0, %v9329
        %v9331 = vpop.f32.mrf.mxu0
        %v9332 = vadd.f32 0.0, %v9331
        %9333 = vmatmul.bf16.gmra.mxu0 %v9120
        %v9334 = vpop.f32.mrf.mxu0
        %v9335 = vadd.f32 0.0, %v9334
        %v9336 = vpop.f32.mrf.mxu0
        %v9337 = vadd.f32 0.0, %v9336
        %9338 = vmatmul.bf16.gmra.mxu0 %v9123
        %v9339 = vpop.f32.mrf.mxu0
        %v9340 = vadd.f32 0.0, %v9339
        %v9341 = vpop.f32.mrf.mxu0
        %v9342 = vadd.f32 0.0, %v9341
        %9343 = vdwg.mxu0
        %v9344 = vadd.f32 %v8936, %v9135
        %v9345 = vadd.f32 %v8937, %v9137
        %v9346 = vadd.f32 %v8938, %v9140
        %v9347 = vadd.f32 %v8939, %v9142
        %v9348 = vadd.f32 %v8940, %v9145
        %v9349 = vadd.f32 %v8941, %v9147
        %v9350 = vadd.f32 %v8942, %v9150
        %v9351 = vadd.f32 %v8943, %v9152
        %v9352 = vadd.f32 %v8944, %v9155
        %v9353 = vadd.f32 %v8945, %v9157
        %v9354 = vadd.f32 %v8946, %v9160
        %v9355 = vadd.f32 %v8947, %v9162
        %v9356 = vadd.f32 %v8948, %v9165
        %v9357 = vadd.f32 %v8949, %v9167
        %v9358 = vadd.f32 %v8950, %v9170
        %v9359 = vadd.f32 %v8951, %v9172
        %v9360 = vadd.f32 %v8952, %v9175
        %v9361 = vadd.f32 %v8953, %v9177
        %v9362 = vadd.f32 %v8954, %v9180
        %v9363 = vadd.f32 %v8955, %v9182
        %v9364 = vadd.f32 %v8956, %v9185
        %v9365 = vadd.f32 %v8957, %v9187
        %v9366 = vadd.f32 %v8958, %v9190
        %v9367 = vadd.f32 %v8959, %v9192
        %v9368 = vadd.f32 %v8960, %v9195
        %v9369 = vadd.f32 %v8961, %v9197
        %v9370 = vadd.f32 %v8962, %v9200
        %v9371 = vadd.f32 %v8963, %v9202
        %v9372 = vadd.f32 %v8964, %v9205
        %v9373 = vadd.f32 %v8965, %v9207
        %v9374 = vadd.f32 %v8966, %v9210
        %v9375 = vadd.f32 %v8967, %v9212
        %v9376 = vadd.f32 %v8968, %v9215
        %v9377 = vadd.f32 %v8969, %v9217
        %v9378 = vadd.f32 %v8970, %v9220
        %v9379 = vadd.f32 %v8971, %v9222
        %v9380 = vadd.f32 %v8972, %v9225
        %v9381 = vadd.f32 %v8973, %v9227
        %v9382 = vadd.f32 %v8974, %v9230
        %v9383 = vadd.f32 %v8975, %v9232
        %v9384 = vadd.f32 %v8976, %v9235
        %v9385 = vadd.f32 %v8977, %v9237
        %v9386 = vadd.f32 %v8978, %v9240
        %v9387 = vadd.f32 %v8979, %v9242
        %v9388 = vadd.f32 %v8980, %v9245
        %v9389 = vadd.f32 %v8981, %v9247
        %v9390 = vadd.f32 %v8982, %v9250
        %v9391 = vadd.f32 %v8983, %v9252
        %v9392 = vadd.f32 %v8984, %v9255
        %v9393 = vadd.f32 %v8985, %v9257
        %v9394 = vadd.f32 %v8986, %v9260
        %v9395 = vadd.f32 %v8987, %v9262
        %v9396 = vadd.f32 %v8988, %v9265
        %v9397 = vadd.f32 %v8989, %v9267
        %v9398 = vadd.f32 %v8990, %v9270
        %v9399 = vadd.f32 %v8991, %v9272
        %v9400 = vadd.f32 %v8992, %v9275
        %v9401 = vadd.f32 %v8993, %v9277
        %v9402 = vadd.f32 %v8994, %v9280
        %v9403 = vadd.f32 %v8995, %v9282
        %v9404 = vadd.f32 %v8996, %v9285
        %v9405 = vadd.f32 %v8997, %v9287
        %v9406 = vadd.f32 %v8998, %v9290
        %v9407 = vadd.f32 %v8999, %v9292
        %v9408 = vadd.f32 %v9000, %v9295
        %v9409 = vadd.f32 %v9001, %v9297
        %v9410 = vadd.f32 %v9002, %v9300
        %v9411 = vadd.f32 %v9003, %v9302
        %v9412 = vadd.f32 %v9004, %v9305
        %v9413 = vadd.f32 %v9005, %v9307
        %v9414 = vadd.f32 %v9006, %v9310
        %v9415 = vadd.f32 %v9007, %v9312
        %v9416 = vadd.f32 %v9008, %v9315
        %v9417 = vadd.f32 %v9009, %v9317
        %v9418 = vadd.f32 %v9010, %v9320
        %v9419 = vadd.f32 %v9011, %v9322
        %v9420 = vadd.f32 %v9012, %v9325
        %v9421 = vadd.f32 %v9013, %v9327
        %v9422 = vadd.f32 %v9014, %v9330
        %v9423 = vadd.f32 %v9015, %v9332
        %v9424 = vadd.f32 %v9016, %v9335
        %v9425 = vadd.f32 %v9017, %v9337
        %v9426 = vadd.f32 %v9018, %v9340
        %v9427 = vadd.f32 %v9019, %v9342
        %v9428 = vpack.c.bf16 %v5395, %v5395
        %s9429 = scalar_lea.vmem [#allocation6], 112
        %v9430 = vld [vmem:[%s9429] sm:$0xf]
        %v9431 = vld [vmem:[%s9429 + $0x4] sm:$0xf]
        %v9432 = vld [vmem:[%s9429 + $0x8] sm:$0xf]
        %v9433 = vld [vmem:[%s9429 + $0xc] sm:$0xf]
        %v9434 = vrot.slane %v7682, 1
        %v9435 = vor.u32 %v7679, %v9434
        %v9436 = vrot.slane %v7691, 1
        %v9437 = vsel %vm5448, %v9435, %v9436
        %v9438 = vor.u32 %v7688, %v9436
        %v9439 = vrot.slane %v7700, 1
        %v9440 = vsel %vm5448, %v9438, %v9439
        %v9441 = vor.u32 %v7697, %v9439
        %v9442 = vrot.slane %v7709, 1
        %v9443 = vsel %vm5448, %v9441, %v9442
        %v9444 = vor.u32 %v7706, %v9442
        %v9445 = vrot.slane %v7718, 1
        %v9446 = vsel %vm5448, %v9444, %v9445
        %v9447 = vor.u32 %v7715, %v9445
        %v9448 = vrot.slane %v7727, 1
        %v9449 = vsel %vm5448, %v9447, %v9448
        %v9450 = vor.u32 %v7724, %v9448
        %v9451 = vrot.slane %v7736, 1
        %v9452 = vsel %vm5448, %v9450, %v9451
        %v9453 = vor.u32 %v7733, %v9451
        %v9454 = vrot.slane %v7745, 1
        %v9455 = vsel %vm5448, %v9453, %v9454
        %v9456 = vor.u32 %v7742, %v9454
        %v9457 = vrot.slane %v7754, 1
        %v9458 = vsel %vm5448, %v9456, %v9457
        %v9459 = vor.u32 %v7751, %v9457
        %v9460 = vrot.slane %v7763, 1
        %v9461 = vsel %vm5448, %v9459, %v9460
        %v9462 = vor.u32 %v7760, %v9460
        %v9463 = vrot.slane %v7772, 1
        %v9464 = vsel %vm5448, %v9462, %v9463
        %v9465 = vor.u32 %v7769, %v9463
        %v9466 = vrot.slane %v7781, 1
        %v9467 = vsel %vm5448, %v9465, %v9466
        %v9468 = vor.u32 %v7778, %v9466
        %v9469 = vrot.slane %v7790, 1
        %v9470 = vsel %vm5448, %v9468, %v9469
        %v9471 = vor.u32 %v7787, %v9469
        %v9472 = vrot.slane %v7799, 1
        %v9473 = vsel %vm5448, %v9471, %v9472
        %v9474 = vor.u32 %v7796, %v9472
        %v9475 = vrot.slane %v7808, 1
        %v9476 = vsel %vm5448, %v9474, %v9475
        %v9477 = vor.u32 %v7805, %v9475
        %v9478 = vrot.slane %v7817, 1
        %v9479 = vsel %vm5448, %v9477, %v9478
        %v9480 = vor.u32 %v7814, %v9478
        %v9481 = vrot.slane %v7826, 1
        %v9482 = vsel %vm5448, %v9480, %v9481
        %v9483 = vor.u32 %v7823, %v9481
        %v9484 = vrot.slane %v7835, 1
        %v9485 = vsel %vm5448, %v9483, %v9484
        %v9486 = vor.u32 %v7832, %v9484
        %v9487 = vrot.slane %v7844, 1
        %v9488 = vsel %vm5448, %v9486, %v9487
        %v9489 = vor.u32 %v7841, %v9487
        %v9490 = vrot.slane %v7853, 1
        %v9491 = vsel %vm5448, %v9489, %v9490
        %v9492 = vor.u32 %v7850, %v9490
        %v9493 = vrot.slane %v7862, 1
        %v9494 = vsel %vm5448, %v9492, %v9493
        %v9495 = vor.u32 %v7859, %v9493
        %v9496 = vrot.slane %v7871, 1
        %v9497 = vsel %vm5448, %v9495, %v9496
        %v9498 = vor.u32 %v7868, %v9496
        %v9499 = vrot.slane %v7880, 1
        %v9500 = vsel %vm5448, %v9498, %v9499
        %v9501 = vor.u32 %v7877, %v9499
        %v9502 = vrot.slane %v7889, 1
        %v9503 = vsel %vm5448, %v9501, %v9502
        %v9504 = vor.u32 %v7886, %v9502
        %v9505 = vrot.slane %v7898, 1
        %v9506 = vsel %vm5448, %v9504, %v9505
        %v9507 = vor.u32 %v7895, %v9505
        %v9508 = vrot.slane %v7907, 1
        %v9509 = vsel %vm5448, %v9507, %v9508
        %v9510 = vor.u32 %v7904, %v9508
        %v9511 = vrot.slane %v7916, 1
        %v9512 = vsel %vm5448, %v9510, %v9511
        %v9513 = vor.u32 %v7913, %v9511
        %v9514 = vrot.slane %v7925, 1
        %v9515 = vsel %vm5448, %v9513, %v9514
        %v9516 = vor.u32 %v7922, %v9514
        %v9517 = vrot.slane %v7934, 1
        %v9518 = vsel %vm5448, %v9516, %v9517
        %v9519 = vor.u32 %v7931, %v9517
        %v9520 = vrot.slane %v7943, 1
        %v9521 = vsel %vm5448, %v9519, %v9520
        %v9522 = vor.u32 %v7940, %v9520
        %v9523 = vrot.slane %v7952, 1
        %v9524 = vsel %vm5448, %v9522, %v9523
        %v9525 = vor.u32 %v7949, %v9523
        %v9526 = vrot.slane %v7961, 1
        %v9527 = vsel %vm5448, %v9525, %v9526
        %v9528 = vor.u32 %v7958, %v9526
        %v9529 = vrot.slane %v7970, 1
        %v9530 = vsel %vm5448, %v9528, %v9529
        %v9531 = vor.u32 %v7967, %v9529
        %v9532 = vrot.slane %v7979, 1
        %v9533 = vsel %vm5448, %v9531, %v9532
        %v9534 = vor.u32 %v7976, %v9532
        %v9535 = vrot.slane %v7988, 1
        %v9536 = vsel %vm5448, %v9534, %v9535
        %v9537 = vor.u32 %v7985, %v9535
        %v9538 = vrot.slane %v7997, 1
        %v9539 = vsel %vm5448, %v9537, %v9538
        %v9540 = vor.u32 %v7994, %v9538
        %v9541 = vrot.slane %v8006, 1
        %v9542 = vsel %vm5448, %v9540, %v9541
        %v9543 = vor.u32 %v8003, %v9541
        %v9544 = vrot.slane %v8015, 1
        %v9545 = vsel %vm5448, %v9543, %v9544
        %v9546 = vor.u32 %v8012, %v9544
        %v9547 = vrot.slane %v8024, 1
        %v9548 = vsel %vm5448, %v9546, %v9547
        %v9549 = vor.u32 %v8021, %v9547
        %v9550 = vrot.slane %v8033, 1
        %v9551 = vsel %vm5448, %v9549, %v9550
        %v9552 = vor.u32 %v8030, %v9550
        %v9553 = vshll.u32 %v9020, 16
        %v9555 = vrot.slane %v9553, 1
        %v9556 = vsel %vm5448, %v9552, %v9555
        %v9557 = vshrl.u32 %v9020, 16
        %v9559 = vor.u32 %v9557, %v9555
        %v9560 = vshll.u32 %v9021, 16
        %v9562 = vrot.slane %v9560, 1
        %v9563 = vsel %vm5448, %v9559, %v9562
        %v9564 = vshrl.u32 %v9021, 16
        %v9566 = vor.u32 %v9564, %v9562
        %v9568 = vshll.u32 %v9428, 16
        %v9570 = vrot.slane %v9568, 1
        %v9571 = vsel %vm5448, %v9566, %v9570
        %v9576 = vunpack.c.l.b16 %v9430
        %v9577 = vunpack.c.l.b16 %v9431
        %v9578 = vunpack.c.l.b16 %v9432
        %v9579 = vunpack.c.l.b16 %v9433
        %v9580 = vpack.c.b16 %v9577, %v9576
        %v9581 = vpack.c.b16 %v9579, %v9578
        %v9585 = vsel %vm5801, %v9437, 0
        %v9588 = vsel %vm5801, %v9440, 0
        %v9591 = vsel %vm5801, %v9443, 0
        %v9594 = vsel %vm5801, %v9446, 0
        %v9597 = vsel %vm5801, %v9449, 0
        %v9600 = vsel %vm5801, %v9452, 0
        %v9603 = vsel %vm5801, %v9455, 0
        %v9606 = vsel %vm5801, %v9458, 0
        %v9609 = vsel %vm5801, %v9461, 0
        %v9612 = vsel %vm5801, %v9464, 0
        %v9615 = vsel %vm5801, %v9467, 0
        %v9618 = vsel %vm5801, %v9470, 0
        %v9621 = vsel %vm5801, %v9473, 0
        %v9624 = vsel %vm5801, %v9476, 0
        %v9627 = vsel %vm5801, %v9479, 0
        %v9630 = vsel %vm5801, %v9482, 0
        %v9633 = vsel %vm5801, %v9485, 0
        %v9636 = vsel %vm5801, %v9488, 0
        %v9639 = vsel %vm5801, %v9491, 0
        %v9642 = vsel %vm5801, %v9494, 0
        %v9645 = vsel %vm5801, %v9497, 0
        %v9648 = vsel %vm5801, %v9500, 0
        %v9651 = vsel %vm5801, %v9503, 0
        %v9654 = vsel %vm5801, %v9506, 0
        %v9657 = vsel %vm5801, %v9509, 0
        %v9660 = vsel %vm5801, %v9512, 0
        %v9663 = vsel %vm5801, %v9515, 0
        %v9666 = vsel %vm5801, %v9518, 0
        %v9669 = vsel %vm5801, %v9521, 0
        %v9672 = vsel %vm5801, %v9524, 0
        %v9675 = vsel %vm5801, %v9527, 0
        %v9678 = vsel %vm5801, %v9530, 0
        %v9681 = vsel %vm5801, %v9533, 0
        %v9684 = vsel %vm5801, %v9536, 0
        %v9687 = vsel %vm5801, %v9539, 0
        %v9690 = vsel %vm5801, %v9542, 0
        %v9693 = vsel %vm5801, %v9545, 0
        %v9696 = vsel %vm5801, %v9548, 0
        %v9699 = vsel %vm5801, %v9551, 0
        %v9702 = vsel %vm5801, %v9556, 0
        %v9705 = vsel %vm5801, %v9563, 0
        %v9708 = vsel %vm5801, %v9571, 0
        %9710 = vmatpush.bf16.msra.mxu0 0
        %9711 = vmatpush.bf16.msra.mxu0 0
        %9712 = vmatpush.bf16.msra.mxu0 0
        %9713 = vmatpush.bf16.msra.mxu0 0
        %9714 = vmatpush.bf16.msra.mxu0 0
        %9715 = vmatpush.bf16.msra.mxu0 0
        %9716 = vmatpush.bf16.msra.mxu0 %v9581
        %9717 = vmatpush.bf16.msra.mxu0 %v9580
        %9718 = vmatmul.bf16.gmra.mxu0 %v9585
        %v9719 = vpop.f32.mrf.mxu0
        %v9720 = vadd.f32 0.0, %v9719
        %v9721 = vpop.f32.mrf.mxu0
        %v9722 = vadd.f32 0.0, %v9721
        %9723 = vmatmul.bf16.gmra.mxu0 %v9588
        %v9724 = vpop.f32.mrf.mxu0
        %v9725 = vadd.f32 0.0, %v9724
        %v9726 = vpop.f32.mrf.mxu0
        %v9727 = vadd.f32 0.0, %v9726
        %9728 = vmatmul.bf16.gmra.mxu0 %v9591
        %v9729 = vpop.f32.mrf.mxu0
        %v9730 = vadd.f32 0.0, %v9729
        %v9731 = vpop.f32.mrf.mxu0
        %v9732 = vadd.f32 0.0, %v9731
        %9733 = vmatmul.bf16.gmra.mxu0 %v9594
        %v9734 = vpop.f32.mrf.mxu0
        %v9735 = vadd.f32 0.0, %v9734
        %v9736 = vpop.f32.mrf.mxu0
        %v9737 = vadd.f32 0.0, %v9736
        %9738 = vmatmul.bf16.gmra.mxu0 %v9597
        %v9739 = vpop.f32.mrf.mxu0
        %v9740 = vadd.f32 0.0, %v9739
        %v9741 = vpop.f32.mrf.mxu0
        %v9742 = vadd.f32 0.0, %v9741
        %9743 = vmatmul.bf16.gmra.mxu0 %v9600
        %v9744 = vpop.f32.mrf.mxu0
        %v9745 = vadd.f32 0.0, %v9744
        %v9746 = vpop.f32.mrf.mxu0
        %v9747 = vadd.f32 0.0, %v9746
        %9748 = vmatmul.bf16.gmra.mxu0 %v9603
        %v9749 = vpop.f32.mrf.mxu0
        %v9750 = vadd.f32 0.0, %v9749
        %v9751 = vpop.f32.mrf.mxu0
        %v9752 = vadd.f32 0.0, %v9751
        %9753 = vmatmul.bf16.gmra.mxu0 %v9606
        %v9754 = vpop.f32.mrf.mxu0
        %v9755 = vadd.f32 0.0, %v9754
        %v9756 = vpop.f32.mrf.mxu0
        %v9757 = vadd.f32 0.0, %v9756
        %9758 = vmatmul.bf16.gmra.mxu0 %v9609
        %v9759 = vpop.f32.mrf.mxu0
        %v9760 = vadd.f32 0.0, %v9759
        %v9761 = vpop.f32.mrf.mxu0
        %v9762 = vadd.f32 0.0, %v9761
        %9763 = vmatmul.bf16.gmra.mxu0 %v9612
        %v9764 = vpop.f32.mrf.mxu0
        %v9765 = vadd.f32 0.0, %v9764
        %v9766 = vpop.f32.mrf.mxu0
        %v9767 = vadd.f32 0.0, %v9766
        %9768 = vmatmul.bf16.gmra.mxu0 %v9615
        %v9769 = vpop.f32.mrf.mxu0
        %v9770 = vadd.f32 0.0, %v9769
        %v9771 = vpop.f32.mrf.mxu0
        %v9772 = vadd.f32 0.0, %v9771
        %9773 = vmatmul.bf16.gmra.mxu0 %v9618
        %v9774 = vpop.f32.mrf.mxu0
        %v9775 = vadd.f32 0.0, %v9774
        %v9776 = vpop.f32.mrf.mxu0
        %v9777 = vadd.f32 0.0, %v9776
        %9778 = vmatmul.bf16.gmra.mxu0 %v9621
        %v9779 = vpop.f32.mrf.mxu0
        %v9780 = vadd.f32 0.0, %v9779
        %v9781 = vpop.f32.mrf.mxu0
        %v9782 = vadd.f32 0.0, %v9781
        %9783 = vmatmul.bf16.gmra.mxu0 %v9624
        %v9784 = vpop.f32.mrf.mxu0
        %v9785 = vadd.f32 0.0, %v9784
        %v9786 = vpop.f32.mrf.mxu0
        %v9787 = vadd.f32 0.0, %v9786
        %9788 = vmatmul.bf16.gmra.mxu0 %v9627
        %v9789 = vpop.f32.mrf.mxu0
        %v9790 = vadd.f32 0.0, %v9789
        %v9791 = vpop.f32.mrf.mxu0
        %v9792 = vadd.f32 0.0, %v9791
        %9793 = vmatmul.bf16.gmra.mxu0 %v9630
        %v9794 = vpop.f32.mrf.mxu0
        %v9795 = vadd.f32 0.0, %v9794
        %v9796 = vpop.f32.mrf.mxu0
        %v9797 = vadd.f32 0.0, %v9796
        %9798 = vmatmul.bf16.gmra.mxu0 %v9633
        %v9799 = vpop.f32.mrf.mxu0
        %v9800 = vadd.f32 0.0, %v9799
        %v9801 = vpop.f32.mrf.mxu0
        %v9802 = vadd.f32 0.0, %v9801
        %9803 = vmatmul.bf16.gmra.mxu0 %v9636
        %v9804 = vpop.f32.mrf.mxu0
        %v9805 = vadd.f32 0.0, %v9804
        %v9806 = vpop.f32.mrf.mxu0
        %v9807 = vadd.f32 0.0, %v9806
        %9808 = vmatmul.bf16.gmra.mxu0 %v9639
        %v9809 = vpop.f32.mrf.mxu0
        %v9810 = vadd.f32 0.0, %v9809
        %v9811 = vpop.f32.mrf.mxu0
        %v9812 = vadd.f32 0.0, %v9811
        %9813 = vmatmul.bf16.gmra.mxu0 %v9642
        %v9814 = vpop.f32.mrf.mxu0
        %v9815 = vadd.f32 0.0, %v9814
        %v9816 = vpop.f32.mrf.mxu0
        %v9817 = vadd.f32 0.0, %v9816
        %9818 = vmatmul.bf16.gmra.mxu0 %v9645
        %v9819 = vpop.f32.mrf.mxu0
        %v9820 = vadd.f32 0.0, %v9819
        %v9821 = vpop.f32.mrf.mxu0
        %v9822 = vadd.f32 0.0, %v9821
        %9823 = vmatmul.bf16.gmra.mxu0 %v9648
        %v9824 = vpop.f32.mrf.mxu0
        %v9825 = vadd.f32 0.0, %v9824
        %v9826 = vpop.f32.mrf.mxu0
        %v9827 = vadd.f32 0.0, %v9826
        %9828 = vmatmul.bf16.gmra.mxu0 %v9651
        %v9829 = vpop.f32.mrf.mxu0
        %v9830 = vadd.f32 0.0, %v9829
        %v9831 = vpop.f32.mrf.mxu0
        %v9832 = vadd.f32 0.0, %v9831
        %9833 = vmatmul.bf16.gmra.mxu0 %v9654
        %v9834 = vpop.f32.mrf.mxu0
        %v9835 = vadd.f32 0.0, %v9834
        %v9836 = vpop.f32.mrf.mxu0
        %v9837 = vadd.f32 0.0, %v9836
        %9838 = vmatmul.bf16.gmra.mxu0 %v9657
        %v9839 = vpop.f32.mrf.mxu0
        %v9840 = vadd.f32 0.0, %v9839
        %v9841 = vpop.f32.mrf.mxu0
        %v9842 = vadd.f32 0.0, %v9841
        %9843 = vmatmul.bf16.gmra.mxu0 %v9660
        %v9844 = vpop.f32.mrf.mxu0
        %v9845 = vadd.f32 0.0, %v9844
        %v9846 = vpop.f32.mrf.mxu0
        %v9847 = vadd.f32 0.0, %v9846
        %9848 = vmatmul.bf16.gmra.mxu0 %v9663
        %v9849 = vpop.f32.mrf.mxu0
        %v9850 = vadd.f32 0.0, %v9849
        %v9851 = vpop.f32.mrf.mxu0
        %v9852 = vadd.f32 0.0, %v9851
        %9853 = vmatmul.bf16.gmra.mxu0 %v9666
        %v9854 = vpop.f32.mrf.mxu0
        %v9855 = vadd.f32 0.0, %v9854
        %v9856 = vpop.f32.mrf.mxu0
        %v9857 = vadd.f32 0.0, %v9856
        %9858 = vmatmul.bf16.gmra.mxu0 %v9669
        %v9859 = vpop.f32.mrf.mxu0
        %v9860 = vadd.f32 0.0, %v9859
        %v9861 = vpop.f32.mrf.mxu0
        %v9862 = vadd.f32 0.0, %v9861
        %9863 = vmatmul.bf16.gmra.mxu0 %v9672
        %v9864 = vpop.f32.mrf.mxu0
        %v9865 = vadd.f32 0.0, %v9864
        %v9866 = vpop.f32.mrf.mxu0
        %v9867 = vadd.f32 0.0, %v9866
        %9868 = vmatmul.bf16.gmra.mxu0 %v9675
        %v9869 = vpop.f32.mrf.mxu0
        %v9870 = vadd.f32 0.0, %v9869
        %v9871 = vpop.f32.mrf.mxu0
        %v9872 = vadd.f32 0.0, %v9871
        %9873 = vmatmul.bf16.gmra.mxu0 %v9678
        %v9874 = vpop.f32.mrf.mxu0
        %v9875 = vadd.f32 0.0, %v9874
        %v9876 = vpop.f32.mrf.mxu0
        %v9877 = vadd.f32 0.0, %v9876
        %9878 = vmatmul.bf16.gmra.mxu0 %v9681
        %v9879 = vpop.f32.mrf.mxu0
        %v9880 = vadd.f32 0.0, %v9879
        %v9881 = vpop.f32.mrf.mxu0
        %v9882 = vadd.f32 0.0, %v9881
        %9883 = vmatmul.bf16.gmra.mxu0 %v9684
        %v9884 = vpop.f32.mrf.mxu0
        %v9885 = vadd.f32 0.0, %v9884
        %v9886 = vpop.f32.mrf.mxu0
        %v9887 = vadd.f32 0.0, %v9886
        %9888 = vmatmul.bf16.gmra.mxu0 %v9687
        %v9889 = vpop.f32.mrf.mxu0
        %v9890 = vadd.f32 0.0, %v9889
        %v9891 = vpop.f32.mrf.mxu0
        %v9892 = vadd.f32 0.0, %v9891
        %9893 = vmatmul.bf16.gmra.mxu0 %v9690
        %v9894 = vpop.f32.mrf.mxu0
        %v9895 = vadd.f32 0.0, %v9894
        %v9896 = vpop.f32.mrf.mxu0
        %v9897 = vadd.f32 0.0, %v9896
        %9898 = vmatmul.bf16.gmra.mxu0 %v9693
        %v9899 = vpop.f32.mrf.mxu0
        %v9900 = vadd.f32 0.0, %v9899
        %v9901 = vpop.f32.mrf.mxu0
        %v9902 = vadd.f32 0.0, %v9901
        %9903 = vmatmul.bf16.gmra.mxu0 %v9696
        %v9904 = vpop.f32.mrf.mxu0
        %v9905 = vadd.f32 0.0, %v9904
        %v9906 = vpop.f32.mrf.mxu0
        %v9907 = vadd.f32 0.0, %v9906
        %9908 = vmatmul.bf16.gmra.mxu0 %v9699
        %v9909 = vpop.f32.mrf.mxu0
        %v9910 = vadd.f32 0.0, %v9909
        %v9911 = vpop.f32.mrf.mxu0
        %v9912 = vadd.f32 0.0, %v9911
        %9913 = vmatmul.bf16.gmra.mxu0 %v9702
        %v9914 = vpop.f32.mrf.mxu0
        %v9915 = vadd.f32 0.0, %v9914
        %v9916 = vpop.f32.mrf.mxu0
        %v9917 = vadd.f32 0.0, %v9916
        %9918 = vmatmul.bf16.gmra.mxu0 %v9705
        %v9919 = vpop.f32.mrf.mxu0
        %v9920 = vadd.f32 0.0, %v9919
        %v9921 = vpop.f32.mrf.mxu0
        %v9922 = vadd.f32 0.0, %v9921
        %9923 = vmatmul.bf16.gmra.mxu0 %v9708
        %v9924 = vpop.f32.mrf.mxu0
        %v9925 = vadd.f32 0.0, %v9924
        %v9926 = vpop.f32.mrf.mxu0
        %v9927 = vadd.f32 0.0, %v9926
        %9928 = vdwg.mxu0
        %v9929 = vadd.f32 %v9344, %v9720
        %v9930 = vadd.f32 %v9345, %v9722
        %v9931 = vadd.f32 %v9346, %v9725
        %v9932 = vadd.f32 %v9347, %v9727
        %v9933 = vadd.f32 %v9348, %v9730
        %v9934 = vadd.f32 %v9349, %v9732
        %v9935 = vadd.f32 %v9350, %v9735
        %v9936 = vadd.f32 %v9351, %v9737
        %v9937 = vadd.f32 %v9352, %v9740
        %v9938 = vadd.f32 %v9353, %v9742
        %v9939 = vadd.f32 %v9354, %v9745
        %v9940 = vadd.f32 %v9355, %v9747
        %v9941 = vadd.f32 %v9356, %v9750
        %v9942 = vadd.f32 %v9357, %v9752
        %v9943 = vadd.f32 %v9358, %v9755
        %v9944 = vadd.f32 %v9359, %v9757
        %v9945 = vadd.f32 %v9360, %v9760
        %v9946 = vadd.f32 %v9361, %v9762
        %v9947 = vadd.f32 %v9362, %v9765
        %v9948 = vadd.f32 %v9363, %v9767
        %v9949 = vadd.f32 %v9364, %v9770
        %v9950 = vadd.f32 %v9365, %v9772
        %v9951 = vadd.f32 %v9366, %v9775
        %v9952 = vadd.f32 %v9367, %v9777
        %v9953 = vadd.f32 %v9368, %v9780
        %v9954 = vadd.f32 %v9369, %v9782
        %v9955 = vadd.f32 %v9370, %v9785
        %v9956 = vadd.f32 %v9371, %v9787
        %v9957 = vadd.f32 %v9372, %v9790
        %v9958 = vadd.f32 %v9373, %v9792
        %v9959 = vadd.f32 %v9374, %v9795
        %v9960 = vadd.f32 %v9375, %v9797
        %v9961 = vadd.f32 %v9376, %v9800
        %v9962 = vadd.f32 %v9377, %v9802
        %v9963 = vadd.f32 %v9378, %v9805
        %v9964 = vadd.f32 %v9379, %v9807
        %v9965 = vadd.f32 %v9380, %v9810
        %v9966 = vadd.f32 %v9381, %v9812
        %v9967 = vadd.f32 %v9382, %v9815
        %v9968 = vadd.f32 %v9383, %v9817
        %v9969 = vadd.f32 %v9384, %v9820
        %v9970 = vadd.f32 %v9385, %v9822
        %v9971 = vadd.f32 %v9386, %v9825
        %v9972 = vadd.f32 %v9387, %v9827
        %v9973 = vadd.f32 %v9388, %v9830
        %v9974 = vadd.f32 %v9389, %v9832
        %v9975 = vadd.f32 %v9390, %v9835
        %v9976 = vadd.f32 %v9391, %v9837
        %v9977 = vadd.f32 %v9392, %v9840
        %v9978 = vadd.f32 %v9393, %v9842
        %v9979 = vadd.f32 %v9394, %v9845
        %v9980 = vadd.f32 %v9395, %v9847
        %v9981 = vadd.f32 %v9396, %v9850
        %v9982 = vadd.f32 %v9397, %v9852
        %v9983 = vadd.f32 %v9398, %v9855
        %v9984 = vadd.f32 %v9399, %v9857
        %v9985 = vadd.f32 %v9400, %v9860
        %v9986 = vadd.f32 %v9401, %v9862
        %v9987 = vadd.f32 %v9402, %v9865
        %v9988 = vadd.f32 %v9403, %v9867
        %v9989 = vadd.f32 %v9404, %v9870
        %v9990 = vadd.f32 %v9405, %v9872
        %v9991 = vadd.f32 %v9406, %v9875
        %v9992 = vadd.f32 %v9407, %v9877
        %v9993 = vadd.f32 %v9408, %v9880
        %v9994 = vadd.f32 %v9409, %v9882
        %v9995 = vadd.f32 %v9410, %v9885
        %v9996 = vadd.f32 %v9411, %v9887
        %v9997 = vadd.f32 %v9412, %v9890
        %v9998 = vadd.f32 %v9413, %v9892
        %v9999 = vadd.f32 %v9414, %v9895
        %v10000 = vadd.f32 %v9415, %v9897
        %v10001 = vadd.f32 %v9416, %v9900
        %v10002 = vadd.f32 %v9417, %v9902
        %v10003 = vadd.f32 %v9418, %v9905
        %v10004 = vadd.f32 %v9419, %v9907
        %v10005 = vadd.f32 %v9420, %v9910
        %v10006 = vadd.f32 %v9421, %v9912
        %v10007 = vadd.f32 %v9422, %v9915
        %v10008 = vadd.f32 %v9423, %v9917
        %v10009 = vadd.f32 %v9424, %v9920
        %v10010 = vadd.f32 %v9425, %v9922
        %v10011 = vadd.f32 %v9426, %v9925
        %v10012 = vadd.f32 %v9427, %v9927
        %s10013 = scalar_lea.vmem [#allocation6], 128
        %v10014 = vld [vmem:[%s10013] sm:$0xf]
        %v10015 = vld [vmem:[%s10013 + $0x4] sm:$0xf]
        %v10016 = vld [vmem:[%s10013 + $0x8] sm:$0xf]
        %v10017 = vld [vmem:[%s10013 + $0xc] sm:$0xf]
        %v10021 = vrot.slane %v7039, 1
        %v10022 = vrot.slane %v7040, 1
        %v10023 = vsel %vm6510, %v10021, %v10022
        %v10024 = vrot.slane %v7041, 1
        %v10025 = vsel %vm6510, %v10022, %v10024
        %v10026 = vrot.slane %v7042, 1
        %v10027 = vsel %vm6510, %v10024, %v10026
        %v10028 = vrot.slane %v7043, 1
        %v10029 = vsel %vm6510, %v10026, %v10028
        %v10030 = vrot.slane %v7044, 1
        %v10031 = vsel %vm6510, %v10028, %v10030
        %v10032 = vrot.slane %v7045, 1
        %v10033 = vsel %vm6510, %v10030, %v10032
        %v10034 = vrot.slane %v7046, 1
        %v10035 = vsel %vm6510, %v10032, %v10034
        %v10036 = vrot.slane %v7047, 1
        %v10037 = vsel %vm6510, %v10034, %v10036
        %v10038 = vrot.slane %v7048, 1
        %v10039 = vsel %vm6510, %v10036, %v10038
        %v10040 = vrot.slane %v7049, 1
        %v10041 = vsel %vm6510, %v10038, %v10040
        %v10042 = vrot.slane %v7050, 1
        %v10043 = vsel %vm6510, %v10040, %v10042
        %v10044 = vrot.slane %v7051, 1
        %v10045 = vsel %vm6510, %v10042, %v10044
        %v10046 = vrot.slane %v7052, 1
        %v10047 = vsel %vm6510, %v10044, %v10046
        %v10048 = vrot.slane %v7053, 1
        %v10049 = vsel %vm6510, %v10046, %v10048
        %v10050 = vrot.slane %v7054, 1
        %v10051 = vsel %vm6510, %v10048, %v10050
        %v10052 = vrot.slane %v7055, 1
        %v10053 = vsel %vm6510, %v10050, %v10052
        %v10054 = vrot.slane %v7056, 1
        %v10055 = vsel %vm6510, %v10052, %v10054
        %v10056 = vrot.slane %v7057, 1
        %v10057 = vsel %vm6510, %v10054, %v10056
        %v10058 = vrot.slane %v7058, 1
        %v10059 = vsel %vm6510, %v10056, %v10058
        %v10060 = vrot.slane %v7059, 1
        %v10061 = vsel %vm6510, %v10058, %v10060
        %v10062 = vrot.slane %v7060, 1
        %v10063 = vsel %vm6510, %v10060, %v10062
        %v10064 = vrot.slane %v7061, 1
        %v10065 = vsel %vm6510, %v10062, %v10064
        %v10066 = vrot.slane %v7062, 1
        %v10067 = vsel %vm6510, %v10064, %v10066
        %v10068 = vrot.slane %v7063, 1
        %v10069 = vsel %vm6510, %v10066, %v10068
        %v10070 = vrot.slane %v7064, 1
        %v10071 = vsel %vm6510, %v10068, %v10070
        %v10072 = vrot.slane %v7065, 1
        %v10073 = vsel %vm6510, %v10070, %v10072
        %v10074 = vrot.slane %v7066, 1
        %v10075 = vsel %vm6510, %v10072, %v10074
        %v10076 = vrot.slane %v7067, 1
        %v10077 = vsel %vm6510, %v10074, %v10076
        %v10078 = vrot.slane %v7068, 1
        %v10079 = vsel %vm6510, %v10076, %v10078
        %v10080 = vrot.slane %v7069, 1
        %v10081 = vsel %vm6510, %v10078, %v10080
        %v10082 = vrot.slane %v7070, 1
        %v10083 = vsel %vm6510, %v10080, %v10082
        %v10084 = vrot.slane %v7071, 1
        %v10085 = vsel %vm6510, %v10082, %v10084
        %v10086 = vrot.slane %v7072, 1
        %v10087 = vsel %vm6510, %v10084, %v10086
        %v10088 = vrot.slane %v7073, 1
        %v10089 = vsel %vm6510, %v10086, %v10088
        %v10090 = vrot.slane %v7074, 1
        %v10091 = vsel %vm6510, %v10088, %v10090
        %v10092 = vrot.slane %v7075, 1
        %v10093 = vsel %vm6510, %v10090, %v10092
        %v10094 = vrot.slane %v7076, 1
        %v10095 = vsel %vm6510, %v10092, %v10094
        %v10096 = vrot.slane %v7077, 1
        %v10097 = vsel %vm6510, %v10094, %v10096
        %v10098 = vrot.slane %v7078, 1
        %v10099 = vsel %vm6510, %v10096, %v10098
        %v10100 = vrot.slane %v9020, 1
        %v10101 = vsel %vm6510, %v10098, %v10100
        %v10102 = vrot.slane %v9021, 1
        %v10103 = vsel %vm6510, %v10100, %v10102
        %v10104 = vrot.slane %v9428, 1
        %v10105 = vsel %vm6510, %v10102, %v10104
        %v10110 = vunpack.c.l.b16 %v10014
        %v10111 = vunpack.c.l.b16 %v10015
        %v10112 = vunpack.c.l.b16 %v10016
        %v10113 = vunpack.c.l.b16 %v10017
        %v10114 = vpack.c.b16 %v10111, %v10110
        %v10115 = vpack.c.b16 %v10113, %v10112
        %v10119 = vsel %vm5801, %v10023, 0
        %v10122 = vsel %vm5801, %v10025, 0
        %v10125 = vsel %vm5801, %v10027, 0
        %v10128 = vsel %vm5801, %v10029, 0
        %v10131 = vsel %vm5801, %v10031, 0
        %v10134 = vsel %vm5801, %v10033, 0
        %v10137 = vsel %vm5801, %v10035, 0
        %v10140 = vsel %vm5801, %v10037, 0
        %v10143 = vsel %vm5801, %v10039, 0
        %v10146 = vsel %vm5801, %v10041, 0
        %v10149 = vsel %vm5801, %v10043, 0
        %v10152 = vsel %vm5801, %v10045, 0
        %v10155 = vsel %vm5801, %v10047, 0
        %v10158 = vsel %vm5801, %v10049, 0
        %v10161 = vsel %vm5801, %v10051, 0
        %v10164 = vsel %vm5801, %v10053, 0
        %v10167 = vsel %vm5801, %v10055, 0
        %v10170 = vsel %vm5801, %v10057, 0
        %v10173 = vsel %vm5801, %v10059, 0
        %v10176 = vsel %vm5801, %v10061, 0
        %v10179 = vsel %vm5801, %v10063, 0
        %v10182 = vsel %vm5801, %v10065, 0
        %v10185 = vsel %vm5801, %v10067, 0
        %v10188 = vsel %vm5801, %v10069, 0
        %v10191 = vsel %vm5801, %v10071, 0
        %v10194 = vsel %vm5801, %v10073, 0
        %v10197 = vsel %vm5801, %v10075, 0
        %v10200 = vsel %vm5801, %v10077, 0
        %v10203 = vsel %vm5801, %v10079, 0
        %v10206 = vsel %vm5801, %v10081, 0
        %v10209 = vsel %vm5801, %v10083, 0
        %v10212 = vsel %vm5801, %v10085, 0
        %v10215 = vsel %vm5801, %v10087, 0
        %v10218 = vsel %vm5801, %v10089, 0
        %v10221 = vsel %vm5801, %v10091, 0
        %v10224 = vsel %vm5801, %v10093, 0
        %v10227 = vsel %vm5801, %v10095, 0
        %v10230 = vsel %vm5801, %v10097, 0
        %v10233 = vsel %vm5801, %v10099, 0
        %v10236 = vsel %vm5801, %v10101, 0
        %v10239 = vsel %vm5801, %v10103, 0
        %v10242 = vsel %vm5801, %v10105, 0
        %10244 = vmatpush.bf16.msra.mxu0 0
        %10245 = vmatpush.bf16.msra.mxu0 0
        %10246 = vmatpush.bf16.msra.mxu0 0
        %10247 = vmatpush.bf16.msra.mxu0 0
        %10248 = vmatpush.bf16.msra.mxu0 0
        %10249 = vmatpush.bf16.msra.mxu0 0
        %10250 = vmatpush.bf16.msra.mxu0 %v10115
        %10251 = vmatpush.bf16.msra.mxu0 %v10114
        %10252 = vmatmul.bf16.gmra.mxu0 %v10119
        %v10253 = vpop.f32.mrf.mxu0
        %v10254 = vadd.f32 0.0, %v10253
        %v10255 = vpop.f32.mrf.mxu0
        %v10256 = vadd.f32 0.0, %v10255
        %10257 = vmatmul.bf16.gmra.mxu0 %v10122
        %v10258 = vpop.f32.mrf.mxu0
        %v10259 = vadd.f32 0.0, %v10258
        %v10260 = vpop.f32.mrf.mxu0
        %v10261 = vadd.f32 0.0, %v10260
        %10262 = vmatmul.bf16.gmra.mxu0 %v10125
        %v10263 = vpop.f32.mrf.mxu0
        %v10264 = vadd.f32 0.0, %v10263
        %v10265 = vpop.f32.mrf.mxu0
        %v10266 = vadd.f32 0.0, %v10265
        %10267 = vmatmul.bf16.gmra.mxu0 %v10128
        %v10268 = vpop.f32.mrf.mxu0
        %v10269 = vadd.f32 0.0, %v10268
        %v10270 = vpop.f32.mrf.mxu0
        %v10271 = vadd.f32 0.0, %v10270
        %10272 = vmatmul.bf16.gmra.mxu0 %v10131
        %v10273 = vpop.f32.mrf.mxu0
        %v10274 = vadd.f32 0.0, %v10273
        %v10275 = vpop.f32.mrf.mxu0
        %v10276 = vadd.f32 0.0, %v10275
        %10277 = vmatmul.bf16.gmra.mxu0 %v10134
        %v10278 = vpop.f32.mrf.mxu0
        %v10279 = vadd.f32 0.0, %v10278
        %v10280 = vpop.f32.mrf.mxu0
        %v10281 = vadd.f32 0.0, %v10280
        %10282 = vmatmul.bf16.gmra.mxu0 %v10137
        %v10283 = vpop.f32.mrf.mxu0
        %v10284 = vadd.f32 0.0, %v10283
        %v10285 = vpop.f32.mrf.mxu0
        %v10286 = vadd.f32 0.0, %v10285
        %10287 = vmatmul.bf16.gmra.mxu0 %v10140
        %v10288 = vpop.f32.mrf.mxu0
        %v10289 = vadd.f32 0.0, %v10288
        %v10290 = vpop.f32.mrf.mxu0
        %v10291 = vadd.f32 0.0, %v10290
        %10292 = vmatmul.bf16.gmra.mxu0 %v10143
        %v10293 = vpop.f32.mrf.mxu0
        %v10294 = vadd.f32 0.0, %v10293
        %v10295 = vpop.f32.mrf.mxu0
        %v10296 = vadd.f32 0.0, %v10295
        %10297 = vmatmul.bf16.gmra.mxu0 %v10146
        %v10298 = vpop.f32.mrf.mxu0
        %v10299 = vadd.f32 0.0, %v10298
        %v10300 = vpop.f32.mrf.mxu0
        %v10301 = vadd.f32 0.0, %v10300
        %10302 = vmatmul.bf16.gmra.mxu0 %v10149
        %v10303 = vpop.f32.mrf.mxu0
        %v10304 = vadd.f32 0.0, %v10303
        %v10305 = vpop.f32.mrf.mxu0
        %v10306 = vadd.f32 0.0, %v10305
        %10307 = vmatmul.bf16.gmra.mxu0 %v10152
        %v10308 = vpop.f32.mrf.mxu0
        %v10309 = vadd.f32 0.0, %v10308
        %v10310 = vpop.f32.mrf.mxu0
        %v10311 = vadd.f32 0.0, %v10310
        %10312 = vmatmul.bf16.gmra.mxu0 %v10155
        %v10313 = vpop.f32.mrf.mxu0
        %v10314 = vadd.f32 0.0, %v10313
        %v10315 = vpop.f32.mrf.mxu0
        %v10316 = vadd.f32 0.0, %v10315
        %10317 = vmatmul.bf16.gmra.mxu0 %v10158
        %v10318 = vpop.f32.mrf.mxu0
        %v10319 = vadd.f32 0.0, %v10318
        %v10320 = vpop.f32.mrf.mxu0
        %v10321 = vadd.f32 0.0, %v10320
        %10322 = vmatmul.bf16.gmra.mxu0 %v10161
        %v10323 = vpop.f32.mrf.mxu0
        %v10324 = vadd.f32 0.0, %v10323
        %v10325 = vpop.f32.mrf.mxu0
        %v10326 = vadd.f32 0.0, %v10325
        %10327 = vmatmul.bf16.gmra.mxu0 %v10164
        %v10328 = vpop.f32.mrf.mxu0
        %v10329 = vadd.f32 0.0, %v10328
        %v10330 = vpop.f32.mrf.mxu0
        %v10331 = vadd.f32 0.0, %v10330
        %10332 = vmatmul.bf16.gmra.mxu0 %v10167
        %v10333 = vpop.f32.mrf.mxu0
        %v10334 = vadd.f32 0.0, %v10333
        %v10335 = vpop.f32.mrf.mxu0
        %v10336 = vadd.f32 0.0, %v10335
        %10337 = vmatmul.bf16.gmra.mxu0 %v10170
        %v10338 = vpop.f32.mrf.mxu0
        %v10339 = vadd.f32 0.0, %v10338
        %v10340 = vpop.f32.mrf.mxu0
        %v10341 = vadd.f32 0.0, %v10340
        %10342 = vmatmul.bf16.gmra.mxu0 %v10173
        %v10343 = vpop.f32.mrf.mxu0
        %v10344 = vadd.f32 0.0, %v10343
        %v10345 = vpop.f32.mrf.mxu0
        %v10346 = vadd.f32 0.0, %v10345
        %10347 = vmatmul.bf16.gmra.mxu0 %v10176
        %v10348 = vpop.f32.mrf.mxu0
        %v10349 = vadd.f32 0.0, %v10348
        %v10350 = vpop.f32.mrf.mxu0
        %v10351 = vadd.f32 0.0, %v10350
        %10352 = vmatmul.bf16.gmra.mxu0 %v10179
        %v10353 = vpop.f32.mrf.mxu0
        %v10354 = vadd.f32 0.0, %v10353
        %v10355 = vpop.f32.mrf.mxu0
        %v10356 = vadd.f32 0.0, %v10355
        %10357 = vmatmul.bf16.gmra.mxu0 %v10182
        %v10358 = vpop.f32.mrf.mxu0
        %v10359 = vadd.f32 0.0, %v10358
        %v10360 = vpop.f32.mrf.mxu0
        %v10361 = vadd.f32 0.0, %v10360
        %10362 = vmatmul.bf16.gmra.mxu0 %v10185
        %v10363 = vpop.f32.mrf.mxu0
        %v10364 = vadd.f32 0.0, %v10363
        %v10365 = vpop.f32.mrf.mxu0
        %v10366 = vadd.f32 0.0, %v10365
        %10367 = vmatmul.bf16.gmra.mxu0 %v10188
        %v10368 = vpop.f32.mrf.mxu0
        %v10369 = vadd.f32 0.0, %v10368
        %v10370 = vpop.f32.mrf.mxu0
        %v10371 = vadd.f32 0.0, %v10370
        %10372 = vmatmul.bf16.gmra.mxu0 %v10191
        %v10373 = vpop.f32.mrf.mxu0
        %v10374 = vadd.f32 0.0, %v10373
        %v10375 = vpop.f32.mrf.mxu0
        %v10376 = vadd.f32 0.0, %v10375
        %10377 = vmatmul.bf16.gmra.mxu0 %v10194
        %v10378 = vpop.f32.mrf.mxu0
        %v10379 = vadd.f32 0.0, %v10378
        %v10380 = vpop.f32.mrf.mxu0
        %v10381 = vadd.f32 0.0, %v10380
        %10382 = vmatmul.bf16.gmra.mxu0 %v10197
        %v10383 = vpop.f32.mrf.mxu0
        %v10384 = vadd.f32 0.0, %v10383
        %v10385 = vpop.f32.mrf.mxu0
        %v10386 = vadd.f32 0.0, %v10385
        %10387 = vmatmul.bf16.gmra.mxu0 %v10200
        %v10388 = vpop.f32.mrf.mxu0
        %v10389 = vadd.f32 0.0, %v10388
        %v10390 = vpop.f32.mrf.mxu0
        %v10391 = vadd.f32 0.0, %v10390
        %10392 = vmatmul.bf16.gmra.mxu0 %v10203
        %v10393 = vpop.f32.mrf.mxu0
        %v10394 = vadd.f32 0.0, %v10393
        %v10395 = vpop.f32.mrf.mxu0
        %v10396 = vadd.f32 0.0, %v10395
        %10397 = vmatmul.bf16.gmra.mxu0 %v10206
        %v10398 = vpop.f32.mrf.mxu0
        %v10399 = vadd.f32 0.0, %v10398
        %v10400 = vpop.f32.mrf.mxu0
        %v10401 = vadd.f32 0.0, %v10400
        %10402 = vmatmul.bf16.gmra.mxu0 %v10209
        %v10403 = vpop.f32.mrf.mxu0
        %v10404 = vadd.f32 0.0, %v10403
        %v10405 = vpop.f32.mrf.mxu0
        %v10406 = vadd.f32 0.0, %v10405
        %10407 = vmatmul.bf16.gmra.mxu0 %v10212
        %v10408 = vpop.f32.mrf.mxu0
        %v10409 = vadd.f32 0.0, %v10408
        %v10410 = vpop.f32.mrf.mxu0
        %v10411 = vadd.f32 0.0, %v10410
        %10412 = vmatmul.bf16.gmra.mxu0 %v10215
        %v10413 = vpop.f32.mrf.mxu0
        %v10414 = vadd.f32 0.0, %v10413
        %v10415 = vpop.f32.mrf.mxu0
        %v10416 = vadd.f32 0.0, %v10415
        %10417 = vmatmul.bf16.gmra.mxu0 %v10218
        %v10418 = vpop.f32.mrf.mxu0
        %v10419 = vadd.f32 0.0, %v10418
        %v10420 = vpop.f32.mrf.mxu0
        %v10421 = vadd.f32 0.0, %v10420
        %10422 = vmatmul.bf16.gmra.mxu0 %v10221
        %v10423 = vpop.f32.mrf.mxu0
        %v10424 = vadd.f32 0.0, %v10423
        %v10425 = vpop.f32.mrf.mxu0
        %v10426 = vadd.f32 0.0, %v10425
        %10427 = vmatmul.bf16.gmra.mxu0 %v10224
        %v10428 = vpop.f32.mrf.mxu0
        %v10429 = vadd.f32 0.0, %v10428
        %v10430 = vpop.f32.mrf.mxu0
        %v10431 = vadd.f32 0.0, %v10430
        %10432 = vmatmul.bf16.gmra.mxu0 %v10227
        %v10433 = vpop.f32.mrf.mxu0
        %v10434 = vadd.f32 0.0, %v10433
        %v10435 = vpop.f32.mrf.mxu0
        %v10436 = vadd.f32 0.0, %v10435
        %10437 = vmatmul.bf16.gmra.mxu0 %v10230
        %v10438 = vpop.f32.mrf.mxu0
        %v10439 = vadd.f32 0.0, %v10438
        %v10440 = vpop.f32.mrf.mxu0
        %v10441 = vadd.f32 0.0, %v10440
        %10442 = vmatmul.bf16.gmra.mxu0 %v10233
        %v10443 = vpop.f32.mrf.mxu0
        %v10444 = vadd.f32 0.0, %v10443
        %v10445 = vpop.f32.mrf.mxu0
        %v10446 = vadd.f32 0.0, %v10445
        %10447 = vmatmul.bf16.gmra.mxu0 %v10236
        %v10448 = vpop.f32.mrf.mxu0
        %v10449 = vadd.f32 0.0, %v10448
        %v10450 = vpop.f32.mrf.mxu0
        %v10451 = vadd.f32 0.0, %v10450
        %10452 = vmatmul.bf16.gmra.mxu0 %v10239
        %v10453 = vpop.f32.mrf.mxu0
        %v10454 = vadd.f32 0.0, %v10453
        %v10455 = vpop.f32.mrf.mxu0
        %v10456 = vadd.f32 0.0, %v10455
        %10457 = vmatmul.bf16.gmra.mxu0 %v10242
        %v10458 = vpop.f32.mrf.mxu0
        %v10459 = vadd.f32 0.0, %v10458
        %v10460 = vpop.f32.mrf.mxu0
        %v10461 = vadd.f32 0.0, %v10460
        %10462 = vdwg.mxu0
        %v10463 = vadd.f32 %v9929, %v10254
        %v10464 = vadd.f32 %v9930, %v10256
        %v10465 = vadd.f32 %v9931, %v10259
        %v10466 = vadd.f32 %v9932, %v10261
        %v10467 = vadd.f32 %v9933, %v10264
        %v10468 = vadd.f32 %v9934, %v10266
        %v10469 = vadd.f32 %v9935, %v10269
        %v10470 = vadd.f32 %v9936, %v10271
        %v10471 = vadd.f32 %v9937, %v10274
        %v10472 = vadd.f32 %v9938, %v10276
        %v10473 = vadd.f32 %v9939, %v10279
        %v10474 = vadd.f32 %v9940, %v10281
        %v10475 = vadd.f32 %v9941, %v10284
        %v10476 = vadd.f32 %v9942, %v10286
        %v10477 = vadd.f32 %v9943, %v10289
        %v10478 = vadd.f32 %v9944, %v10291
        %v10479 = vadd.f32 %v9945, %v10294
        %v10480 = vadd.f32 %v9946, %v10296
        %v10481 = vadd.f32 %v9947, %v10299
        %v10482 = vadd.f32 %v9948, %v10301
        %v10483 = vadd.f32 %v9949, %v10304
        %v10484 = vadd.f32 %v9950, %v10306
        %v10485 = vadd.f32 %v9951, %v10309
        %v10486 = vadd.f32 %v9952, %v10311
        %v10487 = vadd.f32 %v9953, %v10314
        %v10488 = vadd.f32 %v9954, %v10316
        %v10489 = vadd.f32 %v9955, %v10319
        %v10490 = vadd.f32 %v9956, %v10321
        %v10491 = vadd.f32 %v9957, %v10324
        %v10492 = vadd.f32 %v9958, %v10326
        %v10493 = vadd.f32 %v9959, %v10329
        %v10494 = vadd.f32 %v9960, %v10331
        %v10495 = vadd.f32 %v9961, %v10334
        %v10496 = vadd.f32 %v9962, %v10336
        %v10497 = vadd.f32 %v9963, %v10339
        %v10498 = vadd.f32 %v9964, %v10341
        %v10499 = vadd.f32 %v9965, %v10344
        %v10500 = vadd.f32 %v9966, %v10346
        %v10501 = vadd.f32 %v9967, %v10349
        %v10502 = vadd.f32 %v9968, %v10351
        %v10503 = vadd.f32 %v9969, %v10354
        %v10504 = vadd.f32 %v9970, %v10356
        %v10505 = vadd.f32 %v9971, %v10359
        %v10506 = vadd.f32 %v9972, %v10361
        %v10507 = vadd.f32 %v9973, %v10364
        %v10508 = vadd.f32 %v9974, %v10366
        %v10509 = vadd.f32 %v9975, %v10369
        %v10510 = vadd.f32 %v9976, %v10371
        %v10511 = vadd.f32 %v9977, %v10374
        %v10512 = vadd.f32 %v9978, %v10376
        %v10513 = vadd.f32 %v9979, %v10379
        %v10514 = vadd.f32 %v9980, %v10381
        %v10515 = vadd.f32 %v9981, %v10384
        %v10516 = vadd.f32 %v9982, %v10386
        %v10517 = vadd.f32 %v9983, %v10389
        %v10518 = vadd.f32 %v9984, %v10391
        %v10519 = vadd.f32 %v9985, %v10394
        %v10520 = vadd.f32 %v9986, %v10396
        %v10521 = vadd.f32 %v9987, %v10399
        %v10522 = vadd.f32 %v9988, %v10401
        %v10523 = vadd.f32 %v9989, %v10404
        %v10524 = vadd.f32 %v9990, %v10406
        %v10525 = vadd.f32 %v9991, %v10409
        %v10526 = vadd.f32 %v9992, %v10411
        %v10527 = vadd.f32 %v9993, %v10414
        %v10528 = vadd.f32 %v9994, %v10416
        %v10529 = vadd.f32 %v9995, %v10419
        %v10530 = vadd.f32 %v9996, %v10421
        %v10531 = vadd.f32 %v9997, %v10424
        %v10532 = vadd.f32 %v9998, %v10426
        %v10533 = vadd.f32 %v9999, %v10429
        %v10534 = vadd.f32 %v10000, %v10431
        %v10535 = vadd.f32 %v10001, %v10434
        %v10536 = vadd.f32 %v10002, %v10436
        %v10537 = vadd.f32 %v10003, %v10439
        %v10538 = vadd.f32 %v10004, %v10441
        %v10539 = vadd.f32 %v10005, %v10444
        %v10540 = vadd.f32 %v10006, %v10446
        %v10541 = vadd.f32 %v10007, %v10449
        %v10542 = vadd.f32 %v10008, %v10451
        %v10543 = vadd.f32 %v10009, %v10454
        %v10544 = vadd.f32 %v10010, %v10456
        %v10545 = vadd.f32 %v10011, %v10459
        %v10546 = vadd.f32 %v10012, %v10461
        %v10547 = vld [vmem:[#allocation7] sm:$0x1]
        %v10549 = vperm.slane %v10547, 0
        %v10551 = vadd.f32 %v10463, %v10549
        %v10552 = vadd.f32 %v10464, %v10549
        %v10553 = vadd.f32 %v10465, %v10549
        %v10554 = vadd.f32 %v10466, %v10549
        %v10555 = vadd.f32 %v10467, %v10549
        %v10556 = vadd.f32 %v10468, %v10549
        %v10557 = vadd.f32 %v10469, %v10549
        %v10558 = vadd.f32 %v10470, %v10549
        %v10559 = vadd.f32 %v10471, %v10549
        %v10560 = vadd.f32 %v10472, %v10549
        %v10561 = vadd.f32 %v10473, %v10549
        %v10562 = vadd.f32 %v10474, %v10549
        %v10563 = vadd.f32 %v10475, %v10549
        %v10564 = vadd.f32 %v10476, %v10549
        %v10565 = vadd.f32 %v10477, %v10549
        %v10566 = vadd.f32 %v10478, %v10549
        %v10567 = vadd.f32 %v10479, %v10549
        %v10568 = vadd.f32 %v10480, %v10549
        %v10569 = vadd.f32 %v10481, %v10549
        %v10570 = vadd.f32 %v10482, %v10549
        %v10571 = vadd.f32 %v10483, %v10549
        %v10572 = vadd.f32 %v10484, %v10549
        %v10573 = vadd.f32 %v10485, %v10549
        %v10574 = vadd.f32 %v10486, %v10549
        %v10575 = vadd.f32 %v10487, %v10549
        %v10576 = vadd.f32 %v10488, %v10549
        %v10577 = vadd.f32 %v10489, %v10549
        %v10578 = vadd.f32 %v10490, %v10549
        %v10579 = vadd.f32 %v10491, %v10549
        %v10580 = vadd.f32 %v10492, %v10549
        %v10581 = vadd.f32 %v10493, %v10549
        %v10582 = vadd.f32 %v10494, %v10549
        %v10583 = vadd.f32 %v10495, %v10549
        %v10584 = vadd.f32 %v10496, %v10549
        %v10585 = vadd.f32 %v10497, %v10549
        %v10586 = vadd.f32 %v10498, %v10549
        %v10587 = vadd.f32 %v10499, %v10549
        %v10588 = vadd.f32 %v10500, %v10549
        %v10589 = vadd.f32 %v10501, %v10549
        %v10590 = vadd.f32 %v10502, %v10549
        %v10591 = vadd.f32 %v10503, %v10549
        %v10592 = vadd.f32 %v10504, %v10549
        %v10593 = vadd.f32 %v10505, %v10549
        %v10594 = vadd.f32 %v10506, %v10549
        %v10595 = vadd.f32 %v10507, %v10549
        %v10596 = vadd.f32 %v10508, %v10549
        %v10597 = vadd.f32 %v10509, %v10549
        %v10598 = vadd.f32 %v10510, %v10549
        %v10599 = vadd.f32 %v10511, %v10549
        %v10600 = vadd.f32 %v10512, %v10549
        %v10601 = vadd.f32 %v10513, %v10549
        %v10602 = vadd.f32 %v10514, %v10549
        %v10603 = vadd.f32 %v10515, %v10549
        %v10604 = vadd.f32 %v10516, %v10549
        %v10605 = vadd.f32 %v10517, %v10549
        %v10606 = vadd.f32 %v10518, %v10549
        %v10607 = vadd.f32 %v10519, %v10549
        %v10608 = vadd.f32 %v10520, %v10549
        %v10609 = vadd.f32 %v10521, %v10549
        %v10610 = vadd.f32 %v10522, %v10549
        %v10611 = vadd.f32 %v10523, %v10549
        %v10612 = vadd.f32 %v10524, %v10549
        %v10613 = vadd.f32 %v10525, %v10549
        %v10614 = vadd.f32 %v10526, %v10549
        %v10615 = vadd.f32 %v10527, %v10549
        %v10616 = vadd.f32 %v10528, %v10549
        %v10617 = vadd.f32 %v10529, %v10549
        %v10618 = vadd.f32 %v10530, %v10549
        %v10619 = vadd.f32 %v10531, %v10549
        %v10620 = vadd.f32 %v10532, %v10549
        %v10621 = vadd.f32 %v10533, %v10549
        %v10622 = vadd.f32 %v10534, %v10549
        %v10623 = vadd.f32 %v10535, %v10549
        %v10624 = vadd.f32 %v10536, %v10549
        %v10625 = vadd.f32 %v10537, %v10549
        %v10626 = vadd.f32 %v10538, %v10549
        %v10627 = vadd.f32 %v10539, %v10549
        %v10628 = vadd.f32 %v10540, %v10549
        %v10629 = vadd.f32 %v10541, %v10549
        %v10630 = vadd.f32 %v10542, %v10549
        %v10631 = vadd.f32 %v10543, %v10549
        %v10632 = vadd.f32 %v10544, %v10549
        %v10633 = vadd.f32 %v10545, %v10549
        %v10634 = vadd.f32 %v10546, %v10549
        %v10635 = vmax.f32 %v10551, 0.0
        %v10636 = vmax.f32 %v10552, 0.0
        %v10637 = vmax.f32 %v10553, 0.0
        %v10638 = vmax.f32 %v10554, 0.0
        %v10639 = vmax.f32 %v10555, 0.0
        %v10640 = vmax.f32 %v10556, 0.0
        %v10641 = vmax.f32 %v10557, 0.0
        %v10642 = vmax.f32 %v10558, 0.0
        %v10643 = vmax.f32 %v10559, 0.0
        %v10644 = vmax.f32 %v10560, 0.0
        %v10645 = vmax.f32 %v10561, 0.0
        %v10646 = vmax.f32 %v10562, 0.0
        %v10647 = vmax.f32 %v10563, 0.0
        %v10648 = vmax.f32 %v10564, 0.0
        %v10649 = vmax.f32 %v10565, 0.0
        %v10650 = vmax.f32 %v10566, 0.0
        %v10651 = vmax.f32 %v10567, 0.0
        %v10652 = vmax.f32 %v10568, 0.0
        %v10653 = vmax.f32 %v10569, 0.0
        %v10654 = vmax.f32 %v10570, 0.0
        %v10655 = vmax.f32 %v10571, 0.0
        %v10656 = vmax.f32 %v10572, 0.0
        %v10657 = vmax.f32 %v10573, 0.0
        %v10658 = vmax.f32 %v10574, 0.0
        %v10659 = vmax.f32 %v10575, 0.0
        %v10660 = vmax.f32 %v10576, 0.0
        %v10661 = vmax.f32 %v10577, 0.0
        %v10662 = vmax.f32 %v10578, 0.0
        %v10663 = vmax.f32 %v10579, 0.0
        %v10664 = vmax.f32 %v10580, 0.0
        %v10665 = vmax.f32 %v10581, 0.0
        %v10666 = vmax.f32 %v10582, 0.0
        %v10667 = vmax.f32 %v10583, 0.0
        %v10668 = vmax.f32 %v10584, 0.0
        %v10669 = vmax.f32 %v10585, 0.0
        %v10670 = vmax.f32 %v10586, 0.0
        %v10671 = vmax.f32 %v10587, 0.0
        %v10672 = vmax.f32 %v10588, 0.0
        %v10673 = vmax.f32 %v10589, 0.0
        %v10674 = vmax.f32 %v10590, 0.0
        %v10675 = vmax.f32 %v10591, 0.0
        %v10676 = vmax.f32 %v10592, 0.0
        %v10677 = vmax.f32 %v10593, 0.0
        %v10678 = vmax.f32 %v10594, 0.0
        %v10679 = vmax.f32 %v10595, 0.0
        %v10680 = vmax.f32 %v10596, 0.0
        %v10681 = vmax.f32 %v10597, 0.0
        %v10682 = vmax.f32 %v10598, 0.0
        %v10683 = vmax.f32 %v10599, 0.0
        %v10684 = vmax.f32 %v10600, 0.0
        %v10685 = vmax.f32 %v10601, 0.0
        %v10686 = vmax.f32 %v10602, 0.0
        %v10687 = vmax.f32 %v10603, 0.0
        %v10688 = vmax.f32 %v10604, 0.0
        %v10689 = vmax.f32 %v10605, 0.0
        %v10690 = vmax.f32 %v10606, 0.0
        %v10691 = vmax.f32 %v10607, 0.0
        %v10692 = vmax.f32 %v10608, 0.0
        %v10693 = vmax.f32 %v10609, 0.0
        %v10694 = vmax.f32 %v10610, 0.0
        %v10695 = vmax.f32 %v10611, 0.0
        %v10696 = vmax.f32 %v10612, 0.0
        %v10697 = vmax.f32 %v10613, 0.0
        %v10698 = vmax.f32 %v10614, 0.0
        %v10699 = vmax.f32 %v10615, 0.0
        %v10700 = vmax.f32 %v10616, 0.0
        %v10701 = vmax.f32 %v10617, 0.0
        %v10702 = vmax.f32 %v10618, 0.0
        %v10703 = vmax.f32 %v10619, 0.0
        %v10704 = vmax.f32 %v10620, 0.0
        %v10705 = vmax.f32 %v10621, 0.0
        %v10706 = vmax.f32 %v10622, 0.0
        %v10707 = vmax.f32 %v10623, 0.0
        %v10708 = vmax.f32 %v10624, 0.0
        %v10709 = vmax.f32 %v10625, 0.0
        %v10710 = vmax.f32 %v10626, 0.0
        %v10711 = vmax.f32 %v10627, 0.0
        %v10712 = vmax.f32 %v10628, 0.0
        %v10713 = vmax.f32 %v10629, 0.0
        %v10714 = vmax.f32 %v10630, 0.0
        %v10715 = vmax.f32 %v10631, 0.0
        %v10716 = vmax.f32 %v10632, 0.0
        %v10717 = vmax.f32 %v10633, 0.0
        %v10718 = vmax.f32 %v10634, 0.0
        %v10803 = vrot.slane %v10635, 1
        %v10804 = vrot.slane %v10636, 1
        %v10805 = vsel %vm1271, %v10803, %v10804
        %v10806 = vrot.slane %v10637, 1
        %v10807 = vsel %vm1271, %v10804, %v10806
        %v10808 = vrot.slane %v10638, 1
        %v10809 = vsel %vm1271, %v10806, %v10808
        %v10810 = vrot.slane %v10639, 1
        %v10811 = vsel %vm1271, %v10808, %v10810
        %v10812 = vrot.slane %v10640, 1
        %v10813 = vsel %vm1271, %v10810, %v10812
        %v10814 = vrot.slane %v10641, 1
        %v10815 = vsel %vm1271, %v10812, %v10814
        %v10816 = vrot.slane %v10642, 1
        %v10817 = vsel %vm1271, %v10814, %v10816
        %v10818 = vrot.slane %v10643, 1
        %v10819 = vsel %vm1271, %v10816, %v10818
        %v10820 = vrot.slane %v10644, 1
        %v10821 = vsel %vm1271, %v10818, %v10820
        %v10822 = vrot.slane %v10645, 1
        %v10823 = vsel %vm1271, %v10820, %v10822
        %v10824 = vrot.slane %v10646, 1
        %v10825 = vsel %vm1271, %v10822, %v10824
        %v10826 = vrot.slane %v10647, 1
        %v10827 = vsel %vm1271, %v10824, %v10826
        %v10828 = vrot.slane %v10648, 1
        %v10829 = vsel %vm1271, %v10826, %v10828
        %v10830 = vrot.slane %v10649, 1
        %v10831 = vsel %vm1271, %v10828, %v10830
        %v10832 = vrot.slane %v10650, 1
        %v10833 = vsel %vm1271, %v10830, %v10832
        %v10834 = vrot.slane %v10651, 1
        %v10835 = vsel %vm1271, %v10832, %v10834
        %v10836 = vrot.slane %v10652, 1
        %v10837 = vsel %vm1271, %v10834, %v10836
        %v10838 = vrot.slane %v10653, 1
        %v10839 = vsel %vm1271, %v10836, %v10838
        %v10840 = vrot.slane %v10654, 1
        %v10841 = vsel %vm1271, %v10838, %v10840
        %v10842 = vrot.slane %v10655, 1
        %v10843 = vsel %vm1271, %v10840, %v10842
        %v10844 = vrot.slane %v10656, 1
        %v10845 = vsel %vm1271, %v10842, %v10844
        %v10846 = vrot.slane %v10657, 1
        %v10847 = vsel %vm1271, %v10844, %v10846
        %v10848 = vrot.slane %v10658, 1
        %v10849 = vsel %vm1271, %v10846, %v10848
        %v10850 = vrot.slane %v10659, 1
        %v10851 = vsel %vm1271, %v10848, %v10850
        %v10852 = vrot.slane %v10660, 1
        %v10853 = vsel %vm1271, %v10850, %v10852
        %v10854 = vrot.slane %v10661, 1
        %v10855 = vsel %vm1271, %v10852, %v10854
        %v10856 = vrot.slane %v10662, 1
        %v10857 = vsel %vm1271, %v10854, %v10856
        %v10858 = vrot.slane %v10663, 1
        %v10859 = vsel %vm1271, %v10856, %v10858
        %v10860 = vrot.slane %v10664, 1
        %v10861 = vsel %vm1271, %v10858, %v10860
        %v10862 = vrot.slane %v10665, 1
        %v10863 = vsel %vm1271, %v10860, %v10862
        %v10864 = vrot.slane %v10666, 1
        %v10865 = vsel %vm1271, %v10862, %v10864
        %v10866 = vrot.slane %v10667, 1
        %v10867 = vsel %vm1271, %v10864, %v10866
        %v10868 = vrot.slane %v10668, 1
        %v10869 = vsel %vm1271, %v10866, %v10868
        %v10870 = vrot.slane %v10669, 1
        %v10871 = vsel %vm1271, %v10868, %v10870
        %v10872 = vrot.slane %v10670, 1
        %v10873 = vsel %vm1271, %v10870, %v10872
        %v10874 = vrot.slane %v10671, 1
        %v10875 = vsel %vm1271, %v10872, %v10874
        %v10876 = vrot.slane %v10672, 1
        %v10877 = vsel %vm1271, %v10874, %v10876
        %v10878 = vrot.slane %v10673, 1
        %v10879 = vsel %vm1271, %v10876, %v10878
        %v10880 = vrot.slane %v10674, 1
        %v10881 = vsel %vm1271, %v10878, %v10880
        %v10882 = vrot.slane %v10675, 1
        %v10883 = vsel %vm1271, %v10880, %v10882
        %v10884 = vrot.slane %v10676, 1
        %v10885 = vsel %vm1271, %v10882, %v10884
        %v10886 = vrot.slane %v10677, 1
        %v10887 = vsel %vm1271, %v10884, %v10886
        %v10888 = vrot.slane %v10678, 1
        %v10889 = vsel %vm1271, %v10886, %v10888
        %v10890 = vrot.slane %v10679, 1
        %v10891 = vsel %vm1271, %v10888, %v10890
        %v10892 = vrot.slane %v10680, 1
        %v10893 = vsel %vm1271, %v10890, %v10892
        %v10894 = vrot.slane %v10681, 1
        %v10895 = vsel %vm1271, %v10892, %v10894
        %v10896 = vrot.slane %v10682, 1
        %v10897 = vsel %vm1271, %v10894, %v10896
        %v10898 = vrot.slane %v10683, 1
        %v10899 = vsel %vm1271, %v10896, %v10898
        %v10900 = vrot.slane %v10684, 1
        %v10901 = vsel %vm1271, %v10898, %v10900
        %v10902 = vrot.slane %v10685, 1
        %v10903 = vsel %vm1271, %v10900, %v10902
        %v10904 = vrot.slane %v10686, 1
        %v10905 = vsel %vm1271, %v10902, %v10904
        %v10906 = vrot.slane %v10687, 1
        %v10907 = vsel %vm1271, %v10904, %v10906
        %v10908 = vrot.slane %v10688, 1
        %v10909 = vsel %vm1271, %v10906, %v10908
        %v10910 = vrot.slane %v10689, 1
        %v10911 = vsel %vm1271, %v10908, %v10910
        %v10912 = vrot.slane %v10690, 1
        %v10913 = vsel %vm1271, %v10910, %v10912
        %v10914 = vrot.slane %v10691, 1
        %v10915 = vsel %vm1271, %v10912, %v10914
        %v10916 = vrot.slane %v10692, 1
        %v10917 = vsel %vm1271, %v10914, %v10916
        %v10918 = vrot.slane %v10693, 1
        %v10919 = vsel %vm1271, %v10916, %v10918
        %v10920 = vrot.slane %v10694, 1
        %v10921 = vsel %vm1271, %v10918, %v10920
        %v10922 = vrot.slane %v10695, 1
        %v10923 = vsel %vm1271, %v10920, %v10922
        %v10924 = vrot.slane %v10696, 1
        %v10925 = vsel %vm1271, %v10922, %v10924
        %v10926 = vrot.slane %v10697, 1
        %v10927 = vsel %vm1271, %v10924, %v10926
        %v10928 = vrot.slane %v10698, 1
        %v10929 = vsel %vm1271, %v10926, %v10928
        %v10930 = vrot.slane %v10699, 1
        %v10931 = vsel %vm1271, %v10928, %v10930
        %v10932 = vrot.slane %v10700, 1
        %v10933 = vsel %vm1271, %v10930, %v10932
        %v10934 = vrot.slane %v10701, 1
        %v10935 = vsel %vm1271, %v10932, %v10934
        %v10936 = vrot.slane %v10702, 1
        %v10937 = vsel %vm1271, %v10934, %v10936
        %v10938 = vrot.slane %v10703, 1
        %v10939 = vsel %vm1271, %v10936, %v10938
        %v10940 = vrot.slane %v10704, 1
        %v10941 = vsel %vm1271, %v10938, %v10940
        %v10942 = vrot.slane %v10705, 1
        %v10943 = vsel %vm1271, %v10940, %v10942
        %v10944 = vrot.slane %v10706, 1
        %v10945 = vsel %vm1271, %v10942, %v10944
        %v10946 = vrot.slane %v10707, 1
        %v10947 = vsel %vm1271, %v10944, %v10946
        %v10948 = vrot.slane %v10708, 1
        %v10949 = vsel %vm1271, %v10946, %v10948
        %v10950 = vrot.slane %v10709, 1
        %v10951 = vsel %vm1271, %v10948, %v10950
        %v10952 = vrot.slane %v10710, 1
        %v10953 = vsel %vm1271, %v10950, %v10952
        %v10954 = vrot.slane %v10711, 1
        %v10955 = vsel %vm1271, %v10952, %v10954
        %v10956 = vrot.slane %v10712, 1
        %v10957 = vsel %vm1271, %v10954, %v10956
        %v10958 = vrot.slane %v10713, 1
        %v10959 = vsel %vm1271, %v10956, %v10958
        %v10960 = vrot.slane %v10714, 1
        %v10961 = vsel %vm1271, %v10958, %v10960
        %v10962 = vrot.slane %v10715, 1
        %v10963 = vsel %vm1271, %v10960, %v10962
        %v10964 = vrot.slane %v10716, 1
        %v10965 = vsel %vm1271, %v10962, %v10964
        %v10966 = vrot.slane %v10717, 1
        %v10967 = vsel %vm1271, %v10964, %v10966
        %v10968 = vrot.slane %v10718, 1
        %v10969 = vsel %vm1271, %v10966, %v10968
        %v11054 = vmax.f32 %v10635, %v10805
        %v11055 = vmax.f32 %v10636, %v10807
        %v11056 = vmax.f32 %v10637, %v10809
        %v11057 = vmax.f32 %v10638, %v10811
        %v11058 = vmax.f32 %v10639, %v10813
        %v11059 = vmax.f32 %v10640, %v10815
        %v11060 = vmax.f32 %v10641, %v10817
        %v11061 = vmax.f32 %v10642, %v10819
        %v11062 = vmax.f32 %v10643, %v10821
        %v11063 = vmax.f32 %v10644, %v10823
        %v11064 = vmax.f32 %v10645, %v10825
        %v11065 = vmax.f32 %v10646, %v10827
        %v11066 = vmax.f32 %v10647, %v10829
        %v11067 = vmax.f32 %v10648, %v10831
        %v11068 = vmax.f32 %v10649, %v10833
        %v11069 = vmax.f32 %v10650, %v10835
        %v11070 = vmax.f32 %v10651, %v10837
        %v11071 = vmax.f32 %v10652, %v10839
        %v11072 = vmax.f32 %v10653, %v10841
        %v11073 = vmax.f32 %v10654, %v10843
        %v11074 = vmax.f32 %v10655, %v10845
        %v11075 = vmax.f32 %v10656, %v10847
        %v11076 = vmax.f32 %v10657, %v10849
        %v11077 = vmax.f32 %v10658, %v10851
        %v11078 = vmax.f32 %v10659, %v10853
        %v11079 = vmax.f32 %v10660, %v10855
        %v11080 = vmax.f32 %v10661, %v10857
        %v11081 = vmax.f32 %v10662, %v10859
        %v11082 = vmax.f32 %v10663, %v10861
        %v11083 = vmax.f32 %v10664, %v10863
        %v11084 = vmax.f32 %v10665, %v10865
        %v11085 = vmax.f32 %v10666, %v10867
        %v11086 = vmax.f32 %v10667, %v10869
        %v11087 = vmax.f32 %v10668, %v10871
        %v11088 = vmax.f32 %v10669, %v10873
        %v11089 = vmax.f32 %v10670, %v10875
        %v11090 = vmax.f32 %v10671, %v10877
        %v11091 = vmax.f32 %v10672, %v10879
        %v11092 = vmax.f32 %v10673, %v10881
        %v11093 = vmax.f32 %v10674, %v10883
        %v11094 = vmax.f32 %v10675, %v10885
        %v11095 = vmax.f32 %v10676, %v10887
        %v11096 = vmax.f32 %v10677, %v10889
        %v11097 = vmax.f32 %v10678, %v10891
        %v11098 = vmax.f32 %v10679, %v10893
        %v11099 = vmax.f32 %v10680, %v10895
        %v11100 = vmax.f32 %v10681, %v10897
        %v11101 = vmax.f32 %v10682, %v10899
        %v11102 = vmax.f32 %v10683, %v10901
        %v11103 = vmax.f32 %v10684, %v10903
        %v11104 = vmax.f32 %v10685, %v10905
        %v11105 = vmax.f32 %v10686, %v10907
        %v11106 = vmax.f32 %v10687, %v10909
        %v11107 = vmax.f32 %v10688, %v10911
        %v11108 = vmax.f32 %v10689, %v10913
        %v11109 = vmax.f32 %v10690, %v10915
        %v11110 = vmax.f32 %v10691, %v10917
        %v11111 = vmax.f32 %v10692, %v10919
        %v11112 = vmax.f32 %v10693, %v10921
        %v11113 = vmax.f32 %v10694, %v10923
        %v11114 = vmax.f32 %v10695, %v10925
        %v11115 = vmax.f32 %v10696, %v10927
        %v11116 = vmax.f32 %v10697, %v10929
        %v11117 = vmax.f32 %v10698, %v10931
        %v11118 = vmax.f32 %v10699, %v10933
        %v11119 = vmax.f32 %v10700, %v10935
        %v11120 = vmax.f32 %v10701, %v10937
        %v11121 = vmax.f32 %v10702, %v10939
        %v11122 = vmax.f32 %v10703, %v10941
        %v11123 = vmax.f32 %v10704, %v10943
        %v11124 = vmax.f32 %v10705, %v10945
        %v11125 = vmax.f32 %v10706, %v10947
        %v11126 = vmax.f32 %v10707, %v10949
        %v11127 = vmax.f32 %v10708, %v10951
        %v11128 = vmax.f32 %v10709, %v10953
        %v11129 = vmax.f32 %v10710, %v10955
        %v11130 = vmax.f32 %v10711, %v10957
        %v11131 = vmax.f32 %v10712, %v10959
        %v11132 = vmax.f32 %v10713, %v10961
        %v11133 = vmax.f32 %v10714, %v10963
        %v11134 = vmax.f32 %v10715, %v10965
        %v11135 = vmax.f32 %v10716, %v10967
        %v11136 = vmax.f32 %v10717, %v10969
        %v11137 = vmax.f32 %v10718, %v10968
        %v11219 = vrot.slane %v11057, 4
        %v11220 = vrot.slane %v11058, 4
        %v11221 = vsel %vm2402, %v11219, %v11220
        %v11222 = vrot.slane %v11059, 4
        %v11223 = vsel %vm2402, %v11220, %v11222
        %v11224 = vrot.slane %v11060, 4
        %v11225 = vsel %vm2402, %v11222, %v11224
        %v11226 = vrot.slane %v11061, 4
        %v11227 = vsel %vm2402, %v11224, %v11226
        %v11228 = vrot.slane %v11062, 4
        %v11229 = vsel %vm2402, %v11226, %v11228
        %v11230 = vrot.slane %v11063, 4
        %v11231 = vsel %vm2402, %v11228, %v11230
        %v11232 = vrot.slane %v11064, 4
        %v11233 = vsel %vm2402, %v11230, %v11232
        %v11234 = vrot.slane %v11065, 4
        %v11235 = vsel %vm2402, %v11232, %v11234
        %v11236 = vrot.slane %v11066, 4
        %v11237 = vsel %vm2402, %v11234, %v11236
        %v11238 = vrot.slane %v11067, 4
        %v11239 = vsel %vm2402, %v11236, %v11238
        %v11240 = vrot.slane %v11068, 4
        %v11241 = vsel %vm2402, %v11238, %v11240
        %v11242 = vrot.slane %v11069, 4
        %v11243 = vsel %vm2402, %v11240, %v11242
        %v11244 = vrot.slane %v11070, 4
        %v11245 = vsel %vm2402, %v11242, %v11244
        %v11246 = vrot.slane %v11071, 4
        %v11247 = vsel %vm2402, %v11244, %v11246
        %v11248 = vrot.slane %v11072, 4
        %v11249 = vsel %vm2402, %v11246, %v11248
        %v11250 = vrot.slane %v11073, 4
        %v11251 = vsel %vm2402, %v11248, %v11250
        %v11252 = vrot.slane %v11074, 4
        %v11253 = vsel %vm2402, %v11250, %v11252
        %v11254 = vrot.slane %v11075, 4
        %v11255 = vsel %vm2402, %v11252, %v11254
        %v11256 = vrot.slane %v11076, 4
        %v11257 = vsel %vm2402, %v11254, %v11256
        %v11258 = vrot.slane %v11077, 4
        %v11259 = vsel %vm2402, %v11256, %v11258
        %v11260 = vrot.slane %v11078, 4
        %v11261 = vsel %vm2402, %v11258, %v11260
        %v11262 = vrot.slane %v11079, 4
        %v11263 = vsel %vm2402, %v11260, %v11262
        %v11264 = vrot.slane %v11080, 4
        %v11265 = vsel %vm2402, %v11262, %v11264
        %v11266 = vrot.slane %v11081, 4
        %v11267 = vsel %vm2402, %v11264, %v11266
        %v11268 = vrot.slane %v11082, 4
        %v11269 = vsel %vm2402, %v11266, %v11268
        %v11270 = vrot.slane %v11083, 4
        %v11271 = vsel %vm2402, %v11268, %v11270
        %v11272 = vrot.slane %v11084, 4
        %v11273 = vsel %vm2402, %v11270, %v11272
        %v11274 = vrot.slane %v11085, 4
        %v11275 = vsel %vm2402, %v11272, %v11274
        %v11276 = vrot.slane %v11086, 4
        %v11277 = vsel %vm2402, %v11274, %v11276
        %v11278 = vrot.slane %v11087, 4
        %v11279 = vsel %vm2402, %v11276, %v11278
        %v11280 = vrot.slane %v11088, 4
        %v11281 = vsel %vm2402, %v11278, %v11280
        %v11282 = vrot.slane %v11089, 4
        %v11283 = vsel %vm2402, %v11280, %v11282
        %v11284 = vrot.slane %v11090, 4
        %v11285 = vsel %vm2402, %v11282, %v11284
        %v11286 = vrot.slane %v11091, 4
        %v11287 = vsel %vm2402, %v11284, %v11286
        %v11288 = vrot.slane %v11092, 4
        %v11289 = vsel %vm2402, %v11286, %v11288
        %v11290 = vrot.slane %v11093, 4
        %v11291 = vsel %vm2402, %v11288, %v11290
        %v11292 = vrot.slane %v11094, 4
        %v11293 = vsel %vm2402, %v11290, %v11292
        %v11294 = vrot.slane %v11095, 4
        %v11295 = vsel %vm2402, %v11292, %v11294
        %v11296 = vrot.slane %v11096, 4
        %v11297 = vsel %vm2402, %v11294, %v11296
        %v11298 = vrot.slane %v11097, 4
        %v11299 = vsel %vm2402, %v11296, %v11298
        %v11300 = vrot.slane %v11098, 4
        %v11301 = vsel %vm2402, %v11298, %v11300
        %v11302 = vrot.slane %v11099, 4
        %v11303 = vsel %vm2402, %v11300, %v11302
        %v11304 = vrot.slane %v11100, 4
        %v11305 = vsel %vm2402, %v11302, %v11304
        %v11306 = vrot.slane %v11101, 4
        %v11307 = vsel %vm2402, %v11304, %v11306
        %v11308 = vrot.slane %v11102, 4
        %v11309 = vsel %vm2402, %v11306, %v11308
        %v11310 = vrot.slane %v11103, 4
        %v11311 = vsel %vm2402, %v11308, %v11310
        %v11312 = vrot.slane %v11104, 4
        %v11313 = vsel %vm2402, %v11310, %v11312
        %v11314 = vrot.slane %v11105, 4
        %v11315 = vsel %vm2402, %v11312, %v11314
        %v11316 = vrot.slane %v11106, 4
        %v11317 = vsel %vm2402, %v11314, %v11316
        %v11318 = vrot.slane %v11107, 4
        %v11319 = vsel %vm2402, %v11316, %v11318
        %v11320 = vrot.slane %v11108, 4
        %v11321 = vsel %vm2402, %v11318, %v11320
        %v11322 = vrot.slane %v11109, 4
        %v11323 = vsel %vm2402, %v11320, %v11322
        %v11324 = vrot.slane %v11110, 4
        %v11325 = vsel %vm2402, %v11322, %v11324
        %v11326 = vrot.slane %v11111, 4
        %v11327 = vsel %vm2402, %v11324, %v11326
        %v11328 = vrot.slane %v11112, 4
        %v11329 = vsel %vm2402, %v11326, %v11328
        %v11330 = vrot.slane %v11113, 4
        %v11331 = vsel %vm2402, %v11328, %v11330
        %v11332 = vrot.slane %v11114, 4
        %v11333 = vsel %vm2402, %v11330, %v11332
        %v11334 = vrot.slane %v11115, 4
        %v11335 = vsel %vm2402, %v11332, %v11334
        %v11336 = vrot.slane %v11116, 4
        %v11337 = vsel %vm2402, %v11334, %v11336
        %v11338 = vrot.slane %v11117, 4
        %v11339 = vsel %vm2402, %v11336, %v11338
        %v11340 = vrot.slane %v11118, 4
        %v11341 = vsel %vm2402, %v11338, %v11340
        %v11342 = vrot.slane %v11119, 4
        %v11343 = vsel %vm2402, %v11340, %v11342
        %v11344 = vrot.slane %v11120, 4
        %v11345 = vsel %vm2402, %v11342, %v11344
        %v11346 = vrot.slane %v11121, 4
        %v11347 = vsel %vm2402, %v11344, %v11346
        %v11348 = vrot.slane %v11122, 4
        %v11349 = vsel %vm2402, %v11346, %v11348
        %v11350 = vrot.slane %v11123, 4
        %v11351 = vsel %vm2402, %v11348, %v11350
        %v11352 = vrot.slane %v11124, 4
        %v11353 = vsel %vm2402, %v11350, %v11352
        %v11354 = vrot.slane %v11125, 4
        %v11355 = vsel %vm2402, %v11352, %v11354
        %v11356 = vrot.slane %v11126, 4
        %v11357 = vsel %vm2402, %v11354, %v11356
        %v11358 = vrot.slane %v11127, 4
        %v11359 = vsel %vm2402, %v11356, %v11358
        %v11360 = vrot.slane %v11128, 4
        %v11361 = vsel %vm2402, %v11358, %v11360
        %v11362 = vrot.slane %v11129, 4
        %v11363 = vsel %vm2402, %v11360, %v11362
        %v11364 = vrot.slane %v11130, 4
        %v11365 = vsel %vm2402, %v11362, %v11364
        %v11366 = vrot.slane %v11131, 4
        %v11367 = vsel %vm2402, %v11364, %v11366
        %v11368 = vrot.slane %v11132, 4
        %v11369 = vsel %vm2402, %v11366, %v11368
        %v11370 = vrot.slane %v11133, 4
        %v11371 = vsel %vm2402, %v11368, %v11370
        %v11372 = vrot.slane %v11134, 4
        %v11373 = vsel %vm2402, %v11370, %v11372
        %v11374 = vrot.slane %v11135, 4
        %v11375 = vsel %vm2402, %v11372, %v11374
        %v11376 = vrot.slane %v11136, 4
        %v11377 = vsel %vm2402, %v11374, %v11376
        %v11378 = vrot.slane %v11137, 4
        %v11379 = vsel %vm2402, %v11376, %v11378
        %v11460 = vmax.f32 %v11054, %v11221
        %v11461 = vmax.f32 %v11055, %v11223
        %v11462 = vmax.f32 %v11056, %v11225
        %v11463 = vmax.f32 %v11057, %v11227
        %v11464 = vmax.f32 %v11058, %v11229
        %v11465 = vmax.f32 %v11059, %v11231
        %v11466 = vmax.f32 %v11060, %v11233
        %v11467 = vmax.f32 %v11061, %v11235
        %v11468 = vmax.f32 %v11062, %v11237
        %v11469 = vmax.f32 %v11063, %v11239
        %v11470 = vmax.f32 %v11064, %v11241
        %v11471 = vmax.f32 %v11065, %v11243
        %v11472 = vmax.f32 %v11066, %v11245
        %v11473 = vmax.f32 %v11067, %v11247
        %v11474 = vmax.f32 %v11068, %v11249
        %v11475 = vmax.f32 %v11069, %v11251
        %v11476 = vmax.f32 %v11070, %v11253
        %v11477 = vmax.f32 %v11071, %v11255
        %v11478 = vmax.f32 %v11072, %v11257
        %v11479 = vmax.f32 %v11073, %v11259
        %v11480 = vmax.f32 %v11074, %v11261
        %v11481 = vmax.f32 %v11075, %v11263
        %v11482 = vmax.f32 %v11076, %v11265
        %v11483 = vmax.f32 %v11077, %v11267
        %v11484 = vmax.f32 %v11078, %v11269
        %v11485 = vmax.f32 %v11079, %v11271
        %v11486 = vmax.f32 %v11080, %v11273
        %v11487 = vmax.f32 %v11081, %v11275
        %v11488 = vmax.f32 %v11082, %v11277
        %v11489 = vmax.f32 %v11083, %v11279
        %v11490 = vmax.f32 %v11084, %v11281
        %v11491 = vmax.f32 %v11085, %v11283
        %v11492 = vmax.f32 %v11086, %v11285
        %v11493 = vmax.f32 %v11087, %v11287
        %v11494 = vmax.f32 %v11088, %v11289
        %v11495 = vmax.f32 %v11089, %v11291
        %v11496 = vmax.f32 %v11090, %v11293
        %v11497 = vmax.f32 %v11091, %v11295
        %v11498 = vmax.f32 %v11092, %v11297
        %v11499 = vmax.f32 %v11093, %v11299
        %v11500 = vmax.f32 %v11094, %v11301
        %v11501 = vmax.f32 %v11095, %v11303
        %v11502 = vmax.f32 %v11096, %v11305
        %v11503 = vmax.f32 %v11097, %v11307
        %v11504 = vmax.f32 %v11098, %v11309
        %v11505 = vmax.f32 %v11099, %v11311
        %v11506 = vmax.f32 %v11100, %v11313
        %v11507 = vmax.f32 %v11101, %v11315
        %v11508 = vmax.f32 %v11102, %v11317
        %v11509 = vmax.f32 %v11103, %v11319
        %v11510 = vmax.f32 %v11104, %v11321
        %v11511 = vmax.f32 %v11105, %v11323
        %v11512 = vmax.f32 %v11106, %v11325
        %v11513 = vmax.f32 %v11107, %v11327
        %v11514 = vmax.f32 %v11108, %v11329
        %v11515 = vmax.f32 %v11109, %v11331
        %v11516 = vmax.f32 %v11110, %v11333
        %v11517 = vmax.f32 %v11111, %v11335
        %v11518 = vmax.f32 %v11112, %v11337
        %v11519 = vmax.f32 %v11113, %v11339
        %v11520 = vmax.f32 %v11114, %v11341
        %v11521 = vmax.f32 %v11115, %v11343
        %v11522 = vmax.f32 %v11116, %v11345
        %v11523 = vmax.f32 %v11117, %v11347
        %v11524 = vmax.f32 %v11118, %v11349
        %v11525 = vmax.f32 %v11119, %v11351
        %v11526 = vmax.f32 %v11120, %v11353
        %v11527 = vmax.f32 %v11121, %v11355
        %v11528 = vmax.f32 %v11122, %v11357
        %v11529 = vmax.f32 %v11123, %v11359
        %v11530 = vmax.f32 %v11124, %v11361
        %v11531 = vmax.f32 %v11125, %v11363
        %v11532 = vmax.f32 %v11126, %v11365
        %v11533 = vmax.f32 %v11127, %v11367
        %v11534 = vmax.f32 %v11128, %v11369
        %v11535 = vmax.f32 %v11129, %v11371
        %v11536 = vmax.f32 %v11130, %v11373
        %v11537 = vmax.f32 %v11131, %v11375
        %v11538 = vmax.f32 %v11132, %v11377
        %v11539 = vmax.f32 %v11133, %v11379
        %v11540 = vld [vmem:[#allocation9] sm:$0xff]
        %v11541 = vld [vmem:[#allocation9 + $0x8] sm:$0xff]
        %v11542 = vld [vmem:[#allocation9 + $0x10] sm:$0xf]
        %v11543 = vld [vmem:[#allocation9 + $0x14] sm:$0xff]
        %v11544 = vld [vmem:[#allocation9 + $0x1c] sm:$0xff]
        %v11545 = vld [vmem:[#allocation9 + $0x24] sm:$0xf]
        %v11546 = vld [vmem:[#allocation9 + $0x28] sm:$0xff]
        %v11547 = vld [vmem:[#allocation9 + $0x30] sm:$0xff]
        %v11548 = vld [vmem:[#allocation9 + $0x38] sm:$0xf]
        %v11549 = vld [vmem:[#allocation9 + $0x3c] sm:$0xff]
        %v11550 = vld [vmem:[#allocation9 + $0x44] sm:$0xff]
        %v11551 = vld [vmem:[#allocation9 + $0x4c] sm:$0xf]
        %v11552 = vld [vmem:[#allocation9 + $0x50] sm:$0xff]
        %v11553 = vld [vmem:[#allocation9 + $0x58] sm:$0xff]
        %v11554 = vld [vmem:[#allocation9 + $0x60] sm:$0xf]
        %v11555 = vld [vmem:[#allocation9 + $0x64] sm:$0xff]
        %v11556 = vld [vmem:[#allocation9 + $0x6c] sm:$0xff]
        %v11557 = vld [vmem:[#allocation9 + $0x74] sm:$0xf]
        %v11558 = vld [vmem:[#allocation9 + $0x78] sm:$0xff]
        %v11559 = vld [vmem:[#allocation9 + $0x80] sm:$0xff]
        %v11560 = vld [vmem:[#allocation9 + $0x88] sm:$0xf]
        %v11561 = vld [vmem:[#allocation9 + $0x8c] sm:$0xff]
        %v11562 = vld [vmem:[#allocation9 + $0x94] sm:$0xff]
        %v11563 = vld [vmem:[#allocation9 + $0x9c] sm:$0xf]
        %v11564 = vld [vmem:[#allocation9 + $0xa0] sm:$0xff]
        %v11565 = vld [vmem:[#allocation9 + $0xa8] sm:$0xff]
        %v11566 = vld [vmem:[#allocation9 + $0xb0] sm:$0xf]
        %v11567 = vld [vmem:[#allocation9 + $0xb4] sm:$0xff]
        %v11568 = vld [vmem:[#allocation9 + $0xbc] sm:$0xff]
        %v11569 = vld [vmem:[#allocation9 + $0xc4] sm:$0xf]
        %v11570 = vld [vmem:[#allocation9 + $0xc8] sm:$0xff]
        %v11571 = vld [vmem:[#allocation9 + $0xd0] sm:$0xff]
        %v11572 = vld [vmem:[#allocation9 + $0xd8] sm:$0xf]
        %v11573 = vld [vmem:[#allocation9 + $0xdc] sm:$0xff]
        %v11574 = vld [vmem:[#allocation9 + $0xe4] sm:$0xff]
        %v11575 = vld [vmem:[#allocation9 + $0xec] sm:$0xf]
        %v11576 = vld [vmem:[#allocation9 + $0xf0] sm:$0xff]
        %v11577 = vld [vmem:[#allocation9 + $0xf8] sm:$0xff]
        %v11578 = vld [vmem:[#allocation9 + $0x100] sm:$0xf]
        %v11579 = vld [vmem:[#allocation9 + $0x104] sm:$0xff]
        %v11580 = vld [vmem:[#allocation9 + $0x10c] sm:$0xff]
        %v11581 = vld [vmem:[#allocation9 + $0x114] sm:$0xf]
        %v11582 = vld [vmem:[#allocation9 + $0x118] sm:$0xff]
        %v11583 = vld [vmem:[#allocation9 + $0x120] sm:$0xff]
        %v11584 = vld [vmem:[#allocation9 + $0x128] sm:$0xf]
        %v11585 = vld [vmem:[#allocation9 + $0x12c] sm:$0xff]
        %v11586 = vld [vmem:[#allocation9 + $0x134] sm:$0xff]
        %v11587 = vld [vmem:[#allocation9 + $0x13c] sm:$0xf]
        %v11588 = vld [vmem:[#allocation9 + $0x140] sm:$0xff]
        %v11589 = vld [vmem:[#allocation9 + $0x148] sm:$0xff]
        %v11590 = vld [vmem:[#allocation9 + $0x150] sm:$0xf]
        %v11591 = vld [vmem:[#allocation9 + $0x154] sm:$0xff]
        %v11592 = vld [vmem:[#allocation9 + $0x15c] sm:$0xff]
        %v11593 = vld [vmem:[#allocation9 + $0x164] sm:$0xf]
        %v11594 = vpack.c.bf16 %v11461, %v11460
        %v11595 = vpack.c.bf16 %v11463, %v11462
        %v11596 = vpack.c.bf16 %v11465, %v11464
        %v11597 = vpack.c.bf16 %v11467, %v11466
        %v11598 = vpack.c.bf16 %v11469, %v11468
        %v11599 = vpack.c.bf16 %v11471, %v11470
        %v11600 = vpack.c.bf16 %v11473, %v11472
        %v11601 = vpack.c.bf16 %v11475, %v11474
        %v11602 = vpack.c.bf16 %v11477, %v11476
        %v11603 = vpack.c.bf16 %v11479, %v11478
        %v11604 = vpack.c.bf16 %v11481, %v11480
        %v11605 = vpack.c.bf16 %v11483, %v11482
        %v11606 = vpack.c.bf16 %v11485, %v11484
        %v11607 = vpack.c.bf16 %v11487, %v11486
        %v11608 = vpack.c.bf16 %v11489, %v11488
        %v11609 = vpack.c.bf16 %v11491, %v11490
        %v11610 = vpack.c.bf16 %v11493, %v11492
        %v11611 = vpack.c.bf16 %v11495, %v11494
        %v11612 = vpack.c.bf16 %v11497, %v11496
        %v11613 = vpack.c.bf16 %v11499, %v11498
        %v11614 = vpack.c.bf16 %v11501, %v11500
        %v11615 = vpack.c.bf16 %v11503, %v11502
        %v11616 = vpack.c.bf16 %v11505, %v11504
        %v11617 = vpack.c.bf16 %v11507, %v11506
        %v11618 = vpack.c.bf16 %v11509, %v11508
        %v11619 = vpack.c.bf16 %v11511, %v11510
        %v11620 = vpack.c.bf16 %v11513, %v11512
        %v11621 = vpack.c.bf16 %v11515, %v11514
        %v11622 = vpack.c.bf16 %v11517, %v11516
        %v11623 = vpack.c.bf16 %v11519, %v11518
        %v11624 = vpack.c.bf16 %v11521, %v11520
        %v11625 = vpack.c.bf16 %v11523, %v11522
        %v11626 = vpack.c.bf16 %v11525, %v11524
        %v11627 = vpack.c.bf16 %v11527, %v11526
        %v11628 = vpack.c.bf16 %v11529, %v11528
        %v11629 = vpack.c.bf16 %v11531, %v11530
        %v11630 = vpack.c.bf16 %v11533, %v11532
        %v11631 = vpack.c.bf16 %v11535, %v11534
        %v11632 = vpack.c.bf16 %v11537, %v11536
        %v11633 = vpack.c.bf16 %v11539, %v11538
        %v11688 = vunpack.c.l.b16 %v11540
        %v11689 = vunpack.c.h.b16 %v11540
        %v11690 = vunpack.c.l.b16 %v11541
        %v11691 = vunpack.c.h.b16 %v11541
        %v11692 = vunpack.c.l.b16 %v11542
        %v11693 = vunpack.c.l.b16 %v11543
        %v11694 = vunpack.c.h.b16 %v11543
        %v11695 = vunpack.c.l.b16 %v11544
        %v11696 = vunpack.c.h.b16 %v11544
        %v11697 = vunpack.c.l.b16 %v11545
        %v11698 = vunpack.c.l.b16 %v11546
        %v11699 = vunpack.c.h.b16 %v11546
        %v11700 = vunpack.c.l.b16 %v11547
        %v11701 = vunpack.c.h.b16 %v11547
        %v11702 = vunpack.c.l.b16 %v11548
        %v11703 = vunpack.c.l.b16 %v11549
        %v11704 = vunpack.c.h.b16 %v11549
        %v11705 = vunpack.c.l.b16 %v11550
        %v11706 = vunpack.c.h.b16 %v11550
        %v11707 = vunpack.c.l.b16 %v11551
        %v11708 = vunpack.c.l.b16 %v11552
        %v11709 = vunpack.c.h.b16 %v11552
        %v11710 = vunpack.c.l.b16 %v11553
        %v11711 = vunpack.c.h.b16 %v11553
        %v11712 = vunpack.c.l.b16 %v11554
        %v11713 = vunpack.c.l.b16 %v11555
        %v11714 = vunpack.c.h.b16 %v11555
        %v11715 = vunpack.c.l.b16 %v11556
        %v11716 = vunpack.c.h.b16 %v11556
        %v11717 = vunpack.c.l.b16 %v11557
        %v11718 = vunpack.c.l.b16 %v11558
        %v11719 = vunpack.c.h.b16 %v11558
        %v11720 = vunpack.c.l.b16 %v11559
        %v11721 = vunpack.c.h.b16 %v11559
        %v11722 = vunpack.c.l.b16 %v11560
        %v11723 = vunpack.c.l.b16 %v11561
        %v11724 = vunpack.c.h.b16 %v11561
        %v11725 = vunpack.c.l.b16 %v11562
        %v11726 = vunpack.c.h.b16 %v11562
        %v11727 = vunpack.c.l.b16 %v11563
        %v11728 = vunpack.c.l.b16 %v11564
        %v11729 = vunpack.c.h.b16 %v11564
        %v11730 = vunpack.c.l.b16 %v11565
        %v11731 = vunpack.c.h.b16 %v11565
        %v11732 = vunpack.c.l.b16 %v11566
        %v11733 = vunpack.c.l.b16 %v11567
        %v11734 = vunpack.c.h.b16 %v11567
        %v11735 = vunpack.c.l.b16 %v11568
        %v11736 = vunpack.c.h.b16 %v11568
        %v11737 = vunpack.c.l.b16 %v11569
        %v11738 = vunpack.c.l.b16 %v11570
        %v11739 = vunpack.c.h.b16 %v11570
        %v11740 = vunpack.c.l.b16 %v11571
        %v11741 = vunpack.c.h.b16 %v11571
        %v11742 = vunpack.c.l.b16 %v11572
        %v11743 = vunpack.c.l.b16 %v11573
        %v11744 = vunpack.c.h.b16 %v11573
        %v11745 = vunpack.c.l.b16 %v11574
        %v11746 = vunpack.c.h.b16 %v11574
        %v11747 = vunpack.c.l.b16 %v11575
        %v11748 = vunpack.c.l.b16 %v11576
        %v11749 = vunpack.c.h.b16 %v11576
        %v11750 = vunpack.c.l.b16 %v11577
        %v11751 = vunpack.c.h.b16 %v11577
        %v11752 = vunpack.c.l.b16 %v11578
        %v11753 = vunpack.c.l.b16 %v11579
        %v11754 = vunpack.c.h.b16 %v11579
        %v11755 = vunpack.c.l.b16 %v11580
        %v11756 = vunpack.c.h.b16 %v11580
        %v11757 = vunpack.c.l.b16 %v11581
        %v11758 = vunpack.c.l.b16 %v11582
        %v11759 = vunpack.c.h.b16 %v11582
        %v11760 = vunpack.c.l.b16 %v11583
        %v11761 = vunpack.c.h.b16 %v11583
        %v11762 = vunpack.c.l.b16 %v11584
        %v11763 = vunpack.c.l.b16 %v11585
        %v11764 = vunpack.c.h.b16 %v11585
        %v11765 = vunpack.c.l.b16 %v11586
        %v11766 = vunpack.c.h.b16 %v11586
        %v11767 = vunpack.c.l.b16 %v11587
        %v11768 = vunpack.c.l.b16 %v11588
        %v11769 = vunpack.c.h.b16 %v11588
        %v11770 = vunpack.c.l.b16 %v11589
        %v11771 = vunpack.c.h.b16 %v11589
        %v11772 = vunpack.c.l.b16 %v11590
        %v11773 = vunpack.c.l.b16 %v11591
        %v11774 = vunpack.c.h.b16 %v11591
        %v11775 = vunpack.c.l.b16 %v11592
        %v11776 = vunpack.c.h.b16 %v11592
        %v11777 = vunpack.c.l.b16 %v11593
        %v11778 = vpack.c.b16 %v11693, %v11688
        %v11779 = vpack.c.b16 %v11694, %v11689
        %v11780 = vpack.c.b16 %v11695, %v11690
        %v11781 = vpack.c.b16 %v11696, %v11691
        %v11782 = vpack.c.b16 %v11697, %v11692
        %v11783 = vpack.c.b16 %v11703, %v11698
        %v11784 = vpack.c.b16 %v11704, %v11699
        %v11785 = vpack.c.b16 %v11705, %v11700
        %v11786 = vpack.c.b16 %v11706, %v11701
        %v11787 = vpack.c.b16 %v11707, %v11702
        %v11788 = vpack.c.b16 %v11713, %v11708
        %v11789 = vpack.c.b16 %v11714, %v11709
        %v11790 = vpack.c.b16 %v11715, %v11710
        %v11791 = vpack.c.b16 %v11716, %v11711
        %v11792 = vpack.c.b16 %v11717, %v11712
        %v11793 = vpack.c.b16 %v11723, %v11718
        %v11794 = vpack.c.b16 %v11724, %v11719
        %v11795 = vpack.c.b16 %v11725, %v11720
        %v11796 = vpack.c.b16 %v11726, %v11721
        %v11797 = vpack.c.b16 %v11727, %v11722
        %v11798 = vpack.c.b16 %v11733, %v11728
        %v11799 = vpack.c.b16 %v11734, %v11729
        %v11800 = vpack.c.b16 %v11735, %v11730
        %v11801 = vpack.c.b16 %v11736, %v11731
        %v11802 = vpack.c.b16 %v11737, %v11732
        %v11803 = vpack.c.b16 %v11743, %v11738
        %v11804 = vpack.c.b16 %v11744, %v11739
        %v11805 = vpack.c.b16 %v11745, %v11740
        %v11806 = vpack.c.b16 %v11746, %v11741
        %v11807 = vpack.c.b16 %v11747, %v11742
        %v11808 = vpack.c.b16 %v11753, %v11748
        %v11809 = vpack.c.b16 %v11754, %v11749
        %v11810 = vpack.c.b16 %v11755, %v11750
        %v11811 = vpack.c.b16 %v11756, %v11751
        %v11812 = vpack.c.b16 %v11757, %v11752
        %v11813 = vpack.c.b16 %v11763, %v11758
        %v11814 = vpack.c.b16 %v11764, %v11759
        %v11815 = vpack.c.b16 %v11765, %v11760
        %v11816 = vpack.c.b16 %v11766, %v11761
        %v11817 = vpack.c.b16 %v11767, %v11762
        %v11818 = vpack.c.b16 %v11773, %v11768
        %v11819 = vpack.c.b16 %v11774, %v11769
        %v11820 = vpack.c.b16 %v11775, %v11770
        %v11821 = vpack.c.b16 %v11776, %v11771
        %v11822 = vpack.c.b16 %v11777, %v11772
        %vm11859 = vcmask 1039360
        %v11861 = vsel %vm11859, %v11782, 0
        %v11864 = vsel %vm11859, %v11787, 0
        %v11867 = vsel %vm11859, %v11792, 0
        %v11870 = vsel %vm11859, %v11797, 0
        %v11873 = vsel %vm11859, %v11802, 0
        %v11876 = vsel %vm11859, %v11807, 0
        %v11879 = vsel %vm11859, %v11812, 0
        %v11882 = vsel %vm11859, %v11817, 0
        %v11885 = vsel %vm11859, %v11822, 0
        %vm11887 = vcmask 1047552
        %v11888 = vsel %vm1271, 4294967295, 65535
        %v11889 = vsel %vm11887, %v11888, 0
        %v11891 = vand.u32 %v11633, %v11889
        %11893 = vmatpush.bf16.msra.mxu0 %v11601
        %11894 = vmatpush.bf16.msra.mxu0 %v11600
        %11895 = vmatpush.bf16.msra.mxu0 %v11599
        %11896 = vmatpush.bf16.msra.mxu0 %v11598
        %11897 = vmatpush.bf16.msra.mxu0 %v11597
        %11898 = vmatpush.bf16.msra.mxu0 %v11596
        %11899 = vmatpush.bf16.msra.mxu0 %v11595
        %11900 = vmatpush.bf16.msra.mxu0 %v11594
        %11901 = vmatmul.bf16.gmra.mxu0 %v11778
        %v11902 = vpop.f32.mrf.mxu0
        %v11903 = vadd.f32 0.0, %v11902
        %v11904 = vpop.f32.mrf.mxu0
        %v11905 = vadd.f32 0.0, %v11904
        %11906 = vmatmul.bf16.gmra.mxu0 %v11783
        %v11907 = vpop.f32.mrf.mxu0
        %v11908 = vadd.f32 0.0, %v11907
        %v11909 = vpop.f32.mrf.mxu0
        %v11910 = vadd.f32 0.0, %v11909
        %11911 = vmatmul.bf16.gmra.mxu0 %v11788
        %v11912 = vpop.f32.mrf.mxu0
        %v11913 = vadd.f32 0.0, %v11912
        %v11914 = vpop.f32.mrf.mxu0
        %v11915 = vadd.f32 0.0, %v11914
        %11916 = vmatmul.bf16.gmra.mxu0 %v11793
        %v11917 = vpop.f32.mrf.mxu0
        %v11918 = vadd.f32 0.0, %v11917
        %v11919 = vpop.f32.mrf.mxu0
        %v11920 = vadd.f32 0.0, %v11919
        %11921 = vmatmul.bf16.gmra.mxu0 %v11798
        %v11922 = vpop.f32.mrf.mxu0
        %v11923 = vadd.f32 0.0, %v11922
        %v11924 = vpop.f32.mrf.mxu0
        %v11925 = vadd.f32 0.0, %v11924
        %11926 = vmatmul.bf16.gmra.mxu0 %v11803
        %v11927 = vpop.f32.mrf.mxu0
        %v11928 = vadd.f32 0.0, %v11927
        %v11929 = vpop.f32.mrf.mxu0
        %v11930 = vadd.f32 0.0, %v11929
        %11931 = vmatmul.bf16.gmra.mxu0 %v11808
        %v11932 = vpop.f32.mrf.mxu0
        %v11933 = vadd.f32 0.0, %v11932
        %v11934 = vpop.f32.mrf.mxu0
        %v11935 = vadd.f32 0.0, %v11934
        %11936 = vmatmul.bf16.gmra.mxu0 %v11813
        %v11937 = vpop.f32.mrf.mxu0
        %v11938 = vadd.f32 0.0, %v11937
        %v11939 = vpop.f32.mrf.mxu0
        %v11940 = vadd.f32 0.0, %v11939
        %11941 = vmatmul.bf16.gmra.mxu0 %v11818
        %v11942 = vpop.f32.mrf.mxu0
        %v11943 = vadd.f32 0.0, %v11942
        %v11944 = vpop.f32.mrf.mxu0
        %v11945 = vadd.f32 0.0, %v11944
        %11946 = vdwg.mxu0
        %11947 = vmatpush.bf16.msra.mxu0 %v11609
        %11948 = vmatpush.bf16.msra.mxu0 %v11608
        %11949 = vmatpush.bf16.msra.mxu0 %v11607
        %11950 = vmatpush.bf16.msra.mxu0 %v11606
        %11951 = vmatpush.bf16.msra.mxu0 %v11605
        %11952 = vmatpush.bf16.msra.mxu0 %v11604
        %11953 = vmatpush.bf16.msra.mxu0 %v11603
        %11954 = vmatpush.bf16.msra.mxu0 %v11602
        %11955 = vmatmul.bf16.gmra.mxu0 %v11779
        %v11956 = vpop.f32.mrf.mxu0
        %v11957 = vadd.f32 %v11903, %v11956
        %v11958 = vpop.f32.mrf.mxu0
        %v11959 = vadd.f32 %v11905, %v11958
        %11960 = vmatmul.bf16.gmra.mxu0 %v11784
        %v11961 = vpop.f32.mrf.mxu0
        %v11962 = vadd.f32 %v11908, %v11961
        %v11963 = vpop.f32.mrf.mxu0
        %v11964 = vadd.f32 %v11910, %v11963
        %11965 = vmatmul.bf16.gmra.mxu0 %v11789
        %v11966 = vpop.f32.mrf.mxu0
        %v11967 = vadd.f32 %v11913, %v11966
        %v11968 = vpop.f32.mrf.mxu0
        %v11969 = vadd.f32 %v11915, %v11968
        %11970 = vmatmul.bf16.gmra.mxu0 %v11794
        %v11971 = vpop.f32.mrf.mxu0
        %v11972 = vadd.f32 %v11918, %v11971
        %v11973 = vpop.f32.mrf.mxu0
        %v11974 = vadd.f32 %v11920, %v11973
        %11975 = vmatmul.bf16.gmra.mxu0 %v11799
        %v11976 = vpop.f32.mrf.mxu0
        %v11977 = vadd.f32 %v11923, %v11976
        %v11978 = vpop.f32.mrf.mxu0
        %v11979 = vadd.f32 %v11925, %v11978
        %11980 = vmatmul.bf16.gmra.mxu0 %v11804
        %v11981 = vpop.f32.mrf.mxu0
        %v11982 = vadd.f32 %v11928, %v11981
        %v11983 = vpop.f32.mrf.mxu0
        %v11984 = vadd.f32 %v11930, %v11983
        %11985 = vmatmul.bf16.gmra.mxu0 %v11809
        %v11986 = vpop.f32.mrf.mxu0
        %v11987 = vadd.f32 %v11933, %v11986
        %v11988 = vpop.f32.mrf.mxu0
        %v11989 = vadd.f32 %v11935, %v11988
        %11990 = vmatmul.bf16.gmra.mxu0 %v11814
        %v11991 = vpop.f32.mrf.mxu0
        %v11992 = vadd.f32 %v11938, %v11991
        %v11993 = vpop.f32.mrf.mxu0
        %v11994 = vadd.f32 %v11940, %v11993
        %11995 = vmatmul.bf16.gmra.mxu0 %v11819
        %v11996 = vpop.f32.mrf.mxu0
        %v11997 = vadd.f32 %v11943, %v11996
        %v11998 = vpop.f32.mrf.mxu0
        %v11999 = vadd.f32 %v11945, %v11998
        %12000 = vdwg.mxu0
        %12001 = vmatpush.bf16.msra.mxu0 %v11617
        %12002 = vmatpush.bf16.msra.mxu0 %v11616
        %12003 = vmatpush.bf16.msra.mxu0 %v11615
        %12004 = vmatpush.bf16.msra.mxu0 %v11614
        %12005 = vmatpush.bf16.msra.mxu0 %v11613
        %12006 = vmatpush.bf16.msra.mxu0 %v11612
        %12007 = vmatpush.bf16.msra.mxu0 %v11611
        %12008 = vmatpush.bf16.msra.mxu0 %v11610
        %12009 = vmatmul.bf16.gmra.mxu0 %v11780
        %v12010 = vpop.f32.mrf.mxu0
        %v12011 = vadd.f32 %v11957, %v12010
        %v12012 = vpop.f32.mrf.mxu0
        %v12013 = vadd.f32 %v11959, %v12012
        %12014 = vmatmul.bf16.gmra.mxu0 %v11785
        %v12015 = vpop.f32.mrf.mxu0
        %v12016 = vadd.f32 %v11962, %v12015
        %v12017 = vpop.f32.mrf.mxu0
        %v12018 = vadd.f32 %v11964, %v12017
        %12019 = vmatmul.bf16.gmra.mxu0 %v11790
        %v12020 = vpop.f32.mrf.mxu0
        %v12021 = vadd.f32 %v11967, %v12020
        %v12022 = vpop.f32.mrf.mxu0
        %v12023 = vadd.f32 %v11969, %v12022
        %12024 = vmatmul.bf16.gmra.mxu0 %v11795
        %v12025 = vpop.f32.mrf.mxu0
        %v12026 = vadd.f32 %v11972, %v12025
        %v12027 = vpop.f32.mrf.mxu0
        %v12028 = vadd.f32 %v11974, %v12027
        %12029 = vmatmul.bf16.gmra.mxu0 %v11800
        %v12030 = vpop.f32.mrf.mxu0
        %v12031 = vadd.f32 %v11977, %v12030
        %v12032 = vpop.f32.mrf.mxu0
        %v12033 = vadd.f32 %v11979, %v12032
        %12034 = vmatmul.bf16.gmra.mxu0 %v11805
        %v12035 = vpop.f32.mrf.mxu0
        %v12036 = vadd.f32 %v11982, %v12035
        %v12037 = vpop.f32.mrf.mxu0
        %v12038 = vadd.f32 %v11984, %v12037
        %12039 = vmatmul.bf16.gmra.mxu0 %v11810
        %v12040 = vpop.f32.mrf.mxu0
        %v12041 = vadd.f32 %v11987, %v12040
        %v12042 = vpop.f32.mrf.mxu0
        %v12043 = vadd.f32 %v11989, %v12042
        %12044 = vmatmul.bf16.gmra.mxu0 %v11815
        %v12045 = vpop.f32.mrf.mxu0
        %v12046 = vadd.f32 %v11992, %v12045
        %v12047 = vpop.f32.mrf.mxu0
        %v12048 = vadd.f32 %v11994, %v12047
        %12049 = vmatmul.bf16.gmra.mxu0 %v11820
        %v12050 = vpop.f32.mrf.mxu0
        %v12051 = vadd.f32 %v11997, %v12050
        %v12052 = vpop.f32.mrf.mxu0
        %v12053 = vadd.f32 %v11999, %v12052
        %12054 = vdwg.mxu0
        %12055 = vmatpush.bf16.msra.mxu0 %v11625
        %12056 = vmatpush.bf16.msra.mxu0 %v11624
        %12057 = vmatpush.bf16.msra.mxu0 %v11623
        %12058 = vmatpush.bf16.msra.mxu0 %v11622
        %12059 = vmatpush.bf16.msra.mxu0 %v11621
        %12060 = vmatpush.bf16.msra.mxu0 %v11620
        %12061 = vmatpush.bf16.msra.mxu0 %v11619
        %12062 = vmatpush.bf16.msra.mxu0 %v11618
        %12063 = vmatmul.bf16.gmra.mxu0 %v11781
        %v12064 = vpop.f32.mrf.mxu0
        %v12065 = vadd.f32 %v12011, %v12064
        %v12066 = vpop.f32.mrf.mxu0
        %v12067 = vadd.f32 %v12013, %v12066
        %12068 = vmatmul.bf16.gmra.mxu0 %v11786
        %v12069 = vpop.f32.mrf.mxu0
        %v12070 = vadd.f32 %v12016, %v12069
        %v12071 = vpop.f32.mrf.mxu0
        %v12072 = vadd.f32 %v12018, %v12071
        %12073 = vmatmul.bf16.gmra.mxu0 %v11791
        %v12074 = vpop.f32.mrf.mxu0
        %v12075 = vadd.f32 %v12021, %v12074
        %v12076 = vpop.f32.mrf.mxu0
        %v12077 = vadd.f32 %v12023, %v12076
        %12078 = vmatmul.bf16.gmra.mxu0 %v11796
        %v12079 = vpop.f32.mrf.mxu0
        %v12080 = vadd.f32 %v12026, %v12079
        %v12081 = vpop.f32.mrf.mxu0
        %v12082 = vadd.f32 %v12028, %v12081
        %12083 = vmatmul.bf16.gmra.mxu0 %v11801
        %v12084 = vpop.f32.mrf.mxu0
        %v12085 = vadd.f32 %v12031, %v12084
        %v12086 = vpop.f32.mrf.mxu0
        %v12087 = vadd.f32 %v12033, %v12086
        %12088 = vmatmul.bf16.gmra.mxu0 %v11806
        %v12089 = vpop.f32.mrf.mxu0
        %v12090 = vadd.f32 %v12036, %v12089
        %v12091 = vpop.f32.mrf.mxu0
        %v12092 = vadd.f32 %v12038, %v12091
        %12093 = vmatmul.bf16.gmra.mxu0 %v11811
        %v12094 = vpop.f32.mrf.mxu0
        %v12095 = vadd.f32 %v12041, %v12094
        %v12096 = vpop.f32.mrf.mxu0
        %v12097 = vadd.f32 %v12043, %v12096
        %12098 = vmatmul.bf16.gmra.mxu0 %v11816
        %v12099 = vpop.f32.mrf.mxu0
        %v12100 = vadd.f32 %v12046, %v12099
        %v12101 = vpop.f32.mrf.mxu0
        %v12102 = vadd.f32 %v12048, %v12101
        %12103 = vmatmul.bf16.gmra.mxu0 %v11821
        %v12104 = vpop.f32.mrf.mxu0
        %v12105 = vadd.f32 %v12051, %v12104
        %v12106 = vpop.f32.mrf.mxu0
        %v12107 = vadd.f32 %v12053, %v12106
        %12108 = vdwg.mxu0
        %12109 = vmatpush.bf16.msra.mxu0 %v11891
        %12110 = vmatpush.bf16.msra.mxu0 %v11632
        %12111 = vmatpush.bf16.msra.mxu0 %v11631
        %12112 = vmatpush.bf16.msra.mxu0 %v11630
        %12113 = vmatpush.bf16.msra.mxu0 %v11629
        %12114 = vmatpush.bf16.msra.mxu0 %v11628
        %12115 = vmatpush.bf16.msra.mxu0 %v11627
        %12116 = vmatpush.bf16.msra.mxu0 %v11626
        %12117 = vmatmul.bf16.gmra.mxu0 %v11861
        %v12118 = vpop.f32.mrf.mxu0
        %v12119 = vadd.f32 %v12065, %v12118
        %v12120 = vpop.f32.mrf.mxu0
        %v12121 = vadd.f32 %v12067, %v12120
        %12122 = vmatmul.bf16.gmra.mxu0 %v11864
        %v12123 = vpop.f32.mrf.mxu0
        %v12124 = vadd.f32 %v12070, %v12123
        %v12125 = vpop.f32.mrf.mxu0
        %v12126 = vadd.f32 %v12072, %v12125
        %12127 = vmatmul.bf16.gmra.mxu0 %v11867
        %v12128 = vpop.f32.mrf.mxu0
        %v12129 = vadd.f32 %v12075, %v12128
        %v12130 = vpop.f32.mrf.mxu0
        %v12131 = vadd.f32 %v12077, %v12130
        %12132 = vmatmul.bf16.gmra.mxu0 %v11870
        %v12133 = vpop.f32.mrf.mxu0
        %v12134 = vadd.f32 %v12080, %v12133
        %v12135 = vpop.f32.mrf.mxu0
        %v12136 = vadd.f32 %v12082, %v12135
        %12137 = vmatmul.bf16.gmra.mxu0 %v11873
        %v12138 = vpop.f32.mrf.mxu0
        %v12139 = vadd.f32 %v12085, %v12138
        %v12140 = vpop.f32.mrf.mxu0
        %v12141 = vadd.f32 %v12087, %v12140
        %12142 = vmatmul.bf16.gmra.mxu0 %v11876
        %v12143 = vpop.f32.mrf.mxu0
        %v12144 = vadd.f32 %v12090, %v12143
        %v12145 = vpop.f32.mrf.mxu0
        %v12146 = vadd.f32 %v12092, %v12145
        %12147 = vmatmul.bf16.gmra.mxu0 %v11879
        %v12148 = vpop.f32.mrf.mxu0
        %v12149 = vadd.f32 %v12095, %v12148
        %v12150 = vpop.f32.mrf.mxu0
        %v12151 = vadd.f32 %v12097, %v12150
        %12152 = vmatmul.bf16.gmra.mxu0 %v11882
        %v12153 = vpop.f32.mrf.mxu0
        %v12154 = vadd.f32 %v12100, %v12153
        %v12155 = vpop.f32.mrf.mxu0
        %v12156 = vadd.f32 %v12102, %v12155
        %12157 = vmatmul.bf16.gmra.mxu0 %v11885
        %v12158 = vpop.f32.mrf.mxu0
        %v12159 = vadd.f32 %v12105, %v12158
        %v12160 = vpop.f32.mrf.mxu0
        %v12161 = vadd.f32 %v12107, %v12160
        %12162 = vdwg.mxu0
        %v12163 = vpack.c.bf16 %v12119, %v12119
        %v12164 = vpack.c.bf16 %v12121, %v12121
        %v12165 = vpack.c.bf16 %v12124, %v12124
        %v12166 = vpack.c.bf16 %v12126, %v12126
        %v12167 = vpack.c.bf16 %v12129, %v12129
        %v12168 = vpack.c.bf16 %v12131, %v12131
        %v12169 = vpack.c.bf16 %v12134, %v12134
        %v12170 = vpack.c.bf16 %v12136, %v12136
        %v12171 = vpack.c.bf16 %v12139, %v12139
        %v12172 = vpack.c.bf16 %v12141, %v12141
        %v12173 = vpack.c.bf16 %v12144, %v12144
        %v12174 = vpack.c.bf16 %v12146, %v12146
        %v12175 = vpack.c.bf16 %v12149, %v12149
        %v12176 = vpack.c.bf16 %v12151, %v12151
        %v12177 = vpack.c.bf16 %v12154, %v12154
        %v12178 = vpack.c.bf16 %v12156, %v12156
        %v12179 = vpack.c.bf16 %v12159, %v12159
        %v12180 = vpack.c.bf16 %v12161, %v12161
        %vm12181 = vcmask 519168
        %12182 = vst.msk [vmem:[%s330] sm:$0xf] %vm12181, %v12163
        %12183 = vst.msk [vmem:[%s330 + $0x4] sm:$0xf] %vm12181, %v12164
        %12184 = vst.msk [vmem:[%s330 + $0x8] sm:$0xf] %vm12181, %v12165
        %12185 = vst.msk [vmem:[%s330 + $0xc] sm:$0xf] %vm12181, %v12166
        %12186 = vst.msk [vmem:[%s330 + $0x10] sm:$0xf] %vm12181, %v12167
        %12187 = vst.msk [vmem:[%s330 + $0x14] sm:$0xf] %vm12181, %v12168
        %12188 = vst.msk [vmem:[%s330 + $0x18] sm:$0xf] %vm12181, %v12169
        %12189 = vst.msk [vmem:[%s330 + $0x1c] sm:$0xf] %vm12181, %v12170
        %12190 = vst.msk [vmem:[%s330 + $0x20] sm:$0xf] %vm12181, %v12171
        %12191 = vst.msk [vmem:[%s330 + $0x24] sm:$0xf] %vm12181, %v12172
        %12192 = vst.msk [vmem:[%s330 + $0x28] sm:$0xf] %vm12181, %v12173
        %12193 = vst.msk [vmem:[%s330 + $0x2c] sm:$0xf] %vm12181, %v12174
        %12194 = vst.msk [vmem:[%s330 + $0x30] sm:$0xf] %vm12181, %v12175
        %12195 = vst.msk [vmem:[%s330 + $0x34] sm:$0xf] %vm12181, %v12176
        %12196 = vst.msk [vmem:[%s330 + $0x38] sm:$0xf] %vm12181, %v12177
        %12197 = vst.msk [vmem:[%s330 + $0x3c] sm:$0xf] %vm12181, %v12178
        %12198 = vst.msk [vmem:[%s330 + $0x40] sm:$0xf] %vm12181, %v12179
        %12199 = vst.msk [vmem:[%s330 + $0x44] sm:$0xf] %vm12181, %v12180
        %p12200 = scmp.lt.s32.totalorder %s20, 1
        %s12201 = scalar_select %p12200, %s20, 1
        %s12202 = smul.addr %s12201, 18
        %s12203 = smul.addr %s12202, 4
        %s12204 = scalar_lea.vmem %s6, %s12203
        // Predicated region
        $region65: #{net_forward.2} parent=43 // pred_check
          %p12205 = pneg %p169
        $region66: #{net_forward.2} parent=43 // pred_check_branch
          %12207 = sbr.rel (%p12205) target = $region68
        $region67: #{net_forward.2} parent=43 // pred_region
          _
        $region68: #{net_forward.2} parent=43 // pred_fallthru
          _
      $region44: #{net_forward.2} parent=5 // pred_fallthru
        _
      %p12208 = scmp.le.s32.totalorder 2, %s15
      // Predicated region
      $region69: #{net_forward.2} parent=5 // pred_check
        %p12209 = pneg %p12208
      $region70: #{net_forward.2} parent=5 // pred_check_branch
        %12211 = sbr.rel (%p12209) target = $region72
      $region71: #{net_forward.2} parent=5 // pred_region
        %s12212 = ssub.s32 %s15, 2
        // Predicated region
        $region73: #{net_forward.2} parent=71 // pred_check
          %p12213 = pneg %p175
        $region74: #{net_forward.2} parent=71 // pred_check_branch
          %12215 = sbr.rel (%p12213) target = $region76
        $region75: #{net_forward.2} parent=71 // pred_region
          %p12216 = scmp.lt.s32.totalorder %s21, 1
          %s12217 = scalar_select %p12216, %s21, 1
          %s12218 = smul.addr %s12217, 18
          %s12219 = smul.addr %s12218, 4
          %s12220 = scalar_lea.vmem %s6, %s12219
        $region76: #{net_forward.2} parent=71 // pred_fallthru
          _
      $region72: #{net_forward.2} parent=5 // pred_fallthru
        _
    $region6: #{net_forward.2} parent=1 // loop_footer
      %s19 = sadd.s32 1, %s15
    $region7: #{net_forward.2} parent=1 // loop_footer_branch
      %14 = sbr.rel target = $region3
    $region8: #{net_forward.2} parent=1 // loop_exit
      _
    %12221 = vsyncpa [#allocation3], 1
    %s12222 = scalar_lea.sflag [#allocation3], 1
    %12223 = vsyncpa %s12222, 1
    %12224 = vsyncpa [#allocation5], 1
    %12225 = vsyncpa [#allocation8], 1

</llo_original>
